<compile_context>
chip_gen: v6e
topology: v6e:2x2x1
jax: 0.10.0
libtpu: 0.0.40
codegen_flags: <defaults>
</compile_context>

<pallas_src>
import functools

import jax
import jax.numpy as jnp
from jax.experimental import pallas as pl
from jax.experimental.pallas import tpu as pltpu

SIGMA = 0.0                       # Self_Attn_Generator.__init__ sets self.sigma = 0
ATTN_DTYPE = jnp.bfloat16         # attention-map storage (set jnp.float32 for exact parity)
MATMUL_IN_DTYPE = jnp.bfloat16    # MXU operand dtype (accumulation is always f32)


def _roundup(x, m):
    return ((x + m - 1) // m) * m


# --------------------------------------------------------------------------
# Tiled MXU matmul with optional fused activation epilogue
# --------------------------------------------------------------------------
def _matmul_kernel(a_ref, b_ref, o_ref, acc_ref, *, act):
    @pl.when(pl.program_id(2) == 0)
    def _():
        acc_ref[...] = jnp.zeros_like(acc_ref)

    acc_ref[...] += jnp.dot(a_ref[...], b_ref[...],
                            preferred_element_type=jnp.float32)

    @pl.when(pl.program_id(2) == pl.num_programs(2) - 1)
    def _():
        y = acc_ref[...]
        if act == "tanh":                    # trace-time branch: fused epilogue
            y = jnp.tanh(y)
        o_ref[...] = y.astype(o_ref.dtype)


def pallas_matmul(a, b, act=None):
    """C = act(A @ B).  Operands cast to bf16, f32 accumulation, f32 output."""
    M, K = a.shape
    K2, N = b.shape
    assert K == K2
    tm = min(512, _roundup(M, 16))          # big M tiles (few grid steps)
    tk = min(1024, _roundup(K, 128))        # full padded K where it fits
    tn = 128                                # lane-width output tiles
    Mp, Kp, Np = _roundup(M, tm), _roundup(K, tk), _roundup(N, tn)
    a_p = jnp.pad(a.astype(MATMUL_IN_DTYPE), ((0, Mp - M), (0, Kp - K)))
    b_p = jnp.pad(b.astype(MATMUL_IN_DTYPE), ((0, Kp - K), (0, Np - N)))
    out = pl.pallas_call(
        functools.partial(_matmul_kernel, act=act),
        out_shape=jax.ShapeDtypeStruct((Mp, Np), jnp.float32),
        grid_spec=pltpu.PrefetchScalarGridSpec(
            num_scalar_prefetch=0,
            grid=(Mp // tm, Np // tn, Kp // tk),
            in_specs=[pl.BlockSpec((tm, tk), lambda i, j, k: (i, k)),
                      pl.BlockSpec((tk, tn), lambda i, j, k: (k, j))],
            out_specs=pl.BlockSpec((tm, tn), lambda i, j, k: (i, j)),
            scratch_shapes=[pltpu.VMEM((tm, tn), jnp.float32)]),
        compiler_params=pltpu.CompilerParams(
            dimension_semantics=("parallel", "parallel", "arbitrary")),
    )(a_p, b_p)
    return out[:M, :N]


# --------------------------------------------------------------------------
# Lane packing helper: view an (M, C<128) map as full 128-lane rows
# --------------------------------------------------------------------------
def _lane_pack_factor(M, C):
    if C % 128 == 0:
        return 1
    if 128 % C == 0 and M % (128 // C) == 0:
        return 128 // C
    return 1


# --------------------------------------------------------------------------
# Fused per-channel scale/shift + activation (BatchNorm apply + ReLU)
# --------------------------------------------------------------------------
def _scale_shift_act_kernel(x_ref, s_ref, b_ref, o_ref, *, act):
    y = x_ref[...] * s_ref[...] + b_ref[...]
    if act == "relu":
        y = jnp.maximum(y, 0.0)
    elif act == "tanh":
        y = jnp.tanh(y)
    o_ref[...] = y


def scale_shift_act(x2d, scale, shift, act, tm=1024):
    M0, C0 = x2d.shape
    g = _lane_pack_factor(M0, C0)
    if g > 1:                                # lane-dense view: (M/g, 128)
        x2d = x2d.reshape(M0 // g, C0 * g)
        scale = jnp.tile(scale, (1, g))
        shift = jnp.tile(shift, (1, g))
    M, C = x2d.shape
    tm = min(tm, _roundup(M, 8))
    Mp = _roundup(M, tm)
    xp = jnp.pad(x2d, ((0, Mp - M), (0, 0)))
    out = pl.pallas_call(
        functools.partial(_scale_shift_act_kernel, act=act),
        out_shape=jax.ShapeDtypeStruct((Mp, C), jnp.float32),
        grid_spec=pltpu.PrefetchScalarGridSpec(
            num_scalar_prefetch=0,
            grid=(Mp // tm,),
            in_specs=[pl.BlockSpec((tm, C), lambda i: (i, 0)),
                      pl.BlockSpec((1, C), lambda i: (0, 0)),
                      pl.BlockSpec((1, C), lambda i: (0, 0))],
            out_specs=pl.BlockSpec((tm, C), lambda i: (i, 0))),
        compiler_params=pltpu.CompilerParams(
            dimension_semantics=("parallel",)),
    )(xp, scale, shift)
    out = out[:M]
    if g > 1:
        out = out.reshape(M0, C0)
    return out


# --------------------------------------------------------------------------
# Single-pass BatchNorm statistics: per-column sum and sum-of-squares
# --------------------------------------------------------------------------
def _bn_stats_kernel(x_ref, o_ref, acc_ref):
    @pl.when(pl.program_id(0) == 0)
    def _():
        acc_ref[...] = jnp.zeros_like(acc_ref)

    x = x_ref[...]
    acc_ref[0:1, :] += jnp.sum(x, axis=0, keepdims=True)
    acc_ref[1:2, :] += jnp.sum(x * x, axis=0, keepdims=True)

    @pl.when(pl.program_id(0) == pl.num_programs(0) - 1)
    def _():
        o_ref[...] = acc_ref[...]


def bn_stats_pallas(x2d, tm=1024):
    M, C = x2d.shape
    tm = min(tm, _roundup(M, 8))
    Mp = _roundup(M, tm)
    xp = jnp.pad(x2d, ((0, Mp - M), (0, 0)))       # zero rows do not affect sums
    return pl.pallas_call(
        _bn_stats_kernel,
        out_shape=jax.ShapeDtypeStruct((2, C), jnp.float32),
        grid_spec=pltpu.PrefetchScalarGridSpec(
            num_scalar_prefetch=0,
            grid=(Mp // tm,),
            in_specs=[pl.BlockSpec((tm, C), lambda i: (i, 0))],
            out_specs=pl.BlockSpec((2, C), lambda i: (0, 0)),
            scratch_shapes=[pltpu.VMEM((2, C), jnp.float32)]),
        compiler_params=pltpu.CompilerParams(
            dimension_semantics=("arbitrary",)),
    )(xp)


def batchnorm_relu(x, gamma, beta, eps=1e-5):
    """Training-mode BatchNorm2d (batch statistics, biased variance) + ReLU."""
    B, H, W, C = x.shape
    M = B * H * W
    xf = x.reshape(M, C)
    g = _lane_pack_factor(M, C)
    stats = bn_stats_pallas(xf.reshape(M // g, C * g) if g > 1 else xf)
    stats = stats.reshape(2, g, C).sum(axis=1)             # fold packed groups
    mean = stats[0] / M
    var = jnp.maximum(stats[1] / M - mean * mean, 0.0)
    scale = gamma * jax.lax.rsqrt(var + eps)
    shift = beta - mean * scale
    y = scale_shift_act(xf, scale.reshape(1, C), shift.reshape(1, C), act="relu")
    return y.reshape(B, H, W, C)


# --------------------------------------------------------------------------
# ConvTranspose2d lowerings
# --------------------------------------------------------------------------
def conv_transpose_from_1x1(z, w):
    """ConvTranspose2d(Cin, Cout, 4, stride=1, padding=0) on a 1x1 input:
    y[b, kh, kw, co] = sum_ci z[b, ci] * w[ci, co, kh, kw]  (dense matmul)."""
    Cin, Cout, k, _ = w.shape
    wmat = jnp.transpose(w, (0, 2, 3, 1)).reshape(Cin, k * k * Cout)
    y = pallas_matmul(z, wmat)
    return y.reshape(z.shape[0], k, k, Cout)


def conv_transpose_s2_k4_p1(x, w, act=None):
    """ConvTranspose2d(Cin, Cout, 4, stride=2, padding=1), NHWC in/out.

    Sub-pixel phase decomposition: each output parity (ph, pw) is a 2x2 conv
    over the 1-padded input (no structural zeros).  The 4 phase weight blocks
    are stacked along N so one matmul produces all phases; `act` (tanh) commutes
    with the phase interleave, so it is fused into the matmul epilogue."""
    B, H, W, Cin = x.shape
    Cout = w.shape[1]
    xp = jnp.pad(x, ((0, 0), (1, 1), (1, 1), (0, 0)))
    Hg, Wg = H + 1, W + 1
    taps = [xp[:, di:di + Hg, dj:dj + Wg, :] for di in (0, 1) for dj in (0, 1)]
    patches = jnp.concatenate(taps, axis=-1).reshape(B * Hg * Wg, 4 * Cin)

    wcols = []
    for ph in (0, 1):
        for pw in (0, 1):
            rows = []
            for di in (0, 1):
                for dj in (0, 1):
                    kh = (3 - 2 * di) if ph == 0 else (2 - 2 * di)
                    kw = (3 - 2 * dj) if pw == 0 else (2 - 2 * dj)
                    rows.append(w[:, :, kh, kw])              # (Cin, Cout)
            wcols.append(jnp.concatenate(rows, axis=0))       # (4*Cin, Cout)
    wmat = jnp.concatenate(wcols, axis=1)                     # (4*Cin, 4*Cout)

    y = pallas_matmul(patches, wmat, act=act)                 # (B*Hg*Wg, 4*Cout)
    y = y.reshape(B, Hg, Wg, 4, Cout)
    out = jnp.zeros((B, 2 * H, 2 * W, Cout), y.dtype)
    for ph in (0, 1):
        for pw in (0, 1):
            out = out.at[:, ph::2, pw::2, :].set(
                y[:, ph:ph + H, pw:pw + W, ph * 2 + pw, :])
    return out


# --------------------------------------------------------------------------
# Self-attention map: softmax_j( (x_i.wq + bq) * (x_j.wk + bk) )
# --------------------------------------------------------------------------
def _attn_kernel(bias_ref, x_row_ref, x_cn_ref, wq_ref, wk_ref,
                 attn_ref, k_sc, *, rc):
    """One (tn, N) slab of the attention map for one batch image.

    The 1-channel q/k projections are 16-wide dot products done on the VPU.
    The energy q_i * k_j is rank-1, so the exact per-row max comes from
    max(k)/min(k).  Query rows are processed `rc` at a time: temporaries stay
    at (rc, N), each store is a full-lane (N-wide) unmasked store, and each
    row chunk is normalized in a single pass (no read-modify-write)."""
    tn = attn_ref.shape[0]
    bq = bias_ref[0, 0]
    bk = bias_ref[0, 1]

    # key row for the whole image: (C, N) * (C, 1) -> reduce over C -> (1, N)
    k_sc[...] = jnp.sum(x_cn_ref[...] * wk_ref[...], axis=0, keepdims=True) + bk
    kmax = jnp.max(k_sc[...])
    kmin = jnp.min(k_sc[...])

    def body(r, carry):
        roff = pl.multiple_of(r * rc, rc)
        xr = x_row_ref[pl.ds(roff, rc), :]                              # (rc, C)
        q = jnp.sum(xr * wq_ref[...], axis=-1, keepdims=True) + bq      # (rc, 1)
        m = jnp.where(q >= 0.0, q * kmax, q * kmin)                     # exact row max
        e = jnp.exp(q * k_sc[...] - m)                                  # (rc, N)
        inv = 1.0 / jnp.sum(e, axis=-1, keepdims=True)
        attn_ref[pl.ds(roff, rc), :] = (e * inv).astype(attn_ref.dtype)
        return carry

    jax.lax.fori_loop(0, tn // rc, body, 0)


def attention_map_pallas(x_rows, x_cn, wq_row, wk_col, bias,
                         tn=512, rc=16, attn_dtype=ATTN_DTYPE):
    """Per-step VMEM at tn=512 with bf16 output is ~9 MiB (out 4 MiB x2, x^T
    256 KiB x2, temps ~1 MiB), so the default scoped VMEM limit is kept
    (v7x-safe: no 64 MiB override)."""
    B, N, C = x_rows.shape
    tn = min(tn, N)
    assert N % tn == 0 and tn % rc == 0
    return pl.pallas_call(
        functools.partial(_attn_kernel, rc=rc),
        out_shape=jax.ShapeDtypeStruct((B, N, N), attn_dtype),
        grid_spec=pltpu.PrefetchScalarGridSpec(
            num_scalar_prefetch=0,
            grid=(B, N // tn),
            in_specs=[
                pl.BlockSpec((1, 2), lambda b, i: (0, 0)),             # [bq, bk]
                pl.BlockSpec((None, tn, C), lambda b, i: (b, i, 0)),   # query rows
                pl.BlockSpec((None, C, N), lambda b, i: (b, 0, 0)),    # x^T, resident per batch
                pl.BlockSpec((1, C), lambda b, i: (0, 0)),             # wq (row vector)
                pl.BlockSpec((C, 1), lambda b, i: (0, 0)),             # wk (column vector)
            ],
            out_specs=pl.BlockSpec((None, tn, N), lambda b, i: (b, i, 0)),
            scratch_shapes=[pltpu.VMEM((1, N), jnp.float32)]),
        compiler_params=pltpu.CompilerParams(
            dimension_semantics=("parallel", "parallel")),   # b maps 1 batch / TC on v7x
    )(bias, x_rows, x_cn, wq_row, wk_col)


def self_attn_generator(x, p, sigma):
    """Self_Attn_Generator.  With sigma == 0 (as set in the reference __init__):
        out = sigma * (gamma * attn_out + x) + (1 - sigma) * x == x,
    so the value path (value_conv, attn @ V, gamma, residual) is dead compute
    and is skipped; only the attention map is produced."""
    if sigma != 0:
        # TODO(synk): re-add the value projection + attn @ V + gamma residual if
        # a non-zero sigma schedule is ever used.
        raise NotImplementedError("reference module fixes sigma = 0")
    B, H, W, C = x.shape
    N = H * W
    x_rows = x.reshape(B, N, C)
    x_cn = jnp.transpose(x_rows, (0, 2, 1))                   # (B, C, N)
    wq_row = p["wq"].reshape(1, C)
    wk_col = p["wk"].reshape(C, 1)
    bias = jnp.concatenate([p["bq"], p["bk"]]).reshape(1, 2)
    attn = attention_map_pallas(x_rows, x_cn, wq_row, wk_col, bias)
    return x, attn


# --------------------------------------------------------------------------
# Full DCSAGenerator forward
# --------------------------------------------------------------------------
def dcsa_forward(params, z):
    # ConvTranspose2d(z_dim, ngf*16, 4, 1, 0) on the 1x1 z map == dense matmul.
    x = conv_transpose_from_1x1(z, params["w1"])                       # (B, 4, 4, ngf*16)
    x = batchnorm_relu(x, params["bn1_gamma"], params["bn1_beta"])
    for li in (2, 3, 4, 5):
        x = conv_transpose_s2_k4_p1(x, params[f"w{li}"])
        if li < 5:
            x = batchnorm_relu(x, params[f"bn{li}_gamma"], params[f"bn{li}_beta"])
    x, attn = self_attn_generator(x, params, SIGMA)
    x = conv_transpose_s2_k4_p1(x, params["w_rgb"], act="tanh")        # toRGB + fused tanh
    x = jnp.transpose(x, (0, 3, 1, 2))                                 # NHWC -> NCHW
    return x, attn


# --------------------------------------------------------------------------
# Deterministic parameter initialization (shapes follow the PyTorch __init__)
# --------------------------------------------------------------------------
def init_params(key, z_dim, ngf):
    ks = jax.random.split(key, 16)

    def w(k, shape, scale=0.02):
        return (scale * jax.random.normal(k, shape)).astype(jnp.float32)

    p = {}
    chans = [z_dim, ngf * 16, ngf * 8, ngf * 4, ngf * 2, 16]
    for li in range(5):  # ConvTranspose2d weights: (Cin, Cout, 4, 4), bias=False
        p[f"w{li + 1}"] = w(ks[li], (chans[li], chans[li + 1], 4, 4))
    for li, c in enumerate(chans[1:5]):  # BatchNorm2d defaults: weight=1, bias=0
        p[f"bn{li + 1}_gamma"] = jnp.ones((c,), jnp.float32)
        p[f"bn{li + 1}_beta"] = jnp.zeros((c,), jnp.float32)
    # Self_Attn_Base on 16 channels: 1x1 convs (with bias), gamma = ones(1)
    p["wq"] = w(ks[5], (16, 1));  p["bq"] = w(ks[6], (1,))
    p["wk"] = w(ks[7], (16, 1));  p["bk"] = w(ks[8], (1,))
    # value path / gamma kept for parameter parity, but unused (dead under sigma=0)
    p["wv"] = w(ks[9], (16, 16)); p["bv"] = w(ks[10], (16,))
    p["gamma"] = jnp.ones((), jnp.float32)
    # toRGB: ConvTranspose2d(16, 3, 4, 2, 1, bias=False)
    p["w_rgb"] = w(ks[11], (16, 3, 4, 4))
    return p


if __name__ == "__main__":
    B, Z_DIM, NGF = 2, 64, 8          # small channel widths; spatial sizes are
                                      # fixed by the architecture (1->4->...->128)
    key = jax.random.PRNGKey(0)
    kp, kz = jax.random.split(key)
    params = init_params(kp, Z_DIM, NGF)
    z = jax.random.normal(kz, (B, Z_DIM), dtype=jnp.float32)

    fwd = jax.jit(dcsa_forward)
    img, attn = fwd(params, z)
    jax.block_until_ready((img, attn))

    assert img.shape == (B, 3, 128, 128)
    assert attn.shape == (B, 64 * 64, 64 * 64)
    print("KERNEL_OK")
</pallas_src>

<mosaic_0001>
module attributes {stable_mosaic.version = 11 : i64} {
  func.func @_matmul_kernel(%arg0: i32, %arg1: i32, %arg2: i32, %arg3: memref<16x128xbf16, #tpu.memory_space<vmem>>, %arg4: memref<128x128xbf16, #tpu.memory_space<vmem>>, %arg5: memref<16x128xf32, #tpu.memory_space<vmem>>, %arg6: memref<16x128xf32, #tpu.memory_space<vmem>>) attributes {dimension_semantics = [#tpu.dimension_semantics<parallel>, #tpu.dimension_semantics<parallel>, #tpu.dimension_semantics<arbitrary>], iteration_bounds = array<i64: 1, 16, 1>, scalar_prefetch = 0 : i64, scratch_operands = 1 : i64, tpu.core_type = #tpu.core_type<tc>, window_params = [{transform_indices = @transform_0, window_bounds = array<i64: 16, 128>}, {transform_indices = @transform_1, window_bounds = array<i64: 128, 128>}, {transform_indices = @transform_2, window_bounds = array<i64: 16, 128>}]} {
    %c0_i32 = arith.constant 0 : i32
    %0 = arith.cmpi eq, %arg2, %c0_i32 : i32
    %1 = arith.extui %0 : i1 to i32
    %c0_i32_0 = arith.constant 0 : i32
    %2 = arith.cmpi ne, %1, %c0_i32_0 : i32
    scf.if %2 {
      %cst_10 = arith.constant 0.000000e+00 : f32
      %12 = vector.broadcast %cst_10 : f32 to vector<16x128xf32>
      %c0_11 = arith.constant 0 : index
      %c0_12 = arith.constant 0 : index
      %13 = vector.load %arg6[%c0_11, %c0_12] : memref<16x128xf32, #tpu.memory_space<vmem>>, vector<16x128xf32>
      tpu.vector_store %arg6[%c0_11, %c0_12], %12 {strides = array<i32>} : memref<16x128xf32, #tpu.memory_space<vmem>>, vector<16x128xf32>,
    } else {
    }
    %c0 = arith.constant 0 : index
    %c0_1 = arith.constant 0 : index
    %3 = vector.load %arg6[%c0, %c0_1] : memref<16x128xf32, #tpu.memory_space<vmem>>, vector<16x128xf32>
    %c0_2 = arith.constant 0 : index
    %c0_3 = arith.constant 0 : index
    %4 = vector.load %arg3[%c0_2, %c0_3] : memref<16x128xbf16, #tpu.memory_space<vmem>>, vector<16x128xbf16>
    %c0_4 = arith.constant 0 : index
    %c0_5 = arith.constant 0 : index
    %5 = vector.load %arg4[%c0_4, %c0_5] : memref<128x128xbf16, #tpu.memory_space<vmem>>, vector<128x128xbf16>
    %cst = arith.constant dense<0.000000e+00> : vector<16x128xf32>
    %6 = tpu.matmul %4, %5, %cst {dimension_numbers = #tpu.dot_dimension_numbers<[1], [0], [0], [1], [0, 0, 1, 1], [], []>} : vector<16x128xbf16>, vector<128x128xbf16>, vector<16x128xf32> -> vector<16x128xf32>
    %7 = arith.addf %3, %6 : vector<16x128xf32>
    %c0_6 = arith.constant 0 : index
    %c0_7 = arith.constant 0 : index
    %8 = vector.load %arg6[%c0_6, %c0_7] : memref<16x128xf32, #tpu.memory_space<vmem>>, vector<16x128xf32>
    tpu.vector_store %arg6[%c0_6, %c0_7], %7 {strides = array<i32>} : memref<16x128xf32, #tpu.memory_space<vmem>>, vector<16x128xf32>,
    %c0_i32_8 = arith.constant 0 : i32
    %9 = arith.cmpi eq, %arg2, %c0_i32_8 : i32
    %10 = arith.extui %9 : i1 to i32
    %c0_i32_9 = arith.constant 0 : i32
    %11 = arith.cmpi ne, %10, %c0_i32_9 : i32
    scf.if %11 {
      %c0_10 = arith.constant 0 : index
      %c0_11 = arith.constant 0 : index
      %12 = vector.load %arg6[%c0_10, %c0_11] : memref<16x128xf32, #tpu.memory_space<vmem>>, vector<16x128xf32>
      %c0_12 = arith.constant 0 : index
      %c0_13 = arith.constant 0 : index
      %13 = vector.load %arg5[%c0_12, %c0_13] : memref<16x128xf32, #tpu.memory_space<vmem>>, vector<16x128xf32>
      tpu.vector_store %arg5[%c0_12, %c0_13], %12 {strides = array<i32>} : memref<16x128xf32, #tpu.memory_space<vmem>>, vector<16x128xf32>,
    } else {
    }
    return
  }
  func.func @transform_0(%arg0: i32, %arg1: i32, %arg2: i32) -> (i32, i32) {
    %c0_i32 = arith.constant 0 : i32
    return %arg0, %arg2 : i32, i32
  }
  func.func @transform_1(%arg0: i32, %arg1: i32, %arg2: i32) -> (i32, i32) {
    %c0_i32 = arith.constant 0 : i32
    return %arg2, %arg1 : i32, i32
  }
  func.func @transform_2(%arg0: i32, %arg1: i32, %arg2: i32) -> (i32, i32) {
    %c0_i32 = arith.constant 0 : i32
    return %arg0, %arg1 : i32, i32
  }
}

module attributes {stable_mosaic.version = 11 : i64} {
  func.func @_bn_stats_kernel(%arg0: i32, %arg1: memref<32x128xf32, #tpu.memory_space<vmem>>, %arg2: memref<2x128xf32, #tpu.memory_space<vmem>>, %arg3: memref<2x128xf32, #tpu.memory_space<vmem>>) attributes {dimension_semantics = [#tpu.dimension_semantics<arbitrary>], iteration_bounds = array<i64: 1>, scalar_prefetch = 0 : i64, scratch_operands = 1 : i64, tpu.core_type = #tpu.core_type<tc>, window_params = [{transform_indices = @transform_0, window_bounds = array<i64: 32, 128>}, {pipeline_mode = #tpu.pipeline_mode<synchronous>, transform_indices = @transform_1, window_bounds = array<i64: 2, 128>}]} {
    %c0_i32 = arith.constant 0 : i32
    %0 = arith.cmpi eq, %arg0, %c0_i32 : i32
    %1 = arith.extui %0 : i1 to i32
    %c0_i32_0 = arith.constant 0 : i32
    %2 = arith.cmpi ne, %1, %c0_i32_0 : i32
    scf.if %2 {
      %cst_12 = arith.constant 0.000000e+00 : f32
      %18 = vector.broadcast %cst_12 : f32 to vector<2x128xf32>
      %c0_13 = arith.constant 0 : index
      %c0_14 = arith.constant 0 : index
      %19 = vector.load %arg3[%c0_13, %c0_14] : memref<2x128xf32, #tpu.memory_space<vmem>>, vector<2x128xf32>
      tpu.vector_store %arg3[%c0_13, %c0_14], %18 {strides = array<i32>} : memref<2x128xf32, #tpu.memory_space<vmem>>, vector<2x128xf32>,
    } else {
    }
    %c0 = arith.constant 0 : index
    %c0_1 = arith.constant 0 : index
    %3 = vector.load %arg1[%c0, %c0_1] : memref<32x128xf32, #tpu.memory_space<vmem>>, vector<32x128xf32>
    %c0_2 = arith.constant 0 : index
    %c0_3 = arith.constant 0 : index
    %4 = vector.load %arg3[%c0_2, %c0_3] : memref<2x128xf32, #tpu.memory_space<vmem>>, vector<1x128xf32>
    %cst = arith.constant dense<0.000000e+00> : vector<128xf32>
    %5 = vector.multi_reduction <add>, %3, %cst [0] : vector<32x128xf32> to vector<128xf32>
    %6 = vector.shape_cast %5 : vector<128xf32> to vector<1x128xf32>
    %7 = arith.addf %4, %6 : vector<1x128xf32>
    %c0_4 = arith.constant 0 : index
    %c0_5 = arith.constant 0 : index
    %8 = vector.load %arg3[%c0_4, %c0_5] : memref<2x128xf32, #tpu.memory_space<vmem>>, vector<1x128xf32>
    tpu.vector_store %arg3[%c0_4, %c0_5], %7 {strides = array<i32>} : memref<2x128xf32, #tpu.memory_space<vmem>>, vector<1x128xf32>,
    %c1 = arith.constant 1 : index
    %c0_6 = arith.constant 0 : index
    %9 = vector.load %arg3[%c1, %c0_6] : memref<2x128xf32, #tpu.memory_space<vmem>>, vector<1x128xf32>
    %10 = arith.mulf %3, %3 : vector<32x128xf32>
    %cst_7 = arith.constant dense<0.000000e+00> : vector<128xf32>
    %11 = vector.multi_reduction <add>, %10, %cst_7 [0] : vector<32x128xf32> to vector<128xf32>
    %12 = vector.shape_cast %11 : vector<128xf32> to vector<1x128xf32>
    %13 = arith.addf %9, %12 : vector<1x128xf32>
    %c1_8 = arith.constant 1 : index
    %c0_9 = arith.constant 0 : index
    %14 = vector.load %arg3[%c1_8, %c0_9] : memref<2x128xf32, #tpu.memory_space<vmem>>, vector<1x128xf32>
    tpu.vector_store %arg3[%c1_8, %c0_9], %13 {strides = array<i32>} : memref<2x128xf32, #tpu.memory_space<vmem>>, vector<1x128xf32>,
    %c0_i32_10 = arith.constant 0 : i32
    %15 = arith.cmpi eq, %arg0, %c0_i32_10 : i32
    %16 = arith.extui %15 : i1 to i32
    %c0_i32_11 = arith.constant 0 : i32
    %17 = arith.cmpi ne, %16, %c0_i32_11 : i32
    scf.if %17 {
      %c0_12 = arith.constant 0 : index
      %c0_13 = arith.constant 0 : index
      %18 = vector.load %arg3[%c0_12, %c0_13] : memref<2x128xf32, #tpu.memory_space<vmem>>, vector<2x128xf32>
      %c0_14 = arith.constant 0 : index
      %c0_15 = arith.constant 0 : index
      %19 = vector.load %arg2[%c0_14, %c0_15] : memref<2x128xf32, #tpu.memory_space<vmem>>, vector<2x128xf32>
      tpu.vector_store %arg2[%c0_14, %c0_15], %18 {strides = array<i32>} : memref<2x128xf32, #tpu.memory_space<vmem>>, vector<2x128xf32>,
    } else {
    }
    return
  }
  func.func @transform_0(%arg0: i32) -> (i32, i32) {
    %c0_i32 = arith.constant 0 : i32
    %c0_i32_0 = arith.constant 0 : i32
    return %arg0, %c0_i32 : i32, i32
  }
  func.func @transform_1(%arg0: i32) -> (i32, i32) {
    %c0_i32 = arith.constant 0 : i32
    %c0_i32_0 = arith.constant 0 : i32
    %c0_i32_1 = arith.constant 0 : i32
    return %c0_i32, %c0_i32_0 : i32, i32
  }
}

module attributes {stable_mosaic.version = 11 : i64} {
  func.func @_scale_shift_act_kernel(%arg0: i32, %arg1: memref<32x128xf32, #tpu.memory_space<vmem>>, %arg2: memref<1x128xf32, #tpu.memory_space<vmem>>, %arg3: memref<1x128xf32, #tpu.memory_space<vmem>>, %arg4: memref<32x128xf32, #tpu.memory_space<vmem>>) attributes {dimension_semantics = [#tpu.dimension_semantics<parallel>], iteration_bounds = array<i64: 1>, scalar_prefetch = 0 : i64, scratch_operands = 0 : i64, tpu.core_type = #tpu.core_type<tc>, window_params = [{transform_indices = @transform_0, window_bounds = array<i64: 32, 128>}, {pipeline_mode = #tpu.pipeline_mode<synchronous>, transform_indices = @transform_1, window_bounds = array<i64: 1, 128>}, {pipeline_mode = #tpu.pipeline_mode<synchronous>, transform_indices = @transform_2, window_bounds = array<i64: 1, 128>}, {transform_indices = @transform_3, window_bounds = array<i64: 32, 128>}]} {
    %c0 = arith.constant 0 : index
    %c0_0 = arith.constant 0 : index
    %0 = vector.load %arg1[%c0, %c0_0] : memref<32x128xf32, #tpu.memory_space<vmem>>, vector<32x128xf32>
    %c0_1 = arith.constant 0 : index
    %c0_2 = arith.constant 0 : index
    %1 = vector.load %arg2[%c0_1, %c0_2] : memref<1x128xf32, #tpu.memory_space<vmem>>, vector<1x128xf32>
    %2 = vector.broadcast %1 : vector<1x128xf32> to vector<32x128xf32>
    %3 = arith.mulf %0, %2 : vector<32x128xf32>
    %c0_3 = arith.constant 0 : index
    %c0_4 = arith.constant 0 : index
    %4 = vector.load %arg3[%c0_3, %c0_4] : memref<1x128xf32, #tpu.memory_space<vmem>>, vector<1x128xf32>
    %5 = vector.broadcast %4 : vector<1x128xf32> to vector<32x128xf32>
    %6 = arith.addf %3, %5 : vector<32x128xf32>
    %cst = arith.constant 0.000000e+00 : f32
    %7 = vector.broadcast %cst : f32 to vector<32x128xf32>
    %8 = arith.maximumf %6, %7 : vector<32x128xf32>
    %c0_5 = arith.constant 0 : index
    %c0_6 = arith.constant 0 : index
    %9 = vector.load %arg4[%c0_5, %c0_6] : memref<32x128xf32, #tpu.memory_space<vmem>>, vector<32x128xf32>
    tpu.vector_store %arg4[%c0_5, %c0_6], %8 {strides = array<i32>} : memref<32x128xf32, #tpu.memory_space<vmem>>, vector<32x128xf32>,
    return
  }
  func.func @transform_0(%arg0: i32) -> (i32, i32) {
    %c0_i32 = arith.constant 0 : i32
    %c0_i32_0 = arith.constant 0 : i32
    return %arg0, %c0_i32 : i32, i32
  }
  func.func @transform_1(%arg0: i32) -> (i32, i32) {
    %c0_i32 = arith.constant 0 : i32
    %c0_i32_0 = arith.constant 0 : i32
    %c0_i32_1 = arith.constant 0 : i32
    return %c0_i32, %c0_i32_0 : i32, i32
  }
  func.func @transform_2(%arg0: i32) -> (i32, i32) {
    %c0_i32 = arith.constant 0 : i32
    %c0_i32_0 = arith.constant 0 : i32
    %c0_i32_1 = arith.constant 0 : i32
    return %c0_i32, %c0_i32_0 : i32, i32
  }
  func.func @transform_3(%arg0: i32) -> (i32, i32) {
    %c0_i32 = arith.constant 0 : i32
    %c0_i32_0 = arith.constant 0 : i32
    return %arg0, %c0_i32 : i32, i32
  }
}

module attributes {stable_mosaic.version = 11 : i64} {
  func.func @_matmul_kernel(%arg0: i32, %arg1: i32, %arg2: i32, %arg3: memref<64x512xbf16, #tpu.memory_space<vmem>>, %arg4: memref<512x128xbf16, #tpu.memory_space<vmem>>, %arg5: memref<64x128xf32, #tpu.memory_space<vmem>>, %arg6: memref<64x128xf32, #tpu.memory_space<vmem>>) attributes {dimension_semantics = [#tpu.dimension_semantics<parallel>, #tpu.dimension_semantics<parallel>, #tpu.dimension_semantics<arbitrary>], iteration_bounds = array<i64: 1, 2, 1>, scalar_prefetch = 0 : i64, scratch_operands = 1 : i64, tpu.core_type = #tpu.core_type<tc>, window_params = [{transform_indices = @transform_0, window_bounds = array<i64: 64, 512>}, {transform_indices = @transform_1, window_bounds = array<i64: 512, 128>}, {transform_indices = @transform_2, window_bounds = array<i64: 64, 128>}]} {
    %c0_i32 = arith.constant 0 : i32
    %0 = arith.cmpi eq, %arg2, %c0_i32 : i32
    %1 = arith.extui %0 : i1 to i32
    %c0_i32_0 = arith.constant 0 : i32
    %2 = arith.cmpi ne, %1, %c0_i32_0 : i32
    scf.if %2 {
      %cst_10 = arith.constant 0.000000e+00 : f32
      %12 = vector.broadcast %cst_10 : f32 to vector<64x128xf32>
      %c0_11 = arith.constant 0 : index
      %c0_12 = arith.constant 0 : index
      %13 = vector.load %arg6[%c0_11, %c0_12] : memref<64x128xf32, #tpu.memory_space<vmem>>, vector<64x128xf32>
      tpu.vector_store %arg6[%c0_11, %c0_12], %12 {strides = array<i32>} : memref<64x128xf32, #tpu.memory_space<vmem>>, vector<64x128xf32>,
    } else {
    }
    %c0 = arith.constant 0 : index
    %c0_1 = arith.constant 0 : index
    %3 = vector.load %arg6[%c0, %c0_1] : memref<64x128xf32, #tpu.memory_space<vmem>>, vector<64x128xf32>
    %c0_2 = arith.constant 0 : index
    %c0_3 = arith.constant 0 : index
    %4 = vector.load %arg3[%c0_2, %c0_3] : memref<64x512xbf16, #tpu.memory_space<vmem>>, vector<64x512xbf16>
    %c0_4 = arith.constant 0 : index
    %c0_5 = arith.constant 0 : index
    %5 = vector.load %arg4[%c0_4, %c0_5] : memref<512x128xbf16, #tpu.memory_space<vmem>>, vector<512x128xbf16>
    %cst = arith.constant dense<0.000000e+00> : vector<64x128xf32>
    %6 = tpu.matmul %4, %5, %cst {dimension_numbers = #tpu.dot_dimension_numbers<[1], [0], [0], [1], [0, 0, 1, 1], [], []>} : vector<64x512xbf16>, vector<512x128xbf16>, vector<64x128xf32> -> vector<64x128xf32>
    %7 = arith.addf %3, %6 : vector<64x128xf32>
    %c0_6 = arith.constant 0 : index
    %c0_7 = arith.constant 0 : index
    %8 = vector.load %arg6[%c0_6, %c0_7] : memref<64x128xf32, #tpu.memory_space<vmem>>, vector<64x128xf32>
    tpu.vector_store %arg6[%c0_6, %c0_7], %7 {strides = array<i32>} : memref<64x128xf32, #tpu.memory_space<vmem>>, vector<64x128xf32>,
    %c0_i32_8 = arith.constant 0 : i32
    %9 = arith.cmpi eq, %arg2, %c0_i32_8 : i32
    %10 = arith.extui %9 : i1 to i32
    %c0_i32_9 = arith.constant 0 : i32
    %11 = arith.cmpi ne, %10, %c0_i32_9 : i32
    scf.if %11 {
      %c0_10 = arith.constant 0 : index
      %c0_11 = arith.constant 0 : index
      %12 = vector.load %arg6[%c0_10, %c0_11] : memref<64x128xf32, #tpu.memory_space<vmem>>, vector<64x128xf32>
      %c0_12 = arith.constant 0 : index
      %c0_13 = arith.constant 0 : index
      %13 = vector.load %arg5[%c0_12, %c0_13] : memref<64x128xf32, #tpu.memory_space<vmem>>, vector<64x128xf32>
      tpu.vector_store %arg5[%c0_12, %c0_13], %12 {strides = array<i32>} : memref<64x128xf32, #tpu.memory_space<vmem>>, vector<64x128xf32>,
    } else {
    }
    return
  }
  func.func @transform_0(%arg0: i32, %arg1: i32, %arg2: i32) -> (i32, i32) {
    %c0_i32 = arith.constant 0 : i32
    return %arg0, %arg2 : i32, i32
  }
  func.func @transform_1(%arg0: i32, %arg1: i32, %arg2: i32) -> (i32, i32) {
    %c0_i32 = arith.constant 0 : i32
    return %arg2, %arg1 : i32, i32
  }
  func.func @transform_2(%arg0: i32, %arg1: i32, %arg2: i32) -> (i32, i32) {
    %c0_i32 = arith.constant 0 : i32
    return %arg0, %arg1 : i32, i32
  }
}

module attributes {stable_mosaic.version = 11 : i64} {
  func.func @_bn_stats_kernel(%arg0: i32, %arg1: memref<64x128xf32, #tpu.memory_space<vmem>>, %arg2: memref<2x128xf32, #tpu.memory_space<vmem>>, %arg3: memref<2x128xf32, #tpu.memory_space<vmem>>) attributes {dimension_semantics = [#tpu.dimension_semantics<arbitrary>], iteration_bounds = array<i64: 1>, scalar_prefetch = 0 : i64, scratch_operands = 1 : i64, tpu.core_type = #tpu.core_type<tc>, window_params = [{transform_indices = @transform_0, window_bounds = array<i64: 64, 128>}, {pipeline_mode = #tpu.pipeline_mode<synchronous>, transform_indices = @transform_1, window_bounds = array<i64: 2, 128>}]} {
    %c0_i32 = arith.constant 0 : i32
    %0 = arith.cmpi eq, %arg0, %c0_i32 : i32
    %1 = arith.extui %0 : i1 to i32
    %c0_i32_0 = arith.constant 0 : i32
    %2 = arith.cmpi ne, %1, %c0_i32_0 : i32
    scf.if %2 {
      %cst_12 = arith.constant 0.000000e+00 : f32
      %18 = vector.broadcast %cst_12 : f32 to vector<2x128xf32>
      %c0_13 = arith.constant 0 : index
      %c0_14 = arith.constant 0 : index
      %19 = vector.load %arg3[%c0_13, %c0_14] : memref<2x128xf32, #tpu.memory_space<vmem>>, vector<2x128xf32>
      tpu.vector_store %arg3[%c0_13, %c0_14], %18 {strides = array<i32>} : memref<2x128xf32, #tpu.memory_space<vmem>>, vector<2x128xf32>,
    } else {
    }
    %c0 = arith.constant 0 : index
    %c0_1 = arith.constant 0 : index
    %3 = vector.load %arg1[%c0, %c0_1] : memref<64x128xf32, #tpu.memory_space<vmem>>, vector<64x128xf32>
    %c0_2 = arith.constant 0 : index
    %c0_3 = arith.constant 0 : index
    %4 = vector.load %arg3[%c0_2, %c0_3] : memref<2x128xf32, #tpu.memory_space<vmem>>, vector<1x128xf32>
    %cst = arith.constant dense<0.000000e+00> : vector<128xf32>
    %5 = vector.multi_reduction <add>, %3, %cst [0] : vector<64x128xf32> to vector<128xf32>
    %6 = vector.shape_cast %5 : vector<128xf32> to vector<1x128xf32>
    %7 = arith.addf %4, %6 : vector<1x128xf32>
    %c0_4 = arith.constant 0 : index
    %c0_5 = arith.constant 0 : index
    %8 = vector.load %arg3[%c0_4, %c0_5] : memref<2x128xf32, #tpu.memory_space<vmem>>, vector<1x128xf32>
    tpu.vector_store %arg3[%c0_4, %c0_5], %7 {strides = array<i32>} : memref<2x128xf32, #tpu.memory_space<vmem>>, vector<1x128xf32>,
    %c1 = arith.constant 1 : index
    %c0_6 = arith.constant 0 : index
    %9 = vector.load %arg3[%c1, %c0_6] : memref<2x128xf32, #tpu.memory_space<vmem>>, vector<1x128xf32>
    %10 = arith.mulf %3, %3 : vector<64x128xf32>
    %cst_7 = arith.constant dense<0.000000e+00> : vector<128xf32>
    %11 = vector.multi_reduction <add>, %10, %cst_7 [0] : vector<64x128xf32> to vector<128xf32>
    %12 = vector.shape_cast %11 : vector<128xf32> to vector<1x128xf32>
    %13 = arith.addf %9, %12 : vector<1x128xf32>
    %c1_8 = arith.constant 1 : index
    %c0_9 = arith.constant 0 : index
    %14 = vector.load %arg3[%c1_8, %c0_9] : memref<2x128xf32, #tpu.memory_space<vmem>>, vector<1x128xf32>
    tpu.vector_store %arg3[%c1_8, %c0_9], %13 {strides = array<i32>} : memref<2x128xf32, #tpu.memory_space<vmem>>, vector<1x128xf32>,
    %c0_i32_10 = arith.constant 0 : i32
    %15 = arith.cmpi eq, %arg0, %c0_i32_10 : i32
    %16 = arith.extui %15 : i1 to i32
    %c0_i32_11 = arith.constant 0 : i32
    %17 = arith.cmpi ne, %16, %c0_i32_11 : i32
    scf.if %17 {
      %c0_12 = arith.constant 0 : index
      %c0_13 = arith.constant 0 : index
      %18 = vector.load %arg3[%c0_12, %c0_13] : memref<2x128xf32, #tpu.memory_space<vmem>>, vector<2x128xf32>
      %c0_14 = arith.constant 0 : index
      %c0_15 = arith.constant 0 : index
      %19 = vector.load %arg2[%c0_14, %c0_15] : memref<2x128xf32, #tpu.memory_space<vmem>>, vector<2x128xf32>
      tpu.vector_store %arg2[%c0_14, %c0_15], %18 {strides = array<i32>} : memref<2x128xf32, #tpu.memory_space<vmem>>, vector<2x128xf32>,
    } else {
    }
    return
  }
  func.func @transform_0(%arg0: i32) -> (i32, i32) {
    %c0_i32 = arith.constant 0 : i32
    %c0_i32_0 = arith.constant 0 : i32
    return %arg0, %c0_i32 : i32, i32
  }
  func.func @transform_1(%arg0: i32) -> (i32, i32) {
    %c0_i32 = arith.constant 0 : i32
    %c0_i32_0 = arith.constant 0 : i32
    %c0_i32_1 = arith.constant 0 : i32
    return %c0_i32, %c0_i32_0 : i32, i32
  }
}

module attributes {stable_mosaic.version = 11 : i64} {
  func.func @_scale_shift_act_kernel(%arg0: i32, %arg1: memref<64x128xf32, #tpu.memory_space<vmem>>, %arg2: memref<1x128xf32, #tpu.memory_space<vmem>>, %arg3: memref<1x128xf32, #tpu.memory_space<vmem>>, %arg4: memref<64x128xf32, #tpu.memory_space<vmem>>) attributes {dimension_semantics = [#tpu.dimension_semantics<parallel>], iteration_bounds = array<i64: 1>, scalar_prefetch = 0 : i64, scratch_operands = 0 : i64, tpu.core_type = #tpu.core_type<tc>, window_params = [{transform_indices = @transform_0, window_bounds = array<i64: 64, 128>}, {pipeline_mode = #tpu.pipeline_mode<synchronous>, transform_indices = @transform_1, window_bounds = array<i64: 1, 128>}, {pipeline_mode = #tpu.pipeline_mode<synchronous>, transform_indices = @transform_2, window_bounds = array<i64: 1, 128>}, {transform_indices = @transform_3, window_bounds = array<i64: 64, 128>}]} {
    %c0 = arith.constant 0 : index
    %c0_0 = arith.constant 0 : index
    %0 = vector.load %arg1[%c0, %c0_0] : memref<64x128xf32, #tpu.memory_space<vmem>>, vector<64x128xf32>
    %c0_1 = arith.constant 0 : index
    %c0_2 = arith.constant 0 : index
    %1 = vector.load %arg2[%c0_1, %c0_2] : memref<1x128xf32, #tpu.memory_space<vmem>>, vector<1x128xf32>
    %2 = vector.broadcast %1 : vector<1x128xf32> to vector<64x128xf32>
    %3 = arith.mulf %0, %2 : vector<64x128xf32>
    %c0_3 = arith.constant 0 : index
    %c0_4 = arith.constant 0 : index
    %4 = vector.load %arg3[%c0_3, %c0_4] : memref<1x128xf32, #tpu.memory_space<vmem>>, vector<1x128xf32>
    %5 = vector.broadcast %4 : vector<1x128xf32> to vector<64x128xf32>
    %6 = arith.addf %3, %5 : vector<64x128xf32>
    %cst = arith.constant 0.000000e+00 : f32
    %7 = vector.broadcast %cst : f32 to vector<64x128xf32>
    %8 = arith.maximumf %6, %7 : vector<64x128xf32>
    %c0_5 = arith.constant 0 : index
    %c0_6 = arith.constant 0 : index
    %9 = vector.load %arg4[%c0_5, %c0_6] : memref<64x128xf32, #tpu.memory_space<vmem>>, vector<64x128xf32>
    tpu.vector_store %arg4[%c0_5, %c0_6], %8 {strides = array<i32>} : memref<64x128xf32, #tpu.memory_space<vmem>>, vector<64x128xf32>,
    return
  }
  func.func @transform_0(%arg0: i32) -> (i32, i32) {
    %c0_i32 = arith.constant 0 : i32
    %c0_i32_0 = arith.constant 0 : i32
    return %arg0, %c0_i32 : i32, i32
  }
  func.func @transform_1(%arg0: i32) -> (i32, i32) {
    %c0_i32 = arith.constant 0 : i32
    %c0_i32_0 = arith.constant 0 : i32
    %c0_i32_1 = arith.constant 0 : i32
    return %c0_i32, %c0_i32_0 : i32, i32
  }
  func.func @transform_2(%arg0: i32) -> (i32, i32) {
    %c0_i32 = arith.constant 0 : i32
    %c0_i32_0 = arith.constant 0 : i32
    %c0_i32_1 = arith.constant 0 : i32
    return %c0_i32, %c0_i32_0 : i32, i32
  }
  func.func @transform_3(%arg0: i32) -> (i32, i32) {
    %c0_i32 = arith.constant 0 : i32
    %c0_i32_0 = arith.constant 0 : i32
    return %arg0, %c0_i32 : i32, i32
  }
}

module attributes {stable_mosaic.version = 11 : i64} {
  func.func @_matmul_kernel(%arg0: i32, %arg1: i32, %arg2: i32, %arg3: memref<176x256xbf16, #tpu.memory_space<vmem>>, %arg4: memref<256x128xbf16, #tpu.memory_space<vmem>>, %arg5: memref<176x128xf32, #tpu.memory_space<vmem>>, %arg6: memref<176x128xf32, #tpu.memory_space<vmem>>) attributes {dimension_semantics = [#tpu.dimension_semantics<parallel>, #tpu.dimension_semantics<parallel>, #tpu.dimension_semantics<arbitrary>], iteration_bounds = array<i64: 1, 1, 1>, scalar_prefetch = 0 : i64, scratch_operands = 1 : i64, tpu.core_type = #tpu.core_type<tc>, window_params = [{transform_indices = @transform_0, window_bounds = array<i64: 176, 256>}, {transform_indices = @transform_1, window_bounds = array<i64: 256, 128>}, {transform_indices = @transform_2, window_bounds = array<i64: 176, 128>}]} {
    %c0_i32 = arith.constant 0 : i32
    %0 = arith.cmpi eq, %arg2, %c0_i32 : i32
    %1 = arith.extui %0 : i1 to i32
    %c0_i32_0 = arith.constant 0 : i32
    %2 = arith.cmpi ne, %1, %c0_i32_0 : i32
    scf.if %2 {
      %cst_10 = arith.constant 0.000000e+00 : f32
      %12 = vector.broadcast %cst_10 : f32 to vector<176x128xf32>
      %c0_11 = arith.constant 0 : index
      %c0_12 = arith.constant 0 : index
      %13 = vector.load %arg6[%c0_11, %c0_12] : memref<176x128xf32, #tpu.memory_space<vmem>>, vector<176x128xf32>
      tpu.vector_store %arg6[%c0_11, %c0_12], %12 {strides = array<i32>} : memref<176x128xf32, #tpu.memory_space<vmem>>, vector<176x128xf32>,
    } else {
    }
    %c0 = arith.constant 0 : index
    %c0_1 = arith.constant 0 : index
    %3 = vector.load %arg6[%c0, %c0_1] : memref<176x128xf32, #tpu.memory_space<vmem>>, vector<176x128xf32>
    %c0_2 = arith.constant 0 : index
    %c0_3 = arith.constant 0 : index
    %4 = vector.load %arg3[%c0_2, %c0_3] : memref<176x256xbf16, #tpu.memory_space<vmem>>, vector<176x256xbf16>
    %c0_4 = arith.constant 0 : index
    %c0_5 = arith.constant 0 : index
    %5 = vector.load %arg4[%c0_4, %c0_5] : memref<256x128xbf16, #tpu.memory_space<vmem>>, vector<256x128xbf16>
    %cst = arith.constant dense<0.000000e+00> : vector<176x128xf32>
    %6 = tpu.matmul %4, %5, %cst {dimension_numbers = #tpu.dot_dimension_numbers<[1], [0], [0], [1], [0, 0, 1, 1], [], []>} : vector<176x256xbf16>, vector<256x128xbf16>, vector<176x128xf32> -> vector<176x128xf32>
    %7 = arith.addf %3, %6 : vector<176x128xf32>
    %c0_6 = arith.constant 0 : index
    %c0_7 = arith.constant 0 : index
    %8 = vector.load %arg6[%c0_6, %c0_7] : memref<176x128xf32, #tpu.memory_space<vmem>>, vector<176x128xf32>
    tpu.vector_store %arg6[%c0_6, %c0_7], %7 {strides = array<i32>} : memref<176x128xf32, #tpu.memory_space<vmem>>, vector<176x128xf32>,
    %c0_i32_8 = arith.constant 0 : i32
    %9 = arith.cmpi eq, %arg2, %c0_i32_8 : i32
    %10 = arith.extui %9 : i1 to i32
    %c0_i32_9 = arith.constant 0 : i32
    %11 = arith.cmpi ne, %10, %c0_i32_9 : i32
    scf.if %11 {
      %c0_10 = arith.constant 0 : index
      %c0_11 = arith.constant 0 : index
      %12 = vector.load %arg6[%c0_10, %c0_11] : memref<176x128xf32, #tpu.memory_space<vmem>>, vector<176x128xf32>
      %c0_12 = arith.constant 0 : index
      %c0_13 = arith.constant 0 : index
      %13 = vector.load %arg5[%c0_12, %c0_13] : memref<176x128xf32, #tpu.memory_space<vmem>>, vector<176x128xf32>
      tpu.vector_store %arg5[%c0_12, %c0_13], %12 {strides = array<i32>} : memref<176x128xf32, #tpu.memory_space<vmem>>, vector<176x128xf32>,
    } else {
    }
    return
  }
  func.func @transform_0(%arg0: i32, %arg1: i32, %arg2: i32) -> (i32, i32) {
    %c0_i32 = arith.constant 0 : i32
    return %arg0, %arg2 : i32, i32
  }
  func.func @transform_1(%arg0: i32, %arg1: i32, %arg2: i32) -> (i32, i32) {
    %c0_i32 = arith.constant 0 : i32
    return %arg2, %arg1 : i32, i32
  }
  func.func @transform_2(%arg0: i32, %arg1: i32, %arg2: i32) -> (i32, i32) {
    %c0_i32 = arith.constant 0 : i32
    return %arg0, %arg1 : i32, i32
  }
}

module attributes {stable_mosaic.version = 11 : i64} {
  func.func @_bn_stats_kernel(%arg0: i32, %arg1: memref<128x128xf32, #tpu.memory_space<vmem>>, %arg2: memref<2x128xf32, #tpu.memory_space<vmem>>, %arg3: memref<2x128xf32, #tpu.memory_space<vmem>>) attributes {dimension_semantics = [#tpu.dimension_semantics<arbitrary>], iteration_bounds = array<i64: 1>, scalar_prefetch = 0 : i64, scratch_operands = 1 : i64, tpu.core_type = #tpu.core_type<tc>, window_params = [{transform_indices = @transform_0, window_bounds = array<i64: 128, 128>}, {pipeline_mode = #tpu.pipeline_mode<synchronous>, transform_indices = @transform_1, window_bounds = array<i64: 2, 128>}]} {
    %c0_i32 = arith.constant 0 : i32
    %0 = arith.cmpi eq, %arg0, %c0_i32 : i32
    %1 = arith.extui %0 : i1 to i32
    %c0_i32_0 = arith.constant 0 : i32
    %2 = arith.cmpi ne, %1, %c0_i32_0 : i32
    scf.if %2 {
      %cst_12 = arith.constant 0.000000e+00 : f32
      %18 = vector.broadcast %cst_12 : f32 to vector<2x128xf32>
      %c0_13 = arith.constant 0 : index
      %c0_14 = arith.constant 0 : index
      %19 = vector.load %arg3[%c0_13, %c0_14] : memref<2x128xf32, #tpu.memory_space<vmem>>, vector<2x128xf32>
      tpu.vector_store %arg3[%c0_13, %c0_14], %18 {strides = array<i32>} : memref<2x128xf32, #tpu.memory_space<vmem>>, vector<2x128xf32>,
    } else {
    }
    %c0 = arith.constant 0 : index
    %c0_1 = arith.constant 0 : index
    %3 = vector.load %arg1[%c0, %c0_1] : memref<128x128xf32, #tpu.memory_space<vmem>>, vector<128x128xf32>
    %c0_2 = arith.constant 0 : index
    %c0_3 = arith.constant 0 : index
    %4 = vector.load %arg3[%c0_2, %c0_3] : memref<2x128xf32, #tpu.memory_space<vmem>>, vector<1x128xf32>
    %cst = arith.constant dense<0.000000e+00> : vector<128xf32>
    %5 = vector.multi_reduction <add>, %3, %cst [0] : vector<128x128xf32> to vector<128xf32>
    %6 = vector.shape_cast %5 : vector<128xf32> to vector<1x128xf32>
    %7 = arith.addf %4, %6 : vector<1x128xf32>
    %c0_4 = arith.constant 0 : index
    %c0_5 = arith.constant 0 : index
    %8 = vector.load %arg3[%c0_4, %c0_5] : memref<2x128xf32, #tpu.memory_space<vmem>>, vector<1x128xf32>
    tpu.vector_store %arg3[%c0_4, %c0_5], %7 {strides = array<i32>} : memref<2x128xf32, #tpu.memory_space<vmem>>, vector<1x128xf32>,
    %c1 = arith.constant 1 : index
    %c0_6 = arith.constant 0 : index
    %9 = vector.load %arg3[%c1, %c0_6] : memref<2x128xf32, #tpu.memory_space<vmem>>, vector<1x128xf32>
    %10 = arith.mulf %3, %3 : vector<128x128xf32>
    %cst_7 = arith.constant dense<0.000000e+00> : vector<128xf32>
    %11 = vector.multi_reduction <add>, %10, %cst_7 [0] : vector<128x128xf32> to vector<128xf32>
    %12 = vector.shape_cast %11 : vector<128xf32> to vector<1x128xf32>
    %13 = arith.addf %9, %12 : vector<1x128xf32>
    %c1_8 = arith.constant 1 : index
    %c0_9 = arith.constant 0 : index
    %14 = vector.load %arg3[%c1_8, %c0_9] : memref<2x128xf32, #tpu.memory_space<vmem>>, vector<1x128xf32>
    tpu.vector_store %arg3[%c1_8, %c0_9], %13 {strides = array<i32>} : memref<2x128xf32, #tpu.memory_space<vmem>>, vector<1x128xf32>,
    %c0_i32_10 = arith.constant 0 : i32
    %15 = arith.cmpi eq, %arg0, %c0_i32_10 : i32
    %16 = arith.extui %15 : i1 to i32
    %c0_i32_11 = arith.constant 0 : i32
    %17 = arith.cmpi ne, %16, %c0_i32_11 : i32
    scf.if %17 {
      %c0_12 = arith.constant 0 : index
      %c0_13 = arith.constant 0 : index
      %18 = vector.load %arg3[%c0_12, %c0_13] : memref<2x128xf32, #tpu.memory_space<vmem>>, vector<2x128xf32>
      %c0_14 = arith.constant 0 : index
      %c0_15 = arith.constant 0 : index
      %19 = vector.load %arg2[%c0_14, %c0_15] : memref<2x128xf32, #tpu.memory_space<vmem>>, vector<2x128xf32>
      tpu.vector_store %arg2[%c0_14, %c0_15], %18 {strides = array<i32>} : memref<2x128xf32, #tpu.memory_space<vmem>>, vector<2x128xf32>,
    } else {
    }
    return
  }
  func.func @transform_0(%arg0: i32) -> (i32, i32) {
    %c0_i32 = arith.constant 0 : i32
    %c0_i32_0 = arith.constant 0 : i32
    return %arg0, %c0_i32 : i32, i32
  }
  func.func @transform_1(%arg0: i32) -> (i32, i32) {
    %c0_i32 = arith.constant 0 : i32
    %c0_i32_0 = arith.constant 0 : i32
    %c0_i32_1 = arith.constant 0 : i32
    return %c0_i32, %c0_i32_0 : i32, i32
  }
}

module attributes {stable_mosaic.version = 11 : i64} {
  func.func @_scale_shift_act_kernel(%arg0: i32, %arg1: memref<128x128xf32, #tpu.memory_space<vmem>>, %arg2: memref<1x128xf32, #tpu.memory_space<vmem>>, %arg3: memref<1x128xf32, #tpu.memory_space<vmem>>, %arg4: memref<128x128xf32, #tpu.memory_space<vmem>>) attributes {dimension_semantics = [#tpu.dimension_semantics<parallel>], iteration_bounds = array<i64: 1>, scalar_prefetch = 0 : i64, scratch_operands = 0 : i64, tpu.core_type = #tpu.core_type<tc>, window_params = [{transform_indices = @transform_0, window_bounds = array<i64: 128, 128>}, {pipeline_mode = #tpu.pipeline_mode<synchronous>, transform_indices = @transform_1, window_bounds = array<i64: 1, 128>}, {pipeline_mode = #tpu.pipeline_mode<synchronous>, transform_indices = @transform_2, window_bounds = array<i64: 1, 128>}, {transform_indices = @transform_3, window_bounds = array<i64: 128, 128>}]} {
    %c0 = arith.constant 0 : index
    %c0_0 = arith.constant 0 : index
    %0 = vector.load %arg1[%c0, %c0_0] : memref<128x128xf32, #tpu.memory_space<vmem>>, vector<128x128xf32>
    %c0_1 = arith.constant 0 : index
    %c0_2 = arith.constant 0 : index
    %1 = vector.load %arg2[%c0_1, %c0_2] : memref<1x128xf32, #tpu.memory_space<vmem>>, vector<1x128xf32>
    %2 = vector.broadcast %1 : vector<1x128xf32> to vector<128x128xf32>
    %3 = arith.mulf %0, %2 : vector<128x128xf32>
    %c0_3 = arith.constant 0 : index
    %c0_4 = arith.constant 0 : index
    %4 = vector.load %arg3[%c0_3, %c0_4] : memref<1x128xf32, #tpu.memory_space<vmem>>, vector<1x128xf32>
    %5 = vector.broadcast %4 : vector<1x128xf32> to vector<128x128xf32>
    %6 = arith.addf %3, %5 : vector<128x128xf32>
    %cst = arith.constant 0.000000e+00 : f32
    %7 = vector.broadcast %cst : f32 to vector<128x128xf32>
    %8 = arith.maximumf %6, %7 : vector<128x128xf32>
    %c0_5 = arith.constant 0 : index
    %c0_6 = arith.constant 0 : index
    %9 = vector.load %arg4[%c0_5, %c0_6] : memref<128x128xf32, #tpu.memory_space<vmem>>, vector<128x128xf32>
    tpu.vector_store %arg4[%c0_5, %c0_6], %8 {strides = array<i32>} : memref<128x128xf32, #tpu.memory_space<vmem>>, vector<128x128xf32>,
    return
  }
  func.func @transform_0(%arg0: i32) -> (i32, i32) {
    %c0_i32 = arith.constant 0 : i32
    %c0_i32_0 = arith.constant 0 : i32
    return %arg0, %c0_i32 : i32, i32
  }
  func.func @transform_1(%arg0: i32) -> (i32, i32) {
    %c0_i32 = arith.constant 0 : i32
    %c0_i32_0 = arith.constant 0 : i32
    %c0_i32_1 = arith.constant 0 : i32
    return %c0_i32, %c0_i32_0 : i32, i32
  }
  func.func @transform_2(%arg0: i32) -> (i32, i32) {
    %c0_i32 = arith.constant 0 : i32
    %c0_i32_0 = arith.constant 0 : i32
    %c0_i32_1 = arith.constant 0 : i32
    return %c0_i32, %c0_i32_0 : i32, i32
  }
  func.func @transform_3(%arg0: i32) -> (i32, i32) {
    %c0_i32 = arith.constant 0 : i32
    %c0_i32_0 = arith.constant 0 : i32
    return %arg0, %c0_i32 : i32, i32
  }
}

module attributes {stable_mosaic.version = 11 : i64} {
  func.func @_matmul_kernel(%arg0: i32, %arg1: i32, %arg2: i32, %arg3: memref<512x128xbf16, #tpu.memory_space<vmem>>, %arg4: memref<128x128xbf16, #tpu.memory_space<vmem>>, %arg5: memref<512x128xf32, #tpu.memory_space<vmem>>, %arg6: memref<512x128xf32, #tpu.memory_space<vmem>>) attributes {dimension_semantics = [#tpu.dimension_semantics<parallel>, #tpu.dimension_semantics<parallel>, #tpu.dimension_semantics<arbitrary>], iteration_bounds = array<i64: 2, 1, 1>, scalar_prefetch = 0 : i64, scratch_operands = 1 : i64, tpu.core_type = #tpu.core_type<tc>, window_params = [{transform_indices = @transform_0, window_bounds = array<i64: 512, 128>}, {transform_indices = @transform_1, window_bounds = array<i64: 128, 128>}, {transform_indices = @transform_2, window_bounds = array<i64: 512, 128>}]} {
    %c0_i32 = arith.constant 0 : i32
    %0 = arith.cmpi eq, %arg2, %c0_i32 : i32
    %1 = arith.extui %0 : i1 to i32
    %c0_i32_0 = arith.constant 0 : i32
    %2 = arith.cmpi ne, %1, %c0_i32_0 : i32
    scf.if %2 {
      %cst_10 = arith.constant 0.000000e+00 : f32
      %12 = vector.broadcast %cst_10 : f32 to vector<512x128xf32>
      %c0_11 = arith.constant 0 : index
      %c0_12 = arith.constant 0 : index
      %13 = vector.load %arg6[%c0_11, %c0_12] : memref<512x128xf32, #tpu.memory_space<vmem>>, vector<512x128xf32>
      tpu.vector_store %arg6[%c0_11, %c0_12], %12 {strides = array<i32>} : memref<512x128xf32, #tpu.memory_space<vmem>>, vector<512x128xf32>,
    } else {
    }
    %c0 = arith.constant 0 : index
    %c0_1 = arith.constant 0 : index
    %3 = vector.load %arg6[%c0, %c0_1] : memref<512x128xf32, #tpu.memory_space<vmem>>, vector<512x128xf32>
    %c0_2 = arith.constant 0 : index
    %c0_3 = arith.constant 0 : index
    %4 = vector.load %arg3[%c0_2, %c0_3] : memref<512x128xbf16, #tpu.memory_space<vmem>>, vector<512x128xbf16>
    %c0_4 = arith.constant 0 : index
    %c0_5 = arith.constant 0 : index
    %5 = vector.load %arg4[%c0_4, %c0_5] : memref<128x128xbf16, #tpu.memory_space<vmem>>, vector<128x128xbf16>
    %cst = arith.constant dense<0.000000e+00> : vector<512x128xf32>
    %6 = tpu.matmul %4, %5, %cst {dimension_numbers = #tpu.dot_dimension_numbers<[1], [0], [0], [1], [0, 0, 1, 1], [], []>} : vector<512x128xbf16>, vector<128x128xbf16>, vector<512x128xf32> -> vector<512x128xf32>
    %7 = arith.addf %3, %6 : vector<512x128xf32>
    %c0_6 = arith.constant 0 : index
    %c0_7 = arith.constant 0 : index
    %8 = vector.load %arg6[%c0_6, %c0_7] : memref<512x128xf32, #tpu.memory_space<vmem>>, vector<512x128xf32>
    tpu.vector_store %arg6[%c0_6, %c0_7], %7 {strides = array<i32>} : memref<512x128xf32, #tpu.memory_space<vmem>>, vector<512x128xf32>,
    %c0_i32_8 = arith.constant 0 : i32
    %9 = arith.cmpi eq, %arg2, %c0_i32_8 : i32
    %10 = arith.extui %9 : i1 to i32
    %c0_i32_9 = arith.constant 0 : i32
    %11 = arith.cmpi ne, %10, %c0_i32_9 : i32
    scf.if %11 {
      %c0_10 = arith.constant 0 : index
      %c0_11 = arith.constant 0 : index
      %12 = vector.load %arg6[%c0_10, %c0_11] : memref<512x128xf32, #tpu.memory_space<vmem>>, vector<512x128xf32>
      %c0_12 = arith.constant 0 : index
      %c0_13 = arith.constant 0 : index
      %13 = vector.load %arg5[%c0_12, %c0_13] : memref<512x128xf32, #tpu.memory_space<vmem>>, vector<512x128xf32>
      tpu.vector_store %arg5[%c0_12, %c0_13], %12 {strides = array<i32>} : memref<512x128xf32, #tpu.memory_space<vmem>>, vector<512x128xf32>,
    } else {
    }
    return
  }
  func.func @transform_0(%arg0: i32, %arg1: i32, %arg2: i32) -> (i32, i32) {
    %c0_i32 = arith.constant 0 : i32
    return %arg0, %arg2 : i32, i32
  }
  func.func @transform_1(%arg0: i32, %arg1: i32, %arg2: i32) -> (i32, i32) {
    %c0_i32 = arith.constant 0 : i32
    return %arg2, %arg1 : i32, i32
  }
  func.func @transform_2(%arg0: i32, %arg1: i32, %arg2: i32) -> (i32, i32) {
    %c0_i32 = arith.constant 0 : i32
    return %arg0, %arg1 : i32, i32
  }
}

module attributes {stable_mosaic.version = 11 : i64} {
  func.func @_scale_shift_act_kernel(%arg0: i32, %arg1: memref<256x128xf32, #tpu.memory_space<vmem>>, %arg2: memref<1x128xf32, #tpu.memory_space<vmem>>, %arg3: memref<1x128xf32, #tpu.memory_space<vmem>>, %arg4: memref<256x128xf32, #tpu.memory_space<vmem>>) attributes {dimension_semantics = [#tpu.dimension_semantics<parallel>], iteration_bounds = array<i64: 1>, scalar_prefetch = 0 : i64, scratch_operands = 0 : i64, tpu.core_type = #tpu.core_type<tc>, window_params = [{transform_indices = @transform_0, window_bounds = array<i64: 256, 128>}, {pipeline_mode = #tpu.pipeline_mode<synchronous>, transform_indices = @transform_1, window_bounds = array<i64: 1, 128>}, {pipeline_mode = #tpu.pipeline_mode<synchronous>, transform_indices = @transform_2, window_bounds = array<i64: 1, 128>}, {transform_indices = @transform_3, window_bounds = array<i64: 256, 128>}]} {
    %c0 = arith.constant 0 : index
    %c0_0 = arith.constant 0 : index
    %0 = vector.load %arg1[%c0, %c0_0] : memref<256x128xf32, #tpu.memory_space<vmem>>, vector<256x128xf32>
    %c0_1 = arith.constant 0 : index
    %c0_2 = arith.constant 0 : index
    %1 = vector.load %arg2[%c0_1, %c0_2] : memref<1x128xf32, #tpu.memory_space<vmem>>, vector<1x128xf32>
    %2 = vector.broadcast %1 : vector<1x128xf32> to vector<256x128xf32>
    %3 = arith.mulf %0, %2 : vector<256x128xf32>
    %c0_3 = arith.constant 0 : index
    %c0_4 = arith.constant 0 : index
    %4 = vector.load %arg3[%c0_3, %c0_4] : memref<1x128xf32, #tpu.memory_space<vmem>>, vector<1x128xf32>
    %5 = vector.broadcast %4 : vector<1x128xf32> to vector<256x128xf32>
    %6 = arith.addf %3, %5 : vector<256x128xf32>
    %cst = arith.constant 0.000000e+00 : f32
    %7 = vector.broadcast %cst : f32 to vector<256x128xf32>
    %8 = arith.maximumf %6, %7 : vector<256x128xf32>
    %c0_5 = arith.constant 0 : index
    %c0_6 = arith.constant 0 : index
    %9 = vector.load %arg4[%c0_5, %c0_6] : memref<256x128xf32, #tpu.memory_space<vmem>>, vector<256x128xf32>
    tpu.vector_store %arg4[%c0_5, %c0_6], %8 {strides = array<i32>} : memref<256x128xf32, #tpu.memory_space<vmem>>, vector<256x128xf32>,
    return
  }
  func.func @transform_0(%arg0: i32) -> (i32, i32) {
    %c0_i32 = arith.constant 0 : i32
    %c0_i32_0 = arith.constant 0 : i32
    return %arg0, %c0_i32 : i32, i32
  }
  func.func @transform_1(%arg0: i32) -> (i32, i32) {
    %c0_i32 = arith.constant 0 : i32
    %c0_i32_0 = arith.constant 0 : i32
    %c0_i32_1 = arith.constant 0 : i32
    return %c0_i32, %c0_i32_0 : i32, i32
  }
  func.func @transform_2(%arg0: i32) -> (i32, i32) {
    %c0_i32 = arith.constant 0 : i32
    %c0_i32_0 = arith.constant 0 : i32
    %c0_i32_1 = arith.constant 0 : i32
    return %c0_i32, %c0_i32_0 : i32, i32
  }
  func.func @transform_3(%arg0: i32) -> (i32, i32) {
    %c0_i32 = arith.constant 0 : i32
    %c0_i32_0 = arith.constant 0 : i32
    return %arg0, %c0_i32 : i32, i32
  }
}

module attributes {stable_mosaic.version = 11 : i64} {
  func.func @_bn_stats_kernel(%arg0: i32, %arg1: memref<256x128xf32, #tpu.memory_space<vmem>>, %arg2: memref<2x128xf32, #tpu.memory_space<vmem>>, %arg3: memref<2x128xf32, #tpu.memory_space<vmem>>) attributes {dimension_semantics = [#tpu.dimension_semantics<arbitrary>], iteration_bounds = array<i64: 1>, scalar_prefetch = 0 : i64, scratch_operands = 1 : i64, tpu.core_type = #tpu.core_type<tc>, window_params = [{transform_indices = @transform_0, window_bounds = array<i64: 256, 128>}, {pipeline_mode = #tpu.pipeline_mode<synchronous>, transform_indices = @transform_1, window_bounds = array<i64: 2, 128>}]} {
    %c0_i32 = arith.constant 0 : i32
    %0 = arith.cmpi eq, %arg0, %c0_i32 : i32
    %1 = arith.extui %0 : i1 to i32
    %c0_i32_0 = arith.constant 0 : i32
    %2 = arith.cmpi ne, %1, %c0_i32_0 : i32
    scf.if %2 {
      %cst_12 = arith.constant 0.000000e+00 : f32
      %18 = vector.broadcast %cst_12 : f32 to vector<2x128xf32>
      %c0_13 = arith.constant 0 : index
      %c0_14 = arith.constant 0 : index
      %19 = vector.load %arg3[%c0_13, %c0_14] : memref<2x128xf32, #tpu.memory_space<vmem>>, vector<2x128xf32>
      tpu.vector_store %arg3[%c0_13, %c0_14], %18 {strides = array<i32>} : memref<2x128xf32, #tpu.memory_space<vmem>>, vector<2x128xf32>,
    } else {
    }
    %c0 = arith.constant 0 : index
    %c0_1 = arith.constant 0 : index
    %3 = vector.load %arg1[%c0, %c0_1] : memref<256x128xf32, #tpu.memory_space<vmem>>, vector<256x128xf32>
    %c0_2 = arith.constant 0 : index
    %c0_3 = arith.constant 0 : index
    %4 = vector.load %arg3[%c0_2, %c0_3] : memref<2x128xf32, #tpu.memory_space<vmem>>, vector<1x128xf32>
    %cst = arith.constant dense<0.000000e+00> : vector<128xf32>
    %5 = vector.multi_reduction <add>, %3, %cst [0] : vector<256x128xf32> to vector<128xf32>
    %6 = vector.shape_cast %5 : vector<128xf32> to vector<1x128xf32>
    %7 = arith.addf %4, %6 : vector<1x128xf32>
    %c0_4 = arith.constant 0 : index
    %c0_5 = arith.constant 0 : index
    %8 = vector.load %arg3[%c0_4, %c0_5] : memref<2x128xf32, #tpu.memory_space<vmem>>, vector<1x128xf32>
    tpu.vector_store %arg3[%c0_4, %c0_5], %7 {strides = array<i32>} : memref<2x128xf32, #tpu.memory_space<vmem>>, vector<1x128xf32>,
    %c1 = arith.constant 1 : index
    %c0_6 = arith.constant 0 : index
    %9 = vector.load %arg3[%c1, %c0_6] : memref<2x128xf32, #tpu.memory_space<vmem>>, vector<1x128xf32>
    %10 = arith.mulf %3, %3 : vector<256x128xf32>
    %cst_7 = arith.constant dense<0.000000e+00> : vector<128xf32>
    %11 = vector.multi_reduction <add>, %10, %cst_7 [0] : vector<256x128xf32> to vector<128xf32>
    %12 = vector.shape_cast %11 : vector<128xf32> to vector<1x128xf32>
    %13 = arith.addf %9, %12 : vector<1x128xf32>
    %c1_8 = arith.constant 1 : index
    %c0_9 = arith.constant 0 : index
    %14 = vector.load %arg3[%c1_8, %c0_9] : memref<2x128xf32, #tpu.memory_space<vmem>>, vector<1x128xf32>
    tpu.vector_store %arg3[%c1_8, %c0_9], %13 {strides = array<i32>} : memref<2x128xf32, #tpu.memory_space<vmem>>, vector<1x128xf32>,
    %c0_i32_10 = arith.constant 0 : i32
    %15 = arith.cmpi eq, %arg0, %c0_i32_10 : i32
    %16 = arith.extui %15 : i1 to i32
    %c0_i32_11 = arith.constant 0 : i32
    %17 = arith.cmpi ne, %16, %c0_i32_11 : i32
    scf.if %17 {
      %c0_12 = arith.constant 0 : index
      %c0_13 = arith.constant 0 : index
      %18 = vector.load %arg3[%c0_12, %c0_13] : memref<2x128xf32, #tpu.memory_space<vmem>>, vector<2x128xf32>
      %c0_14 = arith.constant 0 : index
      %c0_15 = arith.constant 0 : index
      %19 = vector.load %arg2[%c0_14, %c0_15] : memref<2x128xf32, #tpu.memory_space<vmem>>, vector<2x128xf32>
      tpu.vector_store %arg2[%c0_14, %c0_15], %18 {strides = array<i32>} : memref<2x128xf32, #tpu.memory_space<vmem>>, vector<2x128xf32>,
    } else {
    }
    return
  }
  func.func @transform_0(%arg0: i32) -> (i32, i32) {
    %c0_i32 = arith.constant 0 : i32
    %c0_i32_0 = arith.constant 0 : i32
    return %arg0, %c0_i32 : i32, i32
  }
  func.func @transform_1(%arg0: i32) -> (i32, i32) {
    %c0_i32 = arith.constant 0 : i32
    %c0_i32_0 = arith.constant 0 : i32
    %c0_i32_1 = arith.constant 0 : i32
    return %c0_i32, %c0_i32_0 : i32, i32
  }
}

module attributes {stable_mosaic.version = 11 : i64} {
  func.func @_matmul_kernel(%arg0: i32, %arg1: i32, %arg2: i32, %arg3: memref<512x128xbf16, #tpu.memory_space<vmem>>, %arg4: memref<128x128xbf16, #tpu.memory_space<vmem>>, %arg5: memref<512x128xf32, #tpu.memory_space<vmem>>, %arg6: memref<512x128xf32, #tpu.memory_space<vmem>>) attributes {dimension_semantics = [#tpu.dimension_semantics<parallel>, #tpu.dimension_semantics<parallel>, #tpu.dimension_semantics<arbitrary>], iteration_bounds = array<i64: 5, 1, 1>, scalar_prefetch = 0 : i64, scratch_operands = 1 : i64, tpu.core_type = #tpu.core_type<tc>, window_params = [{transform_indices = @transform_0, window_bounds = array<i64: 512, 128>}, {transform_indices = @transform_1, window_bounds = array<i64: 128, 128>}, {transform_indices = @transform_2, window_bounds = array<i64: 512, 128>}]} {
    %c0_i32 = arith.constant 0 : i32
    %0 = arith.cmpi eq, %arg2, %c0_i32 : i32
    %1 = arith.extui %0 : i1 to i32
    %c0_i32_0 = arith.constant 0 : i32
    %2 = arith.cmpi ne, %1, %c0_i32_0 : i32
    scf.if %2 {
      %cst_10 = arith.constant 0.000000e+00 : f32
      %12 = vector.broadcast %cst_10 : f32 to vector<512x128xf32>
      %c0_11 = arith.constant 0 : index
      %c0_12 = arith.constant 0 : index
      %13 = vector.load %arg6[%c0_11, %c0_12] : memref<512x128xf32, #tpu.memory_space<vmem>>, vector<512x128xf32>
      tpu.vector_store %arg6[%c0_11, %c0_12], %12 {strides = array<i32>} : memref<512x128xf32, #tpu.memory_space<vmem>>, vector<512x128xf32>,
    } else {
    }
    %c0 = arith.constant 0 : index
    %c0_1 = arith.constant 0 : index
    %3 = vector.load %arg6[%c0, %c0_1] : memref<512x128xf32, #tpu.memory_space<vmem>>, vector<512x128xf32>
    %c0_2 = arith.constant 0 : index
    %c0_3 = arith.constant 0 : index
    %4 = vector.load %arg3[%c0_2, %c0_3] : memref<512x128xbf16, #tpu.memory_space<vmem>>, vector<512x128xbf16>
    %c0_4 = arith.constant 0 : index
    %c0_5 = arith.constant 0 : index
    %5 = vector.load %arg4[%c0_4, %c0_5] : memref<128x128xbf16, #tpu.memory_space<vmem>>, vector<128x128xbf16>
    %cst = arith.constant dense<0.000000e+00> : vector<512x128xf32>
    %6 = tpu.matmul %4, %5, %cst {dimension_numbers = #tpu.dot_dimension_numbers<[1], [0], [0], [1], [0, 0, 1, 1], [], []>} : vector<512x128xbf16>, vector<128x128xbf16>, vector<512x128xf32> -> vector<512x128xf32>
    %7 = arith.addf %3, %6 : vector<512x128xf32>
    %c0_6 = arith.constant 0 : index
    %c0_7 = arith.constant 0 : index
    %8 = vector.load %arg6[%c0_6, %c0_7] : memref<512x128xf32, #tpu.memory_space<vmem>>, vector<512x128xf32>
    tpu.vector_store %arg6[%c0_6, %c0_7], %7 {strides = array<i32>} : memref<512x128xf32, #tpu.memory_space<vmem>>, vector<512x128xf32>,
    %c0_i32_8 = arith.constant 0 : i32
    %9 = arith.cmpi eq, %arg2, %c0_i32_8 : i32
    %10 = arith.extui %9 : i1 to i32
    %c0_i32_9 = arith.constant 0 : i32
    %11 = arith.cmpi ne, %10, %c0_i32_9 : i32
    scf.if %11 {
      %c0_10 = arith.constant 0 : index
      %c0_11 = arith.constant 0 : index
      %12 = vector.load %arg6[%c0_10, %c0_11] : memref<512x128xf32, #tpu.memory_space<vmem>>, vector<512x128xf32>
      %c0_12 = arith.constant 0 : index
      %c0_13 = arith.constant 0 : index
      %13 = vector.load %arg5[%c0_12, %c0_13] : memref<512x128xf32, #tpu.memory_space<vmem>>, vector<512x128xf32>
      tpu.vector_store %arg5[%c0_12, %c0_13], %12 {strides = array<i32>} : memref<512x128xf32, #tpu.memory_space<vmem>>, vector<512x128xf32>,
    } else {
    }
    return
  }
  func.func @transform_0(%arg0: i32, %arg1: i32, %arg2: i32) -> (i32, i32) {
    %c0_i32 = arith.constant 0 : i32
    return %arg0, %arg2 : i32, i32
  }
  func.func @transform_1(%arg0: i32, %arg1: i32, %arg2: i32) -> (i32, i32) {
    %c0_i32 = arith.constant 0 : i32
    return %arg2, %arg1 : i32, i32
  }
  func.func @transform_2(%arg0: i32, %arg1: i32, %arg2: i32) -> (i32, i32) {
    %c0_i32 = arith.constant 0 : i32
    return %arg0, %arg1 : i32, i32
  }
}

module attributes {stable_mosaic.version = 11 : i64} {
  func.func @_matmul_kernel(%arg0: i32, %arg1: i32, %arg2: i32, %arg3: memref<512x128xbf16, #tpu.memory_space<vmem>>, %arg4: memref<128x128xbf16, #tpu.memory_space<vmem>>, %arg5: memref<512x128xf32, #tpu.memory_space<vmem>>, %arg6: memref<512x128xf32, #tpu.memory_space<vmem>>) attributes {dimension_semantics = [#tpu.dimension_semantics<parallel>, #tpu.dimension_semantics<parallel>, #tpu.dimension_semantics<arbitrary>], iteration_bounds = array<i64: 17, 1, 1>, scalar_prefetch = 0 : i64, scratch_operands = 1 : i64, tpu.core_type = #tpu.core_type<tc>, window_params = [{transform_indices = @transform_0, window_bounds = array<i64: 512, 128>}, {transform_indices = @transform_1, window_bounds = array<i64: 128, 128>}, {transform_indices = @transform_2, window_bounds = array<i64: 512, 128>}]} {
    %c0_i32 = arith.constant 0 : i32
    %0 = arith.cmpi eq, %arg2, %c0_i32 : i32
    %1 = arith.extui %0 : i1 to i32
    %c0_i32_0 = arith.constant 0 : i32
    %2 = arith.cmpi ne, %1, %c0_i32_0 : i32
    scf.if %2 {
      %cst_10 = arith.constant 0.000000e+00 : f32
      %12 = vector.broadcast %cst_10 : f32 to vector<512x128xf32>
      %c0_11 = arith.constant 0 : index
      %c0_12 = arith.constant 0 : index
      %13 = vector.load %arg6[%c0_11, %c0_12] : memref<512x128xf32, #tpu.memory_space<vmem>>, vector<512x128xf32>
      tpu.vector_store %arg6[%c0_11, %c0_12], %12 {strides = array<i32>} : memref<512x128xf32, #tpu.memory_space<vmem>>, vector<512x128xf32>,
    } else {
    }
    %c0 = arith.constant 0 : index
    %c0_1 = arith.constant 0 : index
    %3 = vector.load %arg6[%c0, %c0_1] : memref<512x128xf32, #tpu.memory_space<vmem>>, vector<512x128xf32>
    %c0_2 = arith.constant 0 : index
    %c0_3 = arith.constant 0 : index
    %4 = vector.load %arg3[%c0_2, %c0_3] : memref<512x128xbf16, #tpu.memory_space<vmem>>, vector<512x128xbf16>
    %c0_4 = arith.constant 0 : index
    %c0_5 = arith.constant 0 : index
    %5 = vector.load %arg4[%c0_4, %c0_5] : memref<128x128xbf16, #tpu.memory_space<vmem>>, vector<128x128xbf16>
    %cst = arith.constant dense<0.000000e+00> : vector<512x128xf32>
    %6 = tpu.matmul %4, %5, %cst {dimension_numbers = #tpu.dot_dimension_numbers<[1], [0], [0], [1], [0, 0, 1, 1], [], []>} : vector<512x128xbf16>, vector<128x128xbf16>, vector<512x128xf32> -> vector<512x128xf32>
    %7 = arith.addf %3, %6 : vector<512x128xf32>
    %c0_6 = arith.constant 0 : index
    %c0_7 = arith.constant 0 : index
    %8 = vector.load %arg6[%c0_6, %c0_7] : memref<512x128xf32, #tpu.memory_space<vmem>>, vector<512x128xf32>
    tpu.vector_store %arg6[%c0_6, %c0_7], %7 {strides = array<i32>} : memref<512x128xf32, #tpu.memory_space<vmem>>, vector<512x128xf32>,
    %c0_i32_8 = arith.constant 0 : i32
    %9 = arith.cmpi eq, %arg2, %c0_i32_8 : i32
    %10 = arith.extui %9 : i1 to i32
    %c0_i32_9 = arith.constant 0 : i32
    %11 = arith.cmpi ne, %10, %c0_i32_9 : i32
    scf.if %11 {
      %c0_10 = arith.constant 0 : index
      %c0_11 = arith.constant 0 : index
      %12 = vector.load %arg6[%c0_10, %c0_11] : memref<512x128xf32, #tpu.memory_space<vmem>>, vector<512x128xf32>
      %13 = math.tanh %12 : vector<512x128xf32>
      %c0_12 = arith.constant 0 : index
      %c0_13 = arith.constant 0 : index
      %14 = vector.load %arg5[%c0_12, %c0_13] : memref<512x128xf32, #tpu.memory_space<vmem>>, vector<512x128xf32>
      tpu.vector_store %arg5[%c0_12, %c0_13], %13 {strides = array<i32>} : memref<512x128xf32, #tpu.memory_space<vmem>>, vector<512x128xf32>,
    } else {
    }
    return
  }
  func.func @transform_0(%arg0: i32, %arg1: i32, %arg2: i32) -> (i32, i32) {
    %c0_i32 = arith.constant 0 : i32
    return %arg0, %arg2 : i32, i32
  }
  func.func @transform_1(%arg0: i32, %arg1: i32, %arg2: i32) -> (i32, i32) {
    %c0_i32 = arith.constant 0 : i32
    return %arg2, %arg1 : i32, i32
  }
  func.func @transform_2(%arg0: i32, %arg1: i32, %arg2: i32) -> (i32, i32) {
    %c0_i32 = arith.constant 0 : i32
    return %arg0, %arg1 : i32, i32
  }
}

module attributes {stable_mosaic.version = 11 : i64} {
  func.func @_attn_kernel(%arg0: i32, %arg1: i32, %arg2: memref<1x2xf32, #tpu.memory_space<vmem>>, %arg3: memref<1x512x16xf32, #tpu.memory_space<vmem>>, %arg4: memref<1x16x4096xf32, #tpu.memory_space<vmem>>, %arg5: memref<1x16xf32, #tpu.memory_space<vmem>>, %arg6: memref<16x1xf32, #tpu.memory_space<vmem>>, %arg7: memref<1x512x4096xbf16, #tpu.memory_space<vmem>>, %arg8: memref<1x4096xf32, #tpu.memory_space<vmem>>) attributes {dimension_semantics = [#tpu.dimension_semantics<parallel>, #tpu.dimension_semantics<parallel>], iteration_bounds = array<i64: 2, 8>, scalar_prefetch = 0 : i64, scratch_operands = 1 : i64, tpu.core_type = #tpu.core_type<tc>, window_params = [{pipeline_mode = #tpu.pipeline_mode<synchronous>, transform_indices = @transform_0, window_bounds = array<i64: 1, 2>}, {transform_indices = @transform_1, window_bounds = array<i64: 1, 512, 16>}, {transform_indices = @transform_2, window_bounds = array<i64: 1, 16, 4096>}, {pipeline_mode = #tpu.pipeline_mode<synchronous>, transform_indices = @transform_3, window_bounds = array<i64: 1, 16>}, {pipeline_mode = #tpu.pipeline_mode<synchronous>, transform_indices = @transform_4, window_bounds = array<i64: 16, 1>}, {transform_indices = @transform_5, window_bounds = array<i64: 1, 512, 4096>}]} {
    %c0 = arith.constant 0 : index
    %c0_0 = arith.constant 0 : index
    %0 = vector.load %arg2[%c0, %c0_0] : memref<1x2xf32, #tpu.memory_space<vmem>>, vector<1x1xf32>
    %1 = vector.extract %0[0, 0] : f32 from vector<1x1xf32>
    %c0_1 = arith.constant 0 : index
    %c1 = arith.constant 1 : index
    %2 = vector.load %arg2[%c0_1, %c1] : memref<1x2xf32, #tpu.memory_space<vmem>>, vector<1x1xf32>
    %3 = vector.extract %2[0, 0] : f32 from vector<1x1xf32>
    %c0_2 = arith.constant 0 : index
    %c0_3 = arith.constant 0 : index
    %c0_4 = arith.constant 0 : index
    %4 = vector.load %arg4[%c0_2, %c0_3, %c0_4] : memref<1x16x4096xf32, #tpu.memory_space<vmem>>, vector<1x16x4096xf32>
    %5 = vector.shape_cast %4 : vector<1x16x4096xf32> to vector<16x4096xf32>
    %c0_5 = arith.constant 0 : index
    %c0_6 = arith.constant 0 : index
    %6 = vector.load %arg6[%c0_5, %c0_6] : memref<16x1xf32, #tpu.memory_space<vmem>>, vector<16x1xf32>
    %7 = vector.broadcast %6 : vector<16x1xf32> to vector<16x4096xf32>
    %8 = arith.mulf %5, %7 : vector<16x4096xf32>
    %cst = arith.constant dense<0.000000e+00> : vector<4096xf32>
    %9 = vector.multi_reduction <add>, %8, %cst [0] : vector<16x4096xf32> to vector<4096xf32>
    %10 = vector.shape_cast %9 : vector<4096xf32> to vector<1x4096xf32>
    %11 = vector.broadcast %3 : f32 to vector<1x4096xf32>
    %12 = arith.addf %10, %11 : vector<1x4096xf32>
    %c0_7 = arith.constant 0 : index
    %c0_8 = arith.constant 0 : index
    %13 = vector.load %arg8[%c0_7, %c0_8] : memref<1x4096xf32, #tpu.memory_space<vmem>>, vector<1x4096xf32>
    tpu.vector_store %arg8[%c0_7, %c0_8], %12 {strides = array<i32>} : memref<1x4096xf32, #tpu.memory_space<vmem>>, vector<1x4096xf32>,
    %c0_9 = arith.constant 0 : index
    %c0_10 = arith.constant 0 : index
    %14 = vector.load %arg8[%c0_9, %c0_10] : memref<1x4096xf32, #tpu.memory_space<vmem>>, vector<1x4096xf32>
    %15 = vector.shape_cast %14 : vector<1x4096xf32> to vector<1x1x4096xf32>
    %cst_11 = arith.constant dense<0xFF800000> : vector<1xf32>
    %16 = vector.multi_reduction <maximumf>, %15, %cst_11 [1, 2] : vector<1x1x4096xf32> to vector<1xf32>
    %17 = vector.shape_cast %16 : vector<1xf32> to vector<1x1x1xf32>
    %18 = vector.extract %17[0, 0, 0] : f32 from vector<1x1x1xf32>
    %c0_12 = arith.constant 0 : index
    %c0_13 = arith.constant 0 : index
    %19 = vector.load %arg8[%c0_12, %c0_13] : memref<1x4096xf32, #tpu.memory_space<vmem>>, vector<1x4096xf32>
    %20 = vector.shape_cast %19 : vector<1x4096xf32> to vector<1x1x4096xf32>
    %cst_14 = arith.constant dense<0x7F800000> : vector<1xf32>
    %21 = vector.multi_reduction <minimumf>, %20, %cst_14 [1, 2] : vector<1x1x4096xf32> to vector<1xf32>
    %22 = vector.shape_cast %21 : vector<1xf32> to vector<1x1x1xf32>
    %23 = vector.extract %22[0, 0, 0] : f32 from vector<1x1x1xf32>
    %c0_i32 = arith.constant 0 : i32
    %c32_i32 = arith.constant 32 : i32
    %24 = arith.addi %c0_i32, %c32_i32 : i32
    %c1_i32 = arith.constant 1 : i32
    scf.for %arg9 = %c0_i32 to %24 step %c1_i32  : i32 {
      %c16_i32 = arith.constant 16 : i32
      %25 = arith.muli %arg9, %c16_i32 : i32
      %26 = tpu.assume_multiple %25, 16 : i32
      %c0_16 = arith.constant 0 : index
      %27 = arith.index_cast %26 : i32 to index
      %c0_17 = arith.constant 0 : index
      %28 = vector.load %arg3[%c0_16, %27, %c0_17] : memref<1x512x16xf32, #tpu.memory_space<vmem>>, vector<1x16x16xf32>
      %29 = vector.shape_cast %28 : vector<1x16x16xf32> to vector<16x16xf32>
      %c0_18 = arith.constant 0 : index
      %c0_19 = arith.constant 0 : index
      %30 = vector.load %arg5[%c0_18, %c0_19] : memref<1x16xf32, #tpu.memory_space<vmem>>, vector<1x16xf32>
      %31 = vector.broadcast %30 : vector<1x16xf32> to vector<16x16xf32>
      %32 = arith.mulf %29, %31 : vector<16x16xf32>
      %cst_20 = arith.constant dense<0.000000e+00> : vector<16xf32>
      %33 = vector.multi_reduction <add>, %32, %cst_20 [1] : vector<16x16xf32> to vector<16xf32>
      %34 = vector.shape_cast %33 : vector<16xf32> to vector<16x1xf32>
      %35 = vector.broadcast %1 : f32 to vector<16x1xf32>
      %36 = arith.addf %34, %35 : vector<16x1xf32>
      %cst_21 = arith.constant 0.000000e+00 : f32
      %37 = vector.broadcast %cst_21 : f32 to vector<16x1xf32>
      %38 = arith.cmpf oge, %36, %37 : vector<16x1xf32>
      %39 = vector.broadcast %18 : f32 to vector<16x1xf32>
      %40 = arith.mulf %36, %39 : vector<16x1xf32>
      %41 = vector.broadcast %23 : f32 to vector<16x1xf32>
      %42 = arith.mulf %36, %41 : vector<16x1xf32>
      %43 = arith.select %38, %40, %42 : vector<16x1xi1>, vector<16x1xf32>
      %c0_22 = arith.constant 0 : index
      %c0_23 = arith.constant 0 : index
      %44 = vector.load %arg8[%c0_22, %c0_23] : memref<1x4096xf32, #tpu.memory_space<vmem>>, vector<1x4096xf32>
      %45 = vector.broadcast %36 : vector<16x1xf32> to vector<16x4096xf32>
      %46 = vector.broadcast %44 : vector<1x4096xf32> to vector<16x4096xf32>
      %47 = arith.mulf %45, %46 : vector<16x4096xf32>
      %48 = vector.broadcast %43 : vector<16x1xf32> to vector<16x4096xf32>
      %49 = arith.subf %47, %48 : vector<16x4096xf32>
      %50 = math.exp %49 : vector<16x4096xf32>
      %cst_24 = arith.constant dense<0.000000e+00> : vector<16xf32>
      %51 = vector.multi_reduction <add>, %50, %cst_24 [1] : vector<16x4096xf32> to vector<16xf32>
      %52 = vector.shape_cast %51 : vector<16xf32> to vector<16x1xf32>
      %cst_25 = arith.constant 1.000000e+00 : f32
      %53 = vector.broadcast %cst_25 : f32 to vector<16x1xf32>
      %54 = arith.divf %53, %52 : vector<16x1xf32>
      %55 = vector.broadcast %54 : vector<16x1xf32> to vector<16x4096xf32>
      %56 = arith.mulf %50, %55 : vector<16x4096xf32>
      %57 = arith.truncf %56 : vector<16x4096xf32> to vector<16x4096xbf16>
      %c0_26 = arith.constant 0 : index
      %58 = arith.index_cast %26 : i32 to index
      %c0_27 = arith.constant 0 : index
      %59 = vector.load %arg7[%c0_26, %58, %c0_27] : memref<1x512x4096xbf16, #tpu.memory_space<vmem>>, vector<1x16x4096xbf16>
      %60 = vector.shape_cast %59 : vector<1x16x4096xbf16> to vector<16x4096xbf16>
      %61 = vector.shape_cast %57 : vector<16x4096xbf16> to vector<1x16x4096xbf16>
      tpu.vector_store %arg7[%c0_26, %58, %c0_27], %61 {strides = array<i32>} : memref<1x512x4096xbf16, #tpu.memory_space<vmem>>, vector<1x16x4096xbf16>,
    }
    %c32_i32_15 = arith.constant 32 : i32
    return
  }
  func.func @transform_0(%arg0: i32, %arg1: i32) -> (i32, i32) {
    %c0_i32 = arith.constant 0 : i32
    %c0_i32_0 = arith.constant 0 : i32
    %c0_i32_1 = arith.constant 0 : i32
    return %c0_i32, %c0_i32_0 : i32, i32
  }
  func.func @transform_1(%arg0: i32, %arg1: i32) -> (i32, i32, i32) {
    %c0_i32 = arith.constant 0 : i32
    %c0_i32_0 = arith.constant 0 : i32
    return %arg0, %arg1, %c0_i32 : i32, i32, i32
  }
  func.func @transform_2(%arg0: i32, %arg1: i32) -> (i32, i32, i32) {
    %c0_i32 = arith.constant 0 : i32
    %c0_i32_0 = arith.constant 0 : i32
    %c0_i32_1 = arith.constant 0 : i32
    return %arg0, %c0_i32, %c0_i32_0 : i32, i32, i32
  }
  func.func @transform_3(%arg0: i32, %arg1: i32) -> (i32, i32) {
    %c0_i32 = arith.constant 0 : i32
    %c0_i32_0 = arith.constant 0 : i32
    %c0_i32_1 = arith.constant 0 : i32
    return %c0_i32, %c0_i32_0 : i32, i32
  }
  func.func @transform_4(%arg0: i32, %arg1: i32) -> (i32, i32) {
    %c0_i32 = arith.constant 0 : i32
    %c0_i32_0 = arith.constant 0 : i32
    %c0_i32_1 = arith.constant 0 : i32
    return %c0_i32, %c0_i32_0 : i32, i32
  }
  func.func @transform_5(%arg0: i32, %arg1: i32) -> (i32, i32, i32) {
    %c0_i32 = arith.constant 0 : i32
    %c0_i32_0 = arith.constant 0 : i32
    return %arg0, %arg1, %c0_i32 : i32, i32, i32
  }
}

</mosaic_0001>

<llo_original>
// kernel: dcsa_forward.16
$region0: #{dcsa_forward.16}
  #allocation0 [shape = 'u32[]', space=smem, size = 0x4, offset = 0x4, fixed_abs, tag = 'smem constant byte address 0x4 - core index']
  #allocation1 [shape = 'u32[144,128]{1,0:T(1,128)}', space=vmem, size = 0x12000, scoped, tag = 'internal scratch']
  #allocation2 [shape = 'f32[2,128]{1,0:T(2,128)}', space=vmem, size = 0x400, scoped, tag = 'scratch operand']
  %s0 = inlined_call_operand.vmem [shape: f32[32,128], index: 0, kind: input, shape index: {}]
  %s1 = inlined_call_operand.vmem [shape: f32[2,128], index: 1, kind: output, shape index: {}]
  %s2 = sld [smem:[#allocation0]]
  $region22: #{dcsa_forward.16} parent=0
    _
  %s4 = ssub.s32 1, %s2
  %s5 = scalar_select 0, %s4, %s2
  // Predicated region
  $region2: #{dcsa_forward.16} parent=0 // pred_check
    _
  $region3: #{dcsa_forward.16} parent=0 // pred_check_branch
    %7 = sbr.rel (0) target = $region5
  $region4: #{dcsa_forward.16} parent=0 // pred_region
    _
  $region5: #{dcsa_forward.16} parent=0 // pred_fallthru
    _
  %p8 = scmp.eq.s32.totalorder 0, 0
  // Predicated region
  $region6: #{dcsa_forward.16} parent=0 // pred_check
    %p9 = pneg %p8
  $region7: #{dcsa_forward.16} parent=0 // pred_check_branch
    %11 = sbr.rel (%p9) target = $region9
  $region8: #{dcsa_forward.16} parent=0 // pred_region
    %12 = vst [vmem:[#allocation2] sm:$0x3] 0.0
  $region9: #{dcsa_forward.16} parent=0 // pred_fallthru
    _
  %v13 = vld [vmem:[%s0] sm:$0xff]
  %v14 = vld [vmem:[%s0 + $0x8] sm:$0xff]
  %v15 = vld [vmem:[%s0 + $0x10] sm:$0xff]
  %v16 = vld [vmem:[%s0 + $0x18] sm:$0xff]
  %v17 = vld [vmem:[#allocation2] sm:$0x1]
  %v18 = vadd.f32 %v13, %v14
  %v19 = vadd.f32 %v18, %v15
  %v20 = vadd.f32 %v19, %v16
  %v21 = vrot.slane %v20, 4
  %v22 = vadd.f32 %v20, %v21
  %v23 = vrot.slane %v22, 2
  %v24 = vadd.f32 %v22, %v23
  %v25 = vrot.slane %v24, 1
  %v26 = vadd.f32 %v24, %v25
  %v27 = vadd.f32 %v17, %v26
  %28 = vst [vmem:[#allocation2] sm:$0x1] %v27
  %v29 = vld [vmem:[#allocation2 + $0x1] sm:$0x1]
  %v30 = vmul.f32 %v13, %v13
  %v31 = vmul.f32 %v14, %v14
  %v32 = vmul.f32 %v15, %v15
  %v33 = vmul.f32 %v16, %v16
  %v34 = vadd.f32 %v30, %v31
  %v35 = vadd.f32 %v34, %v32
  %v36 = vadd.f32 %v35, %v33
  %v37 = vrot.slane %v36, 4
  %v38 = vadd.f32 %v36, %v37
  %v39 = vrot.slane %v38, 2
  %v40 = vadd.f32 %v38, %v39
  %v41 = vrot.slane %v40, 1
  %v42 = vadd.f32 %v40, %v41
  %v43 = vadd.f32 %v29, %v42
  %44 = vst [vmem:[#allocation2 + $0x1] sm:$0x1] %v43
  // Predicated region
  $region10: #{dcsa_forward.16} parent=0 // pred_check
    %p45 = pneg %p8
  $region11: #{dcsa_forward.16} parent=0 // pred_check_branch
    %47 = sbr.rel (%p45) target = $region13
  $region12: #{dcsa_forward.16} parent=0 // pred_region
    %v48 = vld [vmem:[#allocation2] sm:$0x3]
    %49 = vst [vmem:[%s1] sm:$0x3] %v48
  $region13: #{dcsa_forward.16} parent=0 // pred_fallthru
    _
  // Predicated region
  $region14: #{dcsa_forward.16} parent=0 // pred_check
    _
  $region15: #{dcsa_forward.16} parent=0 // pred_check_branch
    %51 = sbr.rel (0) target = $region17
  $region16: #{dcsa_forward.16} parent=0 // pred_region
    _
  $region17: #{dcsa_forward.16} parent=0 // pred_fallthru
    _
  // Predicated region
  $region18: #{dcsa_forward.16} parent=0 // pred_check
    _
  $region19: #{dcsa_forward.16} parent=0 // pred_check_branch
    %53 = sbr.rel (0) target = $region21
  $region20: #{dcsa_forward.16} parent=0 // pred_region
    _
  $region21: #{dcsa_forward.16} parent=0 // pred_fallthru
    _

// kernel: dcsa_forward.17
$region0: #{dcsa_forward.17}
  #allocation0 [shape = 'u32[]', space=smem, size = 0x4, offset = 0x4, fixed_abs, tag = 'smem constant byte address 0x4 - core index']
  #allocation1 [shape = 'u32[144,128]{1,0:T(1,128)}', space=vmem, size = 0x12000, scoped, tag = 'internal scratch']
  %s0 = inlined_call_operand.vmem [shape: f32[32,128], index: 0, kind: input, shape index: {}]
  %s1 = inlined_call_operand.vmem [shape: f32[1,128], index: 1, kind: input, shape index: {}]
  %s2 = inlined_call_operand.vmem [shape: f32[1,128], index: 2, kind: input, shape index: {}]
  %s3 = inlined_call_operand.vmem [shape: f32[32,128], index: 3, kind: output, shape index: {}]
  %s4 = sld [smem:[#allocation0]]
  $region22: #{dcsa_forward.17} parent=0
    _
  %s6 = ssub.s32 1, %s4
  %s7 = scalar_select 0, %s6, %s4
  // Predicated region
  $region2: #{dcsa_forward.17} parent=0 // pred_check
    _
  $region3: #{dcsa_forward.17} parent=0 // pred_check_branch
    %9 = sbr.rel (0) target = $region5
  $region4: #{dcsa_forward.17} parent=0 // pred_region
    _
  $region5: #{dcsa_forward.17} parent=0 // pred_fallthru
    _
  // Predicated region
  $region6: #{dcsa_forward.17} parent=0 // pred_check
    _
  $region7: #{dcsa_forward.17} parent=0 // pred_check_branch
    %11 = sbr.rel (0) target = $region9
  $region8: #{dcsa_forward.17} parent=0 // pred_region
    _
  $region9: #{dcsa_forward.17} parent=0 // pred_fallthru
    _
  // Predicated region
  $region10: #{dcsa_forward.17} parent=0 // pred_check
    _
  $region11: #{dcsa_forward.17} parent=0 // pred_check_branch
    %13 = sbr.rel (0) target = $region13
  $region12: #{dcsa_forward.17} parent=0 // pred_region
    _
  $region13: #{dcsa_forward.17} parent=0 // pred_fallthru
    _
  %v14 = vld [vmem:[%s0] sm:$0xff]
  %v15 = vld [vmem:[%s0 + $0x8] sm:$0xff]
  %v16 = vld [vmem:[%s0 + $0x10] sm:$0xff]
  %v17 = vld [vmem:[%s0 + $0x18] sm:$0xff]
  %v18 = vld [vmem:[%s1] sm:$0x1]
  %v20 = vlaneseq
  %v21 = vshrl.u32 %v20, 7
  %v22 = vsub.s32 0, %v21
  %v23 = vrot.slane %v18, %v22
  %v25 = vmul.f32 %v14, %v23
  %v26 = vmul.f32 %v15, %v23
  %v27 = vmul.f32 %v16, %v23
  %v28 = vmul.f32 %v17, %v23
  %v29 = vld [vmem:[%s2] sm:$0x1]
  %v31 = vlaneseq
  %v32 = vshrl.u32 %v31, 7
  %v33 = vsub.s32 0, %v32
  %v34 = vrot.slane %v29, %v33
  %v36 = vadd.f32 %v25, %v34
  %v37 = vadd.f32 %v26, %v34
  %v38 = vadd.f32 %v27, %v34
  %v39 = vadd.f32 %v28, %v34
  %v40 = vmax.f32 %v36, 0.0
  %v41 = vmax.f32 %v37, 0.0
  %v42 = vmax.f32 %v38, 0.0
  %v43 = vmax.f32 %v39, 0.0
  %44 = vst [vmem:[%s3] sm:$0xff] %v40
  %45 = vst [vmem:[%s3 + $0x8] sm:$0xff] %v41
  %46 = vst [vmem:[%s3 + $0x10] sm:$0xff] %v42
  %47 = vst [vmem:[%s3 + $0x18] sm:$0xff] %v43
  // Predicated region
  $region14: #{dcsa_forward.17} parent=0 // pred_check
    _
  $region15: #{dcsa_forward.17} parent=0 // pred_check_branch
    %49 = sbr.rel (0) target = $region17
  $region16: #{dcsa_forward.17} parent=0 // pred_region
    _
  $region17: #{dcsa_forward.17} parent=0 // pred_fallthru
    _
  // Predicated region
  $region18: #{dcsa_forward.17} parent=0 // pred_check
    _
  $region19: #{dcsa_forward.17} parent=0 // pred_check_branch
    %51 = sbr.rel (0) target = $region21
  $region20: #{dcsa_forward.17} parent=0 // pred_region
    _
  $region21: #{dcsa_forward.17} parent=0 // pred_fallthru
    _

// kernel: dcsa_forward.15
$region0: #{dcsa_forward.15}
  #allocation0 [shape = 'u32[]', space=smem, size = 0x4, offset = 0x4, fixed_abs, tag = 'smem constant byte address 0x4 - core index']
  #allocation1 [shape = 'u32[144,128]{1,0:T(1,128)}', space=vmem, size = 0x12000, scoped, tag = 'internal scratch']
  #allocation2 [shape = 'f32[16,128]{1,0:T(8,128)}', space=vmem, size = 0x2000, scoped, tag = 'scratch operand']
  %s0 = inlined_call_operand.vmem [shape: bf16[16,128], index: 0, kind: input, shape index: {}]
  %s1 = inlined_call_operand.vmem [shape: bf16[128,2048], index: 1, kind: input, shape index: {}]
  %s2 = inlined_call_operand.vmem [shape: f32[16,2048], index: 2, kind: output, shape index: {}]
  %s3 = sld [smem:[#allocation0]]
  $region124: #{dcsa_forward.15} parent=0
    _
  %s5 = ssub.s32 1, %s3
  %s6 = scalar_select 0, %s5, %s3
  $region1: #{dcsa_forward.15} parent=0
    #allocation3 [shape = 'u8[65536]{0}', space=vmem, size = 0x10000, scoped, tag = 'input window, operand 1']
    #allocation4 [shape = 'u8[16384]{0}', space=vmem, size = 0x4000, scoped, tag = 'output window, operand 0']
    loop: start=0, step=1, limit=18
    $region2: #{dcsa_forward.15} parent=1 // loop_pre_header
      _
    $region3: #{dcsa_forward.15} parent=1 // loop_header
      %s8 = sphi 0, %s12
      %p9 = scmp.ge.s32.totalorder %s8, 18
      %s15 = sphi 0, %s34
      %s16 = sphi 0, %s30
      %s17 = sphi 0, %s26
      %s18 = sphi 0, %s15
      %s19 = sphi 0, %s16
      %s20 = sphi 0, %s17
      %s21 = sphi 0, %s18
      %s22 = sphi 0, %s19
      %s23 = sphi 0, %s20
      %s39 = sphi 0, %s41
      %s42 = sphi 0, %s39
      %s43 = sphi 0, %s42
      %s59 = sphi 0, %s43
      %s67 = sphi 0, %s69
      %s70 = sphi 0, %s67
      %s71 = sphi 0, %s70
      %s87 = sphi 0, %s71
      %s95 = sphi 0, %s97
      %s98 = sphi 0, %s95
      %s99 = sphi 0, %s98
      %s115 = sphi 0, %s99
    $region4: #{dcsa_forward.15} parent=1 // loop_header_branch
      %11 = sbr.rel (%p9) target = $region8
    $region5: #{dcsa_forward.15} parent=1 // loop_body
      %s13 = ssub.s32 %s8, 1
      %s14 = ssub.s32 %s8, 2
      %s24 = sadd.s32 1, %s17
      %p25 = scmp.ge.s32.totalorder %s24, 1
      %s26 = scalar_select %p25, 0, %s24
      %s27 = sadd.s32 1, %s16
      %s28 = scalar_select %p25, %s27, %s16
      %p29 = scmp.ge.s32.totalorder %s28, 16
      %s30 = scalar_select %p29, 0, %s28
      %s31 = sadd.s32 1, %s15
      %s32 = scalar_select %p29, %s31, %s15
      %p33 = scmp.ge.s32.totalorder %s32, 1
      %s34 = scalar_select %p33, 0, %s32
      %s35 = ssub.s32 %s15, %s34
      %s36 = ssub.s32 %s17, %s26
      %s37 = sor.u32 %s35, %s36
      %p38 = scmp.eq.s32.totalorder %s37, 0
      %s40 = sadd.s32 %s39, 1
      %s41 = scalar_select %p38, %s39, %s40
      %p44 = pneg %p38
      %p45 = scmp.eq.s32.totalorder %s8, 15
      %p46 = por %p44, %p45
      %p47 = scmp.ne.s32.totalorder %s39, %s42
      %p48 = scmp.eq.s32.totalorder %s8, 0
      %p49 = por %p47, %p48
      %p50 = scmp.ne.s32.totalorder %s39, %s42
      %p51 = scmp.eq.s32.totalorder %s13, 15
      %p52 = por %p50, %p51
      %p53 = scmp.ne.s32.totalorder %s42, %s43
      %p54 = scmp.eq.s32.totalorder %s13, 0
      %p55 = por %p53, %p54
      %p56 = scmp.ne.s32.totalorder %s42, %s43
      %p57 = scmp.eq.s32.totalorder %s14, 15
      %p58 = por %p56, %p57
      %p60 = scmp.ne.s32.totalorder %s43, %s59
      %p61 = scmp.eq.s32.totalorder %s14, 0
      %p62 = por %p60, %p61
      %s63 = ssub.s32 %s17, %s26
      %s64 = ssub.s32 %s16, %s30
      %s65 = sor.u32 %s63, %s64
      %p66 = scmp.eq.s32.totalorder %s65, 0
      %s68 = sadd.s32 %s67, 1
      %s69 = scalar_select %p66, %s67, %s68
      %p72 = pneg %p66
      %p73 = scmp.eq.s32.totalorder %s8, 15
      %p74 = por %p72, %p73
      %p75 = scmp.ne.s32.totalorder %s67, %s70
      %p76 = scmp.eq.s32.totalorder %s8, 0
      %p77 = por %p75, %p76
      %p78 = scmp.ne.s32.totalorder %s67, %s70
      %p79 = scmp.eq.s32.totalorder %s13, 15
      %p80 = por %p78, %p79
      %p81 = scmp.ne.s32.totalorder %s70, %s71
      %p82 = scmp.eq.s32.totalorder %s13, 0
      %p83 = por %p81, %p82
      %p84 = scmp.ne.s32.totalorder %s70, %s71
      %p85 = scmp.eq.s32.totalorder %s14, 15
      %p86 = por %p84, %p85
      %p88 = scmp.ne.s32.totalorder %s71, %s87
      %p89 = scmp.eq.s32.totalorder %s14, 0
      %p90 = por %p88, %p89
      %s91 = ssub.s32 %s15, %s34
      %s92 = ssub.s32 %s16, %s30
      %s93 = sor.u32 %s91, %s92
      %p94 = scmp.eq.s32.totalorder %s93, 0
      %s96 = sadd.s32 %s95, 1
      %s97 = scalar_select %p94, %s95, %s96
      %p100 = pneg %p94
      %p101 = scmp.eq.s32.totalorder %s8, 15
      %p102 = por %p100, %p101
      %p103 = scmp.ne.s32.totalorder %s95, %s98
      %p104 = scmp.eq.s32.totalorder %s8, 0
      %p105 = por %p103, %p104
      %p106 = scmp.ne.s32.totalorder %s95, %s98
      %p107 = scmp.eq.s32.totalorder %s13, 15
      %p108 = por %p106, %p107
      %p109 = scmp.ne.s32.totalorder %s98, %s99
      %p110 = scmp.eq.s32.totalorder %s13, 0
      %p111 = por %p109, %p110
      %p112 = scmp.ne.s32.totalorder %s98, %s99
      %p113 = scmp.eq.s32.totalorder %s14, 15
      %p114 = por %p112, %p113
      %p116 = scmp.ne.s32.totalorder %s99, %s115
      %p117 = scmp.eq.s32.totalorder %s14, 0
      %p118 = por %p116, %p117
      %p119 = scmp.le.s32.totalorder 1, %s8
      %p120 = scmp.lt.s32.totalorder %s8, 17
      %p121 = pnand %p119, %p120
      %p122 = pneg %p121
      // Predicated region
      $region9: #{dcsa_forward.15} parent=5 // pred_check
        _
      $region10: #{dcsa_forward.15} parent=5 // pred_check_branch
        %124 = sbr.rel (%p121) target = $region12
      $region11: #{dcsa_forward.15} parent=5 // pred_region
        %s125 = ssub.s32 %s8, 1
        // Predicated region
        $region13: #{dcsa_forward.15} parent=11 // pred_check
          %p126 = pneg %p55
        $region14: #{dcsa_forward.15} parent=11 // pred_check_branch
          %128 = sbr.rel (%p126) target = $region16
        $region15: #{dcsa_forward.15} parent=11 // pred_region
          %s129 = smul.u32 2, %s18
          %p130 = scmp.lt.s32.totalorder %s129, 1
          %s131 = scalar_select %p130, %s129, 1
          %p132 = scmp.lt.s32.totalorder %s20, 0
          %s133 = scalar_select %p132, %s20, 0
          %s134 = sadd.s32 %s133, %s131
          %s135 = smul.addr %s134, 4
          %s136 = scalar_lea.vmem %s0, %s135
          %s137 = smul.u32 2, %s18
        $region16: #{dcsa_forward.15} parent=11 // pred_fallthru
          _
      $region12: #{dcsa_forward.15} parent=5 // pred_fallthru
        _
      %p138 = scmp.lt.s32.totalorder %s8, 16
      // Predicated region
      $region17: #{dcsa_forward.15} parent=5 // pred_check
        %p139 = pneg %p138
      $region18: #{dcsa_forward.15} parent=5 // pred_check_branch
        %141 = sbr.rel (%p139) target = $region20
      $region19: #{dcsa_forward.15} parent=5 // pred_region
        // Predicated region
        $region21: #{dcsa_forward.15} parent=19 // pred_check
          %p142 = pneg %p77
        $region22: #{dcsa_forward.15} parent=19 // pred_check_branch
          %144 = sbr.rel (%p142) target = $region24
        $region23: #{dcsa_forward.15} parent=19 // pred_region
          %s145 = sand.u32 %s67, 1
          %s146 = sand.u32 %s67, 1
          %s147 = smul.addr %s146, 64
          %s148 = scalar_lea.vmem [#allocation3], %s147
          %s149 = smul.u32 16, %s17
          %s150 = smul.addr %s149, 16
          %s151 = sadd.s32 %s16, %s150
          %s152 = smul.addr %s151, 4
          %s153 = scalar_lea.vmem %s1, %s152
          // Predicated region
          $region25: #{dcsa_forward.15} parent=23 // pred_check
            _
          $region26: #{dcsa_forward.15} parent=23 // pred_check_branch
            %155 = sbr.rel (0) target = $region28
          $region27: #{dcsa_forward.15} parent=23 // pred_region
            // Predicated region
            $region29: #{dcsa_forward.15} parent=27 // pred_check
              _
            $region30: #{dcsa_forward.15} parent=27 // pred_check_branch
              %157 = sbr.rel target = $region32
            $region31: #{dcsa_forward.15} parent=27 // pred_region
              // Predicated region
              $region44: #{dcsa_forward.15} parent=31 // pred_check
                _
              $region45: #{dcsa_forward.15} parent=31 // pred_check_branch
                %203 = sbr.rel (0) target = $region47
              $region46: #{dcsa_forward.15} parent=31 // pred_region
                loop: start=0, step=1, limit=1
                $region48: #{dcsa_forward.15} parent=46 // loop_pre_header
                  _
                $region49: #{dcsa_forward.15} parent=46 // loop_header
                  %s205 = sphi 0, %s209
                  %p206 = scmp.ge.s32.totalorder %s205, 1
                  %s210 = sphi %s153, %s153
                  %s211 = sphi %s148, %s148
                $region50: #{dcsa_forward.15} parent=46 // loop_header_branch
                  %208 = sbr.rel (%p206) target = $region54
                $region51: #{dcsa_forward.15} parent=46 // loop_body
                  _
                $region52: #{dcsa_forward.15} parent=46 // loop_footer
                  %s209 = sadd.s32 1, %s205
                $region53: #{dcsa_forward.15} parent=46 // loop_footer_branch
                  %204 = sbr.rel target = $region49
                $region54: #{dcsa_forward.15} parent=46 // loop_exit
                  _
                %s213 = ssub.s32 16, 1
                loop: start=0, step=1, limit=1
                $region55: #{dcsa_forward.15} parent=46 // loop_pre_header
                  _
                $region56: #{dcsa_forward.15} parent=46 // loop_header
                  %s215 = sphi 0, %s219
                  %p216 = scmp.ge.s32.totalorder %s215, 1
                  %s220 = sphi %s153, %s153
                  %s221 = sphi %s148, %s148
                $region57: #{dcsa_forward.15} parent=46 // loop_header_branch
                  %218 = sbr.rel (%p216) target = $region61
                $region58: #{dcsa_forward.15} parent=46 // loop_body
                  %v222 = vld [vmem:[%s220] sm:%s213]
                  %223 = vst [vmem:[%s221] sm:%s213] %v222
                  %v224 = vld [vmem:[%s220 + $0x40] sm:%s213]
                  %225 = vst [vmem:[%s221 + $0x4] sm:%s213] %v224
                  %v226 = vld [vmem:[%s220 + $0x80] sm:%s213]
                  %227 = vst [vmem:[%s221 + $0x8] sm:%s213] %v226
                  %v228 = vld [vmem:[%s220 + $0xc0] sm:%s213]
                  %229 = vst [vmem:[%s221 + $0xc] sm:%s213] %v228
                  %v230 = vld [vmem:[%s220 + $0x100] sm:%s213]
                  %231 = vst [vmem:[%s221 + $0x10] sm:%s213] %v230
                  %v232 = vld [vmem:[%s220 + $0x140] sm:%s213]
                  %233 = vst [vmem:[%s221 + $0x14] sm:%s213] %v232
                  %v234 = vld [vmem:[%s220 + $0x180] sm:%s213]
                  %235 = vst [vmem:[%s221 + $0x18] sm:%s213] %v234
                  %v236 = vld [vmem:[%s220 + $0x1c0] sm:%s213]
                  %237 = vst [vmem:[%s221 + $0x1c] sm:%s213] %v236
                  %v238 = vld [vmem:[%s220 + $0x200] sm:%s213]
                  %239 = vst [vmem:[%s221 + $0x20] sm:%s213] %v238
                  %v240 = vld [vmem:[%s220 + $0x240] sm:%s213]
                  %241 = vst [vmem:[%s221 + $0x24] sm:%s213] %v240
                  %v242 = vld [vmem:[%s220 + $0x280] sm:%s213]
                  %243 = vst [vmem:[%s221 + $0x28] sm:%s213] %v242
                  %v244 = vld [vmem:[%s220 + $0x2c0] sm:%s213]
                  %245 = vst [vmem:[%s221 + $0x2c] sm:%s213] %v244
                  %v246 = vld [vmem:[%s220 + $0x300] sm:%s213]
                  %247 = vst [vmem:[%s221 + $0x30] sm:%s213] %v246
                  %v248 = vld [vmem:[%s220 + $0x340] sm:%s213]
                  %249 = vst [vmem:[%s221 + $0x34] sm:%s213] %v248
                  %v250 = vld [vmem:[%s220 + $0x380] sm:%s213]
                  %251 = vst [vmem:[%s221 + $0x38] sm:%s213] %v250
                  %v252 = vld [vmem:[%s220 + $0x3c0] sm:%s213]
                  %253 = vst [vmem:[%s221 + $0x3c] sm:%s213] %v252
                $region59: #{dcsa_forward.15} parent=46 // loop_footer
                  %s219 = sadd.s32 1, %s215
                $region60: #{dcsa_forward.15} parent=46 // loop_footer_branch
                  %214 = sbr.rel target = $region56
                $region61: #{dcsa_forward.15} parent=46 // loop_exit
                  _
              $region47: #{dcsa_forward.15} parent=31 // pred_fallthru
                _
            $region32: #{dcsa_forward.15} parent=27 // pred_fallthru
              _
            // Predicated region
            $region33: #{dcsa_forward.15} parent=27 // pred_check
              _
            $region34: #{dcsa_forward.15} parent=27 // pred_check_branch
              %159 = sbr.rel (0) target = $region36
            $region35: #{dcsa_forward.15} parent=27 // pred_region
              %s161 = ssub.s32 16, 1
              loop: start=0, step=1, limit=1
              $region37: #{dcsa_forward.15} parent=35 // loop_pre_header
                _
              $region38: #{dcsa_forward.15} parent=35 // loop_header
                %s163 = sphi 0, %s167
                %p164 = scmp.ge.s32.totalorder %s163, 1
                %s168 = sphi %s153, %s153
                %s169 = sphi %s148, %s148
              $region39: #{dcsa_forward.15} parent=35 // loop_header_branch
                %166 = sbr.rel (%p164) target = $region43
              $region40: #{dcsa_forward.15} parent=35 // loop_body
                %v170 = vld [vmem:[%s168] sm:%s161]
                %171 = vst [vmem:[%s169] sm:%s161] %v170
                %v172 = vld [vmem:[%s168 + $0x40] sm:%s161]
                %173 = vst [vmem:[%s169 + $0x4] sm:%s161] %v172
                %v174 = vld [vmem:[%s168 + $0x80] sm:%s161]
                %175 = vst [vmem:[%s169 + $0x8] sm:%s161] %v174
                %v176 = vld [vmem:[%s168 + $0xc0] sm:%s161]
                %177 = vst [vmem:[%s169 + $0xc] sm:%s161] %v176
                %v178 = vld [vmem:[%s168 + $0x100] sm:%s161]
                %179 = vst [vmem:[%s169 + $0x10] sm:%s161] %v178
                %v180 = vld [vmem:[%s168 + $0x140] sm:%s161]
                %181 = vst [vmem:[%s169 + $0x14] sm:%s161] %v180
                %v182 = vld [vmem:[%s168 + $0x180] sm:%s161]
                %183 = vst [vmem:[%s169 + $0x18] sm:%s161] %v182
                %v184 = vld [vmem:[%s168 + $0x1c0] sm:%s161]
                %185 = vst [vmem:[%s169 + $0x1c] sm:%s161] %v184
                %v186 = vld [vmem:[%s168 + $0x200] sm:%s161]
                %187 = vst [vmem:[%s169 + $0x20] sm:%s161] %v186
                %v188 = vld [vmem:[%s168 + $0x240] sm:%s161]
                %189 = vst [vmem:[%s169 + $0x24] sm:%s161] %v188
                %v190 = vld [vmem:[%s168 + $0x280] sm:%s161]
                %191 = vst [vmem:[%s169 + $0x28] sm:%s161] %v190
                %v192 = vld [vmem:[%s168 + $0x2c0] sm:%s161]
                %193 = vst [vmem:[%s169 + $0x2c] sm:%s161] %v192
                %v194 = vld [vmem:[%s168 + $0x300] sm:%s161]
                %195 = vst [vmem:[%s169 + $0x30] sm:%s161] %v194
                %v196 = vld [vmem:[%s168 + $0x340] sm:%s161]
                %197 = vst [vmem:[%s169 + $0x34] sm:%s161] %v196
                %v198 = vld [vmem:[%s168 + $0x380] sm:%s161]
                %199 = vst [vmem:[%s169 + $0x38] sm:%s161] %v198
                %v200 = vld [vmem:[%s168 + $0x3c0] sm:%s161]
                %201 = vst [vmem:[%s169 + $0x3c] sm:%s161] %v200
              $region41: #{dcsa_forward.15} parent=35 // loop_footer
                %s167 = sadd.s32 1, %s163
              $region42: #{dcsa_forward.15} parent=35 // loop_footer_branch
                %162 = sbr.rel target = $region38
              $region43: #{dcsa_forward.15} parent=35 // loop_exit
                _
            $region36: #{dcsa_forward.15} parent=27 // pred_fallthru
              _
          $region28: #{dcsa_forward.15} parent=23 // pred_fallthru
            _
          %254 = vnop
        $region24: #{dcsa_forward.15} parent=19 // pred_fallthru
          _
      $region20: #{dcsa_forward.15} parent=5 // pred_fallthru
        _
      %p255 = scmp.le.s32.totalorder 1, %s8
      %p256 = scmp.lt.s32.totalorder %s8, 17
      %p257 = pnand %p255, %p256
      %p258 = pneg %p257
      // Predicated region
      $region62: #{dcsa_forward.15} parent=5 // pred_check
        _
      $region63: #{dcsa_forward.15} parent=5 // pred_check_branch
        %260 = sbr.rel (%p257) target = $region65
      $region64: #{dcsa_forward.15} parent=5 // pred_region
        %s261 = ssub.s32 %s8, 1
        %s262 = sand.u32 %s70, 1
        %s263 = sand.u32 %s70, 1
        %s264 = smul.addr %s263, 64
        %s265 = scalar_lea.vmem [#allocation3], %s264
        // Predicated region
        $region66: #{dcsa_forward.15} parent=64 // pred_check
          %p266 = pneg %p83
        $region67: #{dcsa_forward.15} parent=64 // pred_check_branch
          %268 = sbr.rel (%p266) target = $region69
        $region68: #{dcsa_forward.15} parent=64 // pred_region
          _
        $region69: #{dcsa_forward.15} parent=64 // pred_fallthru
          _
        %s269 = smul.u32 2, %s18
        %p270 = scmp.lt.s32.totalorder %s269, 1
        %s271 = scalar_select %p270, %s269, 1
        %p272 = scmp.lt.s32.totalorder %s20, 0
        %s273 = scalar_select %p272, %s20, 0
        %s274 = sadd.s32 %s273, %s271
        %s275 = smul.addr %s274, 4
        %s276 = scalar_lea.vmem %s0, %s275
        %p277 = pneg %p55
        %p278 = pneg %p52
        %s279 = sand.u32 %s70, 1
        %s280 = sand.u32 %s70, 1
        %s281 = smul.addr %s280, 64
        %s282 = scalar_lea.vmem [#allocation3], %s281
        %p283 = pneg %p83
        %p284 = pneg %p80
        %p285 = pneg %p111
        %p286 = pneg %p108
        %s287 = sand.u32 %s98, 1
        %s288 = sand.u32 %s98, 1
        %s289 = smul.addr %s288, 16
        %s290 = scalar_lea.vmem [#allocation4], %s289
        %s291 = smul.u32 2, %s18
        %p292 = scmp.lt.s32.totalorder %s291, 1
        %s293 = scalar_select %p292, %s291, 1
        %p294 = scmp.lt.s32.totalorder %s20, 0
        %s295 = scalar_select %p294, %s20, 0
        %s296 = sadd.s32 %s295, %s293
        %s297 = smul.addr %s296, 4
        %s298 = scalar_lea.vmem %s0, %s297
        %s299 = smul.u32 2, %s18
        %s300 = smul.u32 16, %s20
        %s301 = smul.u32 2, %s18
        %p303 = scmp.eq.s32.totalorder %s20, 0
        // Predicated region
        $region70: #{dcsa_forward.15} parent=64 // pred_check
          %p304 = pneg %p303
        $region71: #{dcsa_forward.15} parent=64 // pred_check_branch
          %306 = sbr.rel (%p304) target = $region73
        $region72: #{dcsa_forward.15} parent=64 // pred_region
          %307 = vst [vmem:[#allocation2] sm:$0xff] 0.0
          %308 = vst [vmem:[#allocation2 + $0x8] sm:$0xff] 0.0
        $region73: #{dcsa_forward.15} parent=64 // pred_fallthru
          _
        %v309 = vld [vmem:[#allocation2] sm:$0xff]
        %v310 = vld [vmem:[#allocation2 + $0x8] sm:$0xff]
        %v311 = vld [vmem:[%s298] sm:$0xf]
        %v312 = vld [vmem:[%s298 + $0x4] sm:$0xf]
        %v313 = vld [vmem:[%s265] sm:$0xf]
        %v314 = vld [vmem:[%s265 + $0x4] sm:$0xf]
        %v315 = vld [vmem:[%s265 + $0x8] sm:$0xf]
        %v316 = vld [vmem:[%s265 + $0xc] sm:$0xf]
        %v317 = vld [vmem:[%s265 + $0x10] sm:$0xf]
        %v318 = vld [vmem:[%s265 + $0x14] sm:$0xf]
        %v319 = vld [vmem:[%s265 + $0x18] sm:$0xf]
        %v320 = vld [vmem:[%s265 + $0x1c] sm:$0xf]
        %v321 = vld [vmem:[%s265 + $0x20] sm:$0xf]
        %v322 = vld [vmem:[%s265 + $0x24] sm:$0xf]
        %v323 = vld [vmem:[%s265 + $0x28] sm:$0xf]
        %v324 = vld [vmem:[%s265 + $0x2c] sm:$0xf]
        %v325 = vld [vmem:[%s265 + $0x30] sm:$0xf]
        %v326 = vld [vmem:[%s265 + $0x34] sm:$0xf]
        %v327 = vld [vmem:[%s265 + $0x38] sm:$0xf]
        %v328 = vld [vmem:[%s265 + $0x3c] sm:$0xf]
        %v331 = vunpack.c.l.b16 %v311
        %v332 = vunpack.c.l.b16 %v312
        %v333 = vpack.c.b16 %v332, %v331
        %v351 = vunpack.c.l.b16 %v313
        %v352 = vunpack.c.l.b16 %v314
        %v353 = vunpack.c.l.b16 %v315
        %v354 = vunpack.c.l.b16 %v316
        %v355 = vunpack.c.l.b16 %v317
        %v356 = vunpack.c.l.b16 %v318
        %v357 = vunpack.c.l.b16 %v319
        %v358 = vunpack.c.l.b16 %v320
        %v359 = vunpack.c.l.b16 %v321
        %v360 = vunpack.c.l.b16 %v322
        %v361 = vunpack.c.l.b16 %v323
        %v362 = vunpack.c.l.b16 %v324
        %v363 = vunpack.c.l.b16 %v325
        %v364 = vunpack.c.l.b16 %v326
        %v365 = vunpack.c.l.b16 %v327
        %v366 = vunpack.c.l.b16 %v328
        %v367 = vpack.c.b16 %v352, %v351
        %v368 = vpack.c.b16 %v354, %v353
        %v369 = vpack.c.b16 %v356, %v355
        %v370 = vpack.c.b16 %v358, %v357
        %v371 = vpack.c.b16 %v360, %v359
        %v372 = vpack.c.b16 %v362, %v361
        %v373 = vpack.c.b16 %v364, %v363
        %v374 = vpack.c.b16 %v366, %v365
        %383 = vmatprep.subr.bf16.mxu0 0
        %384 = vmatpush1.bf16.msra.mxu0 %v374
        %385 = vmatprep.subr.bf16.mxu0 0
        %386 = vmatpush1.bf16.msra.mxu0 %v373
        %387 = vmatprep.subr.bf16.mxu0 0
        %388 = vmatpush1.bf16.msra.mxu0 %v372
        %389 = vmatprep.subr.bf16.mxu0 0
        %390 = vmatpush1.bf16.msra.mxu0 %v371
        %391 = vmatprep.subr.bf16.mxu0 0
        %392 = vmatpush1.bf16.msra.mxu0 %v370
        %393 = vmatprep.subr.bf16.mxu0 0
        %394 = vmatpush1.bf16.msra.mxu0 %v369
        %395 = vmatprep.subr.bf16.mxu0 0
        %396 = vmatpush1.bf16.msra.mxu0 %v368
        %397 = vmatprep.subr.bf16.mxu0 0
        %398 = vmatpush1.bf16.msra.mxu0 %v367
        %399 = vmatprep.subr.bf16.mxu0 0
        %400 = vmatpush2.bf16.msra.mxu0 0
        %401 = vmatprep.subr.bf16.mxu0 0
        %402 = vmatpush2.bf16.msra.mxu0 0
        %403 = vmatprep.subr.bf16.mxu0 0
        %404 = vmatpush2.bf16.msra.mxu0 0
        %405 = vmatprep.subr.bf16.mxu0 0
        %406 = vmatpush2.bf16.msra.mxu0 0
        %407 = vmatprep.subr.bf16.mxu0 0
        %408 = vmatpush2.bf16.msra.mxu0 0
        %409 = vmatprep.subr.bf16.mxu0 0
        %410 = vmatpush2.bf16.msra.mxu0 0
        %411 = vmatprep.subr.bf16.mxu0 0
        %412 = vmatpush2.bf16.msra.mxu0 0
        %413 = vmatprep.subr.bf16.mxu0 0
        %414 = vmatpush2.bf16.msra.mxu0 0
        %415 = vmatprep.mubr.bf16.mxu0 0
        %416 = vmatmul.mubr.bf16.gmra.mxu0 %v333
        %v417 = vpop.f32.mrf.mxu0
        %v418 = vadd.f32 0.0, %v417
        %v419 = vpop.f32.mrf.mxu0
        %v420 = vpop.f32.mrf.mxu0
        %v421 = vadd.f32 0.0, %v420
        %v422 = vpop.f32.mrf.mxu0
        %423 = vdwg.mxu0
        %v424 = vadd.f32 %v309, %v418
        %v425 = vadd.f32 %v310, %v421
        %426 = vst [vmem:[#allocation2] sm:$0xff] %v424
        %427 = vst [vmem:[#allocation2 + $0x8] sm:$0xff] %v425
        // Predicated region
        $region74: #{dcsa_forward.15} parent=64 // pred_check
          %p428 = pneg %p303
        $region75: #{dcsa_forward.15} parent=64 // pred_check_branch
          %430 = sbr.rel (%p428) target = $region77
        $region76: #{dcsa_forward.15} parent=64 // pred_region
          %v431 = vld [vmem:[#allocation2] sm:$0xff]
          %v432 = vld [vmem:[#allocation2 + $0x8] sm:$0xff]
          %433 = vst [vmem:[%s290] sm:$0xff] %v431
          %434 = vst [vmem:[%s290 + $0x8] sm:$0xff] %v432
        $region77: #{dcsa_forward.15} parent=64 // pred_fallthru
          _
        %s435 = sand.u32 %s98, 1
        %s436 = sand.u32 %s98, 1
        %s437 = smul.addr %s436, 16
        %s438 = scalar_lea.vmem [#allocation4], %s437
        // Predicated region
        $region78: #{dcsa_forward.15} parent=64 // pred_check
          %p439 = pneg %p108
        $region79: #{dcsa_forward.15} parent=64 // pred_check_branch
          %441 = sbr.rel (%p439) target = $region81
        $region80: #{dcsa_forward.15} parent=64 // pred_region
          %s442 = smul.u32 2, %s18
          %s443 = smul.addr %s442, 16
          %s444 = sadd.s32 %s19, %s443
          %s445 = smul.addr %s444, 8
          %s446 = scalar_lea.vmem %s2, %s445
          // Predicated region
          $region82: #{dcsa_forward.15} parent=80 // pred_check
            _
          $region83: #{dcsa_forward.15} parent=80 // pred_check_branch
            %448 = sbr.rel (0) target = $region85
          $region84: #{dcsa_forward.15} parent=80 // pred_region
            // Predicated region
            $region86: #{dcsa_forward.15} parent=84 // pred_check
              _
            $region87: #{dcsa_forward.15} parent=84 // pred_check_branch
              %450 = sbr.rel (0) target = $region89
            $region88: #{dcsa_forward.15} parent=84 // pred_region
              // Predicated region
              $region101: #{dcsa_forward.15} parent=88 // pred_check
                _
              $region102: #{dcsa_forward.15} parent=88 // pred_check_branch
                %468 = sbr.rel (0) target = $region104
              $region103: #{dcsa_forward.15} parent=88 // pred_region
                loop: start=0, step=1, limit=1
                $region105: #{dcsa_forward.15} parent=103 // loop_pre_header
                  _
                $region106: #{dcsa_forward.15} parent=103 // loop_header
                  %s470 = sphi 0, %s474
                  %p471 = scmp.ge.s32.totalorder %s470, 1
                  %s475 = sphi %s438, %s438
                  %s476 = sphi %s446, %s446
                $region107: #{dcsa_forward.15} parent=103 // loop_header_branch
                  %473 = sbr.rel (%p471) target = $region111
                $region108: #{dcsa_forward.15} parent=103 // loop_body
                  %v477 = vld [vmem:[%s475] sm:$0xff]
                  %478 = vst [vmem:[%s476] sm:$0xff] %v477
                  %v479 = vld [vmem:[%s475 + $0x8] sm:$0xff]
                  %480 = vst [vmem:[%s476 + $0x80] sm:$0xff] %v479
                $region109: #{dcsa_forward.15} parent=103 // loop_footer
                  %s474 = sadd.s32 1, %s470
                $region110: #{dcsa_forward.15} parent=103 // loop_footer_branch
                  %469 = sbr.rel target = $region106
                $region111: #{dcsa_forward.15} parent=103 // loop_exit
                  _
              $region104: #{dcsa_forward.15} parent=88 // pred_fallthru
                _
              // Predicated region
              $region112: #{dcsa_forward.15} parent=88 // pred_check
                _
              $region113: #{dcsa_forward.15} parent=88 // pred_check_branch
                %482 = sbr.rel target = $region115
              $region114: #{dcsa_forward.15} parent=88 // pred_region
                _
              $region115: #{dcsa_forward.15} parent=88 // pred_fallthru
                _
            $region89: #{dcsa_forward.15} parent=84 // pred_fallthru
              _
            // Predicated region
            $region90: #{dcsa_forward.15} parent=84 // pred_check
              _
            $region91: #{dcsa_forward.15} parent=84 // pred_check_branch
              %452 = sbr.rel target = $region93
            $region92: #{dcsa_forward.15} parent=84 // pred_region
              %s454 = ssub.s32 256, 1
              loop: start=0, step=1, limit=1
              $region94: #{dcsa_forward.15} parent=92 // loop_pre_header
                _
              $region95: #{dcsa_forward.15} parent=92 // loop_header
                %s456 = sphi 0, %s460
                %p457 = scmp.ge.s32.totalorder %s456, 1
                %s461 = sphi %s438, %s438
                %s462 = sphi %s446, %s446
              $region96: #{dcsa_forward.15} parent=92 // loop_header_branch
                %459 = sbr.rel (%p457) target = $region100
              $region97: #{dcsa_forward.15} parent=92 // loop_body
                %v463 = vld [vmem:[%s461] sm:%s454]
                %464 = vst [vmem:[%s462] sm:%s454] %v463
                %v465 = vld [vmem:[%s461 + $0x8] sm:%s454]
                %466 = vst [vmem:[%s462 + $0x80] sm:%s454] %v465
              $region98: #{dcsa_forward.15} parent=92 // loop_footer
                %s460 = sadd.s32 1, %s456
              $region99: #{dcsa_forward.15} parent=92 // loop_footer_branch
                %455 = sbr.rel target = $region95
              $region100: #{dcsa_forward.15} parent=92 // loop_exit
                _
            $region93: #{dcsa_forward.15} parent=84 // pred_fallthru
              _
          $region85: #{dcsa_forward.15} parent=80 // pred_fallthru
            _
          %483 = vnop
        $region81: #{dcsa_forward.15} parent=64 // pred_fallthru
          _
      $region65: #{dcsa_forward.15} parent=5 // pred_fallthru
        _
      %p484 = scmp.le.s32.totalorder 2, %s8
      // Predicated region
      $region116: #{dcsa_forward.15} parent=5 // pred_check
        %p485 = pneg %p484
      $region117: #{dcsa_forward.15} parent=5 // pred_check_branch
        %487 = sbr.rel (%p485) target = $region119
      $region118: #{dcsa_forward.15} parent=5 // pred_region
        %s488 = ssub.s32 %s8, 2
        // Predicated region
        $region120: #{dcsa_forward.15} parent=118 // pred_check
          %p489 = pneg %p114
        $region121: #{dcsa_forward.15} parent=118 // pred_check_branch
          %491 = sbr.rel (%p489) target = $region123
        $region122: #{dcsa_forward.15} parent=118 // pred_region
          %s492 = sand.u32 %s99, 1
          %s493 = sand.u32 %s99, 1
          %s494 = smul.addr %s493, 16
          %s495 = scalar_lea.vmem [#allocation4], %s494
        $region123: #{dcsa_forward.15} parent=118 // pred_fallthru
          _
      $region119: #{dcsa_forward.15} parent=5 // pred_fallthru
        _
    $region6: #{dcsa_forward.15} parent=1 // loop_footer
      %s12 = sadd.s32 1, %s8
    $region7: #{dcsa_forward.15} parent=1 // loop_footer_branch
      %7 = sbr.rel target = $region3
    $region8: #{dcsa_forward.15} parent=1 // loop_exit
      _

// kernel: dcsa_forward.18
$region0: #{dcsa_forward.18}
  #allocation0 [shape = 'u32[]', space=smem, size = 0x4, offset = 0x4, fixed_abs, tag = 'smem constant byte address 0x4 - core index']
  #allocation1 [shape = 'u32[144,128]{1,0:T(1,128)}', space=vmem, size = 0x12000, scoped, tag = 'internal scratch']
  #allocation2 [shape = 'f32[64,128]{1,0:T(8,128)}', space=vmem, size = 0x8000, scoped, tag = 'scratch operand']
  %s0 = inlined_call_operand.vmem [shape: bf16[64,512], index: 0, kind: input, shape index: {}]
  %s1 = inlined_call_operand.vmem [shape: bf16[512,256], index: 1, kind: input, shape index: {}]
  %s2 = inlined_call_operand.vmem [shape: f32[64,256], index: 2, kind: output, shape index: {}]
  %s3 = sld [smem:[#allocation0]]
  $region124: #{dcsa_forward.18} parent=0
    _
  %s5 = ssub.s32 1, %s3
  %s6 = scalar_select 0, %s5, %s3
  $region1: #{dcsa_forward.18} parent=0
    #allocation3 [shape = 'u8[262144]{0}', space=vmem, size = 0x40000, scoped, tag = 'input window, operand 1']
    #allocation4 [shape = 'u8[65536]{0}', space=vmem, size = 0x10000, scoped, tag = 'output window, operand 0']
    loop: start=0, step=1, limit=4
    $region2: #{dcsa_forward.18} parent=1 // loop_pre_header
      _
    $region3: #{dcsa_forward.18} parent=1 // loop_header
      %s8 = sphi 0, %s12
      %p9 = scmp.ge.s32.totalorder %s8, 4
      %s15 = sphi 0, %s34
      %s16 = sphi 0, %s30
      %s17 = sphi 0, %s26
      %s18 = sphi 0, %s15
      %s19 = sphi 0, %s16
      %s20 = sphi 0, %s17
      %s21 = sphi 0, %s18
      %s22 = sphi 0, %s19
      %s23 = sphi 0, %s20
      %s39 = sphi 0, %s41
      %s42 = sphi 0, %s39
      %s43 = sphi 0, %s42
      %s59 = sphi 0, %s43
      %s67 = sphi 0, %s69
      %s70 = sphi 0, %s67
      %s71 = sphi 0, %s70
      %s87 = sphi 0, %s71
      %s95 = sphi 0, %s97
      %s98 = sphi 0, %s95
      %s99 = sphi 0, %s98
      %s115 = sphi 0, %s99
    $region4: #{dcsa_forward.18} parent=1 // loop_header_branch
      %11 = sbr.rel (%p9) target = $region8
    $region5: #{dcsa_forward.18} parent=1 // loop_body
      %s13 = ssub.s32 %s8, 1
      %s14 = ssub.s32 %s8, 2
      %s24 = sadd.s32 1, %s17
      %p25 = scmp.ge.s32.totalorder %s24, 1
      %s26 = scalar_select %p25, 0, %s24
      %s27 = sadd.s32 1, %s16
      %s28 = scalar_select %p25, %s27, %s16
      %p29 = scmp.ge.s32.totalorder %s28, 2
      %s30 = scalar_select %p29, 0, %s28
      %s31 = sadd.s32 1, %s15
      %s32 = scalar_select %p29, %s31, %s15
      %p33 = scmp.ge.s32.totalorder %s32, 1
      %s34 = scalar_select %p33, 0, %s32
      %s35 = ssub.s32 %s15, %s34
      %s36 = ssub.s32 %s17, %s26
      %s37 = sor.u32 %s35, %s36
      %p38 = scmp.eq.s32.totalorder %s37, 0
      %s40 = sadd.s32 %s39, 1
      %s41 = scalar_select %p38, %s39, %s40
      %p44 = pneg %p38
      %p45 = scmp.eq.s32.totalorder %s8, 1
      %p46 = por %p44, %p45
      %p47 = scmp.ne.s32.totalorder %s39, %s42
      %p48 = scmp.eq.s32.totalorder %s8, 0
      %p49 = por %p47, %p48
      %p50 = scmp.ne.s32.totalorder %s39, %s42
      %p51 = scmp.eq.s32.totalorder %s13, 1
      %p52 = por %p50, %p51
      %p53 = scmp.ne.s32.totalorder %s42, %s43
      %p54 = scmp.eq.s32.totalorder %s13, 0
      %p55 = por %p53, %p54
      %p56 = scmp.ne.s32.totalorder %s42, %s43
      %p57 = scmp.eq.s32.totalorder %s14, 1
      %p58 = por %p56, %p57
      %p60 = scmp.ne.s32.totalorder %s43, %s59
      %p61 = scmp.eq.s32.totalorder %s14, 0
      %p62 = por %p60, %p61
      %s63 = ssub.s32 %s17, %s26
      %s64 = ssub.s32 %s16, %s30
      %s65 = sor.u32 %s63, %s64
      %p66 = scmp.eq.s32.totalorder %s65, 0
      %s68 = sadd.s32 %s67, 1
      %s69 = scalar_select %p66, %s67, %s68
      %p72 = pneg %p66
      %p73 = scmp.eq.s32.totalorder %s8, 1
      %p74 = por %p72, %p73
      %p75 = scmp.ne.s32.totalorder %s67, %s70
      %p76 = scmp.eq.s32.totalorder %s8, 0
      %p77 = por %p75, %p76
      %p78 = scmp.ne.s32.totalorder %s67, %s70
      %p79 = scmp.eq.s32.totalorder %s13, 1
      %p80 = por %p78, %p79
      %p81 = scmp.ne.s32.totalorder %s70, %s71
      %p82 = scmp.eq.s32.totalorder %s13, 0
      %p83 = por %p81, %p82
      %p84 = scmp.ne.s32.totalorder %s70, %s71
      %p85 = scmp.eq.s32.totalorder %s14, 1
      %p86 = por %p84, %p85
      %p88 = scmp.ne.s32.totalorder %s71, %s87
      %p89 = scmp.eq.s32.totalorder %s14, 0
      %p90 = por %p88, %p89
      %s91 = ssub.s32 %s15, %s34
      %s92 = ssub.s32 %s16, %s30
      %s93 = sor.u32 %s91, %s92
      %p94 = scmp.eq.s32.totalorder %s93, 0
      %s96 = sadd.s32 %s95, 1
      %s97 = scalar_select %p94, %s95, %s96
      %p100 = pneg %p94
      %p101 = scmp.eq.s32.totalorder %s8, 1
      %p102 = por %p100, %p101
      %p103 = scmp.ne.s32.totalorder %s95, %s98
      %p104 = scmp.eq.s32.totalorder %s8, 0
      %p105 = por %p103, %p104
      %p106 = scmp.ne.s32.totalorder %s95, %s98
      %p107 = scmp.eq.s32.totalorder %s13, 1
      %p108 = por %p106, %p107
      %p109 = scmp.ne.s32.totalorder %s98, %s99
      %p110 = scmp.eq.s32.totalorder %s13, 0
      %p111 = por %p109, %p110
      %p112 = scmp.ne.s32.totalorder %s98, %s99
      %p113 = scmp.eq.s32.totalorder %s14, 1
      %p114 = por %p112, %p113
      %p116 = scmp.ne.s32.totalorder %s99, %s115
      %p117 = scmp.eq.s32.totalorder %s14, 0
      %p118 = por %p116, %p117
      %p119 = scmp.le.s32.totalorder 1, %s8
      %p120 = scmp.lt.s32.totalorder %s8, 3
      %p121 = pnand %p119, %p120
      %p122 = pneg %p121
      // Predicated region
      $region9: #{dcsa_forward.18} parent=5 // pred_check
        _
      $region10: #{dcsa_forward.18} parent=5 // pred_check_branch
        %124 = sbr.rel (%p121) target = $region12
      $region11: #{dcsa_forward.18} parent=5 // pred_region
        %s125 = ssub.s32 %s8, 1
        // Predicated region
        $region13: #{dcsa_forward.18} parent=11 // pred_check
          %p126 = pneg %p55
        $region14: #{dcsa_forward.18} parent=11 // pred_check_branch
          %128 = sbr.rel (%p126) target = $region16
        $region15: #{dcsa_forward.18} parent=11 // pred_region
          %s129 = smul.u32 8, %s18
          %s130 = smul.u32 4, %s20
          %p131 = scmp.lt.s32.totalorder %s129, 7
          %s132 = scalar_select %p131, %s129, 7
          %p133 = scmp.lt.s32.totalorder %s130, 3
          %s134 = scalar_select %p133, %s130, 3
          %s135 = smul.addr %s132, 4
          %s136 = sadd.s32 %s134, %s135
          %s137 = smul.addr %s136, 4
          %s138 = scalar_lea.vmem %s0, %s137
          %s139 = smul.u32 8, %s18
          %s140 = smul.u32 4, %s20
        $region16: #{dcsa_forward.18} parent=11 // pred_fallthru
          _
      $region12: #{dcsa_forward.18} parent=5 // pred_fallthru
        _
      %p141 = scmp.lt.s32.totalorder %s8, 2
      // Predicated region
      $region17: #{dcsa_forward.18} parent=5 // pred_check
        %p142 = pneg %p141
      $region18: #{dcsa_forward.18} parent=5 // pred_check_branch
        %144 = sbr.rel (%p142) target = $region20
      $region19: #{dcsa_forward.18} parent=5 // pred_region
        // Predicated region
        $region21: #{dcsa_forward.18} parent=19 // pred_check
          %p145 = pneg %p77
        $region22: #{dcsa_forward.18} parent=19 // pred_check_branch
          %147 = sbr.rel (%p145) target = $region24
        $region23: #{dcsa_forward.18} parent=19 // pred_region
          %s148 = sand.u32 %s67, 1
          %s149 = sand.u32 %s67, 1
          %s150 = smul.addr %s149, 256
          %s151 = scalar_lea.vmem [#allocation3], %s150
          %s152 = smul.u32 64, %s17
          %s153 = smul.addr %s152, 2
          %s154 = sadd.s32 %s16, %s153
          %s155 = smul.addr %s154, 4
          %s156 = scalar_lea.vmem %s1, %s155
          // Predicated region
          $region25: #{dcsa_forward.18} parent=23 // pred_check
            _
          $region26: #{dcsa_forward.18} parent=23 // pred_check_branch
            %158 = sbr.rel (0) target = $region28
          $region27: #{dcsa_forward.18} parent=23 // pred_region
            // Predicated region
            $region29: #{dcsa_forward.18} parent=27 // pred_check
              _
            $region30: #{dcsa_forward.18} parent=27 // pred_check_branch
              %160 = sbr.rel target = $region32
            $region31: #{dcsa_forward.18} parent=27 // pred_region
              // Predicated region
              $region44: #{dcsa_forward.18} parent=31 // pred_check
                _
              $region45: #{dcsa_forward.18} parent=31 // pred_check_branch
                %302 = sbr.rel (0) target = $region47
              $region46: #{dcsa_forward.18} parent=31 // pred_region
                loop: start=0, step=1, limit=1
                $region48: #{dcsa_forward.18} parent=46 // loop_pre_header
                  _
                $region49: #{dcsa_forward.18} parent=46 // loop_header
                  %s304 = sphi 0, %s308
                  %p305 = scmp.ge.s32.totalorder %s304, 1
                  %s309 = sphi %s156, %s156
                  %s310 = sphi %s151, %s151
                $region50: #{dcsa_forward.18} parent=46 // loop_header_branch
                  %307 = sbr.rel (%p305) target = $region54
                $region51: #{dcsa_forward.18} parent=46 // loop_body
                  _
                $region52: #{dcsa_forward.18} parent=46 // loop_footer
                  %s308 = sadd.s32 1, %s304
                $region53: #{dcsa_forward.18} parent=46 // loop_footer_branch
                  %303 = sbr.rel target = $region49
                $region54: #{dcsa_forward.18} parent=46 // loop_exit
                  _
                %s312 = ssub.s32 16, 1
                loop: start=0, step=1, limit=1
                $region55: #{dcsa_forward.18} parent=46 // loop_pre_header
                  _
                $region56: #{dcsa_forward.18} parent=46 // loop_header
                  %s314 = sphi 0, %s318
                  %p315 = scmp.ge.s32.totalorder %s314, 1
                  %s319 = sphi %s156, %s156
                  %s320 = sphi %s151, %s151
                $region57: #{dcsa_forward.18} parent=46 // loop_header_branch
                  %317 = sbr.rel (%p315) target = $region61
                $region58: #{dcsa_forward.18} parent=46 // loop_body
                  %v321 = vld [vmem:[%s319] sm:%s312]
                  %322 = vst [vmem:[%s320] sm:%s312] %v321
                  %v323 = vld [vmem:[%s319 + $0x8] sm:%s312]
                  %324 = vst [vmem:[%s320 + $0x4] sm:%s312] %v323
                  %v325 = vld [vmem:[%s319 + $0x10] sm:%s312]
                  %326 = vst [vmem:[%s320 + $0x8] sm:%s312] %v325
                  %v327 = vld [vmem:[%s319 + $0x18] sm:%s312]
                  %328 = vst [vmem:[%s320 + $0xc] sm:%s312] %v327
                  %v329 = vld [vmem:[%s319 + $0x20] sm:%s312]
                  %330 = vst [vmem:[%s320 + $0x10] sm:%s312] %v329
                  %v331 = vld [vmem:[%s319 + $0x28] sm:%s312]
                  %332 = vst [vmem:[%s320 + $0x14] sm:%s312] %v331
                  %v333 = vld [vmem:[%s319 + $0x30] sm:%s312]
                  %334 = vst [vmem:[%s320 + $0x18] sm:%s312] %v333
                  %v335 = vld [vmem:[%s319 + $0x38] sm:%s312]
                  %336 = vst [vmem:[%s320 + $0x1c] sm:%s312] %v335
                  %v337 = vld [vmem:[%s319 + $0x40] sm:%s312]
                  %338 = vst [vmem:[%s320 + $0x20] sm:%s312] %v337
                  %v339 = vld [vmem:[%s319 + $0x48] sm:%s312]
                  %340 = vst [vmem:[%s320 + $0x24] sm:%s312] %v339
                  %v341 = vld [vmem:[%s319 + $0x50] sm:%s312]
                  %342 = vst [vmem:[%s320 + $0x28] sm:%s312] %v341
                  %v343 = vld [vmem:[%s319 + $0x58] sm:%s312]
                  %344 = vst [vmem:[%s320 + $0x2c] sm:%s312] %v343
                  %v345 = vld [vmem:[%s319 + $0x60] sm:%s312]
                  %346 = vst [vmem:[%s320 + $0x30] sm:%s312] %v345
                  %v347 = vld [vmem:[%s319 + $0x68] sm:%s312]
                  %348 = vst [vmem:[%s320 + $0x34] sm:%s312] %v347
                  %v349 = vld [vmem:[%s319 + $0x70] sm:%s312]
                  %350 = vst [vmem:[%s320 + $0x38] sm:%s312] %v349
                  %v351 = vld [vmem:[%s319 + $0x78] sm:%s312]
                  %352 = vst [vmem:[%s320 + $0x3c] sm:%s312] %v351
                  %v353 = vld [vmem:[%s319 + $0x80] sm:%s312]
                  %354 = vst [vmem:[%s320 + $0x40] sm:%s312] %v353
                  %v355 = vld [vmem:[%s319 + $0x88] sm:%s312]
                  %356 = vst [vmem:[%s320 + $0x44] sm:%s312] %v355
                  %v357 = vld [vmem:[%s319 + $0x90] sm:%s312]
                  %358 = vst [vmem:[%s320 + $0x48] sm:%s312] %v357
                  %v359 = vld [vmem:[%s319 + $0x98] sm:%s312]
                  %360 = vst [vmem:[%s320 + $0x4c] sm:%s312] %v359
                  %v361 = vld [vmem:[%s319 + $0xa0] sm:%s312]
                  %362 = vst [vmem:[%s320 + $0x50] sm:%s312] %v361
                  %v363 = vld [vmem:[%s319 + $0xa8] sm:%s312]
                  %364 = vst [vmem:[%s320 + $0x54] sm:%s312] %v363
                  %v365 = vld [vmem:[%s319 + $0xb0] sm:%s312]
                  %366 = vst [vmem:[%s320 + $0x58] sm:%s312] %v365
                  %v367 = vld [vmem:[%s319 + $0xb8] sm:%s312]
                  %368 = vst [vmem:[%s320 + $0x5c] sm:%s312] %v367
                  %v369 = vld [vmem:[%s319 + $0xc0] sm:%s312]
                  %370 = vst [vmem:[%s320 + $0x60] sm:%s312] %v369
                  %v371 = vld [vmem:[%s319 + $0xc8] sm:%s312]
                  %372 = vst [vmem:[%s320 + $0x64] sm:%s312] %v371
                  %v373 = vld [vmem:[%s319 + $0xd0] sm:%s312]
                  %374 = vst [vmem:[%s320 + $0x68] sm:%s312] %v373
                  %v375 = vld [vmem:[%s319 + $0xd8] sm:%s312]
                  %376 = vst [vmem:[%s320 + $0x6c] sm:%s312] %v375
                  %v377 = vld [vmem:[%s319 + $0xe0] sm:%s312]
                  %378 = vst [vmem:[%s320 + $0x70] sm:%s312] %v377
                  %v379 = vld [vmem:[%s319 + $0xe8] sm:%s312]
                  %380 = vst [vmem:[%s320 + $0x74] sm:%s312] %v379
                  %v381 = vld [vmem:[%s319 + $0xf0] sm:%s312]
                  %382 = vst [vmem:[%s320 + $0x78] sm:%s312] %v381
                  %v383 = vld [vmem:[%s319 + $0xf8] sm:%s312]
                  %384 = vst [vmem:[%s320 + $0x7c] sm:%s312] %v383
                  %v385 = vld [vmem:[%s319 + $0x100] sm:%s312]
                  %386 = vst [vmem:[%s320 + $0x80] sm:%s312] %v385
                  %v387 = vld [vmem:[%s319 + $0x108] sm:%s312]
                  %388 = vst [vmem:[%s320 + $0x84] sm:%s312] %v387
                  %v389 = vld [vmem:[%s319 + $0x110] sm:%s312]
                  %390 = vst [vmem:[%s320 + $0x88] sm:%s312] %v389
                  %v391 = vld [vmem:[%s319 + $0x118] sm:%s312]
                  %392 = vst [vmem:[%s320 + $0x8c] sm:%s312] %v391
                  %v393 = vld [vmem:[%s319 + $0x120] sm:%s312]
                  %394 = vst [vmem:[%s320 + $0x90] sm:%s312] %v393
                  %v395 = vld [vmem:[%s319 + $0x128] sm:%s312]
                  %396 = vst [vmem:[%s320 + $0x94] sm:%s312] %v395
                  %v397 = vld [vmem:[%s319 + $0x130] sm:%s312]
                  %398 = vst [vmem:[%s320 + $0x98] sm:%s312] %v397
                  %v399 = vld [vmem:[%s319 + $0x138] sm:%s312]
                  %400 = vst [vmem:[%s320 + $0x9c] sm:%s312] %v399
                  %v401 = vld [vmem:[%s319 + $0x140] sm:%s312]
                  %402 = vst [vmem:[%s320 + $0xa0] sm:%s312] %v401
                  %v403 = vld [vmem:[%s319 + $0x148] sm:%s312]
                  %404 = vst [vmem:[%s320 + $0xa4] sm:%s312] %v403
                  %v405 = vld [vmem:[%s319 + $0x150] sm:%s312]
                  %406 = vst [vmem:[%s320 + $0xa8] sm:%s312] %v405
                  %v407 = vld [vmem:[%s319 + $0x158] sm:%s312]
                  %408 = vst [vmem:[%s320 + $0xac] sm:%s312] %v407
                  %v409 = vld [vmem:[%s319 + $0x160] sm:%s312]
                  %410 = vst [vmem:[%s320 + $0xb0] sm:%s312] %v409
                  %v411 = vld [vmem:[%s319 + $0x168] sm:%s312]
                  %412 = vst [vmem:[%s320 + $0xb4] sm:%s312] %v411
                  %v413 = vld [vmem:[%s319 + $0x170] sm:%s312]
                  %414 = vst [vmem:[%s320 + $0xb8] sm:%s312] %v413
                  %v415 = vld [vmem:[%s319 + $0x178] sm:%s312]
                  %416 = vst [vmem:[%s320 + $0xbc] sm:%s312] %v415
                  %v417 = vld [vmem:[%s319 + $0x180] sm:%s312]
                  %418 = vst [vmem:[%s320 + $0xc0] sm:%s312] %v417
                  %v419 = vld [vmem:[%s319 + $0x188] sm:%s312]
                  %420 = vst [vmem:[%s320 + $0xc4] sm:%s312] %v419
                  %v421 = vld [vmem:[%s319 + $0x190] sm:%s312]
                  %422 = vst [vmem:[%s320 + $0xc8] sm:%s312] %v421
                  %v423 = vld [vmem:[%s319 + $0x198] sm:%s312]
                  %424 = vst [vmem:[%s320 + $0xcc] sm:%s312] %v423
                  %v425 = vld [vmem:[%s319 + $0x1a0] sm:%s312]
                  %426 = vst [vmem:[%s320 + $0xd0] sm:%s312] %v425
                  %v427 = vld [vmem:[%s319 + $0x1a8] sm:%s312]
                  %428 = vst [vmem:[%s320 + $0xd4] sm:%s312] %v427
                  %v429 = vld [vmem:[%s319 + $0x1b0] sm:%s312]
                  %430 = vst [vmem:[%s320 + $0xd8] sm:%s312] %v429
                  %v431 = vld [vmem:[%s319 + $0x1b8] sm:%s312]
                  %432 = vst [vmem:[%s320 + $0xdc] sm:%s312] %v431
                  %v433 = vld [vmem:[%s319 + $0x1c0] sm:%s312]
                  %434 = vst [vmem:[%s320 + $0xe0] sm:%s312] %v433
                  %v435 = vld [vmem:[%s319 + $0x1c8] sm:%s312]
                  %436 = vst [vmem:[%s320 + $0xe4] sm:%s312] %v435
                  %v437 = vld [vmem:[%s319 + $0x1d0] sm:%s312]
                  %438 = vst [vmem:[%s320 + $0xe8] sm:%s312] %v437
                  %v439 = vld [vmem:[%s319 + $0x1d8] sm:%s312]
                  %440 = vst [vmem:[%s320 + $0xec] sm:%s312] %v439
                  %v441 = vld [vmem:[%s319 + $0x1e0] sm:%s312]
                  %442 = vst [vmem:[%s320 + $0xf0] sm:%s312] %v441
                  %v443 = vld [vmem:[%s319 + $0x1e8] sm:%s312]
                  %444 = vst [vmem:[%s320 + $0xf4] sm:%s312] %v443
                  %v445 = vld [vmem:[%s319 + $0x1f0] sm:%s312]
                  %446 = vst [vmem:[%s320 + $0xf8] sm:%s312] %v445
                  %v447 = vld [vmem:[%s319 + $0x1f8] sm:%s312]
                  %448 = vst [vmem:[%s320 + $0xfc] sm:%s312] %v447
                $region59: #{dcsa_forward.18} parent=46 // loop_footer
                  %s318 = sadd.s32 1, %s314
                $region60: #{dcsa_forward.18} parent=46 // loop_footer_branch
                  %313 = sbr.rel target = $region56
                $region61: #{dcsa_forward.18} parent=46 // loop_exit
                  _
              $region47: #{dcsa_forward.18} parent=31 // pred_fallthru
                _
            $region32: #{dcsa_forward.18} parent=27 // pred_fallthru
              _
            // Predicated region
            $region33: #{dcsa_forward.18} parent=27 // pred_check
              _
            $region34: #{dcsa_forward.18} parent=27 // pred_check_branch
              %162 = sbr.rel (0) target = $region36
            $region35: #{dcsa_forward.18} parent=27 // pred_region
              %s164 = ssub.s32 16, 1
              loop: start=0, step=1, limit=1
              $region37: #{dcsa_forward.18} parent=35 // loop_pre_header
                _
              $region38: #{dcsa_forward.18} parent=35 // loop_header
                %s166 = sphi 0, %s170
                %p167 = scmp.ge.s32.totalorder %s166, 1
                %s171 = sphi %s156, %s156
                %s172 = sphi %s151, %s151
              $region39: #{dcsa_forward.18} parent=35 // loop_header_branch
                %169 = sbr.rel (%p167) target = $region43
              $region40: #{dcsa_forward.18} parent=35 // loop_body
                %v173 = vld [vmem:[%s171] sm:%s164]
                %174 = vst [vmem:[%s172] sm:%s164] %v173
                %v175 = vld [vmem:[%s171 + $0x8] sm:%s164]
                %176 = vst [vmem:[%s172 + $0x4] sm:%s164] %v175
                %v177 = vld [vmem:[%s171 + $0x10] sm:%s164]
                %178 = vst [vmem:[%s172 + $0x8] sm:%s164] %v177
                %v179 = vld [vmem:[%s171 + $0x18] sm:%s164]
                %180 = vst [vmem:[%s172 + $0xc] sm:%s164] %v179
                %v181 = vld [vmem:[%s171 + $0x20] sm:%s164]
                %182 = vst [vmem:[%s172 + $0x10] sm:%s164] %v181
                %v183 = vld [vmem:[%s171 + $0x28] sm:%s164]
                %184 = vst [vmem:[%s172 + $0x14] sm:%s164] %v183
                %v185 = vld [vmem:[%s171 + $0x30] sm:%s164]
                %186 = vst [vmem:[%s172 + $0x18] sm:%s164] %v185
                %v187 = vld [vmem:[%s171 + $0x38] sm:%s164]
                %188 = vst [vmem:[%s172 + $0x1c] sm:%s164] %v187
                %v189 = vld [vmem:[%s171 + $0x40] sm:%s164]
                %190 = vst [vmem:[%s172 + $0x20] sm:%s164] %v189
                %v191 = vld [vmem:[%s171 + $0x48] sm:%s164]
                %192 = vst [vmem:[%s172 + $0x24] sm:%s164] %v191
                %v193 = vld [vmem:[%s171 + $0x50] sm:%s164]
                %194 = vst [vmem:[%s172 + $0x28] sm:%s164] %v193
                %v195 = vld [vmem:[%s171 + $0x58] sm:%s164]
                %196 = vst [vmem:[%s172 + $0x2c] sm:%s164] %v195
                %v197 = vld [vmem:[%s171 + $0x60] sm:%s164]
                %198 = vst [vmem:[%s172 + $0x30] sm:%s164] %v197
                %v199 = vld [vmem:[%s171 + $0x68] sm:%s164]
                %200 = vst [vmem:[%s172 + $0x34] sm:%s164] %v199
                %v201 = vld [vmem:[%s171 + $0x70] sm:%s164]
                %202 = vst [vmem:[%s172 + $0x38] sm:%s164] %v201
                %v203 = vld [vmem:[%s171 + $0x78] sm:%s164]
                %204 = vst [vmem:[%s172 + $0x3c] sm:%s164] %v203
                %v205 = vld [vmem:[%s171 + $0x80] sm:%s164]
                %206 = vst [vmem:[%s172 + $0x40] sm:%s164] %v205
                %v207 = vld [vmem:[%s171 + $0x88] sm:%s164]
                %208 = vst [vmem:[%s172 + $0x44] sm:%s164] %v207
                %v209 = vld [vmem:[%s171 + $0x90] sm:%s164]
                %210 = vst [vmem:[%s172 + $0x48] sm:%s164] %v209
                %v211 = vld [vmem:[%s171 + $0x98] sm:%s164]
                %212 = vst [vmem:[%s172 + $0x4c] sm:%s164] %v211
                %v213 = vld [vmem:[%s171 + $0xa0] sm:%s164]
                %214 = vst [vmem:[%s172 + $0x50] sm:%s164] %v213
                %v215 = vld [vmem:[%s171 + $0xa8] sm:%s164]
                %216 = vst [vmem:[%s172 + $0x54] sm:%s164] %v215
                %v217 = vld [vmem:[%s171 + $0xb0] sm:%s164]
                %218 = vst [vmem:[%s172 + $0x58] sm:%s164] %v217
                %v219 = vld [vmem:[%s171 + $0xb8] sm:%s164]
                %220 = vst [vmem:[%s172 + $0x5c] sm:%s164] %v219
                %v221 = vld [vmem:[%s171 + $0xc0] sm:%s164]
                %222 = vst [vmem:[%s172 + $0x60] sm:%s164] %v221
                %v223 = vld [vmem:[%s171 + $0xc8] sm:%s164]
                %224 = vst [vmem:[%s172 + $0x64] sm:%s164] %v223
                %v225 = vld [vmem:[%s171 + $0xd0] sm:%s164]
                %226 = vst [vmem:[%s172 + $0x68] sm:%s164] %v225
                %v227 = vld [vmem:[%s171 + $0xd8] sm:%s164]
                %228 = vst [vmem:[%s172 + $0x6c] sm:%s164] %v227
                %v229 = vld [vmem:[%s171 + $0xe0] sm:%s164]
                %230 = vst [vmem:[%s172 + $0x70] sm:%s164] %v229
                %v231 = vld [vmem:[%s171 + $0xe8] sm:%s164]
                %232 = vst [vmem:[%s172 + $0x74] sm:%s164] %v231
                %v233 = vld [vmem:[%s171 + $0xf0] sm:%s164]
                %234 = vst [vmem:[%s172 + $0x78] sm:%s164] %v233
                %v235 = vld [vmem:[%s171 + $0xf8] sm:%s164]
                %236 = vst [vmem:[%s172 + $0x7c] sm:%s164] %v235
                %v237 = vld [vmem:[%s171 + $0x100] sm:%s164]
                %238 = vst [vmem:[%s172 + $0x80] sm:%s164] %v237
                %v239 = vld [vmem:[%s171 + $0x108] sm:%s164]
                %240 = vst [vmem:[%s172 + $0x84] sm:%s164] %v239
                %v241 = vld [vmem:[%s171 + $0x110] sm:%s164]
                %242 = vst [vmem:[%s172 + $0x88] sm:%s164] %v241
                %v243 = vld [vmem:[%s171 + $0x118] sm:%s164]
                %244 = vst [vmem:[%s172 + $0x8c] sm:%s164] %v243
                %v245 = vld [vmem:[%s171 + $0x120] sm:%s164]
                %246 = vst [vmem:[%s172 + $0x90] sm:%s164] %v245
                %v247 = vld [vmem:[%s171 + $0x128] sm:%s164]
                %248 = vst [vmem:[%s172 + $0x94] sm:%s164] %v247
                %v249 = vld [vmem:[%s171 + $0x130] sm:%s164]
                %250 = vst [vmem:[%s172 + $0x98] sm:%s164] %v249
                %v251 = vld [vmem:[%s171 + $0x138] sm:%s164]
                %252 = vst [vmem:[%s172 + $0x9c] sm:%s164] %v251
                %v253 = vld [vmem:[%s171 + $0x140] sm:%s164]
                %254 = vst [vmem:[%s172 + $0xa0] sm:%s164] %v253
                %v255 = vld [vmem:[%s171 + $0x148] sm:%s164]
                %256 = vst [vmem:[%s172 + $0xa4] sm:%s164] %v255
                %v257 = vld [vmem:[%s171 + $0x150] sm:%s164]
                %258 = vst [vmem:[%s172 + $0xa8] sm:%s164] %v257
                %v259 = vld [vmem:[%s171 + $0x158] sm:%s164]
                %260 = vst [vmem:[%s172 + $0xac] sm:%s164] %v259
                %v261 = vld [vmem:[%s171 + $0x160] sm:%s164]
                %262 = vst [vmem:[%s172 + $0xb0] sm:%s164] %v261
                %v263 = vld [vmem:[%s171 + $0x168] sm:%s164]
                %264 = vst [vmem:[%s172 + $0xb4] sm:%s164] %v263
                %v265 = vld [vmem:[%s171 + $0x170] sm:%s164]
                %266 = vst [vmem:[%s172 + $0xb8] sm:%s164] %v265
                %v267 = vld [vmem:[%s171 + $0x178] sm:%s164]
                %268 = vst [vmem:[%s172 + $0xbc] sm:%s164] %v267
                %v269 = vld [vmem:[%s171 + $0x180] sm:%s164]
                %270 = vst [vmem:[%s172 + $0xc0] sm:%s164] %v269
                %v271 = vld [vmem:[%s171 + $0x188] sm:%s164]
                %272 = vst [vmem:[%s172 + $0xc4] sm:%s164] %v271
                %v273 = vld [vmem:[%s171 + $0x190] sm:%s164]
                %274 = vst [vmem:[%s172 + $0xc8] sm:%s164] %v273
                %v275 = vld [vmem:[%s171 + $0x198] sm:%s164]
                %276 = vst [vmem:[%s172 + $0xcc] sm:%s164] %v275
                %v277 = vld [vmem:[%s171 + $0x1a0] sm:%s164]
                %278 = vst [vmem:[%s172 + $0xd0] sm:%s164] %v277
                %v279 = vld [vmem:[%s171 + $0x1a8] sm:%s164]
                %280 = vst [vmem:[%s172 + $0xd4] sm:%s164] %v279
                %v281 = vld [vmem:[%s171 + $0x1b0] sm:%s164]
                %282 = vst [vmem:[%s172 + $0xd8] sm:%s164] %v281
                %v283 = vld [vmem:[%s171 + $0x1b8] sm:%s164]
                %284 = vst [vmem:[%s172 + $0xdc] sm:%s164] %v283
                %v285 = vld [vmem:[%s171 + $0x1c0] sm:%s164]
                %286 = vst [vmem:[%s172 + $0xe0] sm:%s164] %v285
                %v287 = vld [vmem:[%s171 + $0x1c8] sm:%s164]
                %288 = vst [vmem:[%s172 + $0xe4] sm:%s164] %v287
                %v289 = vld [vmem:[%s171 + $0x1d0] sm:%s164]
                %290 = vst [vmem:[%s172 + $0xe8] sm:%s164] %v289
                %v291 = vld [vmem:[%s171 + $0x1d8] sm:%s164]
                %292 = vst [vmem:[%s172 + $0xec] sm:%s164] %v291
                %v293 = vld [vmem:[%s171 + $0x1e0] sm:%s164]
                %294 = vst [vmem:[%s172 + $0xf0] sm:%s164] %v293
                %v295 = vld [vmem:[%s171 + $0x1e8] sm:%s164]
                %296 = vst [vmem:[%s172 + $0xf4] sm:%s164] %v295
                %v297 = vld [vmem:[%s171 + $0x1f0] sm:%s164]
                %298 = vst [vmem:[%s172 + $0xf8] sm:%s164] %v297
                %v299 = vld [vmem:[%s171 + $0x1f8] sm:%s164]
                %300 = vst [vmem:[%s172 + $0xfc] sm:%s164] %v299
              $region41: #{dcsa_forward.18} parent=35 // loop_footer
                %s170 = sadd.s32 1, %s166
              $region42: #{dcsa_forward.18} parent=35 // loop_footer_branch
                %165 = sbr.rel target = $region38
              $region43: #{dcsa_forward.18} parent=35 // loop_exit
                _
            $region36: #{dcsa_forward.18} parent=27 // pred_fallthru
              _
          $region28: #{dcsa_forward.18} parent=23 // pred_fallthru
            _
          %449 = vnop
        $region24: #{dcsa_forward.18} parent=19 // pred_fallthru
          _
      $region20: #{dcsa_forward.18} parent=5 // pred_fallthru
        _
      %p450 = scmp.le.s32.totalorder 1, %s8
      %p451 = scmp.lt.s32.totalorder %s8, 3
      %p452 = pnand %p450, %p451
      %p453 = pneg %p452
      // Predicated region
      $region62: #{dcsa_forward.18} parent=5 // pred_check
        _
      $region63: #{dcsa_forward.18} parent=5 // pred_check_branch
        %455 = sbr.rel (%p452) target = $region65
      $region64: #{dcsa_forward.18} parent=5 // pred_region
        %s456 = ssub.s32 %s8, 1
        %s457 = sand.u32 %s70, 1
        %s458 = sand.u32 %s70, 1
        %s459 = smul.addr %s458, 256
        %s460 = scalar_lea.vmem [#allocation3], %s459
        // Predicated region
        $region66: #{dcsa_forward.18} parent=64 // pred_check
          %p461 = pneg %p83
        $region67: #{dcsa_forward.18} parent=64 // pred_check_branch
          %463 = sbr.rel (%p461) target = $region69
        $region68: #{dcsa_forward.18} parent=64 // pred_region
          _
        $region69: #{dcsa_forward.18} parent=64 // pred_fallthru
          _
        %s464 = smul.u32 8, %s18
        %s465 = smul.u32 4, %s20
        %p466 = scmp.lt.s32.totalorder %s464, 7
        %s467 = scalar_select %p466, %s464, 7
        %p468 = scmp.lt.s32.totalorder %s465, 3
        %s469 = scalar_select %p468, %s465, 3
        %s470 = smul.addr %s467, 4
        %s471 = sadd.s32 %s469, %s470
        %s472 = smul.addr %s471, 4
        %s473 = scalar_lea.vmem %s0, %s472
        %p474 = pneg %p55
        %p475 = pneg %p52
        %s476 = sand.u32 %s70, 1
        %s477 = sand.u32 %s70, 1
        %s478 = smul.addr %s477, 256
        %s479 = scalar_lea.vmem [#allocation3], %s478
        %p480 = pneg %p83
        %p481 = pneg %p80
        %p482 = pneg %p111
        %p483 = pneg %p108
        %s484 = sand.u32 %s98, 1
        %s485 = sand.u32 %s98, 1
        %s486 = smul.addr %s485, 64
        %s487 = scalar_lea.vmem [#allocation4], %s486
        %s488 = smul.u32 8, %s18
        %s489 = smul.u32 4, %s20
        %p490 = scmp.lt.s32.totalorder %s488, 7
        %s491 = scalar_select %p490, %s488, 7
        %p492 = scmp.lt.s32.totalorder %s489, 3
        %s493 = scalar_select %p492, %s489, 3
        %s494 = smul.addr %s491, 4
        %s495 = sadd.s32 %s493, %s494
        %s496 = smul.addr %s495, 4
        %s497 = scalar_lea.vmem %s0, %s496
        %s498 = smul.u32 8, %s18
        %s499 = smul.u32 4, %s20
        %s500 = smul.u32 64, %s20
        %s501 = smul.u32 8, %s18
        %p503 = scmp.eq.s32.totalorder %s20, 0
        // Predicated region
        $region70: #{dcsa_forward.18} parent=64 // pred_check
          %p504 = pneg %p503
        $region71: #{dcsa_forward.18} parent=64 // pred_check_branch
          %506 = sbr.rel (%p504) target = $region73
        $region72: #{dcsa_forward.18} parent=64 // pred_region
          %507 = vst [vmem:[#allocation2] sm:$0xff] 0.0
          %508 = vst [vmem:[#allocation2 + $0x8] sm:$0xff] 0.0
          %509 = vst [vmem:[#allocation2 + $0x10] sm:$0xff] 0.0
          %510 = vst [vmem:[#allocation2 + $0x18] sm:$0xff] 0.0
          %511 = vst [vmem:[#allocation2 + $0x20] sm:$0xff] 0.0
          %512 = vst [vmem:[#allocation2 + $0x28] sm:$0xff] 0.0
          %513 = vst [vmem:[#allocation2 + $0x30] sm:$0xff] 0.0
          %514 = vst [vmem:[#allocation2 + $0x38] sm:$0xff] 0.0
        $region73: #{dcsa_forward.18} parent=64 // pred_fallthru
          _
        %v515 = vld [vmem:[#allocation2] sm:$0xff]
        %v516 = vld [vmem:[#allocation2 + $0x8] sm:$0xff]
        %v517 = vld [vmem:[#allocation2 + $0x10] sm:$0xff]
        %v518 = vld [vmem:[#allocation2 + $0x18] sm:$0xff]
        %v519 = vld [vmem:[#allocation2 + $0x20] sm:$0xff]
        %v520 = vld [vmem:[#allocation2 + $0x28] sm:$0xff]
        %v521 = vld [vmem:[#allocation2 + $0x30] sm:$0xff]
        %v522 = vld [vmem:[#allocation2 + $0x38] sm:$0xff]
        %v523 = vld [vmem:[%s497] sm:$0xff]
        %v524 = vld [vmem:[%s497 + $0x8] sm:$0xff]
        %v525 = vld [vmem:[%s497 + $0x10] sm:$0xff]
        %v526 = vld [vmem:[%s497 + $0x18] sm:$0xff]
        %v527 = vld [vmem:[%s497 + $0x20] sm:$0xff]
        %v528 = vld [vmem:[%s497 + $0x28] sm:$0xff]
        %v529 = vld [vmem:[%s497 + $0x30] sm:$0xff]
        %v530 = vld [vmem:[%s497 + $0x38] sm:$0xff]
        %v531 = vld [vmem:[%s497 + $0x40] sm:$0xff]
        %v532 = vld [vmem:[%s497 + $0x48] sm:$0xff]
        %v533 = vld [vmem:[%s497 + $0x50] sm:$0xff]
        %v534 = vld [vmem:[%s497 + $0x58] sm:$0xff]
        %v535 = vld [vmem:[%s497 + $0x60] sm:$0xff]
        %v536 = vld [vmem:[%s497 + $0x68] sm:$0xff]
        %v537 = vld [vmem:[%s497 + $0x70] sm:$0xff]
        %v538 = vld [vmem:[%s497 + $0x78] sm:$0xff]
        %v539 = vld [vmem:[%s460] sm:$0xf]
        %v540 = vld [vmem:[%s460 + $0x4] sm:$0xf]
        %v541 = vld [vmem:[%s460 + $0x8] sm:$0xf]
        %v542 = vld [vmem:[%s460 + $0xc] sm:$0xf]
        %v543 = vld [vmem:[%s460 + $0x10] sm:$0xf]
        %v544 = vld [vmem:[%s460 + $0x14] sm:$0xf]
        %v545 = vld [vmem:[%s460 + $0x18] sm:$0xf]
        %v546 = vld [vmem:[%s460 + $0x1c] sm:$0xf]
        %v547 = vld [vmem:[%s460 + $0x20] sm:$0xf]
        %v548 = vld [vmem:[%s460 + $0x24] sm:$0xf]
        %v549 = vld [vmem:[%s460 + $0x28] sm:$0xf]
        %v550 = vld [vmem:[%s460 + $0x2c] sm:$0xf]
        %v551 = vld [vmem:[%s460 + $0x30] sm:$0xf]
        %v552 = vld [vmem:[%s460 + $0x34] sm:$0xf]
        %v553 = vld [vmem:[%s460 + $0x38] sm:$0xf]
        %v554 = vld [vmem:[%s460 + $0x3c] sm:$0xf]
        %v555 = vld [vmem:[%s460 + $0x40] sm:$0xf]
        %v556 = vld [vmem:[%s460 + $0x44] sm:$0xf]
        %v557 = vld [vmem:[%s460 + $0x48] sm:$0xf]
        %v558 = vld [vmem:[%s460 + $0x4c] sm:$0xf]
        %v559 = vld [vmem:[%s460 + $0x50] sm:$0xf]
        %v560 = vld [vmem:[%s460 + $0x54] sm:$0xf]
        %v561 = vld [vmem:[%s460 + $0x58] sm:$0xf]
        %v562 = vld [vmem:[%s460 + $0x5c] sm:$0xf]
        %v563 = vld [vmem:[%s460 + $0x60] sm:$0xf]
        %v564 = vld [vmem:[%s460 + $0x64] sm:$0xf]
        %v565 = vld [vmem:[%s460 + $0x68] sm:$0xf]
        %v566 = vld [vmem:[%s460 + $0x6c] sm:$0xf]
        %v567 = vld [vmem:[%s460 + $0x70] sm:$0xf]
        %v568 = vld [vmem:[%s460 + $0x74] sm:$0xf]
        %v569 = vld [vmem:[%s460 + $0x78] sm:$0xf]
        %v570 = vld [vmem:[%s460 + $0x7c] sm:$0xf]
        %v571 = vld [vmem:[%s460 + $0x80] sm:$0xf]
        %v572 = vld [vmem:[%s460 + $0x84] sm:$0xf]
        %v573 = vld [vmem:[%s460 + $0x88] sm:$0xf]
        %v574 = vld [vmem:[%s460 + $0x8c] sm:$0xf]
        %v575 = vld [vmem:[%s460 + $0x90] sm:$0xf]
        %v576 = vld [vmem:[%s460 + $0x94] sm:$0xf]
        %v577 = vld [vmem:[%s460 + $0x98] sm:$0xf]
        %v578 = vld [vmem:[%s460 + $0x9c] sm:$0xf]
        %v579 = vld [vmem:[%s460 + $0xa0] sm:$0xf]
        %v580 = vld [vmem:[%s460 + $0xa4] sm:$0xf]
        %v581 = vld [vmem:[%s460 + $0xa8] sm:$0xf]
        %v582 = vld [vmem:[%s460 + $0xac] sm:$0xf]
        %v583 = vld [vmem:[%s460 + $0xb0] sm:$0xf]
        %v584 = vld [vmem:[%s460 + $0xb4] sm:$0xf]
        %v585 = vld [vmem:[%s460 + $0xb8] sm:$0xf]
        %v586 = vld [vmem:[%s460 + $0xbc] sm:$0xf]
        %v587 = vld [vmem:[%s460 + $0xc0] sm:$0xf]
        %v588 = vld [vmem:[%s460 + $0xc4] sm:$0xf]
        %v589 = vld [vmem:[%s460 + $0xc8] sm:$0xf]
        %v590 = vld [vmem:[%s460 + $0xcc] sm:$0xf]
        %v591 = vld [vmem:[%s460 + $0xd0] sm:$0xf]
        %v592 = vld [vmem:[%s460 + $0xd4] sm:$0xf]
        %v593 = vld [vmem:[%s460 + $0xd8] sm:$0xf]
        %v594 = vld [vmem:[%s460 + $0xdc] sm:$0xf]
        %v595 = vld [vmem:[%s460 + $0xe0] sm:$0xf]
        %v596 = vld [vmem:[%s460 + $0xe4] sm:$0xf]
        %v597 = vld [vmem:[%s460 + $0xe8] sm:$0xf]
        %v598 = vld [vmem:[%s460 + $0xec] sm:$0xf]
        %v599 = vld [vmem:[%s460 + $0xf0] sm:$0xf]
        %v600 = vld [vmem:[%s460 + $0xf4] sm:$0xf]
        %v601 = vld [vmem:[%s460 + $0xf8] sm:$0xf]
        %v602 = vld [vmem:[%s460 + $0xfc] sm:$0xf]
        %v619 = vunpack.c.l.b16 %v523
        %v620 = vunpack.c.h.b16 %v523
        %v621 = vunpack.c.l.b16 %v524
        %v622 = vunpack.c.h.b16 %v524
        %v623 = vunpack.c.l.b16 %v525
        %v624 = vunpack.c.h.b16 %v525
        %v625 = vunpack.c.l.b16 %v526
        %v626 = vunpack.c.h.b16 %v526
        %v627 = vunpack.c.l.b16 %v527
        %v628 = vunpack.c.h.b16 %v527
        %v629 = vunpack.c.l.b16 %v528
        %v630 = vunpack.c.h.b16 %v528
        %v631 = vunpack.c.l.b16 %v529
        %v632 = vunpack.c.h.b16 %v529
        %v633 = vunpack.c.l.b16 %v530
        %v634 = vunpack.c.h.b16 %v530
        %v635 = vunpack.c.l.b16 %v531
        %v636 = vunpack.c.h.b16 %v531
        %v637 = vunpack.c.l.b16 %v532
        %v638 = vunpack.c.h.b16 %v532
        %v639 = vunpack.c.l.b16 %v533
        %v640 = vunpack.c.h.b16 %v533
        %v641 = vunpack.c.l.b16 %v534
        %v642 = vunpack.c.h.b16 %v534
        %v643 = vunpack.c.l.b16 %v535
        %v644 = vunpack.c.h.b16 %v535
        %v645 = vunpack.c.l.b16 %v536
        %v646 = vunpack.c.h.b16 %v536
        %v647 = vunpack.c.l.b16 %v537
        %v648 = vunpack.c.h.b16 %v537
        %v649 = vunpack.c.l.b16 %v538
        %v650 = vunpack.c.h.b16 %v538
        %v651 = vpack.c.b16 %v623, %v619
        %v652 = vpack.c.b16 %v624, %v620
        %v653 = vpack.c.b16 %v625, %v621
        %v654 = vpack.c.b16 %v626, %v622
        %v655 = vpack.c.b16 %v631, %v627
        %v656 = vpack.c.b16 %v632, %v628
        %v657 = vpack.c.b16 %v633, %v629
        %v658 = vpack.c.b16 %v634, %v630
        %v659 = vpack.c.b16 %v639, %v635
        %v660 = vpack.c.b16 %v640, %v636
        %v661 = vpack.c.b16 %v641, %v637
        %v662 = vpack.c.b16 %v642, %v638
        %v663 = vpack.c.b16 %v647, %v643
        %v664 = vpack.c.b16 %v648, %v644
        %v665 = vpack.c.b16 %v649, %v645
        %v666 = vpack.c.b16 %v650, %v646
        %v747 = vunpack.c.l.b16 %v539
        %v748 = vunpack.c.l.b16 %v540
        %v749 = vunpack.c.l.b16 %v541
        %v750 = vunpack.c.l.b16 %v542
        %v751 = vunpack.c.l.b16 %v543
        %v752 = vunpack.c.l.b16 %v544
        %v753 = vunpack.c.l.b16 %v545
        %v754 = vunpack.c.l.b16 %v546
        %v755 = vunpack.c.l.b16 %v547
        %v756 = vunpack.c.l.b16 %v548
        %v757 = vunpack.c.l.b16 %v549
        %v758 = vunpack.c.l.b16 %v550
        %v759 = vunpack.c.l.b16 %v551
        %v760 = vunpack.c.l.b16 %v552
        %v761 = vunpack.c.l.b16 %v553
        %v762 = vunpack.c.l.b16 %v554
        %v763 = vunpack.c.l.b16 %v555
        %v764 = vunpack.c.l.b16 %v556
        %v765 = vunpack.c.l.b16 %v557
        %v766 = vunpack.c.l.b16 %v558
        %v767 = vunpack.c.l.b16 %v559
        %v768 = vunpack.c.l.b16 %v560
        %v769 = vunpack.c.l.b16 %v561
        %v770 = vunpack.c.l.b16 %v562
        %v771 = vunpack.c.l.b16 %v563
        %v772 = vunpack.c.l.b16 %v564
        %v773 = vunpack.c.l.b16 %v565
        %v774 = vunpack.c.l.b16 %v566
        %v775 = vunpack.c.l.b16 %v567
        %v776 = vunpack.c.l.b16 %v568
        %v777 = vunpack.c.l.b16 %v569
        %v778 = vunpack.c.l.b16 %v570
        %v779 = vunpack.c.l.b16 %v571
        %v780 = vunpack.c.l.b16 %v572
        %v781 = vunpack.c.l.b16 %v573
        %v782 = vunpack.c.l.b16 %v574
        %v783 = vunpack.c.l.b16 %v575
        %v784 = vunpack.c.l.b16 %v576
        %v785 = vunpack.c.l.b16 %v577
        %v786 = vunpack.c.l.b16 %v578
        %v787 = vunpack.c.l.b16 %v579
        %v788 = vunpack.c.l.b16 %v580
        %v789 = vunpack.c.l.b16 %v581
        %v790 = vunpack.c.l.b16 %v582
        %v791 = vunpack.c.l.b16 %v583
        %v792 = vunpack.c.l.b16 %v584
        %v793 = vunpack.c.l.b16 %v585
        %v794 = vunpack.c.l.b16 %v586
        %v795 = vunpack.c.l.b16 %v587
        %v796 = vunpack.c.l.b16 %v588
        %v797 = vunpack.c.l.b16 %v589
        %v798 = vunpack.c.l.b16 %v590
        %v799 = vunpack.c.l.b16 %v591
        %v800 = vunpack.c.l.b16 %v592
        %v801 = vunpack.c.l.b16 %v593
        %v802 = vunpack.c.l.b16 %v594
        %v803 = vunpack.c.l.b16 %v595
        %v804 = vunpack.c.l.b16 %v596
        %v805 = vunpack.c.l.b16 %v597
        %v806 = vunpack.c.l.b16 %v598
        %v807 = vunpack.c.l.b16 %v599
        %v808 = vunpack.c.l.b16 %v600
        %v809 = vunpack.c.l.b16 %v601
        %v810 = vunpack.c.l.b16 %v602
        %v811 = vpack.c.b16 %v748, %v747
        %v812 = vpack.c.b16 %v750, %v749
        %v813 = vpack.c.b16 %v752, %v751
        %v814 = vpack.c.b16 %v754, %v753
        %v815 = vpack.c.b16 %v756, %v755
        %v816 = vpack.c.b16 %v758, %v757
        %v817 = vpack.c.b16 %v760, %v759
        %v818 = vpack.c.b16 %v762, %v761
        %v819 = vpack.c.b16 %v764, %v763
        %v820 = vpack.c.b16 %v766, %v765
        %v821 = vpack.c.b16 %v768, %v767
        %v822 = vpack.c.b16 %v770, %v769
        %v823 = vpack.c.b16 %v772, %v771
        %v824 = vpack.c.b16 %v774, %v773
        %v825 = vpack.c.b16 %v776, %v775
        %v826 = vpack.c.b16 %v778, %v777
        %v827 = vpack.c.b16 %v780, %v779
        %v828 = vpack.c.b16 %v782, %v781
        %v829 = vpack.c.b16 %v784, %v783
        %v830 = vpack.c.b16 %v786, %v785
        %v831 = vpack.c.b16 %v788, %v787
        %v832 = vpack.c.b16 %v790, %v789
        %v833 = vpack.c.b16 %v792, %v791
        %v834 = vpack.c.b16 %v794, %v793
        %v835 = vpack.c.b16 %v796, %v795
        %v836 = vpack.c.b16 %v798, %v797
        %v837 = vpack.c.b16 %v800, %v799
        %v838 = vpack.c.b16 %v802, %v801
        %v839 = vpack.c.b16 %v804, %v803
        %v840 = vpack.c.b16 %v806, %v805
        %v841 = vpack.c.b16 %v808, %v807
        %v842 = vpack.c.b16 %v810, %v809
        %875 = vmatprep.subr.bf16.mxu0 0
        %876 = vmatpush1.bf16.msra.mxu0 %v818
        %877 = vmatprep.subr.bf16.mxu0 0
        %878 = vmatpush1.bf16.msra.mxu0 %v817
        %879 = vmatprep.subr.bf16.mxu0 0
        %880 = vmatpush1.bf16.msra.mxu0 %v816
        %881 = vmatprep.subr.bf16.mxu0 0
        %882 = vmatpush1.bf16.msra.mxu0 %v815
        %883 = vmatprep.subr.bf16.mxu0 0
        %884 = vmatpush1.bf16.msra.mxu0 %v814
        %885 = vmatprep.subr.bf16.mxu0 0
        %886 = vmatpush1.bf16.msra.mxu0 %v813
        %887 = vmatprep.subr.bf16.mxu0 0
        %888 = vmatpush1.bf16.msra.mxu0 %v812
        %889 = vmatprep.subr.bf16.mxu0 0
        %890 = vmatpush1.bf16.msra.mxu0 %v811
        %891 = vmatprep.subr.bf16.mxu0 0
        %892 = vmatpush2.bf16.msra.mxu0 %v826
        %893 = vmatprep.subr.bf16.mxu0 0
        %894 = vmatpush2.bf16.msra.mxu0 %v825
        %895 = vmatprep.subr.bf16.mxu0 0
        %896 = vmatpush2.bf16.msra.mxu0 %v824
        %897 = vmatprep.subr.bf16.mxu0 0
        %898 = vmatpush2.bf16.msra.mxu0 %v823
        %899 = vmatprep.subr.bf16.mxu0 0
        %900 = vmatpush2.bf16.msra.mxu0 %v822
        %901 = vmatprep.subr.bf16.mxu0 0
        %902 = vmatpush2.bf16.msra.mxu0 %v821
        %903 = vmatprep.subr.bf16.mxu0 0
        %904 = vmatpush2.bf16.msra.mxu0 %v820
        %905 = vmatprep.subr.bf16.mxu0 0
        %906 = vmatpush2.bf16.msra.mxu0 %v819
        %907 = vmatprep.mubr.bf16.mxu0 %v652
        %908 = vmatmul.mubr.bf16.gmra.mxu0 %v651
        %v909 = vpop.f32.mrf.mxu0
        %v910 = vadd.f32 0.0, %v909
        %v911 = vpop.f32.mrf.mxu0
        %v912 = vpop.f32.mrf.mxu0
        %v913 = vadd.f32 0.0, %v912
        %v914 = vpop.f32.mrf.mxu0
        %915 = vmatprep.mubr.bf16.mxu0 %v656
        %916 = vmatmul.mubr.bf16.gmra.mxu0 %v655
        %v917 = vpop.f32.mrf.mxu0
        %v918 = vadd.f32 0.0, %v917
        %v919 = vpop.f32.mrf.mxu0
        %v920 = vpop.f32.mrf.mxu0
        %v921 = vadd.f32 0.0, %v920
        %v922 = vpop.f32.mrf.mxu0
        %923 = vmatprep.mubr.bf16.mxu0 %v660
        %924 = vmatmul.mubr.bf16.gmra.mxu0 %v659
        %v925 = vpop.f32.mrf.mxu0
        %v926 = vadd.f32 0.0, %v925
        %v927 = vpop.f32.mrf.mxu0
        %v928 = vpop.f32.mrf.mxu0
        %v929 = vadd.f32 0.0, %v928
        %v930 = vpop.f32.mrf.mxu0
        %931 = vmatprep.mubr.bf16.mxu0 %v664
        %932 = vmatmul.mubr.bf16.gmra.mxu0 %v663
        %v933 = vpop.f32.mrf.mxu0
        %v934 = vadd.f32 0.0, %v933
        %v935 = vpop.f32.mrf.mxu0
        %v936 = vpop.f32.mrf.mxu0
        %v937 = vadd.f32 0.0, %v936
        %v938 = vpop.f32.mrf.mxu0
        %939 = vdwg.mxu0
        %940 = vmatprep.subr.bf16.mxu0 0
        %941 = vmatpush1.bf16.msra.mxu0 %v834
        %942 = vmatprep.subr.bf16.mxu0 0
        %943 = vmatpush1.bf16.msra.mxu0 %v833
        %944 = vmatprep.subr.bf16.mxu0 0
        %945 = vmatpush1.bf16.msra.mxu0 %v832
        %946 = vmatprep.subr.bf16.mxu0 0
        %947 = vmatpush1.bf16.msra.mxu0 %v831
        %948 = vmatprep.subr.bf16.mxu0 0
        %949 = vmatpush1.bf16.msra.mxu0 %v830
        %950 = vmatprep.subr.bf16.mxu0 0
        %951 = vmatpush1.bf16.msra.mxu0 %v829
        %952 = vmatprep.subr.bf16.mxu0 0
        %953 = vmatpush1.bf16.msra.mxu0 %v828
        %954 = vmatprep.subr.bf16.mxu0 0
        %955 = vmatpush1.bf16.msra.mxu0 %v827
        %956 = vmatprep.subr.bf16.mxu0 0
        %957 = vmatpush2.bf16.msra.mxu0 %v842
        %958 = vmatprep.subr.bf16.mxu0 0
        %959 = vmatpush2.bf16.msra.mxu0 %v841
        %960 = vmatprep.subr.bf16.mxu0 0
        %961 = vmatpush2.bf16.msra.mxu0 %v840
        %962 = vmatprep.subr.bf16.mxu0 0
        %963 = vmatpush2.bf16.msra.mxu0 %v839
        %964 = vmatprep.subr.bf16.mxu0 0
        %965 = vmatpush2.bf16.msra.mxu0 %v838
        %966 = vmatprep.subr.bf16.mxu0 0
        %967 = vmatpush2.bf16.msra.mxu0 %v837
        %968 = vmatprep.subr.bf16.mxu0 0
        %969 = vmatpush2.bf16.msra.mxu0 %v836
        %970 = vmatprep.subr.bf16.mxu0 0
        %971 = vmatpush2.bf16.msra.mxu0 %v835
        %972 = vmatprep.mubr.bf16.mxu0 %v654
        %973 = vmatmul.mubr.bf16.gmra.mxu0 %v653
        %v974 = vpop.f32.mrf.mxu0
        %v975 = vadd.f32 %v910, %v974
        %v976 = vpop.f32.mrf.mxu0
        %v977 = vpop.f32.mrf.mxu0
        %v978 = vadd.f32 %v913, %v977
        %v979 = vpop.f32.mrf.mxu0
        %980 = vmatprep.mubr.bf16.mxu0 %v658
        %981 = vmatmul.mubr.bf16.gmra.mxu0 %v657
        %v982 = vpop.f32.mrf.mxu0
        %v983 = vadd.f32 %v918, %v982
        %v984 = vpop.f32.mrf.mxu0
        %v985 = vpop.f32.mrf.mxu0
        %v986 = vadd.f32 %v921, %v985
        %v987 = vpop.f32.mrf.mxu0
        %988 = vmatprep.mubr.bf16.mxu0 %v662
        %989 = vmatmul.mubr.bf16.gmra.mxu0 %v661
        %v990 = vpop.f32.mrf.mxu0
        %v991 = vadd.f32 %v926, %v990
        %v992 = vpop.f32.mrf.mxu0
        %v993 = vpop.f32.mrf.mxu0
        %v994 = vadd.f32 %v929, %v993
        %v995 = vpop.f32.mrf.mxu0
        %996 = vmatprep.mubr.bf16.mxu0 %v666
        %997 = vmatmul.mubr.bf16.gmra.mxu0 %v665
        %v998 = vpop.f32.mrf.mxu0
        %v999 = vadd.f32 %v934, %v998
        %v1000 = vpop.f32.mrf.mxu0
        %v1001 = vpop.f32.mrf.mxu0
        %v1002 = vadd.f32 %v937, %v1001
        %v1003 = vpop.f32.mrf.mxu0
        %1004 = vdwg.mxu0
        %v1005 = vadd.f32 %v515, %v975
        %v1006 = vadd.f32 %v516, %v978
        %v1007 = vadd.f32 %v517, %v983
        %v1008 = vadd.f32 %v518, %v986
        %v1009 = vadd.f32 %v519, %v991
        %v1010 = vadd.f32 %v520, %v994
        %v1011 = vadd.f32 %v521, %v999
        %v1012 = vadd.f32 %v522, %v1002
        %1013 = vst [vmem:[#allocation2] sm:$0xff] %v1005
        %1014 = vst [vmem:[#allocation2 + $0x8] sm:$0xff] %v1006
        %1015 = vst [vmem:[#allocation2 + $0x10] sm:$0xff] %v1007
        %1016 = vst [vmem:[#allocation2 + $0x18] sm:$0xff] %v1008
        %1017 = vst [vmem:[#allocation2 + $0x20] sm:$0xff] %v1009
        %1018 = vst [vmem:[#allocation2 + $0x28] sm:$0xff] %v1010
        %1019 = vst [vmem:[#allocation2 + $0x30] sm:$0xff] %v1011
        %1020 = vst [vmem:[#allocation2 + $0x38] sm:$0xff] %v1012
        // Predicated region
        $region74: #{dcsa_forward.18} parent=64 // pred_check
          %p1021 = pneg %p503
        $region75: #{dcsa_forward.18} parent=64 // pred_check_branch
          %1023 = sbr.rel (%p1021) target = $region77
        $region76: #{dcsa_forward.18} parent=64 // pred_region
          %v1024 = vld [vmem:[#allocation2] sm:$0xff]
          %v1025 = vld [vmem:[#allocation2 + $0x8] sm:$0xff]
          %v1026 = vld [vmem:[#allocation2 + $0x10] sm:$0xff]
          %v1027 = vld [vmem:[#allocation2 + $0x18] sm:$0xff]
          %v1028 = vld [vmem:[#allocation2 + $0x20] sm:$0xff]
          %v1029 = vld [vmem:[#allocation2 + $0x28] sm:$0xff]
          %v1030 = vld [vmem:[#allocation2 + $0x30] sm:$0xff]
          %v1031 = vld [vmem:[#allocation2 + $0x38] sm:$0xff]
          %1032 = vst [vmem:[%s487] sm:$0xff] %v1024
          %1033 = vst [vmem:[%s487 + $0x8] sm:$0xff] %v1025
          %1034 = vst [vmem:[%s487 + $0x10] sm:$0xff] %v1026
          %1035 = vst [vmem:[%s487 + $0x18] sm:$0xff] %v1027
          %1036 = vst [vmem:[%s487 + $0x20] sm:$0xff] %v1028
          %1037 = vst [vmem:[%s487 + $0x28] sm:$0xff] %v1029
          %1038 = vst [vmem:[%s487 + $0x30] sm:$0xff] %v1030
          %1039 = vst [vmem:[%s487 + $0x38] sm:$0xff] %v1031
        $region77: #{dcsa_forward.18} parent=64 // pred_fallthru
          _
        %s1040 = sand.u32 %s98, 1
        %s1041 = sand.u32 %s98, 1
        %s1042 = smul.addr %s1041, 64
        %s1043 = scalar_lea.vmem [#allocation4], %s1042
        // Predicated region
        $region78: #{dcsa_forward.18} parent=64 // pred_check
          %p1044 = pneg %p108
        $region79: #{dcsa_forward.18} parent=64 // pred_check_branch
          %1046 = sbr.rel (%p1044) target = $region81
        $region80: #{dcsa_forward.18} parent=64 // pred_region
          %s1047 = smul.u32 8, %s18
          %s1048 = smul.addr %s1047, 2
          %s1049 = sadd.s32 %s19, %s1048
          %s1050 = smul.addr %s1049, 8
          %s1051 = scalar_lea.vmem %s2, %s1050
          // Predicated region
          $region82: #{dcsa_forward.18} parent=80 // pred_check
            _
          $region83: #{dcsa_forward.18} parent=80 // pred_check_branch
            %1053 = sbr.rel (0) target = $region85
          $region84: #{dcsa_forward.18} parent=80 // pred_region
            // Predicated region
            $region86: #{dcsa_forward.18} parent=84 // pred_check
              _
            $region87: #{dcsa_forward.18} parent=84 // pred_check_branch
              %1055 = sbr.rel (0) target = $region89
            $region88: #{dcsa_forward.18} parent=84 // pred_region
              // Predicated region
              $region101: #{dcsa_forward.18} parent=88 // pred_check
                _
              $region102: #{dcsa_forward.18} parent=88 // pred_check_branch
                %1085 = sbr.rel (0) target = $region104
              $region103: #{dcsa_forward.18} parent=88 // pred_region
                loop: start=0, step=1, limit=1
                $region105: #{dcsa_forward.18} parent=103 // loop_pre_header
                  _
                $region106: #{dcsa_forward.18} parent=103 // loop_header
                  %s1087 = sphi 0, %s1091
                  %p1088 = scmp.ge.s32.totalorder %s1087, 1
                  %s1092 = sphi %s1043, %s1043
                  %s1093 = sphi %s1051, %s1051
                $region107: #{dcsa_forward.18} parent=103 // loop_header_branch
                  %1090 = sbr.rel (%p1088) target = $region111
                $region108: #{dcsa_forward.18} parent=103 // loop_body
                  %v1094 = vld [vmem:[%s1092] sm:$0xff]
                  %1095 = vst [vmem:[%s1093] sm:$0xff] %v1094
                  %v1096 = vld [vmem:[%s1092 + $0x8] sm:$0xff]
                  %1097 = vst [vmem:[%s1093 + $0x10] sm:$0xff] %v1096
                  %v1098 = vld [vmem:[%s1092 + $0x10] sm:$0xff]
                  %1099 = vst [vmem:[%s1093 + $0x20] sm:$0xff] %v1098
                  %v1100 = vld [vmem:[%s1092 + $0x18] sm:$0xff]
                  %1101 = vst [vmem:[%s1093 + $0x30] sm:$0xff] %v1100
                  %v1102 = vld [vmem:[%s1092 + $0x20] sm:$0xff]
                  %1103 = vst [vmem:[%s1093 + $0x40] sm:$0xff] %v1102
                  %v1104 = vld [vmem:[%s1092 + $0x28] sm:$0xff]
                  %1105 = vst [vmem:[%s1093 + $0x50] sm:$0xff] %v1104
                  %v1106 = vld [vmem:[%s1092 + $0x30] sm:$0xff]
                  %1107 = vst [vmem:[%s1093 + $0x60] sm:$0xff] %v1106
                  %v1108 = vld [vmem:[%s1092 + $0x38] sm:$0xff]
                  %1109 = vst [vmem:[%s1093 + $0x70] sm:$0xff] %v1108
                $region109: #{dcsa_forward.18} parent=103 // loop_footer
                  %s1091 = sadd.s32 1, %s1087
                $region110: #{dcsa_forward.18} parent=103 // loop_footer_branch
                  %1086 = sbr.rel target = $region106
                $region111: #{dcsa_forward.18} parent=103 // loop_exit
                  _
              $region104: #{dcsa_forward.18} parent=88 // pred_fallthru
                _
              // Predicated region
              $region112: #{dcsa_forward.18} parent=88 // pred_check
                _
              $region113: #{dcsa_forward.18} parent=88 // pred_check_branch
                %1111 = sbr.rel target = $region115
              $region114: #{dcsa_forward.18} parent=88 // pred_region
                _
              $region115: #{dcsa_forward.18} parent=88 // pred_fallthru
                _
            $region89: #{dcsa_forward.18} parent=84 // pred_fallthru
              _
            // Predicated region
            $region90: #{dcsa_forward.18} parent=84 // pred_check
              _
            $region91: #{dcsa_forward.18} parent=84 // pred_check_branch
              %1057 = sbr.rel target = $region93
            $region92: #{dcsa_forward.18} parent=84 // pred_region
              %s1059 = ssub.s32 256, 1
              loop: start=0, step=1, limit=1
              $region94: #{dcsa_forward.18} parent=92 // loop_pre_header
                _
              $region95: #{dcsa_forward.18} parent=92 // loop_header
                %s1061 = sphi 0, %s1065
                %p1062 = scmp.ge.s32.totalorder %s1061, 1
                %s1066 = sphi %s1043, %s1043
                %s1067 = sphi %s1051, %s1051
              $region96: #{dcsa_forward.18} parent=92 // loop_header_branch
                %1064 = sbr.rel (%p1062) target = $region100
              $region97: #{dcsa_forward.18} parent=92 // loop_body
                %v1068 = vld [vmem:[%s1066] sm:%s1059]
                %1069 = vst [vmem:[%s1067] sm:%s1059] %v1068
                %v1070 = vld [vmem:[%s1066 + $0x8] sm:%s1059]
                %1071 = vst [vmem:[%s1067 + $0x10] sm:%s1059] %v1070
                %v1072 = vld [vmem:[%s1066 + $0x10] sm:%s1059]
                %1073 = vst [vmem:[%s1067 + $0x20] sm:%s1059] %v1072
                %v1074 = vld [vmem:[%s1066 + $0x18] sm:%s1059]
                %1075 = vst [vmem:[%s1067 + $0x30] sm:%s1059] %v1074
                %v1076 = vld [vmem:[%s1066 + $0x20] sm:%s1059]
                %1077 = vst [vmem:[%s1067 + $0x40] sm:%s1059] %v1076
                %v1078 = vld [vmem:[%s1066 + $0x28] sm:%s1059]
                %1079 = vst [vmem:[%s1067 + $0x50] sm:%s1059] %v1078
                %v1080 = vld [vmem:[%s1066 + $0x30] sm:%s1059]
                %1081 = vst [vmem:[%s1067 + $0x60] sm:%s1059] %v1080
                %v1082 = vld [vmem:[%s1066 + $0x38] sm:%s1059]
                %1083 = vst [vmem:[%s1067 + $0x70] sm:%s1059] %v1082
              $region98: #{dcsa_forward.18} parent=92 // loop_footer
                %s1065 = sadd.s32 1, %s1061
              $region99: #{dcsa_forward.18} parent=92 // loop_footer_branch
                %1060 = sbr.rel target = $region95
              $region100: #{dcsa_forward.18} parent=92 // loop_exit
                _
            $region93: #{dcsa_forward.18} parent=84 // pred_fallthru
              _
          $region85: #{dcsa_forward.18} parent=80 // pred_fallthru
            _
          %1112 = vnop
        $region81: #{dcsa_forward.18} parent=64 // pred_fallthru
          _
      $region65: #{dcsa_forward.18} parent=5 // pred_fallthru
        _
      %p1113 = scmp.le.s32.totalorder 2, %s8
      // Predicated region
      $region116: #{dcsa_forward.18} parent=5 // pred_check
        %p1114 = pneg %p1113
      $region117: #{dcsa_forward.18} parent=5 // pred_check_branch
        %1116 = sbr.rel (%p1114) target = $region119
      $region118: #{dcsa_forward.18} parent=5 // pred_region
        %s1117 = ssub.s32 %s8, 2
        // Predicated region
        $region120: #{dcsa_forward.18} parent=118 // pred_check
          %p1118 = pneg %p114
        $region121: #{dcsa_forward.18} parent=118 // pred_check_branch
          %1120 = sbr.rel (%p1118) target = $region123
        $region122: #{dcsa_forward.18} parent=118 // pred_region
          %s1121 = sand.u32 %s99, 1
          %s1122 = sand.u32 %s99, 1
          %s1123 = smul.addr %s1122, 64
          %s1124 = scalar_lea.vmem [#allocation4], %s1123
        $region123: #{dcsa_forward.18} parent=118 // pred_fallthru
          _
      $region119: #{dcsa_forward.18} parent=5 // pred_fallthru
        _
    $region6: #{dcsa_forward.18} parent=1 // loop_footer
      %s12 = sadd.s32 1, %s8
    $region7: #{dcsa_forward.18} parent=1 // loop_footer_branch
      %7 = sbr.rel target = $region3
    $region8: #{dcsa_forward.18} parent=1 // loop_exit
      _

// kernel: dcsa_forward.19
$region0: #{dcsa_forward.19}
  #allocation0 [shape = 'u32[]', space=smem, size = 0x4, offset = 0x4, fixed_abs, tag = 'smem constant byte address 0x4 - core index']
  #allocation1 [shape = 'u32[144,128]{1,0:T(1,128)}', space=vmem, size = 0x12000, scoped, tag = 'internal scratch']
  #allocation2 [shape = 'f32[2,128]{1,0:T(2,128)}', space=vmem, size = 0x400, scoped, tag = 'scratch operand']
  %s0 = inlined_call_operand.vmem [shape: f32[64,128], index: 0, kind: input, shape index: {}]
  %s1 = inlined_call_operand.vmem [shape: f32[2,128], index: 1, kind: output, shape index: {}]
  %s2 = sld [smem:[#allocation0]]
  $region22: #{dcsa_forward.19} parent=0
    _
  %s4 = ssub.s32 1, %s2
  %s5 = scalar_select 0, %s4, %s2
  // Predicated region
  $region2: #{dcsa_forward.19} parent=0 // pred_check
    _
  $region3: #{dcsa_forward.19} parent=0 // pred_check_branch
    %7 = sbr.rel (0) target = $region5
  $region4: #{dcsa_forward.19} parent=0 // pred_region
    _
  $region5: #{dcsa_forward.19} parent=0 // pred_fallthru
    _
  %p8 = scmp.eq.s32.totalorder 0, 0
  // Predicated region
  $region6: #{dcsa_forward.19} parent=0 // pred_check
    %p9 = pneg %p8
  $region7: #{dcsa_forward.19} parent=0 // pred_check_branch
    %11 = sbr.rel (%p9) target = $region9
  $region8: #{dcsa_forward.19} parent=0 // pred_region
    %12 = vst [vmem:[#allocation2] sm:$0x3] 0.0
  $region9: #{dcsa_forward.19} parent=0 // pred_fallthru
    _
  %v13 = vld [vmem:[%s0] sm:$0xff]
  %v14 = vld [vmem:[%s0 + $0x8] sm:$0xff]
  %v15 = vld [vmem:[%s0 + $0x10] sm:$0xff]
  %v16 = vld [vmem:[%s0 + $0x18] sm:$0xff]
  %v17 = vld [vmem:[%s0 + $0x20] sm:$0xff]
  %v18 = vld [vmem:[%s0 + $0x28] sm:$0xff]
  %v19 = vld [vmem:[%s0 + $0x30] sm:$0xff]
  %v20 = vld [vmem:[%s0 + $0x38] sm:$0xff]
  %v21 = vld [vmem:[#allocation2] sm:$0x1]
  %v22 = vadd.f32 %v13, %v14
  %v23 = vadd.f32 %v22, %v15
  %v24 = vadd.f32 %v23, %v16
  %v25 = vadd.f32 %v24, %v17
  %v26 = vadd.f32 %v25, %v18
  %v27 = vadd.f32 %v26, %v19
  %v28 = vadd.f32 %v27, %v20
  %v29 = vrot.slane %v28, 4
  %v30 = vadd.f32 %v28, %v29
  %v31 = vrot.slane %v30, 2
  %v32 = vadd.f32 %v30, %v31
  %v33 = vrot.slane %v32, 1
  %v34 = vadd.f32 %v32, %v33
  %v35 = vadd.f32 %v21, %v34
  %36 = vst [vmem:[#allocation2] sm:$0x1] %v35
  %v37 = vld [vmem:[#allocation2 + $0x1] sm:$0x1]
  %v38 = vmul.f32 %v13, %v13
  %v39 = vmul.f32 %v14, %v14
  %v40 = vmul.f32 %v15, %v15
  %v41 = vmul.f32 %v16, %v16
  %v42 = vmul.f32 %v17, %v17
  %v43 = vmul.f32 %v18, %v18
  %v44 = vmul.f32 %v19, %v19
  %v45 = vmul.f32 %v20, %v20
  %v46 = vadd.f32 %v38, %v39
  %v47 = vadd.f32 %v46, %v40
  %v48 = vadd.f32 %v47, %v41
  %v49 = vadd.f32 %v48, %v42
  %v50 = vadd.f32 %v49, %v43
  %v51 = vadd.f32 %v50, %v44
  %v52 = vadd.f32 %v51, %v45
  %v53 = vrot.slane %v52, 4
  %v54 = vadd.f32 %v52, %v53
  %v55 = vrot.slane %v54, 2
  %v56 = vadd.f32 %v54, %v55
  %v57 = vrot.slane %v56, 1
  %v58 = vadd.f32 %v56, %v57
  %v59 = vadd.f32 %v37, %v58
  %60 = vst [vmem:[#allocation2 + $0x1] sm:$0x1] %v59
  // Predicated region
  $region10: #{dcsa_forward.19} parent=0 // pred_check
    %p61 = pneg %p8
  $region11: #{dcsa_forward.19} parent=0 // pred_check_branch
    %63 = sbr.rel (%p61) target = $region13
  $region12: #{dcsa_forward.19} parent=0 // pred_region
    %v64 = vld [vmem:[#allocation2] sm:$0x3]
    %65 = vst [vmem:[%s1] sm:$0x3] %v64
  $region13: #{dcsa_forward.19} parent=0 // pred_fallthru
    _
  // Predicated region
  $region14: #{dcsa_forward.19} parent=0 // pred_check
    _
  $region15: #{dcsa_forward.19} parent=0 // pred_check_branch
    %67 = sbr.rel (0) target = $region17
  $region16: #{dcsa_forward.19} parent=0 // pred_region
    _
  $region17: #{dcsa_forward.19} parent=0 // pred_fallthru
    _
  // Predicated region
  $region18: #{dcsa_forward.19} parent=0 // pred_check
    _
  $region19: #{dcsa_forward.19} parent=0 // pred_check_branch
    %69 = sbr.rel (0) target = $region21
  $region20: #{dcsa_forward.19} parent=0 // pred_region
    _
  $region21: #{dcsa_forward.19} parent=0 // pred_fallthru
    _

// kernel: dcsa_forward.20
$region0: #{dcsa_forward.20}
  #allocation0 [shape = 'u32[]', space=smem, size = 0x4, offset = 0x4, fixed_abs, tag = 'smem constant byte address 0x4 - core index']
  #allocation1 [shape = 'u32[144,128]{1,0:T(1,128)}', space=vmem, size = 0x12000, scoped, tag = 'internal scratch']
  %s0 = inlined_call_operand.vmem [shape: f32[64,128], index: 0, kind: input, shape index: {}]
  %s1 = inlined_call_operand.vmem [shape: f32[1,128], index: 1, kind: input, shape index: {}]
  %s2 = inlined_call_operand.vmem [shape: f32[1,128], index: 2, kind: input, shape index: {}]
  %s3 = inlined_call_operand.vmem [shape: f32[64,128], index: 3, kind: output, shape index: {}]
  %s4 = sld [smem:[#allocation0]]
  $region22: #{dcsa_forward.20} parent=0
    _
  %s6 = ssub.s32 1, %s4
  %s7 = scalar_select 0, %s6, %s4
  // Predicated region
  $region2: #{dcsa_forward.20} parent=0 // pred_check
    _
  $region3: #{dcsa_forward.20} parent=0 // pred_check_branch
    %9 = sbr.rel (0) target = $region5
  $region4: #{dcsa_forward.20} parent=0 // pred_region
    _
  $region5: #{dcsa_forward.20} parent=0 // pred_fallthru
    _
  // Predicated region
  $region6: #{dcsa_forward.20} parent=0 // pred_check
    _
  $region7: #{dcsa_forward.20} parent=0 // pred_check_branch
    %11 = sbr.rel (0) target = $region9
  $region8: #{dcsa_forward.20} parent=0 // pred_region
    _
  $region9: #{dcsa_forward.20} parent=0 // pred_fallthru
    _
  // Predicated region
  $region10: #{dcsa_forward.20} parent=0 // pred_check
    _
  $region11: #{dcsa_forward.20} parent=0 // pred_check_branch
    %13 = sbr.rel (0) target = $region13
  $region12: #{dcsa_forward.20} parent=0 // pred_region
    _
  $region13: #{dcsa_forward.20} parent=0 // pred_fallthru
    _
  %v14 = vld [vmem:[%s0] sm:$0xff]
  %v15 = vld [vmem:[%s0 + $0x8] sm:$0xff]
  %v16 = vld [vmem:[%s0 + $0x10] sm:$0xff]
  %v17 = vld [vmem:[%s0 + $0x18] sm:$0xff]
  %v18 = vld [vmem:[%s0 + $0x20] sm:$0xff]
  %v19 = vld [vmem:[%s0 + $0x28] sm:$0xff]
  %v20 = vld [vmem:[%s0 + $0x30] sm:$0xff]
  %v21 = vld [vmem:[%s0 + $0x38] sm:$0xff]
  %v22 = vld [vmem:[%s1] sm:$0x1]
  %v24 = vlaneseq
  %v25 = vshrl.u32 %v24, 7
  %v26 = vsub.s32 0, %v25
  %v27 = vrot.slane %v22, %v26
  %v29 = vmul.f32 %v14, %v27
  %v30 = vmul.f32 %v15, %v27
  %v31 = vmul.f32 %v16, %v27
  %v32 = vmul.f32 %v17, %v27
  %v33 = vmul.f32 %v18, %v27
  %v34 = vmul.f32 %v19, %v27
  %v35 = vmul.f32 %v20, %v27
  %v36 = vmul.f32 %v21, %v27
  %v37 = vld [vmem:[%s2] sm:$0x1]
  %v39 = vlaneseq
  %v40 = vshrl.u32 %v39, 7
  %v41 = vsub.s32 0, %v40
  %v42 = vrot.slane %v37, %v41
  %v44 = vadd.f32 %v29, %v42
  %v45 = vadd.f32 %v30, %v42
  %v46 = vadd.f32 %v31, %v42
  %v47 = vadd.f32 %v32, %v42
  %v48 = vadd.f32 %v33, %v42
  %v49 = vadd.f32 %v34, %v42
  %v50 = vadd.f32 %v35, %v42
  %v51 = vadd.f32 %v36, %v42
  %v52 = vmax.f32 %v44, 0.0
  %v53 = vmax.f32 %v45, 0.0
  %v54 = vmax.f32 %v46, 0.0
  %v55 = vmax.f32 %v47, 0.0
  %v56 = vmax.f32 %v48, 0.0
  %v57 = vmax.f32 %v49, 0.0
  %v58 = vmax.f32 %v50, 0.0
  %v59 = vmax.f32 %v51, 0.0
  %60 = vst [vmem:[%s3] sm:$0xff] %v52
  %61 = vst [vmem:[%s3 + $0x8] sm:$0xff] %v53
  %62 = vst [vmem:[%s3 + $0x10] sm:$0xff] %v54
  %63 = vst [vmem:[%s3 + $0x18] sm:$0xff] %v55
  %64 = vst [vmem:[%s3 + $0x20] sm:$0xff] %v56
  %65 = vst [vmem:[%s3 + $0x28] sm:$0xff] %v57
  %66 = vst [vmem:[%s3 + $0x30] sm:$0xff] %v58
  %67 = vst [vmem:[%s3 + $0x38] sm:$0xff] %v59
  // Predicated region
  $region14: #{dcsa_forward.20} parent=0 // pred_check
    _
  $region15: #{dcsa_forward.20} parent=0 // pred_check_branch
    %69 = sbr.rel (0) target = $region17
  $region16: #{dcsa_forward.20} parent=0 // pred_region
    _
  $region17: #{dcsa_forward.20} parent=0 // pred_fallthru
    _
  // Predicated region
  $region18: #{dcsa_forward.20} parent=0 // pred_check
    _
  $region19: #{dcsa_forward.20} parent=0 // pred_check_branch
    %71 = sbr.rel (0) target = $region21
  $region20: #{dcsa_forward.20} parent=0 // pred_region
    _
  $region21: #{dcsa_forward.20} parent=0 // pred_fallthru
    _

// kernel: dcsa_forward.21
$region0: #{dcsa_forward.21}
  #allocation0 [shape = 'u32[]', space=smem, size = 0x4, offset = 0x4, fixed_abs, tag = 'smem constant byte address 0x4 - core index']
  #allocation1 [shape = 'u32[144,128]{1,0:T(1,128)}', space=vmem, size = 0x12000, scoped, tag = 'internal scratch']
  #allocation2 [shape = 'f32[176,128]{1,0:T(8,128)}', space=vmem, size = 0x16000, scoped, tag = 'scratch operand']
  %s0 = inlined_call_operand.vmem [shape: bf16[176,256], index: 0, kind: input, shape index: {}]
  %s1 = inlined_call_operand.vmem [shape: bf16[256,128], index: 1, kind: input, shape index: {}]
  %s2 = inlined_call_operand.vmem [shape: f32[176,128], index: 2, kind: output, shape index: {}]
  %s3 = sld [smem:[#allocation0]]
  $region26: #{dcsa_forward.21} parent=0
    _
  %s5 = ssub.s32 1, %s3
  %s6 = scalar_select 0, %s5, %s3
  // Predicated region
  $region2: #{dcsa_forward.21} parent=0 // pred_check
    _
  $region3: #{dcsa_forward.21} parent=0 // pred_check_branch
    %8 = sbr.rel (0) target = $region5
  $region4: #{dcsa_forward.21} parent=0 // pred_region
    _
  $region5: #{dcsa_forward.21} parent=0 // pred_fallthru
    _
  // Predicated region
  $region6: #{dcsa_forward.21} parent=0 // pred_check
    _
  $region7: #{dcsa_forward.21} parent=0 // pred_check_branch
    %10 = sbr.rel (0) target = $region9
  $region8: #{dcsa_forward.21} parent=0 // pred_region
    _
  $region9: #{dcsa_forward.21} parent=0 // pred_fallthru
    _
  %p12 = scmp.eq.s32.totalorder 0, 0
  // Predicated region
  $region10: #{dcsa_forward.21} parent=0 // pred_check
    %p13 = pneg %p12
  $region11: #{dcsa_forward.21} parent=0 // pred_check_branch
    %15 = sbr.rel (%p13) target = $region13
  $region12: #{dcsa_forward.21} parent=0 // pred_region
    %16 = vst [vmem:[#allocation2] sm:$0xff] 0.0
    %17 = vst [vmem:[#allocation2 + $0x8] sm:$0xff] 0.0
    %18 = vst [vmem:[#allocation2 + $0x10] sm:$0xff] 0.0
    %19 = vst [vmem:[#allocation2 + $0x18] sm:$0xff] 0.0
    %20 = vst [vmem:[#allocation2 + $0x20] sm:$0xff] 0.0
    %21 = vst [vmem:[#allocation2 + $0x28] sm:$0xff] 0.0
    %22 = vst [vmem:[#allocation2 + $0x30] sm:$0xff] 0.0
    %23 = vst [vmem:[#allocation2 + $0x38] sm:$0xff] 0.0
    %24 = vst [vmem:[#allocation2 + $0x40] sm:$0xff] 0.0
    %25 = vst [vmem:[#allocation2 + $0x48] sm:$0xff] 0.0
    %26 = vst [vmem:[#allocation2 + $0x50] sm:$0xff] 0.0
    %27 = vst [vmem:[#allocation2 + $0x58] sm:$0xff] 0.0
    %28 = vst [vmem:[#allocation2 + $0x60] sm:$0xff] 0.0
    %29 = vst [vmem:[#allocation2 + $0x68] sm:$0xff] 0.0
    %30 = vst [vmem:[#allocation2 + $0x70] sm:$0xff] 0.0
    %31 = vst [vmem:[#allocation2 + $0x78] sm:$0xff] 0.0
    %32 = vst [vmem:[#allocation2 + $0x80] sm:$0xff] 0.0
    %33 = vst [vmem:[#allocation2 + $0x88] sm:$0xff] 0.0
    %34 = vst [vmem:[#allocation2 + $0x90] sm:$0xff] 0.0
    %35 = vst [vmem:[#allocation2 + $0x98] sm:$0xff] 0.0
    %36 = vst [vmem:[#allocation2 + $0xa0] sm:$0xff] 0.0
    %37 = vst [vmem:[#allocation2 + $0xa8] sm:$0xff] 0.0
  $region13: #{dcsa_forward.21} parent=0 // pred_fallthru
    _
  %v38 = vld [vmem:[#allocation2] sm:$0xff]
  %v39 = vld [vmem:[#allocation2 + $0x8] sm:$0xff]
  %v40 = vld [vmem:[#allocation2 + $0x10] sm:$0xff]
  %v41 = vld [vmem:[#allocation2 + $0x18] sm:$0xff]
  %v42 = vld [vmem:[#allocation2 + $0x20] sm:$0xff]
  %v43 = vld [vmem:[#allocation2 + $0x28] sm:$0xff]
  %v44 = vld [vmem:[#allocation2 + $0x30] sm:$0xff]
  %v45 = vld [vmem:[#allocation2 + $0x38] sm:$0xff]
  %v46 = vld [vmem:[#allocation2 + $0x40] sm:$0xff]
  %v47 = vld [vmem:[#allocation2 + $0x48] sm:$0xff]
  %v48 = vld [vmem:[#allocation2 + $0x50] sm:$0xff]
  %v49 = vld [vmem:[#allocation2 + $0x58] sm:$0xff]
  %v50 = vld [vmem:[#allocation2 + $0x60] sm:$0xff]
  %v51 = vld [vmem:[#allocation2 + $0x68] sm:$0xff]
  %v52 = vld [vmem:[#allocation2 + $0x70] sm:$0xff]
  %v53 = vld [vmem:[#allocation2 + $0x78] sm:$0xff]
  %v54 = vld [vmem:[#allocation2 + $0x80] sm:$0xff]
  %v55 = vld [vmem:[#allocation2 + $0x88] sm:$0xff]
  %v56 = vld [vmem:[#allocation2 + $0x90] sm:$0xff]
  %v57 = vld [vmem:[#allocation2 + $0x98] sm:$0xff]
  %v58 = vld [vmem:[#allocation2 + $0xa0] sm:$0xff]
  %v59 = vld [vmem:[#allocation2 + $0xa8] sm:$0xff]
  %v60 = vld [vmem:[%s0] sm:$0xff]
  %v61 = vld [vmem:[%s0 + $0x8] sm:$0xff]
  %v62 = vld [vmem:[%s0 + $0x10] sm:$0xff]
  %v63 = vld [vmem:[%s0 + $0x18] sm:$0xff]
  %v64 = vld [vmem:[%s0 + $0x20] sm:$0xff]
  %v65 = vld [vmem:[%s0 + $0x28] sm:$0xff]
  %v66 = vld [vmem:[%s0 + $0x30] sm:$0xff]
  %v67 = vld [vmem:[%s0 + $0x38] sm:$0xff]
  %v68 = vld [vmem:[%s0 + $0x40] sm:$0xff]
  %v69 = vld [vmem:[%s0 + $0x48] sm:$0xff]
  %v70 = vld [vmem:[%s0 + $0x50] sm:$0xff]
  %v71 = vld [vmem:[%s0 + $0x58] sm:$0xff]
  %v72 = vld [vmem:[%s0 + $0x60] sm:$0xff]
  %v73 = vld [vmem:[%s0 + $0x68] sm:$0xff]
  %v74 = vld [vmem:[%s0 + $0x70] sm:$0xff]
  %v75 = vld [vmem:[%s0 + $0x78] sm:$0xff]
  %v76 = vld [vmem:[%s0 + $0x80] sm:$0xff]
  %v77 = vld [vmem:[%s0 + $0x88] sm:$0xff]
  %v78 = vld [vmem:[%s0 + $0x90] sm:$0xff]
  %v79 = vld [vmem:[%s0 + $0x98] sm:$0xff]
  %v80 = vld [vmem:[%s0 + $0xa0] sm:$0xff]
  %v81 = vld [vmem:[%s0 + $0xa8] sm:$0xff]
  %v82 = vld [vmem:[%s1] sm:$0xf]
  %v83 = vld [vmem:[%s1 + $0x4] sm:$0xf]
  %v84 = vld [vmem:[%s1 + $0x8] sm:$0xf]
  %v85 = vld [vmem:[%s1 + $0xc] sm:$0xf]
  %v86 = vld [vmem:[%s1 + $0x10] sm:$0xf]
  %v87 = vld [vmem:[%s1 + $0x14] sm:$0xf]
  %v88 = vld [vmem:[%s1 + $0x18] sm:$0xf]
  %v89 = vld [vmem:[%s1 + $0x1c] sm:$0xf]
  %v90 = vld [vmem:[%s1 + $0x20] sm:$0xf]
  %v91 = vld [vmem:[%s1 + $0x24] sm:$0xf]
  %v92 = vld [vmem:[%s1 + $0x28] sm:$0xf]
  %v93 = vld [vmem:[%s1 + $0x2c] sm:$0xf]
  %v94 = vld [vmem:[%s1 + $0x30] sm:$0xf]
  %v95 = vld [vmem:[%s1 + $0x34] sm:$0xf]
  %v96 = vld [vmem:[%s1 + $0x38] sm:$0xf]
  %v97 = vld [vmem:[%s1 + $0x3c] sm:$0xf]
  %v98 = vld [vmem:[%s1 + $0x40] sm:$0xf]
  %v99 = vld [vmem:[%s1 + $0x44] sm:$0xf]
  %v100 = vld [vmem:[%s1 + $0x48] sm:$0xf]
  %v101 = vld [vmem:[%s1 + $0x4c] sm:$0xf]
  %v102 = vld [vmem:[%s1 + $0x50] sm:$0xf]
  %v103 = vld [vmem:[%s1 + $0x54] sm:$0xf]
  %v104 = vld [vmem:[%s1 + $0x58] sm:$0xf]
  %v105 = vld [vmem:[%s1 + $0x5c] sm:$0xf]
  %v106 = vld [vmem:[%s1 + $0x60] sm:$0xf]
  %v107 = vld [vmem:[%s1 + $0x64] sm:$0xf]
  %v108 = vld [vmem:[%s1 + $0x68] sm:$0xf]
  %v109 = vld [vmem:[%s1 + $0x6c] sm:$0xf]
  %v110 = vld [vmem:[%s1 + $0x70] sm:$0xf]
  %v111 = vld [vmem:[%s1 + $0x74] sm:$0xf]
  %v112 = vld [vmem:[%s1 + $0x78] sm:$0xf]
  %v113 = vld [vmem:[%s1 + $0x7c] sm:$0xf]
  %v136 = vunpack.c.l.b16 %v60
  %v137 = vunpack.c.h.b16 %v60
  %v138 = vunpack.c.l.b16 %v61
  %v139 = vunpack.c.h.b16 %v61
  %v140 = vunpack.c.l.b16 %v62
  %v141 = vunpack.c.h.b16 %v62
  %v142 = vunpack.c.l.b16 %v63
  %v143 = vunpack.c.h.b16 %v63
  %v144 = vunpack.c.l.b16 %v64
  %v145 = vunpack.c.h.b16 %v64
  %v146 = vunpack.c.l.b16 %v65
  %v147 = vunpack.c.h.b16 %v65
  %v148 = vunpack.c.l.b16 %v66
  %v149 = vunpack.c.h.b16 %v66
  %v150 = vunpack.c.l.b16 %v67
  %v151 = vunpack.c.h.b16 %v67
  %v152 = vunpack.c.l.b16 %v68
  %v153 = vunpack.c.h.b16 %v68
  %v154 = vunpack.c.l.b16 %v69
  %v155 = vunpack.c.h.b16 %v69
  %v156 = vunpack.c.l.b16 %v70
  %v157 = vunpack.c.h.b16 %v70
  %v158 = vunpack.c.l.b16 %v71
  %v159 = vunpack.c.h.b16 %v71
  %v160 = vunpack.c.l.b16 %v72
  %v161 = vunpack.c.h.b16 %v72
  %v162 = vunpack.c.l.b16 %v73
  %v163 = vunpack.c.h.b16 %v73
  %v164 = vunpack.c.l.b16 %v74
  %v165 = vunpack.c.h.b16 %v74
  %v166 = vunpack.c.l.b16 %v75
  %v167 = vunpack.c.h.b16 %v75
  %v168 = vunpack.c.l.b16 %v76
  %v169 = vunpack.c.h.b16 %v76
  %v170 = vunpack.c.l.b16 %v77
  %v171 = vunpack.c.h.b16 %v77
  %v172 = vunpack.c.l.b16 %v78
  %v173 = vunpack.c.h.b16 %v78
  %v174 = vunpack.c.l.b16 %v79
  %v175 = vunpack.c.h.b16 %v79
  %v176 = vunpack.c.l.b16 %v80
  %v177 = vunpack.c.h.b16 %v80
  %v178 = vunpack.c.l.b16 %v81
  %v179 = vunpack.c.h.b16 %v81
  %v180 = vpack.c.b16 %v138, %v136
  %v181 = vpack.c.b16 %v139, %v137
  %v182 = vpack.c.b16 %v142, %v140
  %v183 = vpack.c.b16 %v143, %v141
  %v184 = vpack.c.b16 %v146, %v144
  %v185 = vpack.c.b16 %v147, %v145
  %v186 = vpack.c.b16 %v150, %v148
  %v187 = vpack.c.b16 %v151, %v149
  %v188 = vpack.c.b16 %v154, %v152
  %v189 = vpack.c.b16 %v155, %v153
  %v190 = vpack.c.b16 %v158, %v156
  %v191 = vpack.c.b16 %v159, %v157
  %v192 = vpack.c.b16 %v162, %v160
  %v193 = vpack.c.b16 %v163, %v161
  %v194 = vpack.c.b16 %v166, %v164
  %v195 = vpack.c.b16 %v167, %v165
  %v196 = vpack.c.b16 %v170, %v168
  %v197 = vpack.c.b16 %v171, %v169
  %v198 = vpack.c.b16 %v174, %v172
  %v199 = vpack.c.b16 %v175, %v173
  %v200 = vpack.c.b16 %v178, %v176
  %v201 = vpack.c.b16 %v179, %v177
  %v256 = vunpack.c.l.b16 %v82
  %v257 = vunpack.c.l.b16 %v83
  %v258 = vunpack.c.l.b16 %v84
  %v259 = vunpack.c.l.b16 %v85
  %v260 = vunpack.c.l.b16 %v86
  %v261 = vunpack.c.l.b16 %v87
  %v262 = vunpack.c.l.b16 %v88
  %v263 = vunpack.c.l.b16 %v89
  %v264 = vunpack.c.l.b16 %v90
  %v265 = vunpack.c.l.b16 %v91
  %v266 = vunpack.c.l.b16 %v92
  %v267 = vunpack.c.l.b16 %v93
  %v268 = vunpack.c.l.b16 %v94
  %v269 = vunpack.c.l.b16 %v95
  %v270 = vunpack.c.l.b16 %v96
  %v271 = vunpack.c.l.b16 %v97
  %v272 = vunpack.c.l.b16 %v98
  %v273 = vunpack.c.l.b16 %v99
  %v274 = vunpack.c.l.b16 %v100
  %v275 = vunpack.c.l.b16 %v101
  %v276 = vunpack.c.l.b16 %v102
  %v277 = vunpack.c.l.b16 %v103
  %v278 = vunpack.c.l.b16 %v104
  %v279 = vunpack.c.l.b16 %v105
  %v280 = vunpack.c.l.b16 %v106
  %v281 = vunpack.c.l.b16 %v107
  %v282 = vunpack.c.l.b16 %v108
  %v283 = vunpack.c.l.b16 %v109
  %v284 = vunpack.c.l.b16 %v110
  %v285 = vunpack.c.l.b16 %v111
  %v286 = vunpack.c.l.b16 %v112
  %v287 = vunpack.c.l.b16 %v113
  %v288 = vpack.c.b16 %v257, %v256
  %v289 = vpack.c.b16 %v259, %v258
  %v290 = vpack.c.b16 %v261, %v260
  %v291 = vpack.c.b16 %v263, %v262
  %v292 = vpack.c.b16 %v265, %v264
  %v293 = vpack.c.b16 %v267, %v266
  %v294 = vpack.c.b16 %v269, %v268
  %v295 = vpack.c.b16 %v271, %v270
  %v296 = vpack.c.b16 %v273, %v272
  %v297 = vpack.c.b16 %v275, %v274
  %v298 = vpack.c.b16 %v277, %v276
  %v299 = vpack.c.b16 %v279, %v278
  %v300 = vpack.c.b16 %v281, %v280
  %v301 = vpack.c.b16 %v283, %v282
  %v302 = vpack.c.b16 %v285, %v284
  %v303 = vpack.c.b16 %v287, %v286
  %320 = vmatprep.subr.bf16.mxu0 0
  %321 = vmatpush1.bf16.msra.mxu0 %v295
  %322 = vmatprep.subr.bf16.mxu0 0
  %323 = vmatpush1.bf16.msra.mxu0 %v294
  %324 = vmatprep.subr.bf16.mxu0 0
  %325 = vmatpush1.bf16.msra.mxu0 %v293
  %326 = vmatprep.subr.bf16.mxu0 0
  %327 = vmatpush1.bf16.msra.mxu0 %v292
  %328 = vmatprep.subr.bf16.mxu0 0
  %329 = vmatpush1.bf16.msra.mxu0 %v291
  %330 = vmatprep.subr.bf16.mxu0 0
  %331 = vmatpush1.bf16.msra.mxu0 %v290
  %332 = vmatprep.subr.bf16.mxu0 0
  %333 = vmatpush1.bf16.msra.mxu0 %v289
  %334 = vmatprep.subr.bf16.mxu0 0
  %335 = vmatpush1.bf16.msra.mxu0 %v288
  %336 = vmatprep.subr.bf16.mxu0 0
  %337 = vmatpush2.bf16.msra.mxu0 %v303
  %338 = vmatprep.subr.bf16.mxu0 0
  %339 = vmatpush2.bf16.msra.mxu0 %v302
  %340 = vmatprep.subr.bf16.mxu0 0
  %341 = vmatpush2.bf16.msra.mxu0 %v301
  %342 = vmatprep.subr.bf16.mxu0 0
  %343 = vmatpush2.bf16.msra.mxu0 %v300
  %344 = vmatprep.subr.bf16.mxu0 0
  %345 = vmatpush2.bf16.msra.mxu0 %v299
  %346 = vmatprep.subr.bf16.mxu0 0
  %347 = vmatpush2.bf16.msra.mxu0 %v298
  %348 = vmatprep.subr.bf16.mxu0 0
  %349 = vmatpush2.bf16.msra.mxu0 %v297
  %350 = vmatprep.subr.bf16.mxu0 0
  %351 = vmatpush2.bf16.msra.mxu0 %v296
  %352 = vmatprep.mubr.bf16.mxu0 %v181
  %353 = vmatmul.mubr.bf16.gmra.mxu0 %v180
  %v354 = vpop.f32.mrf.mxu0
  %v355 = vadd.f32 0.0, %v354
  %v356 = vpop.f32.mrf.mxu0
  %v357 = vpop.f32.mrf.mxu0
  %v358 = vadd.f32 0.0, %v357
  %v359 = vpop.f32.mrf.mxu0
  %360 = vmatprep.mubr.bf16.mxu0 %v183
  %361 = vmatmul.mubr.bf16.gmra.mxu0 %v182
  %v362 = vpop.f32.mrf.mxu0
  %v363 = vadd.f32 0.0, %v362
  %v364 = vpop.f32.mrf.mxu0
  %v365 = vpop.f32.mrf.mxu0
  %v366 = vadd.f32 0.0, %v365
  %v367 = vpop.f32.mrf.mxu0
  %368 = vmatprep.mubr.bf16.mxu0 %v185
  %369 = vmatmul.mubr.bf16.gmra.mxu0 %v184
  %v370 = vpop.f32.mrf.mxu0
  %v371 = vadd.f32 0.0, %v370
  %v372 = vpop.f32.mrf.mxu0
  %v373 = vpop.f32.mrf.mxu0
  %v374 = vadd.f32 0.0, %v373
  %v375 = vpop.f32.mrf.mxu0
  %376 = vmatprep.mubr.bf16.mxu0 %v187
  %377 = vmatmul.mubr.bf16.gmra.mxu0 %v186
  %v378 = vpop.f32.mrf.mxu0
  %v379 = vadd.f32 0.0, %v378
  %v380 = vpop.f32.mrf.mxu0
  %v381 = vpop.f32.mrf.mxu0
  %v382 = vadd.f32 0.0, %v381
  %v383 = vpop.f32.mrf.mxu0
  %384 = vmatprep.mubr.bf16.mxu0 %v189
  %385 = vmatmul.mubr.bf16.gmra.mxu0 %v188
  %v386 = vpop.f32.mrf.mxu0
  %v387 = vadd.f32 0.0, %v386
  %v388 = vpop.f32.mrf.mxu0
  %v389 = vpop.f32.mrf.mxu0
  %v390 = vadd.f32 0.0, %v389
  %v391 = vpop.f32.mrf.mxu0
  %392 = vmatprep.mubr.bf16.mxu0 %v191
  %393 = vmatmul.mubr.bf16.gmra.mxu0 %v190
  %v394 = vpop.f32.mrf.mxu0
  %v395 = vadd.f32 0.0, %v394
  %v396 = vpop.f32.mrf.mxu0
  %v397 = vpop.f32.mrf.mxu0
  %v398 = vadd.f32 0.0, %v397
  %v399 = vpop.f32.mrf.mxu0
  %400 = vmatprep.mubr.bf16.mxu0 %v193
  %401 = vmatmul.mubr.bf16.gmra.mxu0 %v192
  %v402 = vpop.f32.mrf.mxu0
  %v403 = vadd.f32 0.0, %v402
  %v404 = vpop.f32.mrf.mxu0
  %v405 = vpop.f32.mrf.mxu0
  %v406 = vadd.f32 0.0, %v405
  %v407 = vpop.f32.mrf.mxu0
  %408 = vmatprep.mubr.bf16.mxu0 %v195
  %409 = vmatmul.mubr.bf16.gmra.mxu0 %v194
  %v410 = vpop.f32.mrf.mxu0
  %v411 = vadd.f32 0.0, %v410
  %v412 = vpop.f32.mrf.mxu0
  %v413 = vpop.f32.mrf.mxu0
  %v414 = vadd.f32 0.0, %v413
  %v415 = vpop.f32.mrf.mxu0
  %416 = vmatprep.mubr.bf16.mxu0 %v197
  %417 = vmatmul.mubr.bf16.gmra.mxu0 %v196
  %v418 = vpop.f32.mrf.mxu0
  %v419 = vadd.f32 0.0, %v418
  %v420 = vpop.f32.mrf.mxu0
  %v421 = vpop.f32.mrf.mxu0
  %v422 = vadd.f32 0.0, %v421
  %v423 = vpop.f32.mrf.mxu0
  %424 = vmatprep.mubr.bf16.mxu0 %v199
  %425 = vmatmul.mubr.bf16.gmra.mxu0 %v198
  %v426 = vpop.f32.mrf.mxu0
  %v427 = vadd.f32 0.0, %v426
  %v428 = vpop.f32.mrf.mxu0
  %v429 = vpop.f32.mrf.mxu0
  %v430 = vadd.f32 0.0, %v429
  %v431 = vpop.f32.mrf.mxu0
  %432 = vmatprep.mubr.bf16.mxu0 %v201
  %433 = vmatmul.mubr.bf16.gmra.mxu0 %v200
  %v434 = vpop.f32.mrf.mxu0
  %v435 = vadd.f32 0.0, %v434
  %v436 = vpop.f32.mrf.mxu0
  %v437 = vpop.f32.mrf.mxu0
  %v438 = vadd.f32 0.0, %v437
  %v439 = vpop.f32.mrf.mxu0
  %440 = vdwg.mxu0
  %v441 = vadd.f32 %v38, %v355
  %v442 = vadd.f32 %v39, %v358
  %v443 = vadd.f32 %v40, %v363
  %v444 = vadd.f32 %v41, %v366
  %v445 = vadd.f32 %v42, %v371
  %v446 = vadd.f32 %v43, %v374
  %v447 = vadd.f32 %v44, %v379
  %v448 = vadd.f32 %v45, %v382
  %v449 = vadd.f32 %v46, %v387
  %v450 = vadd.f32 %v47, %v390
  %v451 = vadd.f32 %v48, %v395
  %v452 = vadd.f32 %v49, %v398
  %v453 = vadd.f32 %v50, %v403
  %v454 = vadd.f32 %v51, %v406
  %v455 = vadd.f32 %v52, %v411
  %v456 = vadd.f32 %v53, %v414
  %v457 = vadd.f32 %v54, %v419
  %v458 = vadd.f32 %v55, %v422
  %v459 = vadd.f32 %v56, %v427
  %v460 = vadd.f32 %v57, %v430
  %v461 = vadd.f32 %v58, %v435
  %v462 = vadd.f32 %v59, %v438
  %463 = vst [vmem:[#allocation2] sm:$0xff] %v441
  %464 = vst [vmem:[#allocation2 + $0x8] sm:$0xff] %v442
  %465 = vst [vmem:[#allocation2 + $0x10] sm:$0xff] %v443
  %466 = vst [vmem:[#allocation2 + $0x18] sm:$0xff] %v444
  %467 = vst [vmem:[#allocation2 + $0x20] sm:$0xff] %v445
  %468 = vst [vmem:[#allocation2 + $0x28] sm:$0xff] %v446
  %469 = vst [vmem:[#allocation2 + $0x30] sm:$0xff] %v447
  %470 = vst [vmem:[#allocation2 + $0x38] sm:$0xff] %v448
  %471 = vst [vmem:[#allocation2 + $0x40] sm:$0xff] %v449
  %472 = vst [vmem:[#allocation2 + $0x48] sm:$0xff] %v450
  %473 = vst [vmem:[#allocation2 + $0x50] sm:$0xff] %v451
  %474 = vst [vmem:[#allocation2 + $0x58] sm:$0xff] %v452
  %475 = vst [vmem:[#allocation2 + $0x60] sm:$0xff] %v453
  %476 = vst [vmem:[#allocation2 + $0x68] sm:$0xff] %v454
  %477 = vst [vmem:[#allocation2 + $0x70] sm:$0xff] %v455
  %478 = vst [vmem:[#allocation2 + $0x78] sm:$0xff] %v456
  %479 = vst [vmem:[#allocation2 + $0x80] sm:$0xff] %v457
  %480 = vst [vmem:[#allocation2 + $0x88] sm:$0xff] %v458
  %481 = vst [vmem:[#allocation2 + $0x90] sm:$0xff] %v459
  %482 = vst [vmem:[#allocation2 + $0x98] sm:$0xff] %v460
  %483 = vst [vmem:[#allocation2 + $0xa0] sm:$0xff] %v461
  %484 = vst [vmem:[#allocation2 + $0xa8] sm:$0xff] %v462
  // Predicated region
  $region14: #{dcsa_forward.21} parent=0 // pred_check
    %p485 = pneg %p12
  $region15: #{dcsa_forward.21} parent=0 // pred_check_branch
    %487 = sbr.rel (%p485) target = $region17
  $region16: #{dcsa_forward.21} parent=0 // pred_region
    %v488 = vld [vmem:[#allocation2] sm:$0xff]
    %v489 = vld [vmem:[#allocation2 + $0x8] sm:$0xff]
    %v490 = vld [vmem:[#allocation2 + $0x10] sm:$0xff]
    %v491 = vld [vmem:[#allocation2 + $0x18] sm:$0xff]
    %v492 = vld [vmem:[#allocation2 + $0x20] sm:$0xff]
    %v493 = vld [vmem:[#allocation2 + $0x28] sm:$0xff]
    %v494 = vld [vmem:[#allocation2 + $0x30] sm:$0xff]
    %v495 = vld [vmem:[#allocation2 + $0x38] sm:$0xff]
    %v496 = vld [vmem:[#allocation2 + $0x40] sm:$0xff]
    %v497 = vld [vmem:[#allocation2 + $0x48] sm:$0xff]
    %v498 = vld [vmem:[#allocation2 + $0x50] sm:$0xff]
    %v499 = vld [vmem:[#allocation2 + $0x58] sm:$0xff]
    %v500 = vld [vmem:[#allocation2 + $0x60] sm:$0xff]
    %v501 = vld [vmem:[#allocation2 + $0x68] sm:$0xff]
    %v502 = vld [vmem:[#allocation2 + $0x70] sm:$0xff]
    %v503 = vld [vmem:[#allocation2 + $0x78] sm:$0xff]
    %v504 = vld [vmem:[#allocation2 + $0x80] sm:$0xff]
    %v505 = vld [vmem:[#allocation2 + $0x88] sm:$0xff]
    %v506 = vld [vmem:[#allocation2 + $0x90] sm:$0xff]
    %v507 = vld [vmem:[#allocation2 + $0x98] sm:$0xff]
    %v508 = vld [vmem:[#allocation2 + $0xa0] sm:$0xff]
    %v509 = vld [vmem:[#allocation2 + $0xa8] sm:$0xff]
    %510 = vst [vmem:[%s2] sm:$0xff] %v488
    %511 = vst [vmem:[%s2 + $0x8] sm:$0xff] %v489
    %512 = vst [vmem:[%s2 + $0x10] sm:$0xff] %v490
    %513 = vst [vmem:[%s2 + $0x18] sm:$0xff] %v491
    %514 = vst [vmem:[%s2 + $0x20] sm:$0xff] %v492
    %515 = vst [vmem:[%s2 + $0x28] sm:$0xff] %v493
    %516 = vst [vmem:[%s2 + $0x30] sm:$0xff] %v494
    %517 = vst [vmem:[%s2 + $0x38] sm:$0xff] %v495
    %518 = vst [vmem:[%s2 + $0x40] sm:$0xff] %v496
    %519 = vst [vmem:[%s2 + $0x48] sm:$0xff] %v497
    %520 = vst [vmem:[%s2 + $0x50] sm:$0xff] %v498
    %521 = vst [vmem:[%s2 + $0x58] sm:$0xff] %v499
    %522 = vst [vmem:[%s2 + $0x60] sm:$0xff] %v500
    %523 = vst [vmem:[%s2 + $0x68] sm:$0xff] %v501
    %524 = vst [vmem:[%s2 + $0x70] sm:$0xff] %v502
    %525 = vst [vmem:[%s2 + $0x78] sm:$0xff] %v503
    %526 = vst [vmem:[%s2 + $0x80] sm:$0xff] %v504
    %527 = vst [vmem:[%s2 + $0x88] sm:$0xff] %v505
    %528 = vst [vmem:[%s2 + $0x90] sm:$0xff] %v506
    %529 = vst [vmem:[%s2 + $0x98] sm:$0xff] %v507
    %530 = vst [vmem:[%s2 + $0xa0] sm:$0xff] %v508
    %531 = vst [vmem:[%s2 + $0xa8] sm:$0xff] %v509
  $region17: #{dcsa_forward.21} parent=0 // pred_fallthru
    _
  // Predicated region
  $region18: #{dcsa_forward.21} parent=0 // pred_check
    _
  $region19: #{dcsa_forward.21} parent=0 // pred_check_branch
    %533 = sbr.rel (0) target = $region21
  $region20: #{dcsa_forward.21} parent=0 // pred_region
    _
  $region21: #{dcsa_forward.21} parent=0 // pred_fallthru
    _
  // Predicated region
  $region22: #{dcsa_forward.21} parent=0 // pred_check
    _
  $region23: #{dcsa_forward.21} parent=0 // pred_check_branch
    %535 = sbr.rel (0) target = $region25
  $region24: #{dcsa_forward.21} parent=0 // pred_region
    _
  $region25: #{dcsa_forward.21} parent=0 // pred_fallthru
    _

// kernel: dcsa_forward.22
$region0: #{dcsa_forward.22}
  #allocation0 [shape = 'u32[]', space=smem, size = 0x4, offset = 0x4, fixed_abs, tag = 'smem constant byte address 0x4 - core index']
  #allocation1 [shape = 'u32[144,128]{1,0:T(1,128)}', space=vmem, size = 0x12000, scoped, tag = 'internal scratch']
  #allocation2 [shape = 'f32[2,128]{1,0:T(2,128)}', space=vmem, size = 0x400, scoped, tag = 'scratch operand']
  %s0 = inlined_call_operand.vmem [shape: f32[128,128], index: 0, kind: input, shape index: {}]
  %s1 = inlined_call_operand.vmem [shape: f32[2,128], index: 1, kind: output, shape index: {}]
  %s2 = sld [smem:[#allocation0]]
  $region22: #{dcsa_forward.22} parent=0
    _
  %s4 = ssub.s32 1, %s2
  %s5 = scalar_select 0, %s4, %s2
  // Predicated region
  $region2: #{dcsa_forward.22} parent=0 // pred_check
    _
  $region3: #{dcsa_forward.22} parent=0 // pred_check_branch
    %7 = sbr.rel (0) target = $region5
  $region4: #{dcsa_forward.22} parent=0 // pred_region
    _
  $region5: #{dcsa_forward.22} parent=0 // pred_fallthru
    _
  %p8 = scmp.eq.s32.totalorder 0, 0
  // Predicated region
  $region6: #{dcsa_forward.22} parent=0 // pred_check
    %p9 = pneg %p8
  $region7: #{dcsa_forward.22} parent=0 // pred_check_branch
    %11 = sbr.rel (%p9) target = $region9
  $region8: #{dcsa_forward.22} parent=0 // pred_region
    %12 = vst [vmem:[#allocation2] sm:$0x3] 0.0
  $region9: #{dcsa_forward.22} parent=0 // pred_fallthru
    _
  %v13 = vld [vmem:[%s0] sm:$0xff]
  %v14 = vld [vmem:[%s0 + $0x8] sm:$0xff]
  %v15 = vld [vmem:[%s0 + $0x10] sm:$0xff]
  %v16 = vld [vmem:[%s0 + $0x18] sm:$0xff]
  %v17 = vld [vmem:[%s0 + $0x20] sm:$0xff]
  %v18 = vld [vmem:[%s0 + $0x28] sm:$0xff]
  %v19 = vld [vmem:[%s0 + $0x30] sm:$0xff]
  %v20 = vld [vmem:[%s0 + $0x38] sm:$0xff]
  %v21 = vld [vmem:[%s0 + $0x40] sm:$0xff]
  %v22 = vld [vmem:[%s0 + $0x48] sm:$0xff]
  %v23 = vld [vmem:[%s0 + $0x50] sm:$0xff]
  %v24 = vld [vmem:[%s0 + $0x58] sm:$0xff]
  %v25 = vld [vmem:[%s0 + $0x60] sm:$0xff]
  %v26 = vld [vmem:[%s0 + $0x68] sm:$0xff]
  %v27 = vld [vmem:[%s0 + $0x70] sm:$0xff]
  %v28 = vld [vmem:[%s0 + $0x78] sm:$0xff]
  %v29 = vld [vmem:[#allocation2] sm:$0x1]
  %v30 = vadd.f32 %v13, %v14
  %v31 = vadd.f32 %v30, %v15
  %v32 = vadd.f32 %v31, %v16
  %v33 = vadd.f32 %v32, %v17
  %v34 = vadd.f32 %v33, %v18
  %v35 = vadd.f32 %v34, %v19
  %v36 = vadd.f32 %v35, %v20
  %v37 = vadd.f32 %v36, %v21
  %v38 = vadd.f32 %v37, %v22
  %v39 = vadd.f32 %v38, %v23
  %v40 = vadd.f32 %v39, %v24
  %v41 = vadd.f32 %v40, %v25
  %v42 = vadd.f32 %v41, %v26
  %v43 = vadd.f32 %v42, %v27
  %v44 = vadd.f32 %v43, %v28
  %v45 = vrot.slane %v44, 4
  %v46 = vadd.f32 %v44, %v45
  %v47 = vrot.slane %v46, 2
  %v48 = vadd.f32 %v46, %v47
  %v49 = vrot.slane %v48, 1
  %v50 = vadd.f32 %v48, %v49
  %v51 = vadd.f32 %v29, %v50
  %52 = vst [vmem:[#allocation2] sm:$0x1] %v51
  %v53 = vld [vmem:[#allocation2 + $0x1] sm:$0x1]
  %v54 = vmul.f32 %v13, %v13
  %v55 = vmul.f32 %v14, %v14
  %v56 = vmul.f32 %v15, %v15
  %v57 = vmul.f32 %v16, %v16
  %v58 = vmul.f32 %v17, %v17
  %v59 = vmul.f32 %v18, %v18
  %v60 = vmul.f32 %v19, %v19
  %v61 = vmul.f32 %v20, %v20
  %v62 = vmul.f32 %v21, %v21
  %v63 = vmul.f32 %v22, %v22
  %v64 = vmul.f32 %v23, %v23
  %v65 = vmul.f32 %v24, %v24
  %v66 = vmul.f32 %v25, %v25
  %v67 = vmul.f32 %v26, %v26
  %v68 = vmul.f32 %v27, %v27
  %v69 = vmul.f32 %v28, %v28
  %v70 = vadd.f32 %v54, %v55
  %v71 = vadd.f32 %v70, %v56
  %v72 = vadd.f32 %v71, %v57
  %v73 = vadd.f32 %v72, %v58
  %v74 = vadd.f32 %v73, %v59
  %v75 = vadd.f32 %v74, %v60
  %v76 = vadd.f32 %v75, %v61
  %v77 = vadd.f32 %v76, %v62
  %v78 = vadd.f32 %v77, %v63
  %v79 = vadd.f32 %v78, %v64
  %v80 = vadd.f32 %v79, %v65
  %v81 = vadd.f32 %v80, %v66
  %v82 = vadd.f32 %v81, %v67
  %v83 = vadd.f32 %v82, %v68
  %v84 = vadd.f32 %v83, %v69
  %v85 = vrot.slane %v84, 4
  %v86 = vadd.f32 %v84, %v85
  %v87 = vrot.slane %v86, 2
  %v88 = vadd.f32 %v86, %v87
  %v89 = vrot.slane %v88, 1
  %v90 = vadd.f32 %v88, %v89
  %v91 = vadd.f32 %v53, %v90
  %92 = vst [vmem:[#allocation2 + $0x1] sm:$0x1] %v91
  // Predicated region
  $region10: #{dcsa_forward.22} parent=0 // pred_check
    %p93 = pneg %p8
  $region11: #{dcsa_forward.22} parent=0 // pred_check_branch
    %95 = sbr.rel (%p93) target = $region13
  $region12: #{dcsa_forward.22} parent=0 // pred_region
    %v96 = vld [vmem:[#allocation2] sm:$0x3]
    %97 = vst [vmem:[%s1] sm:$0x3] %v96
  $region13: #{dcsa_forward.22} parent=0 // pred_fallthru
    _
  // Predicated region
  $region14: #{dcsa_forward.22} parent=0 // pred_check
    _
  $region15: #{dcsa_forward.22} parent=0 // pred_check_branch
    %99 = sbr.rel (0) target = $region17
  $region16: #{dcsa_forward.22} parent=0 // pred_region
    _
  $region17: #{dcsa_forward.22} parent=0 // pred_fallthru
    _
  // Predicated region
  $region18: #{dcsa_forward.22} parent=0 // pred_check
    _
  $region19: #{dcsa_forward.22} parent=0 // pred_check_branch
    %101 = sbr.rel (0) target = $region21
  $region20: #{dcsa_forward.22} parent=0 // pred_region
    _
  $region21: #{dcsa_forward.22} parent=0 // pred_fallthru
    _

// kernel: dcsa_forward.23
$region0: #{dcsa_forward.23}
  #allocation0 [shape = 'u32[]', space=smem, size = 0x4, offset = 0x4, fixed_abs, tag = 'smem constant byte address 0x4 - core index']
  #allocation1 [shape = 'u32[144,128]{1,0:T(1,128)}', space=vmem, size = 0x12000, scoped, tag = 'internal scratch']
  %s0 = inlined_call_operand.vmem [shape: f32[128,128], index: 0, kind: input, shape index: {}]
  %s1 = inlined_call_operand.vmem [shape: f32[1,128], index: 1, kind: input, shape index: {}]
  %s2 = inlined_call_operand.vmem [shape: f32[1,128], index: 2, kind: input, shape index: {}]
  %s3 = inlined_call_operand.vmem [shape: f32[128,128], index: 3, kind: output, shape index: {}]
  %s4 = sld [smem:[#allocation0]]
  $region22: #{dcsa_forward.23} parent=0
    _
  %s6 = ssub.s32 1, %s4
  %s7 = scalar_select 0, %s6, %s4
  // Predicated region
  $region2: #{dcsa_forward.23} parent=0 // pred_check
    _
  $region3: #{dcsa_forward.23} parent=0 // pred_check_branch
    %9 = sbr.rel (0) target = $region5
  $region4: #{dcsa_forward.23} parent=0 // pred_region
    _
  $region5: #{dcsa_forward.23} parent=0 // pred_fallthru
    _
  // Predicated region
  $region6: #{dcsa_forward.23} parent=0 // pred_check
    _
  $region7: #{dcsa_forward.23} parent=0 // pred_check_branch
    %11 = sbr.rel (0) target = $region9
  $region8: #{dcsa_forward.23} parent=0 // pred_region
    _
  $region9: #{dcsa_forward.23} parent=0 // pred_fallthru
    _
  // Predicated region
  $region10: #{dcsa_forward.23} parent=0 // pred_check
    _
  $region11: #{dcsa_forward.23} parent=0 // pred_check_branch
    %13 = sbr.rel (0) target = $region13
  $region12: #{dcsa_forward.23} parent=0 // pred_region
    _
  $region13: #{dcsa_forward.23} parent=0 // pred_fallthru
    _
  %v14 = vld [vmem:[%s0] sm:$0xff]
  %v15 = vld [vmem:[%s0 + $0x8] sm:$0xff]
  %v16 = vld [vmem:[%s0 + $0x10] sm:$0xff]
  %v17 = vld [vmem:[%s0 + $0x18] sm:$0xff]
  %v18 = vld [vmem:[%s0 + $0x20] sm:$0xff]
  %v19 = vld [vmem:[%s0 + $0x28] sm:$0xff]
  %v20 = vld [vmem:[%s0 + $0x30] sm:$0xff]
  %v21 = vld [vmem:[%s0 + $0x38] sm:$0xff]
  %v22 = vld [vmem:[%s0 + $0x40] sm:$0xff]
  %v23 = vld [vmem:[%s0 + $0x48] sm:$0xff]
  %v24 = vld [vmem:[%s0 + $0x50] sm:$0xff]
  %v25 = vld [vmem:[%s0 + $0x58] sm:$0xff]
  %v26 = vld [vmem:[%s0 + $0x60] sm:$0xff]
  %v27 = vld [vmem:[%s0 + $0x68] sm:$0xff]
  %v28 = vld [vmem:[%s0 + $0x70] sm:$0xff]
  %v29 = vld [vmem:[%s0 + $0x78] sm:$0xff]
  %v30 = vld [vmem:[%s1] sm:$0x1]
  %v32 = vlaneseq
  %v33 = vshrl.u32 %v32, 7
  %v34 = vsub.s32 0, %v33
  %v35 = vrot.slane %v30, %v34
  %v37 = vmul.f32 %v14, %v35
  %v38 = vmul.f32 %v15, %v35
  %v39 = vmul.f32 %v16, %v35
  %v40 = vmul.f32 %v17, %v35
  %v41 = vmul.f32 %v18, %v35
  %v42 = vmul.f32 %v19, %v35
  %v43 = vmul.f32 %v20, %v35
  %v44 = vmul.f32 %v21, %v35
  %v45 = vmul.f32 %v22, %v35
  %v46 = vmul.f32 %v23, %v35
  %v47 = vmul.f32 %v24, %v35
  %v48 = vmul.f32 %v25, %v35
  %v49 = vmul.f32 %v26, %v35
  %v50 = vmul.f32 %v27, %v35
  %v51 = vmul.f32 %v28, %v35
  %v52 = vmul.f32 %v29, %v35
  %v53 = vld [vmem:[%s2] sm:$0x1]
  %v55 = vlaneseq
  %v56 = vshrl.u32 %v55, 7
  %v57 = vsub.s32 0, %v56
  %v58 = vrot.slane %v53, %v57
  %v60 = vadd.f32 %v37, %v58
  %v61 = vadd.f32 %v38, %v58
  %v62 = vadd.f32 %v39, %v58
  %v63 = vadd.f32 %v40, %v58
  %v64 = vadd.f32 %v41, %v58
  %v65 = vadd.f32 %v42, %v58
  %v66 = vadd.f32 %v43, %v58
  %v67 = vadd.f32 %v44, %v58
  %v68 = vadd.f32 %v45, %v58
  %v69 = vadd.f32 %v46, %v58
  %v70 = vadd.f32 %v47, %v58
  %v71 = vadd.f32 %v48, %v58
  %v72 = vadd.f32 %v49, %v58
  %v73 = vadd.f32 %v50, %v58
  %v74 = vadd.f32 %v51, %v58
  %v75 = vadd.f32 %v52, %v58
  %v76 = vmax.f32 %v60, 0.0
  %v77 = vmax.f32 %v61, 0.0
  %v78 = vmax.f32 %v62, 0.0
  %v79 = vmax.f32 %v63, 0.0
  %v80 = vmax.f32 %v64, 0.0
  %v81 = vmax.f32 %v65, 0.0
  %v82 = vmax.f32 %v66, 0.0
  %v83 = vmax.f32 %v67, 0.0
  %v84 = vmax.f32 %v68, 0.0
  %v85 = vmax.f32 %v69, 0.0
  %v86 = vmax.f32 %v70, 0.0
  %v87 = vmax.f32 %v71, 0.0
  %v88 = vmax.f32 %v72, 0.0
  %v89 = vmax.f32 %v73, 0.0
  %v90 = vmax.f32 %v74, 0.0
  %v91 = vmax.f32 %v75, 0.0
  %92 = vst [vmem:[%s3] sm:$0xff] %v76
  %93 = vst [vmem:[%s3 + $0x8] sm:$0xff] %v77
  %94 = vst [vmem:[%s3 + $0x10] sm:$0xff] %v78
  %95 = vst [vmem:[%s3 + $0x18] sm:$0xff] %v79
  %96 = vst [vmem:[%s3 + $0x20] sm:$0xff] %v80
  %97 = vst [vmem:[%s3 + $0x28] sm:$0xff] %v81
  %98 = vst [vmem:[%s3 + $0x30] sm:$0xff] %v82
  %99 = vst [vmem:[%s3 + $0x38] sm:$0xff] %v83
  %100 = vst [vmem:[%s3 + $0x40] sm:$0xff] %v84
  %101 = vst [vmem:[%s3 + $0x48] sm:$0xff] %v85
  %102 = vst [vmem:[%s3 + $0x50] sm:$0xff] %v86
  %103 = vst [vmem:[%s3 + $0x58] sm:$0xff] %v87
  %104 = vst [vmem:[%s3 + $0x60] sm:$0xff] %v88
  %105 = vst [vmem:[%s3 + $0x68] sm:$0xff] %v89
  %106 = vst [vmem:[%s3 + $0x70] sm:$0xff] %v90
  %107 = vst [vmem:[%s3 + $0x78] sm:$0xff] %v91
  // Predicated region
  $region14: #{dcsa_forward.23} parent=0 // pred_check
    _
  $region15: #{dcsa_forward.23} parent=0 // pred_check_branch
    %109 = sbr.rel (0) target = $region17
  $region16: #{dcsa_forward.23} parent=0 // pred_region
    _
  $region17: #{dcsa_forward.23} parent=0 // pred_fallthru
    _
  // Predicated region
  $region18: #{dcsa_forward.23} parent=0 // pred_check
    _
  $region19: #{dcsa_forward.23} parent=0 // pred_check_branch
    %111 = sbr.rel (0) target = $region21
  $region20: #{dcsa_forward.23} parent=0 // pred_region
    _
  $region21: #{dcsa_forward.23} parent=0 // pred_fallthru
    _

// kernel: dcsa_forward.24
$region0: #{dcsa_forward.24}
  #allocation0 [shape = 'u32[]', space=smem, size = 0x4, offset = 0x4, fixed_abs, tag = 'smem constant byte address 0x4 - core index']
  #allocation1 [shape = 'u32[144,128]{1,0:T(1,128)}', space=vmem, size = 0x12000, scoped, tag = 'internal scratch']
  #allocation2 [shape = 'f32[512,128]{1,0:T(8,128)}', space=vmem, size = 0x40000, scoped, tag = 'scratch operand']
  %s0 = inlined_call_operand.vmem [shape: bf16[1024,128], index: 0, kind: input, shape index: {}]
  %s1 = inlined_call_operand.vmem [shape: bf16[128,128], index: 1, kind: input, shape index: {}]
  %s2 = inlined_call_operand.vmem [shape: f32[1024,128], index: 2, kind: output, shape index: {}]
  %s3 = sld [smem:[#allocation0]]
  $region49: #{dcsa_forward.24} parent=0
    _
  %s5 = ssub.s32 1, %s3
  %s6 = scalar_select 0, %s5, %s3
  loop: start=0, step=1, limit=4
  $region2: #{dcsa_forward.24} parent=0 // loop_pre_header
    _
  $region3: #{dcsa_forward.24} parent=0 // loop_header
    %s8 = sphi 0, %s12
    %p9 = scmp.ge.s32.totalorder %s8, 4
    %s15 = sphi 0, %s34
    %s16 = sphi 0, %s30
    %s17 = sphi 0, %s26
    %s18 = sphi 0, %s15
    %s19 = sphi 0, %s16
    %s20 = sphi 0, %s17
    %s21 = sphi 0, %s18
    %s22 = sphi 0, %s19
    %s23 = sphi 0, %s20
    %s39 = sphi 0, %s41
    %s42 = sphi 0, %s39
    %s43 = sphi 0, %s42
    %s59 = sphi 0, %s43
    %s67 = sphi 0, %s69
    %s70 = sphi 0, %s67
    %s71 = sphi 0, %s70
    %s87 = sphi 0, %s71
    %s95 = sphi 0, %s97
    %s98 = sphi 0, %s95
    %s99 = sphi 0, %s98
    %s115 = sphi 0, %s99
  $region4: #{dcsa_forward.24} parent=0 // loop_header_branch
    %11 = sbr.rel (%p9) target = $region8
  $region5: #{dcsa_forward.24} parent=0 // loop_body
    %s13 = ssub.s32 %s8, 1
    %s14 = ssub.s32 %s8, 2
    %s24 = sadd.s32 1, %s17
    %p25 = scmp.ge.s32.totalorder %s24, 1
    %s26 = scalar_select %p25, 0, %s24
    %s27 = sadd.s32 1, %s16
    %s28 = scalar_select %p25, %s27, %s16
    %p29 = scmp.ge.s32.totalorder %s28, 1
    %s30 = scalar_select %p29, 0, %s28
    %s31 = sadd.s32 1, %s15
    %s32 = scalar_select %p29, %s31, %s15
    %p33 = scmp.ge.s32.totalorder %s32, 2
    %s34 = scalar_select %p33, 0, %s32
    %s35 = ssub.s32 %s15, %s34
    %s36 = ssub.s32 %s17, %s26
    %s37 = sor.u32 %s35, %s36
    %p38 = scmp.eq.s32.totalorder %s37, 0
    %s40 = sadd.s32 %s39, 1
    %s41 = scalar_select %p38, %s39, %s40
    %p44 = pneg %p38
    %p45 = scmp.eq.s32.totalorder %s8, 1
    %p46 = por %p44, %p45
    %p47 = scmp.ne.s32.totalorder %s39, %s42
    %p48 = scmp.eq.s32.totalorder %s8, 0
    %p49 = por %p47, %p48
    %p50 = scmp.ne.s32.totalorder %s39, %s42
    %p51 = scmp.eq.s32.totalorder %s13, 1
    %p52 = por %p50, %p51
    %p53 = scmp.ne.s32.totalorder %s42, %s43
    %p54 = scmp.eq.s32.totalorder %s13, 0
    %p55 = por %p53, %p54
    %p56 = scmp.ne.s32.totalorder %s42, %s43
    %p57 = scmp.eq.s32.totalorder %s14, 1
    %p58 = por %p56, %p57
    %p60 = scmp.ne.s32.totalorder %s43, %s59
    %p61 = scmp.eq.s32.totalorder %s14, 0
    %p62 = por %p60, %p61
    %s63 = ssub.s32 %s17, %s26
    %s64 = ssub.s32 %s16, %s30
    %s65 = sor.u32 %s63, %s64
    %p66 = scmp.eq.s32.totalorder %s65, 0
    %s68 = sadd.s32 %s67, 1
    %s69 = scalar_select %p66, %s67, %s68
    %p72 = pneg %p66
    %p73 = scmp.eq.s32.totalorder %s8, 1
    %p74 = por %p72, %p73
    %p75 = scmp.ne.s32.totalorder %s67, %s70
    %p76 = scmp.eq.s32.totalorder %s8, 0
    %p77 = por %p75, %p76
    %p78 = scmp.ne.s32.totalorder %s67, %s70
    %p79 = scmp.eq.s32.totalorder %s13, 1
    %p80 = por %p78, %p79
    %p81 = scmp.ne.s32.totalorder %s70, %s71
    %p82 = scmp.eq.s32.totalorder %s13, 0
    %p83 = por %p81, %p82
    %p84 = scmp.ne.s32.totalorder %s70, %s71
    %p85 = scmp.eq.s32.totalorder %s14, 1
    %p86 = por %p84, %p85
    %p88 = scmp.ne.s32.totalorder %s71, %s87
    %p89 = scmp.eq.s32.totalorder %s14, 0
    %p90 = por %p88, %p89
    %s91 = ssub.s32 %s15, %s34
    %s92 = ssub.s32 %s16, %s30
    %s93 = sor.u32 %s91, %s92
    %p94 = scmp.eq.s32.totalorder %s93, 0
    %s96 = sadd.s32 %s95, 1
    %s97 = scalar_select %p94, %s95, %s96
    %p100 = pneg %p94
    %p101 = scmp.eq.s32.totalorder %s8, 1
    %p102 = por %p100, %p101
    %p103 = scmp.ne.s32.totalorder %s95, %s98
    %p104 = scmp.eq.s32.totalorder %s8, 0
    %p105 = por %p103, %p104
    %p106 = scmp.ne.s32.totalorder %s95, %s98
    %p107 = scmp.eq.s32.totalorder %s13, 1
    %p108 = por %p106, %p107
    %p109 = scmp.ne.s32.totalorder %s98, %s99
    %p110 = scmp.eq.s32.totalorder %s13, 0
    %p111 = por %p109, %p110
    %p112 = scmp.ne.s32.totalorder %s98, %s99
    %p113 = scmp.eq.s32.totalorder %s14, 1
    %p114 = por %p112, %p113
    %p116 = scmp.ne.s32.totalorder %s99, %s115
    %p117 = scmp.eq.s32.totalorder %s14, 0
    %p118 = por %p116, %p117
    %p119 = scmp.le.s32.totalorder 1, %s8
    %p120 = scmp.lt.s32.totalorder %s8, 3
    %p121 = pnand %p119, %p120
    %p122 = pneg %p121
    // Predicated region
    $region9: #{dcsa_forward.24} parent=5 // pred_check
      _
    $region10: #{dcsa_forward.24} parent=5 // pred_check_branch
      %124 = sbr.rel (%p121) target = $region12
    $region11: #{dcsa_forward.24} parent=5 // pred_region
      %s125 = ssub.s32 %s8, 1
      // Predicated region
      $region13: #{dcsa_forward.24} parent=11 // pred_check
        %p126 = pneg %p83
      $region14: #{dcsa_forward.24} parent=11 // pred_check_branch
        %128 = sbr.rel (%p126) target = $region16
      $region15: #{dcsa_forward.24} parent=11 // pred_region
        %s129 = smul.u32 16, %s20
        %p130 = scmp.lt.s32.totalorder %s129, 15
        %s131 = scalar_select %p130, %s129, 15
        %p132 = scmp.lt.s32.totalorder %s19, 0
        %s133 = scalar_select %p132, %s19, 0
        %s134 = sadd.s32 %s133, %s131
        %s135 = smul.addr %s134, 4
        %s136 = scalar_lea.vmem %s1, %s135
        %s137 = smul.u32 16, %s20
      $region16: #{dcsa_forward.24} parent=11 // pred_fallthru
        _
    $region12: #{dcsa_forward.24} parent=5 // pred_fallthru
      _
    %p138 = scmp.lt.s32.totalorder %s8, 2
    // Predicated region
    $region17: #{dcsa_forward.24} parent=5 // pred_check
      %p139 = pneg %p138
    $region18: #{dcsa_forward.24} parent=5 // pred_check_branch
      %141 = sbr.rel (%p139) target = $region20
    $region19: #{dcsa_forward.24} parent=5 // pred_region
      // Predicated region
      $region21: #{dcsa_forward.24} parent=19 // pred_check
        %p142 = pneg %p49
      $region22: #{dcsa_forward.24} parent=19 // pred_check_branch
        %144 = sbr.rel (%p142) target = $region24
      $region23: #{dcsa_forward.24} parent=19 // pred_region
        %s145 = smul.u32 64, %s15
        %p146 = scmp.lt.s32.totalorder %s145, 127
        %s147 = scalar_select %p146, %s145, 127
        %p148 = scmp.lt.s32.totalorder %s17, 0
        %s149 = scalar_select %p148, %s17, 0
        %s150 = sadd.s32 %s149, %s147
        %s151 = smul.addr %s150, 4
        %s152 = scalar_lea.vmem %s0, %s151
        %s153 = smul.u32 64, %s15
      $region24: #{dcsa_forward.24} parent=19 // pred_fallthru
        _
    $region20: #{dcsa_forward.24} parent=5 // pred_fallthru
      _
    %p154 = scmp.le.s32.totalorder 1, %s8
    %p155 = scmp.lt.s32.totalorder %s8, 3
    %p156 = pnand %p154, %p155
    %p157 = pneg %p156
    // Predicated region
    $region25: #{dcsa_forward.24} parent=5 // pred_check
      _
    $region26: #{dcsa_forward.24} parent=5 // pred_check_branch
      %159 = sbr.rel (%p156) target = $region28
    $region27: #{dcsa_forward.24} parent=5 // pred_region
      %s160 = ssub.s32 %s8, 1
      %s161 = smul.u32 64, %s18
      %p162 = scmp.lt.s32.totalorder %s161, 127
      %s163 = scalar_select %p162, %s161, 127
      %p164 = scmp.lt.s32.totalorder %s20, 0
      %s165 = scalar_select %p164, %s20, 0
      %s166 = sadd.s32 %s165, %s163
      %s167 = smul.addr %s166, 4
      %s168 = scalar_lea.vmem %s0, %s167
      %p169 = pneg %p55
      %p170 = pneg %p52
      %s171 = smul.u32 16, %s20
      %p172 = scmp.lt.s32.totalorder %s171, 15
      %s173 = scalar_select %p172, %s171, 15
      %p174 = scmp.lt.s32.totalorder %s19, 0
      %s175 = scalar_select %p174, %s19, 0
      %s176 = sadd.s32 %s175, %s173
      %s177 = smul.addr %s176, 4
      %s178 = scalar_lea.vmem %s1, %s177
      %p179 = pneg %p83
      %p180 = pneg %p80
      %p181 = pneg %p111
      %p182 = pneg %p108
      %s183 = smul.u32 64, %s18
      %p184 = scmp.lt.s32.totalorder %s183, 127
      %s185 = scalar_select %p184, %s183, 127
      %p186 = scmp.lt.s32.totalorder %s19, 0
      %s187 = scalar_select %p186, %s19, 0
      %s188 = sadd.s32 %s187, %s185
      %s189 = smul.addr %s188, 8
      %s190 = scalar_lea.vmem %s2, %s189
      %s191 = smul.u32 64, %s18
      %p192 = scmp.lt.s32.totalorder %s191, 127
      %s193 = scalar_select %p192, %s191, 127
      %p194 = scmp.lt.s32.totalorder %s20, 0
      %s195 = scalar_select %p194, %s20, 0
      %s196 = sadd.s32 %s195, %s193
      %s197 = smul.addr %s196, 4
      %s198 = scalar_lea.vmem %s0, %s197
      %s199 = smul.u32 64, %s18
      %s200 = smul.u32 16, %s20
      %p201 = scmp.lt.s32.totalorder %s200, 15
      %s202 = scalar_select %p201, %s200, 15
      %p203 = scmp.lt.s32.totalorder %s19, 0
      %s204 = scalar_select %p203, %s19, 0
      %s205 = sadd.s32 %s204, %s202
      %s206 = smul.addr %s205, 4
      %s207 = scalar_lea.vmem %s1, %s206
      %s208 = smul.u32 16, %s20
      %s209 = smul.u32 64, %s18
      %p210 = scmp.lt.s32.totalorder %s209, 127
      %s211 = scalar_select %p210, %s209, 127
      %p212 = scmp.lt.s32.totalorder %s19, 0
      %s213 = scalar_select %p212, %s19, 0
      %s214 = sadd.s32 %s213, %s211
      %s215 = smul.addr %s214, 8
      %s216 = scalar_lea.vmem %s2, %s215
      %s217 = smul.u32 64, %s18
      %p219 = scmp.eq.s32.totalorder %s20, 0
      // Predicated region
      $region29: #{dcsa_forward.24} parent=27 // pred_check
        %p220 = pneg %p219
      $region30: #{dcsa_forward.24} parent=27 // pred_check_branch
        %222 = sbr.rel (%p220) target = $region32
      $region31: #{dcsa_forward.24} parent=27 // pred_region
        %223 = vst [vmem:[#allocation2] sm:$0xff] 0.0
        %224 = vst [vmem:[#allocation2 + $0x8] sm:$0xff] 0.0
        %225 = vst [vmem:[#allocation2 + $0x10] sm:$0xff] 0.0
        %226 = vst [vmem:[#allocation2 + $0x18] sm:$0xff] 0.0
        %227 = vst [vmem:[#allocation2 + $0x20] sm:$0xff] 0.0
        %228 = vst [vmem:[#allocation2 + $0x28] sm:$0xff] 0.0
        %229 = vst [vmem:[#allocation2 + $0x30] sm:$0xff] 0.0
        %230 = vst [vmem:[#allocation2 + $0x38] sm:$0xff] 0.0
        %231 = vst [vmem:[#allocation2 + $0x40] sm:$0xff] 0.0
        %232 = vst [vmem:[#allocation2 + $0x48] sm:$0xff] 0.0
        %233 = vst [vmem:[#allocation2 + $0x50] sm:$0xff] 0.0
        %234 = vst [vmem:[#allocation2 + $0x58] sm:$0xff] 0.0
        %235 = vst [vmem:[#allocation2 + $0x60] sm:$0xff] 0.0
        %236 = vst [vmem:[#allocation2 + $0x68] sm:$0xff] 0.0
        %237 = vst [vmem:[#allocation2 + $0x70] sm:$0xff] 0.0
        %238 = vst [vmem:[#allocation2 + $0x78] sm:$0xff] 0.0
        %239 = vst [vmem:[#allocation2 + $0x80] sm:$0xff] 0.0
        %240 = vst [vmem:[#allocation2 + $0x88] sm:$0xff] 0.0
        %241 = vst [vmem:[#allocation2 + $0x90] sm:$0xff] 0.0
        %242 = vst [vmem:[#allocation2 + $0x98] sm:$0xff] 0.0
        %243 = vst [vmem:[#allocation2 + $0xa0] sm:$0xff] 0.0
        %244 = vst [vmem:[#allocation2 + $0xa8] sm:$0xff] 0.0
        %245 = vst [vmem:[#allocation2 + $0xb0] sm:$0xff] 0.0
        %246 = vst [vmem:[#allocation2 + $0xb8] sm:$0xff] 0.0
        %247 = vst [vmem:[#allocation2 + $0xc0] sm:$0xff] 0.0
        %248 = vst [vmem:[#allocation2 + $0xc8] sm:$0xff] 0.0
        %249 = vst [vmem:[#allocation2 + $0xd0] sm:$0xff] 0.0
        %250 = vst [vmem:[#allocation2 + $0xd8] sm:$0xff] 0.0
        %251 = vst [vmem:[#allocation2 + $0xe0] sm:$0xff] 0.0
        %252 = vst [vmem:[#allocation2 + $0xe8] sm:$0xff] 0.0
        %253 = vst [vmem:[#allocation2 + $0xf0] sm:$0xff] 0.0
        %254 = vst [vmem:[#allocation2 + $0xf8] sm:$0xff] 0.0
        %255 = vst [vmem:[#allocation2 + $0x100] sm:$0xff] 0.0
        %256 = vst [vmem:[#allocation2 + $0x108] sm:$0xff] 0.0
        %257 = vst [vmem:[#allocation2 + $0x110] sm:$0xff] 0.0
        %258 = vst [vmem:[#allocation2 + $0x118] sm:$0xff] 0.0
        %259 = vst [vmem:[#allocation2 + $0x120] sm:$0xff] 0.0
        %260 = vst [vmem:[#allocation2 + $0x128] sm:$0xff] 0.0
        %261 = vst [vmem:[#allocation2 + $0x130] sm:$0xff] 0.0
        %262 = vst [vmem:[#allocation2 + $0x138] sm:$0xff] 0.0
        %263 = vst [vmem:[#allocation2 + $0x140] sm:$0xff] 0.0
        %264 = vst [vmem:[#allocation2 + $0x148] sm:$0xff] 0.0
        %265 = vst [vmem:[#allocation2 + $0x150] sm:$0xff] 0.0
        %266 = vst [vmem:[#allocation2 + $0x158] sm:$0xff] 0.0
        %267 = vst [vmem:[#allocation2 + $0x160] sm:$0xff] 0.0
        %268 = vst [vmem:[#allocation2 + $0x168] sm:$0xff] 0.0
        %269 = vst [vmem:[#allocation2 + $0x170] sm:$0xff] 0.0
        %270 = vst [vmem:[#allocation2 + $0x178] sm:$0xff] 0.0
        %271 = vst [vmem:[#allocation2 + $0x180] sm:$0xff] 0.0
        %272 = vst [vmem:[#allocation2 + $0x188] sm:$0xff] 0.0
        %273 = vst [vmem:[#allocation2 + $0x190] sm:$0xff] 0.0
        %274 = vst [vmem:[#allocation2 + $0x198] sm:$0xff] 0.0
        %275 = vst [vmem:[#allocation2 + $0x1a0] sm:$0xff] 0.0
        %276 = vst [vmem:[#allocation2 + $0x1a8] sm:$0xff] 0.0
        %277 = vst [vmem:[#allocation2 + $0x1b0] sm:$0xff] 0.0
        %278 = vst [vmem:[#allocation2 + $0x1b8] sm:$0xff] 0.0
        %279 = vst [vmem:[#allocation2 + $0x1c0] sm:$0xff] 0.0
        %280 = vst [vmem:[#allocation2 + $0x1c8] sm:$0xff] 0.0
        %281 = vst [vmem:[#allocation2 + $0x1d0] sm:$0xff] 0.0
        %282 = vst [vmem:[#allocation2 + $0x1d8] sm:$0xff] 0.0
        %283 = vst [vmem:[#allocation2 + $0x1e0] sm:$0xff] 0.0
        %284 = vst [vmem:[#allocation2 + $0x1e8] sm:$0xff] 0.0
        %285 = vst [vmem:[#allocation2 + $0x1f0] sm:$0xff] 0.0
        %286 = vst [vmem:[#allocation2 + $0x1f8] sm:$0xff] 0.0
      $region32: #{dcsa_forward.24} parent=27 // pred_fallthru
        _
      %v287 = vld [vmem:[#allocation2] sm:$0xff]
      %v288 = vld [vmem:[#allocation2 + $0x8] sm:$0xff]
      %v289 = vld [vmem:[#allocation2 + $0x10] sm:$0xff]
      %v290 = vld [vmem:[#allocation2 + $0x18] sm:$0xff]
      %v291 = vld [vmem:[#allocation2 + $0x20] sm:$0xff]
      %v292 = vld [vmem:[#allocation2 + $0x28] sm:$0xff]
      %v293 = vld [vmem:[#allocation2 + $0x30] sm:$0xff]
      %v294 = vld [vmem:[#allocation2 + $0x38] sm:$0xff]
      %v295 = vld [vmem:[#allocation2 + $0x40] sm:$0xff]
      %v296 = vld [vmem:[#allocation2 + $0x48] sm:$0xff]
      %v297 = vld [vmem:[#allocation2 + $0x50] sm:$0xff]
      %v298 = vld [vmem:[#allocation2 + $0x58] sm:$0xff]
      %v299 = vld [vmem:[#allocation2 + $0x60] sm:$0xff]
      %v300 = vld [vmem:[#allocation2 + $0x68] sm:$0xff]
      %v301 = vld [vmem:[#allocation2 + $0x70] sm:$0xff]
      %v302 = vld [vmem:[#allocation2 + $0x78] sm:$0xff]
      %v303 = vld [vmem:[#allocation2 + $0x80] sm:$0xff]
      %v304 = vld [vmem:[#allocation2 + $0x88] sm:$0xff]
      %v305 = vld [vmem:[#allocation2 + $0x90] sm:$0xff]
      %v306 = vld [vmem:[#allocation2 + $0x98] sm:$0xff]
      %v307 = vld [vmem:[#allocation2 + $0xa0] sm:$0xff]
      %v308 = vld [vmem:[#allocation2 + $0xa8] sm:$0xff]
      %v309 = vld [vmem:[#allocation2 + $0xb0] sm:$0xff]
      %v310 = vld [vmem:[#allocation2 + $0xb8] sm:$0xff]
      %v311 = vld [vmem:[#allocation2 + $0xc0] sm:$0xff]
      %v312 = vld [vmem:[#allocation2 + $0xc8] sm:$0xff]
      %v313 = vld [vmem:[#allocation2 + $0xd0] sm:$0xff]
      %v314 = vld [vmem:[#allocation2 + $0xd8] sm:$0xff]
      %v315 = vld [vmem:[#allocation2 + $0xe0] sm:$0xff]
      %v316 = vld [vmem:[#allocation2 + $0xe8] sm:$0xff]
      %v317 = vld [vmem:[#allocation2 + $0xf0] sm:$0xff]
      %v318 = vld [vmem:[#allocation2 + $0xf8] sm:$0xff]
      %v319 = vld [vmem:[#allocation2 + $0x100] sm:$0xff]
      %v320 = vld [vmem:[#allocation2 + $0x108] sm:$0xff]
      %v321 = vld [vmem:[#allocation2 + $0x110] sm:$0xff]
      %v322 = vld [vmem:[#allocation2 + $0x118] sm:$0xff]
      %v323 = vld [vmem:[#allocation2 + $0x120] sm:$0xff]
      %v324 = vld [vmem:[#allocation2 + $0x128] sm:$0xff]
      %v325 = vld [vmem:[#allocation2 + $0x130] sm:$0xff]
      %v326 = vld [vmem:[#allocation2 + $0x138] sm:$0xff]
      %v327 = vld [vmem:[#allocation2 + $0x140] sm:$0xff]
      %v328 = vld [vmem:[#allocation2 + $0x148] sm:$0xff]
      %v329 = vld [vmem:[#allocation2 + $0x150] sm:$0xff]
      %v330 = vld [vmem:[#allocation2 + $0x158] sm:$0xff]
      %v331 = vld [vmem:[#allocation2 + $0x160] sm:$0xff]
      %v332 = vld [vmem:[#allocation2 + $0x168] sm:$0xff]
      %v333 = vld [vmem:[#allocation2 + $0x170] sm:$0xff]
      %v334 = vld [vmem:[#allocation2 + $0x178] sm:$0xff]
      %v335 = vld [vmem:[#allocation2 + $0x180] sm:$0xff]
      %v336 = vld [vmem:[#allocation2 + $0x188] sm:$0xff]
      %v337 = vld [vmem:[#allocation2 + $0x190] sm:$0xff]
      %v338 = vld [vmem:[#allocation2 + $0x198] sm:$0xff]
      %v339 = vld [vmem:[#allocation2 + $0x1a0] sm:$0xff]
      %v340 = vld [vmem:[#allocation2 + $0x1a8] sm:$0xff]
      %v341 = vld [vmem:[#allocation2 + $0x1b0] sm:$0xff]
      %v342 = vld [vmem:[#allocation2 + $0x1b8] sm:$0xff]
      %v343 = vld [vmem:[#allocation2 + $0x1c0] sm:$0xff]
      %v344 = vld [vmem:[#allocation2 + $0x1c8] sm:$0xff]
      %v345 = vld [vmem:[#allocation2 + $0x1d0] sm:$0xff]
      %v346 = vld [vmem:[#allocation2 + $0x1d8] sm:$0xff]
      %v347 = vld [vmem:[#allocation2 + $0x1e0] sm:$0xff]
      %v348 = vld [vmem:[#allocation2 + $0x1e8] sm:$0xff]
      %v349 = vld [vmem:[#allocation2 + $0x1f0] sm:$0xff]
      %v350 = vld [vmem:[#allocation2 + $0x1f8] sm:$0xff]
      %v351 = vld [vmem:[%s198] sm:$0xf]
      %v352 = vld [vmem:[%s198 + $0x4] sm:$0xf]
      %v353 = vld [vmem:[%s198 + $0x8] sm:$0xf]
      %v354 = vld [vmem:[%s198 + $0xc] sm:$0xf]
      %v355 = vld [vmem:[%s198 + $0x10] sm:$0xf]
      %v356 = vld [vmem:[%s198 + $0x14] sm:$0xf]
      %v357 = vld [vmem:[%s198 + $0x18] sm:$0xf]
      %v358 = vld [vmem:[%s198 + $0x1c] sm:$0xf]
      %v359 = vld [vmem:[%s198 + $0x20] sm:$0xf]
      %v360 = vld [vmem:[%s198 + $0x24] sm:$0xf]
      %v361 = vld [vmem:[%s198 + $0x28] sm:$0xf]
      %v362 = vld [vmem:[%s198 + $0x2c] sm:$0xf]
      %v363 = vld [vmem:[%s198 + $0x30] sm:$0xf]
      %v364 = vld [vmem:[%s198 + $0x34] sm:$0xf]
      %v365 = vld [vmem:[%s198 + $0x38] sm:$0xf]
      %v366 = vld [vmem:[%s198 + $0x3c] sm:$0xf]
      %v367 = vld [vmem:[%s198 + $0x40] sm:$0xf]
      %v368 = vld [vmem:[%s198 + $0x44] sm:$0xf]
      %v369 = vld [vmem:[%s198 + $0x48] sm:$0xf]
      %v370 = vld [vmem:[%s198 + $0x4c] sm:$0xf]
      %v371 = vld [vmem:[%s198 + $0x50] sm:$0xf]
      %v372 = vld [vmem:[%s198 + $0x54] sm:$0xf]
      %v373 = vld [vmem:[%s198 + $0x58] sm:$0xf]
      %v374 = vld [vmem:[%s198 + $0x5c] sm:$0xf]
      %v375 = vld [vmem:[%s198 + $0x60] sm:$0xf]
      %v376 = vld [vmem:[%s198 + $0x64] sm:$0xf]
      %v377 = vld [vmem:[%s198 + $0x68] sm:$0xf]
      %v378 = vld [vmem:[%s198 + $0x6c] sm:$0xf]
      %v379 = vld [vmem:[%s198 + $0x70] sm:$0xf]
      %v380 = vld [vmem:[%s198 + $0x74] sm:$0xf]
      %v381 = vld [vmem:[%s198 + $0x78] sm:$0xf]
      %v382 = vld [vmem:[%s198 + $0x7c] sm:$0xf]
      %v383 = vld [vmem:[%s198 + $0x80] sm:$0xf]
      %v384 = vld [vmem:[%s198 + $0x84] sm:$0xf]
      %v385 = vld [vmem:[%s198 + $0x88] sm:$0xf]
      %v386 = vld [vmem:[%s198 + $0x8c] sm:$0xf]
      %v387 = vld [vmem:[%s198 + $0x90] sm:$0xf]
      %v388 = vld [vmem:[%s198 + $0x94] sm:$0xf]
      %v389 = vld [vmem:[%s198 + $0x98] sm:$0xf]
      %v390 = vld [vmem:[%s198 + $0x9c] sm:$0xf]
      %v391 = vld [vmem:[%s198 + $0xa0] sm:$0xf]
      %v392 = vld [vmem:[%s198 + $0xa4] sm:$0xf]
      %v393 = vld [vmem:[%s198 + $0xa8] sm:$0xf]
      %v394 = vld [vmem:[%s198 + $0xac] sm:$0xf]
      %v395 = vld [vmem:[%s198 + $0xb0] sm:$0xf]
      %v396 = vld [vmem:[%s198 + $0xb4] sm:$0xf]
      %v397 = vld [vmem:[%s198 + $0xb8] sm:$0xf]
      %v398 = vld [vmem:[%s198 + $0xbc] sm:$0xf]
      %v399 = vld [vmem:[%s198 + $0xc0] sm:$0xf]
      %v400 = vld [vmem:[%s198 + $0xc4] sm:$0xf]
      %v401 = vld [vmem:[%s198 + $0xc8] sm:$0xf]
      %v402 = vld [vmem:[%s198 + $0xcc] sm:$0xf]
      %v403 = vld [vmem:[%s198 + $0xd0] sm:$0xf]
      %v404 = vld [vmem:[%s198 + $0xd4] sm:$0xf]
      %v405 = vld [vmem:[%s198 + $0xd8] sm:$0xf]
      %v406 = vld [vmem:[%s198 + $0xdc] sm:$0xf]
      %v407 = vld [vmem:[%s198 + $0xe0] sm:$0xf]
      %v408 = vld [vmem:[%s198 + $0xe4] sm:$0xf]
      %v409 = vld [vmem:[%s198 + $0xe8] sm:$0xf]
      %v410 = vld [vmem:[%s198 + $0xec] sm:$0xf]
      %v411 = vld [vmem:[%s198 + $0xf0] sm:$0xf]
      %v412 = vld [vmem:[%s198 + $0xf4] sm:$0xf]
      %v413 = vld [vmem:[%s198 + $0xf8] sm:$0xf]
      %v414 = vld [vmem:[%s198 + $0xfc] sm:$0xf]
      %v415 = vld [vmem:[%s207] sm:$0xf]
      %v416 = vld [vmem:[%s207 + $0x4] sm:$0xf]
      %v417 = vld [vmem:[%s207 + $0x8] sm:$0xf]
      %v418 = vld [vmem:[%s207 + $0xc] sm:$0xf]
      %v419 = vld [vmem:[%s207 + $0x10] sm:$0xf]
      %v420 = vld [vmem:[%s207 + $0x14] sm:$0xf]
      %v421 = vld [vmem:[%s207 + $0x18] sm:$0xf]
      %v422 = vld [vmem:[%s207 + $0x1c] sm:$0xf]
      %v423 = vld [vmem:[%s207 + $0x20] sm:$0xf]
      %v424 = vld [vmem:[%s207 + $0x24] sm:$0xf]
      %v425 = vld [vmem:[%s207 + $0x28] sm:$0xf]
      %v426 = vld [vmem:[%s207 + $0x2c] sm:$0xf]
      %v427 = vld [vmem:[%s207 + $0x30] sm:$0xf]
      %v428 = vld [vmem:[%s207 + $0x34] sm:$0xf]
      %v429 = vld [vmem:[%s207 + $0x38] sm:$0xf]
      %v430 = vld [vmem:[%s207 + $0x3c] sm:$0xf]
      %v495 = vunpack.c.l.b16 %v351
      %v496 = vunpack.c.l.b16 %v352
      %v497 = vunpack.c.l.b16 %v353
      %v498 = vunpack.c.l.b16 %v354
      %v499 = vunpack.c.l.b16 %v355
      %v500 = vunpack.c.l.b16 %v356
      %v501 = vunpack.c.l.b16 %v357
      %v502 = vunpack.c.l.b16 %v358
      %v503 = vunpack.c.l.b16 %v359
      %v504 = vunpack.c.l.b16 %v360
      %v505 = vunpack.c.l.b16 %v361
      %v506 = vunpack.c.l.b16 %v362
      %v507 = vunpack.c.l.b16 %v363
      %v508 = vunpack.c.l.b16 %v364
      %v509 = vunpack.c.l.b16 %v365
      %v510 = vunpack.c.l.b16 %v366
      %v511 = vunpack.c.l.b16 %v367
      %v512 = vunpack.c.l.b16 %v368
      %v513 = vunpack.c.l.b16 %v369
      %v514 = vunpack.c.l.b16 %v370
      %v515 = vunpack.c.l.b16 %v371
      %v516 = vunpack.c.l.b16 %v372
      %v517 = vunpack.c.l.b16 %v373
      %v518 = vunpack.c.l.b16 %v374
      %v519 = vunpack.c.l.b16 %v375
      %v520 = vunpack.c.l.b16 %v376
      %v521 = vunpack.c.l.b16 %v377
      %v522 = vunpack.c.l.b16 %v378
      %v523 = vunpack.c.l.b16 %v379
      %v524 = vunpack.c.l.b16 %v380
      %v525 = vunpack.c.l.b16 %v381
      %v526 = vunpack.c.l.b16 %v382
      %v527 = vunpack.c.l.b16 %v383
      %v528 = vunpack.c.l.b16 %v384
      %v529 = vunpack.c.l.b16 %v385
      %v530 = vunpack.c.l.b16 %v386
      %v531 = vunpack.c.l.b16 %v387
      %v532 = vunpack.c.l.b16 %v388
      %v533 = vunpack.c.l.b16 %v389
      %v534 = vunpack.c.l.b16 %v390
      %v535 = vunpack.c.l.b16 %v391
      %v536 = vunpack.c.l.b16 %v392
      %v537 = vunpack.c.l.b16 %v393
      %v538 = vunpack.c.l.b16 %v394
      %v539 = vunpack.c.l.b16 %v395
      %v540 = vunpack.c.l.b16 %v396
      %v541 = vunpack.c.l.b16 %v397
      %v542 = vunpack.c.l.b16 %v398
      %v543 = vunpack.c.l.b16 %v399
      %v544 = vunpack.c.l.b16 %v400
      %v545 = vunpack.c.l.b16 %v401
      %v546 = vunpack.c.l.b16 %v402
      %v547 = vunpack.c.l.b16 %v403
      %v548 = vunpack.c.l.b16 %v404
      %v549 = vunpack.c.l.b16 %v405
      %v550 = vunpack.c.l.b16 %v406
      %v551 = vunpack.c.l.b16 %v407
      %v552 = vunpack.c.l.b16 %v408
      %v553 = vunpack.c.l.b16 %v409
      %v554 = vunpack.c.l.b16 %v410
      %v555 = vunpack.c.l.b16 %v411
      %v556 = vunpack.c.l.b16 %v412
      %v557 = vunpack.c.l.b16 %v413
      %v558 = vunpack.c.l.b16 %v414
      %v559 = vpack.c.b16 %v496, %v495
      %v560 = vpack.c.b16 %v498, %v497
      %v561 = vpack.c.b16 %v500, %v499
      %v562 = vpack.c.b16 %v502, %v501
      %v563 = vpack.c.b16 %v504, %v503
      %v564 = vpack.c.b16 %v506, %v505
      %v565 = vpack.c.b16 %v508, %v507
      %v566 = vpack.c.b16 %v510, %v509
      %v567 = vpack.c.b16 %v512, %v511
      %v568 = vpack.c.b16 %v514, %v513
      %v569 = vpack.c.b16 %v516, %v515
      %v570 = vpack.c.b16 %v518, %v517
      %v571 = vpack.c.b16 %v520, %v519
      %v572 = vpack.c.b16 %v522, %v521
      %v573 = vpack.c.b16 %v524, %v523
      %v574 = vpack.c.b16 %v526, %v525
      %v575 = vpack.c.b16 %v528, %v527
      %v576 = vpack.c.b16 %v530, %v529
      %v577 = vpack.c.b16 %v532, %v531
      %v578 = vpack.c.b16 %v534, %v533
      %v579 = vpack.c.b16 %v536, %v535
      %v580 = vpack.c.b16 %v538, %v537
      %v581 = vpack.c.b16 %v540, %v539
      %v582 = vpack.c.b16 %v542, %v541
      %v583 = vpack.c.b16 %v544, %v543
      %v584 = vpack.c.b16 %v546, %v545
      %v585 = vpack.c.b16 %v548, %v547
      %v586 = vpack.c.b16 %v550, %v549
      %v587 = vpack.c.b16 %v552, %v551
      %v588 = vpack.c.b16 %v554, %v553
      %v589 = vpack.c.b16 %v556, %v555
      %v590 = vpack.c.b16 %v558, %v557
      %v639 = vunpack.c.l.b16 %v415
      %v640 = vunpack.c.l.b16 %v416
      %v641 = vunpack.c.l.b16 %v417
      %v642 = vunpack.c.l.b16 %v418
      %v643 = vunpack.c.l.b16 %v419
      %v644 = vunpack.c.l.b16 %v420
      %v645 = vunpack.c.l.b16 %v421
      %v646 = vunpack.c.l.b16 %v422
      %v647 = vunpack.c.l.b16 %v423
      %v648 = vunpack.c.l.b16 %v424
      %v649 = vunpack.c.l.b16 %v425
      %v650 = vunpack.c.l.b16 %v426
      %v651 = vunpack.c.l.b16 %v427
      %v652 = vunpack.c.l.b16 %v428
      %v653 = vunpack.c.l.b16 %v429
      %v654 = vunpack.c.l.b16 %v430
      %v655 = vpack.c.b16 %v640, %v639
      %v656 = vpack.c.b16 %v642, %v641
      %v657 = vpack.c.b16 %v644, %v643
      %v658 = vpack.c.b16 %v646, %v645
      %v659 = vpack.c.b16 %v648, %v647
      %v660 = vpack.c.b16 %v650, %v649
      %v661 = vpack.c.b16 %v652, %v651
      %v662 = vpack.c.b16 %v654, %v653
      %671 = vmatprep.subr.bf16.mxu0 0
      %672 = vmatpush1.bf16.msra.mxu0 %v662
      %673 = vmatprep.subr.bf16.mxu0 0
      %674 = vmatpush1.bf16.msra.mxu0 %v661
      %675 = vmatprep.subr.bf16.mxu0 0
      %676 = vmatpush1.bf16.msra.mxu0 %v660
      %677 = vmatprep.subr.bf16.mxu0 0
      %678 = vmatpush1.bf16.msra.mxu0 %v659
      %679 = vmatprep.subr.bf16.mxu0 0
      %680 = vmatpush1.bf16.msra.mxu0 %v658
      %681 = vmatprep.subr.bf16.mxu0 0
      %682 = vmatpush1.bf16.msra.mxu0 %v657
      %683 = vmatprep.subr.bf16.mxu0 0
      %684 = vmatpush1.bf16.msra.mxu0 %v656
      %685 = vmatprep.subr.bf16.mxu0 0
      %686 = vmatpush1.bf16.msra.mxu0 %v655
      %687 = vmatprep.subr.bf16.mxu0 0
      %688 = vmatpush2.bf16.msra.mxu0 0
      %689 = vmatprep.subr.bf16.mxu0 0
      %690 = vmatpush2.bf16.msra.mxu0 0
      %691 = vmatprep.subr.bf16.mxu0 0
      %692 = vmatpush2.bf16.msra.mxu0 0
      %693 = vmatprep.subr.bf16.mxu0 0
      %694 = vmatpush2.bf16.msra.mxu0 0
      %695 = vmatprep.subr.bf16.mxu0 0
      %696 = vmatpush2.bf16.msra.mxu0 0
      %697 = vmatprep.subr.bf16.mxu0 0
      %698 = vmatpush2.bf16.msra.mxu0 0
      %699 = vmatprep.subr.bf16.mxu0 0
      %700 = vmatpush2.bf16.msra.mxu0 0
      %701 = vmatprep.subr.bf16.mxu0 0
      %702 = vmatpush2.bf16.msra.mxu0 0
      %703 = vmatprep.mubr.bf16.mxu0 0
      %704 = vmatmul.mubr.bf16.gmra.mxu0 %v559
      %v705 = vpop.f32.mrf.mxu0
      %v706 = vadd.f32 0.0, %v705
      %v707 = vpop.f32.mrf.mxu0
      %v708 = vpop.f32.mrf.mxu0
      %v709 = vadd.f32 0.0, %v708
      %v710 = vpop.f32.mrf.mxu0
      %711 = vmatprep.mubr.bf16.mxu0 0
      %712 = vmatmul.mubr.bf16.gmra.mxu0 %v560
      %v713 = vpop.f32.mrf.mxu0
      %v714 = vadd.f32 0.0, %v713
      %v715 = vpop.f32.mrf.mxu0
      %v716 = vpop.f32.mrf.mxu0
      %v717 = vadd.f32 0.0, %v716
      %v718 = vpop.f32.mrf.mxu0
      %719 = vmatprep.mubr.bf16.mxu0 0
      %720 = vmatmul.mubr.bf16.gmra.mxu0 %v561
      %v721 = vpop.f32.mrf.mxu0
      %v722 = vadd.f32 0.0, %v721
      %v723 = vpop.f32.mrf.mxu0
      %v724 = vpop.f32.mrf.mxu0
      %v725 = vadd.f32 0.0, %v724
      %v726 = vpop.f32.mrf.mxu0
      %727 = vmatprep.mubr.bf16.mxu0 0
      %728 = vmatmul.mubr.bf16.gmra.mxu0 %v562
      %v729 = vpop.f32.mrf.mxu0
      %v730 = vadd.f32 0.0, %v729
      %v731 = vpop.f32.mrf.mxu0
      %v732 = vpop.f32.mrf.mxu0
      %v733 = vadd.f32 0.0, %v732
      %v734 = vpop.f32.mrf.mxu0
      %735 = vmatprep.mubr.bf16.mxu0 0
      %736 = vmatmul.mubr.bf16.gmra.mxu0 %v563
      %v737 = vpop.f32.mrf.mxu0
      %v738 = vadd.f32 0.0, %v737
      %v739 = vpop.f32.mrf.mxu0
      %v740 = vpop.f32.mrf.mxu0
      %v741 = vadd.f32 0.0, %v740
      %v742 = vpop.f32.mrf.mxu0
      %743 = vmatprep.mubr.bf16.mxu0 0
      %744 = vmatmul.mubr.bf16.gmra.mxu0 %v564
      %v745 = vpop.f32.mrf.mxu0
      %v746 = vadd.f32 0.0, %v745
      %v747 = vpop.f32.mrf.mxu0
      %v748 = vpop.f32.mrf.mxu0
      %v749 = vadd.f32 0.0, %v748
      %v750 = vpop.f32.mrf.mxu0
      %751 = vmatprep.mubr.bf16.mxu0 0
      %752 = vmatmul.mubr.bf16.gmra.mxu0 %v565
      %v753 = vpop.f32.mrf.mxu0
      %v754 = vadd.f32 0.0, %v753
      %v755 = vpop.f32.mrf.mxu0
      %v756 = vpop.f32.mrf.mxu0
      %v757 = vadd.f32 0.0, %v756
      %v758 = vpop.f32.mrf.mxu0
      %759 = vmatprep.mubr.bf16.mxu0 0
      %760 = vmatmul.mubr.bf16.gmra.mxu0 %v566
      %v761 = vpop.f32.mrf.mxu0
      %v762 = vadd.f32 0.0, %v761
      %v763 = vpop.f32.mrf.mxu0
      %v764 = vpop.f32.mrf.mxu0
      %v765 = vadd.f32 0.0, %v764
      %v766 = vpop.f32.mrf.mxu0
      %767 = vmatprep.mubr.bf16.mxu0 0
      %768 = vmatmul.mubr.bf16.gmra.mxu0 %v567
      %v769 = vpop.f32.mrf.mxu0
      %v770 = vadd.f32 0.0, %v769
      %v771 = vpop.f32.mrf.mxu0
      %v772 = vpop.f32.mrf.mxu0
      %v773 = vadd.f32 0.0, %v772
      %v774 = vpop.f32.mrf.mxu0
      %775 = vmatprep.mubr.bf16.mxu0 0
      %776 = vmatmul.mubr.bf16.gmra.mxu0 %v568
      %v777 = vpop.f32.mrf.mxu0
      %v778 = vadd.f32 0.0, %v777
      %v779 = vpop.f32.mrf.mxu0
      %v780 = vpop.f32.mrf.mxu0
      %v781 = vadd.f32 0.0, %v780
      %v782 = vpop.f32.mrf.mxu0
      %783 = vmatprep.mubr.bf16.mxu0 0
      %784 = vmatmul.mubr.bf16.gmra.mxu0 %v569
      %v785 = vpop.f32.mrf.mxu0
      %v786 = vadd.f32 0.0, %v785
      %v787 = vpop.f32.mrf.mxu0
      %v788 = vpop.f32.mrf.mxu0
      %v789 = vadd.f32 0.0, %v788
      %v790 = vpop.f32.mrf.mxu0
      %791 = vmatprep.mubr.bf16.mxu0 0
      %792 = vmatmul.mubr.bf16.gmra.mxu0 %v570
      %v793 = vpop.f32.mrf.mxu0
      %v794 = vadd.f32 0.0, %v793
      %v795 = vpop.f32.mrf.mxu0
      %v796 = vpop.f32.mrf.mxu0
      %v797 = vadd.f32 0.0, %v796
      %v798 = vpop.f32.mrf.mxu0
      %799 = vmatprep.mubr.bf16.mxu0 0
      %800 = vmatmul.mubr.bf16.gmra.mxu0 %v571
      %v801 = vpop.f32.mrf.mxu0
      %v802 = vadd.f32 0.0, %v801
      %v803 = vpop.f32.mrf.mxu0
      %v804 = vpop.f32.mrf.mxu0
      %v805 = vadd.f32 0.0, %v804
      %v806 = vpop.f32.mrf.mxu0
      %807 = vmatprep.mubr.bf16.mxu0 0
      %808 = vmatmul.mubr.bf16.gmra.mxu0 %v572
      %v809 = vpop.f32.mrf.mxu0
      %v810 = vadd.f32 0.0, %v809
      %v811 = vpop.f32.mrf.mxu0
      %v812 = vpop.f32.mrf.mxu0
      %v813 = vadd.f32 0.0, %v812
      %v814 = vpop.f32.mrf.mxu0
      %815 = vmatprep.mubr.bf16.mxu0 0
      %816 = vmatmul.mubr.bf16.gmra.mxu0 %v573
      %v817 = vpop.f32.mrf.mxu0
      %v818 = vadd.f32 0.0, %v817
      %v819 = vpop.f32.mrf.mxu0
      %v820 = vpop.f32.mrf.mxu0
      %v821 = vadd.f32 0.0, %v820
      %v822 = vpop.f32.mrf.mxu0
      %823 = vmatprep.mubr.bf16.mxu0 0
      %824 = vmatmul.mubr.bf16.gmra.mxu0 %v574
      %v825 = vpop.f32.mrf.mxu0
      %v826 = vadd.f32 0.0, %v825
      %v827 = vpop.f32.mrf.mxu0
      %v828 = vpop.f32.mrf.mxu0
      %v829 = vadd.f32 0.0, %v828
      %v830 = vpop.f32.mrf.mxu0
      %831 = vmatprep.mubr.bf16.mxu0 0
      %832 = vmatmul.mubr.bf16.gmra.mxu0 %v575
      %v833 = vpop.f32.mrf.mxu0
      %v834 = vadd.f32 0.0, %v833
      %v835 = vpop.f32.mrf.mxu0
      %v836 = vpop.f32.mrf.mxu0
      %v837 = vadd.f32 0.0, %v836
      %v838 = vpop.f32.mrf.mxu0
      %839 = vmatprep.mubr.bf16.mxu0 0
      %840 = vmatmul.mubr.bf16.gmra.mxu0 %v576
      %v841 = vpop.f32.mrf.mxu0
      %v842 = vadd.f32 0.0, %v841
      %v843 = vpop.f32.mrf.mxu0
      %v844 = vpop.f32.mrf.mxu0
      %v845 = vadd.f32 0.0, %v844
      %v846 = vpop.f32.mrf.mxu0
      %847 = vmatprep.mubr.bf16.mxu0 0
      %848 = vmatmul.mubr.bf16.gmra.mxu0 %v577
      %v849 = vpop.f32.mrf.mxu0
      %v850 = vadd.f32 0.0, %v849
      %v851 = vpop.f32.mrf.mxu0
      %v852 = vpop.f32.mrf.mxu0
      %v853 = vadd.f32 0.0, %v852
      %v854 = vpop.f32.mrf.mxu0
      %855 = vmatprep.mubr.bf16.mxu0 0
      %856 = vmatmul.mubr.bf16.gmra.mxu0 %v578
      %v857 = vpop.f32.mrf.mxu0
      %v858 = vadd.f32 0.0, %v857
      %v859 = vpop.f32.mrf.mxu0
      %v860 = vpop.f32.mrf.mxu0
      %v861 = vadd.f32 0.0, %v860
      %v862 = vpop.f32.mrf.mxu0
      %863 = vmatprep.mubr.bf16.mxu0 0
      %864 = vmatmul.mubr.bf16.gmra.mxu0 %v579
      %v865 = vpop.f32.mrf.mxu0
      %v866 = vadd.f32 0.0, %v865
      %v867 = vpop.f32.mrf.mxu0
      %v868 = vpop.f32.mrf.mxu0
      %v869 = vadd.f32 0.0, %v868
      %v870 = vpop.f32.mrf.mxu0
      %871 = vmatprep.mubr.bf16.mxu0 0
      %872 = vmatmul.mubr.bf16.gmra.mxu0 %v580
      %v873 = vpop.f32.mrf.mxu0
      %v874 = vadd.f32 0.0, %v873
      %v875 = vpop.f32.mrf.mxu0
      %v876 = vpop.f32.mrf.mxu0
      %v877 = vadd.f32 0.0, %v876
      %v878 = vpop.f32.mrf.mxu0
      %879 = vmatprep.mubr.bf16.mxu0 0
      %880 = vmatmul.mubr.bf16.gmra.mxu0 %v581
      %v881 = vpop.f32.mrf.mxu0
      %v882 = vadd.f32 0.0, %v881
      %v883 = vpop.f32.mrf.mxu0
      %v884 = vpop.f32.mrf.mxu0
      %v885 = vadd.f32 0.0, %v884
      %v886 = vpop.f32.mrf.mxu0
      %887 = vmatprep.mubr.bf16.mxu0 0
      %888 = vmatmul.mubr.bf16.gmra.mxu0 %v582
      %v889 = vpop.f32.mrf.mxu0
      %v890 = vadd.f32 0.0, %v889
      %v891 = vpop.f32.mrf.mxu0
      %v892 = vpop.f32.mrf.mxu0
      %v893 = vadd.f32 0.0, %v892
      %v894 = vpop.f32.mrf.mxu0
      %895 = vmatprep.mubr.bf16.mxu0 0
      %896 = vmatmul.mubr.bf16.gmra.mxu0 %v583
      %v897 = vpop.f32.mrf.mxu0
      %v898 = vadd.f32 0.0, %v897
      %v899 = vpop.f32.mrf.mxu0
      %v900 = vpop.f32.mrf.mxu0
      %v901 = vadd.f32 0.0, %v900
      %v902 = vpop.f32.mrf.mxu0
      %903 = vmatprep.mubr.bf16.mxu0 0
      %904 = vmatmul.mubr.bf16.gmra.mxu0 %v584
      %v905 = vpop.f32.mrf.mxu0
      %v906 = vadd.f32 0.0, %v905
      %v907 = vpop.f32.mrf.mxu0
      %v908 = vpop.f32.mrf.mxu0
      %v909 = vadd.f32 0.0, %v908
      %v910 = vpop.f32.mrf.mxu0
      %911 = vmatprep.mubr.bf16.mxu0 0
      %912 = vmatmul.mubr.bf16.gmra.mxu0 %v585
      %v913 = vpop.f32.mrf.mxu0
      %v914 = vadd.f32 0.0, %v913
      %v915 = vpop.f32.mrf.mxu0
      %v916 = vpop.f32.mrf.mxu0
      %v917 = vadd.f32 0.0, %v916
      %v918 = vpop.f32.mrf.mxu0
      %919 = vmatprep.mubr.bf16.mxu0 0
      %920 = vmatmul.mubr.bf16.gmra.mxu0 %v586
      %v921 = vpop.f32.mrf.mxu0
      %v922 = vadd.f32 0.0, %v921
      %v923 = vpop.f32.mrf.mxu0
      %v924 = vpop.f32.mrf.mxu0
      %v925 = vadd.f32 0.0, %v924
      %v926 = vpop.f32.mrf.mxu0
      %927 = vmatprep.mubr.bf16.mxu0 0
      %928 = vmatmul.mubr.bf16.gmra.mxu0 %v587
      %v929 = vpop.f32.mrf.mxu0
      %v930 = vadd.f32 0.0, %v929
      %v931 = vpop.f32.mrf.mxu0
      %v932 = vpop.f32.mrf.mxu0
      %v933 = vadd.f32 0.0, %v932
      %v934 = vpop.f32.mrf.mxu0
      %935 = vmatprep.mubr.bf16.mxu0 0
      %936 = vmatmul.mubr.bf16.gmra.mxu0 %v588
      %v937 = vpop.f32.mrf.mxu0
      %v938 = vadd.f32 0.0, %v937
      %v939 = vpop.f32.mrf.mxu0
      %v940 = vpop.f32.mrf.mxu0
      %v941 = vadd.f32 0.0, %v940
      %v942 = vpop.f32.mrf.mxu0
      %943 = vmatprep.mubr.bf16.mxu0 0
      %944 = vmatmul.mubr.bf16.gmra.mxu0 %v589
      %v945 = vpop.f32.mrf.mxu0
      %v946 = vadd.f32 0.0, %v945
      %v947 = vpop.f32.mrf.mxu0
      %v948 = vpop.f32.mrf.mxu0
      %v949 = vadd.f32 0.0, %v948
      %v950 = vpop.f32.mrf.mxu0
      %951 = vmatprep.mubr.bf16.mxu0 0
      %952 = vmatmul.mubr.bf16.gmra.mxu0 %v590
      %v953 = vpop.f32.mrf.mxu0
      %v954 = vadd.f32 0.0, %v953
      %v955 = vpop.f32.mrf.mxu0
      %v956 = vpop.f32.mrf.mxu0
      %v957 = vadd.f32 0.0, %v956
      %v958 = vpop.f32.mrf.mxu0
      %959 = vdwg.mxu0
      %v960 = vadd.f32 %v287, %v706
      %v961 = vadd.f32 %v288, %v709
      %v962 = vadd.f32 %v289, %v714
      %v963 = vadd.f32 %v290, %v717
      %v964 = vadd.f32 %v291, %v722
      %v965 = vadd.f32 %v292, %v725
      %v966 = vadd.f32 %v293, %v730
      %v967 = vadd.f32 %v294, %v733
      %v968 = vadd.f32 %v295, %v738
      %v969 = vadd.f32 %v296, %v741
      %v970 = vadd.f32 %v297, %v746
      %v971 = vadd.f32 %v298, %v749
      %v972 = vadd.f32 %v299, %v754
      %v973 = vadd.f32 %v300, %v757
      %v974 = vadd.f32 %v301, %v762
      %v975 = vadd.f32 %v302, %v765
      %v976 = vadd.f32 %v303, %v770
      %v977 = vadd.f32 %v304, %v773
      %v978 = vadd.f32 %v305, %v778
      %v979 = vadd.f32 %v306, %v781
      %v980 = vadd.f32 %v307, %v786
      %v981 = vadd.f32 %v308, %v789
      %v982 = vadd.f32 %v309, %v794
      %v983 = vadd.f32 %v310, %v797
      %v984 = vadd.f32 %v311, %v802
      %v985 = vadd.f32 %v312, %v805
      %v986 = vadd.f32 %v313, %v810
      %v987 = vadd.f32 %v314, %v813
      %v988 = vadd.f32 %v315, %v818
      %v989 = vadd.f32 %v316, %v821
      %v990 = vadd.f32 %v317, %v826
      %v991 = vadd.f32 %v318, %v829
      %v992 = vadd.f32 %v319, %v834
      %v993 = vadd.f32 %v320, %v837
      %v994 = vadd.f32 %v321, %v842
      %v995 = vadd.f32 %v322, %v845
      %v996 = vadd.f32 %v323, %v850
      %v997 = vadd.f32 %v324, %v853
      %v998 = vadd.f32 %v325, %v858
      %v999 = vadd.f32 %v326, %v861
      %v1000 = vadd.f32 %v327, %v866
      %v1001 = vadd.f32 %v328, %v869
      %v1002 = vadd.f32 %v329, %v874
      %v1003 = vadd.f32 %v330, %v877
      %v1004 = vadd.f32 %v331, %v882
      %v1005 = vadd.f32 %v332, %v885
      %v1006 = vadd.f32 %v333, %v890
      %v1007 = vadd.f32 %v334, %v893
      %v1008 = vadd.f32 %v335, %v898
      %v1009 = vadd.f32 %v336, %v901
      %v1010 = vadd.f32 %v337, %v906
      %v1011 = vadd.f32 %v338, %v909
      %v1012 = vadd.f32 %v339, %v914
      %v1013 = vadd.f32 %v340, %v917
      %v1014 = vadd.f32 %v341, %v922
      %v1015 = vadd.f32 %v342, %v925
      %v1016 = vadd.f32 %v343, %v930
      %v1017 = vadd.f32 %v344, %v933
      %v1018 = vadd.f32 %v345, %v938
      %v1019 = vadd.f32 %v346, %v941
      %v1020 = vadd.f32 %v347, %v946
      %v1021 = vadd.f32 %v348, %v949
      %v1022 = vadd.f32 %v349, %v954
      %v1023 = vadd.f32 %v350, %v957
      %1024 = vst [vmem:[#allocation2] sm:$0xff] %v960
      %1025 = vst [vmem:[#allocation2 + $0x8] sm:$0xff] %v961
      %1026 = vst [vmem:[#allocation2 + $0x10] sm:$0xff] %v962
      %1027 = vst [vmem:[#allocation2 + $0x18] sm:$0xff] %v963
      %1028 = vst [vmem:[#allocation2 + $0x20] sm:$0xff] %v964
      %1029 = vst [vmem:[#allocation2 + $0x28] sm:$0xff] %v965
      %1030 = vst [vmem:[#allocation2 + $0x30] sm:$0xff] %v966
      %1031 = vst [vmem:[#allocation2 + $0x38] sm:$0xff] %v967
      %1032 = vst [vmem:[#allocation2 + $0x40] sm:$0xff] %v968
      %1033 = vst [vmem:[#allocation2 + $0x48] sm:$0xff] %v969
      %1034 = vst [vmem:[#allocation2 + $0x50] sm:$0xff] %v970
      %1035 = vst [vmem:[#allocation2 + $0x58] sm:$0xff] %v971
      %1036 = vst [vmem:[#allocation2 + $0x60] sm:$0xff] %v972
      %1037 = vst [vmem:[#allocation2 + $0x68] sm:$0xff] %v973
      %1038 = vst [vmem:[#allocation2 + $0x70] sm:$0xff] %v974
      %1039 = vst [vmem:[#allocation2 + $0x78] sm:$0xff] %v975
      %1040 = vst [vmem:[#allocation2 + $0x80] sm:$0xff] %v976
      %1041 = vst [vmem:[#allocation2 + $0x88] sm:$0xff] %v977
      %1042 = vst [vmem:[#allocation2 + $0x90] sm:$0xff] %v978
      %1043 = vst [vmem:[#allocation2 + $0x98] sm:$0xff] %v979
      %1044 = vst [vmem:[#allocation2 + $0xa0] sm:$0xff] %v980
      %1045 = vst [vmem:[#allocation2 + $0xa8] sm:$0xff] %v981
      %1046 = vst [vmem:[#allocation2 + $0xb0] sm:$0xff] %v982
      %1047 = vst [vmem:[#allocation2 + $0xb8] sm:$0xff] %v983
      %1048 = vst [vmem:[#allocation2 + $0xc0] sm:$0xff] %v984
      %1049 = vst [vmem:[#allocation2 + $0xc8] sm:$0xff] %v985
      %1050 = vst [vmem:[#allocation2 + $0xd0] sm:$0xff] %v986
      %1051 = vst [vmem:[#allocation2 + $0xd8] sm:$0xff] %v987
      %1052 = vst [vmem:[#allocation2 + $0xe0] sm:$0xff] %v988
      %1053 = vst [vmem:[#allocation2 + $0xe8] sm:$0xff] %v989
      %1054 = vst [vmem:[#allocation2 + $0xf0] sm:$0xff] %v990
      %1055 = vst [vmem:[#allocation2 + $0xf8] sm:$0xff] %v991
      %1056 = vst [vmem:[#allocation2 + $0x100] sm:$0xff] %v992
      %1057 = vst [vmem:[#allocation2 + $0x108] sm:$0xff] %v993
      %1058 = vst [vmem:[#allocation2 + $0x110] sm:$0xff] %v994
      %1059 = vst [vmem:[#allocation2 + $0x118] sm:$0xff] %v995
      %1060 = vst [vmem:[#allocation2 + $0x120] sm:$0xff] %v996
      %1061 = vst [vmem:[#allocation2 + $0x128] sm:$0xff] %v997
      %1062 = vst [vmem:[#allocation2 + $0x130] sm:$0xff] %v998
      %1063 = vst [vmem:[#allocation2 + $0x138] sm:$0xff] %v999
      %1064 = vst [vmem:[#allocation2 + $0x140] sm:$0xff] %v1000
      %1065 = vst [vmem:[#allocation2 + $0x148] sm:$0xff] %v1001
      %1066 = vst [vmem:[#allocation2 + $0x150] sm:$0xff] %v1002
      %1067 = vst [vmem:[#allocation2 + $0x158] sm:$0xff] %v1003
      %1068 = vst [vmem:[#allocation2 + $0x160] sm:$0xff] %v1004
      %1069 = vst [vmem:[#allocation2 + $0x168] sm:$0xff] %v1005
      %1070 = vst [vmem:[#allocation2 + $0x170] sm:$0xff] %v1006
      %1071 = vst [vmem:[#allocation2 + $0x178] sm:$0xff] %v1007
      %1072 = vst [vmem:[#allocation2 + $0x180] sm:$0xff] %v1008
      %1073 = vst [vmem:[#allocation2 + $0x188] sm:$0xff] %v1009
      %1074 = vst [vmem:[#allocation2 + $0x190] sm:$0xff] %v1010
      %1075 = vst [vmem:[#allocation2 + $0x198] sm:$0xff] %v1011
      %1076 = vst [vmem:[#allocation2 + $0x1a0] sm:$0xff] %v1012
      %1077 = vst [vmem:[#allocation2 + $0x1a8] sm:$0xff] %v1013
      %1078 = vst [vmem:[#allocation2 + $0x1b0] sm:$0xff] %v1014
      %1079 = vst [vmem:[#allocation2 + $0x1b8] sm:$0xff] %v1015
      %1080 = vst [vmem:[#allocation2 + $0x1c0] sm:$0xff] %v1016
      %1081 = vst [vmem:[#allocation2 + $0x1c8] sm:$0xff] %v1017
      %1082 = vst [vmem:[#allocation2 + $0x1d0] sm:$0xff] %v1018
      %1083 = vst [vmem:[#allocation2 + $0x1d8] sm:$0xff] %v1019
      %1084 = vst [vmem:[#allocation2 + $0x1e0] sm:$0xff] %v1020
      %1085 = vst [vmem:[#allocation2 + $0x1e8] sm:$0xff] %v1021
      %1086 = vst [vmem:[#allocation2 + $0x1f0] sm:$0xff] %v1022
      %1087 = vst [vmem:[#allocation2 + $0x1f8] sm:$0xff] %v1023
      // Predicated region
      $region33: #{dcsa_forward.24} parent=27 // pred_check
        %p1088 = pneg %p219
      $region34: #{dcsa_forward.24} parent=27 // pred_check_branch
        %1090 = sbr.rel (%p1088) target = $region36
      $region35: #{dcsa_forward.24} parent=27 // pred_region
        %v1091 = vld [vmem:[#allocation2] sm:$0xff]
        %v1092 = vld [vmem:[#allocation2 + $0x8] sm:$0xff]
        %v1093 = vld [vmem:[#allocation2 + $0x10] sm:$0xff]
        %v1094 = vld [vmem:[#allocation2 + $0x18] sm:$0xff]
        %v1095 = vld [vmem:[#allocation2 + $0x20] sm:$0xff]
        %v1096 = vld [vmem:[#allocation2 + $0x28] sm:$0xff]
        %v1097 = vld [vmem:[#allocation2 + $0x30] sm:$0xff]
        %v1098 = vld [vmem:[#allocation2 + $0x38] sm:$0xff]
        %v1099 = vld [vmem:[#allocation2 + $0x40] sm:$0xff]
        %v1100 = vld [vmem:[#allocation2 + $0x48] sm:$0xff]
        %v1101 = vld [vmem:[#allocation2 + $0x50] sm:$0xff]
        %v1102 = vld [vmem:[#allocation2 + $0x58] sm:$0xff]
        %v1103 = vld [vmem:[#allocation2 + $0x60] sm:$0xff]
        %v1104 = vld [vmem:[#allocation2 + $0x68] sm:$0xff]
        %v1105 = vld [vmem:[#allocation2 + $0x70] sm:$0xff]
        %v1106 = vld [vmem:[#allocation2 + $0x78] sm:$0xff]
        %v1107 = vld [vmem:[#allocation2 + $0x80] sm:$0xff]
        %v1108 = vld [vmem:[#allocation2 + $0x88] sm:$0xff]
        %v1109 = vld [vmem:[#allocation2 + $0x90] sm:$0xff]
        %v1110 = vld [vmem:[#allocation2 + $0x98] sm:$0xff]
        %v1111 = vld [vmem:[#allocation2 + $0xa0] sm:$0xff]
        %v1112 = vld [vmem:[#allocation2 + $0xa8] sm:$0xff]
        %v1113 = vld [vmem:[#allocation2 + $0xb0] sm:$0xff]
        %v1114 = vld [vmem:[#allocation2 + $0xb8] sm:$0xff]
        %v1115 = vld [vmem:[#allocation2 + $0xc0] sm:$0xff]
        %v1116 = vld [vmem:[#allocation2 + $0xc8] sm:$0xff]
        %v1117 = vld [vmem:[#allocation2 + $0xd0] sm:$0xff]
        %v1118 = vld [vmem:[#allocation2 + $0xd8] sm:$0xff]
        %v1119 = vld [vmem:[#allocation2 + $0xe0] sm:$0xff]
        %v1120 = vld [vmem:[#allocation2 + $0xe8] sm:$0xff]
        %v1121 = vld [vmem:[#allocation2 + $0xf0] sm:$0xff]
        %v1122 = vld [vmem:[#allocation2 + $0xf8] sm:$0xff]
        %v1123 = vld [vmem:[#allocation2 + $0x100] sm:$0xff]
        %v1124 = vld [vmem:[#allocation2 + $0x108] sm:$0xff]
        %v1125 = vld [vmem:[#allocation2 + $0x110] sm:$0xff]
        %v1126 = vld [vmem:[#allocation2 + $0x118] sm:$0xff]
        %v1127 = vld [vmem:[#allocation2 + $0x120] sm:$0xff]
        %v1128 = vld [vmem:[#allocation2 + $0x128] sm:$0xff]
        %v1129 = vld [vmem:[#allocation2 + $0x130] sm:$0xff]
        %v1130 = vld [vmem:[#allocation2 + $0x138] sm:$0xff]
        %v1131 = vld [vmem:[#allocation2 + $0x140] sm:$0xff]
        %v1132 = vld [vmem:[#allocation2 + $0x148] sm:$0xff]
        %v1133 = vld [vmem:[#allocation2 + $0x150] sm:$0xff]
        %v1134 = vld [vmem:[#allocation2 + $0x158] sm:$0xff]
        %v1135 = vld [vmem:[#allocation2 + $0x160] sm:$0xff]
        %v1136 = vld [vmem:[#allocation2 + $0x168] sm:$0xff]
        %v1137 = vld [vmem:[#allocation2 + $0x170] sm:$0xff]
        %v1138 = vld [vmem:[#allocation2 + $0x178] sm:$0xff]
        %v1139 = vld [vmem:[#allocation2 + $0x180] sm:$0xff]
        %v1140 = vld [vmem:[#allocation2 + $0x188] sm:$0xff]
        %v1141 = vld [vmem:[#allocation2 + $0x190] sm:$0xff]
        %v1142 = vld [vmem:[#allocation2 + $0x198] sm:$0xff]
        %v1143 = vld [vmem:[#allocation2 + $0x1a0] sm:$0xff]
        %v1144 = vld [vmem:[#allocation2 + $0x1a8] sm:$0xff]
        %v1145 = vld [vmem:[#allocation2 + $0x1b0] sm:$0xff]
        %v1146 = vld [vmem:[#allocation2 + $0x1b8] sm:$0xff]
        %v1147 = vld [vmem:[#allocation2 + $0x1c0] sm:$0xff]
        %v1148 = vld [vmem:[#allocation2 + $0x1c8] sm:$0xff]
        %v1149 = vld [vmem:[#allocation2 + $0x1d0] sm:$0xff]
        %v1150 = vld [vmem:[#allocation2 + $0x1d8] sm:$0xff]
        %v1151 = vld [vmem:[#allocation2 + $0x1e0] sm:$0xff]
        %v1152 = vld [vmem:[#allocation2 + $0x1e8] sm:$0xff]
        %v1153 = vld [vmem:[#allocation2 + $0x1f0] sm:$0xff]
        %v1154 = vld [vmem:[#allocation2 + $0x1f8] sm:$0xff]
        %1155 = vst [vmem:[%s216] sm:$0xff] %v1091
        %1156 = vst [vmem:[%s216 + $0x8] sm:$0xff] %v1092
        %1157 = vst [vmem:[%s216 + $0x10] sm:$0xff] %v1093
        %1158 = vst [vmem:[%s216 + $0x18] sm:$0xff] %v1094
        %1159 = vst [vmem:[%s216 + $0x20] sm:$0xff] %v1095
        %1160 = vst [vmem:[%s216 + $0x28] sm:$0xff] %v1096
        %1161 = vst [vmem:[%s216 + $0x30] sm:$0xff] %v1097
        %1162 = vst [vmem:[%s216 + $0x38] sm:$0xff] %v1098
        %1163 = vst [vmem:[%s216 + $0x40] sm:$0xff] %v1099
        %1164 = vst [vmem:[%s216 + $0x48] sm:$0xff] %v1100
        %1165 = vst [vmem:[%s216 + $0x50] sm:$0xff] %v1101
        %1166 = vst [vmem:[%s216 + $0x58] sm:$0xff] %v1102
        %1167 = vst [vmem:[%s216 + $0x60] sm:$0xff] %v1103
        %1168 = vst [vmem:[%s216 + $0x68] sm:$0xff] %v1104
        %1169 = vst [vmem:[%s216 + $0x70] sm:$0xff] %v1105
        %1170 = vst [vmem:[%s216 + $0x78] sm:$0xff] %v1106
        %1171 = vst [vmem:[%s216 + $0x80] sm:$0xff] %v1107
        %1172 = vst [vmem:[%s216 + $0x88] sm:$0xff] %v1108
        %1173 = vst [vmem:[%s216 + $0x90] sm:$0xff] %v1109
        %1174 = vst [vmem:[%s216 + $0x98] sm:$0xff] %v1110
        %1175 = vst [vmem:[%s216 + $0xa0] sm:$0xff] %v1111
        %1176 = vst [vmem:[%s216 + $0xa8] sm:$0xff] %v1112
        %1177 = vst [vmem:[%s216 + $0xb0] sm:$0xff] %v1113
        %1178 = vst [vmem:[%s216 + $0xb8] sm:$0xff] %v1114
        %1179 = vst [vmem:[%s216 + $0xc0] sm:$0xff] %v1115
        %1180 = vst [vmem:[%s216 + $0xc8] sm:$0xff] %v1116
        %1181 = vst [vmem:[%s216 + $0xd0] sm:$0xff] %v1117
        %1182 = vst [vmem:[%s216 + $0xd8] sm:$0xff] %v1118
        %1183 = vst [vmem:[%s216 + $0xe0] sm:$0xff] %v1119
        %1184 = vst [vmem:[%s216 + $0xe8] sm:$0xff] %v1120
        %1185 = vst [vmem:[%s216 + $0xf0] sm:$0xff] %v1121
        %1186 = vst [vmem:[%s216 + $0xf8] sm:$0xff] %v1122
        %1187 = vst [vmem:[%s216 + $0x100] sm:$0xff] %v1123
        %1188 = vst [vmem:[%s216 + $0x108] sm:$0xff] %v1124
        %1189 = vst [vmem:[%s216 + $0x110] sm:$0xff] %v1125
        %1190 = vst [vmem:[%s216 + $0x118] sm:$0xff] %v1126
        %1191 = vst [vmem:[%s216 + $0x120] sm:$0xff] %v1127
        %1192 = vst [vmem:[%s216 + $0x128] sm:$0xff] %v1128
        %1193 = vst [vmem:[%s216 + $0x130] sm:$0xff] %v1129
        %1194 = vst [vmem:[%s216 + $0x138] sm:$0xff] %v1130
        %1195 = vst [vmem:[%s216 + $0x140] sm:$0xff] %v1131
        %1196 = vst [vmem:[%s216 + $0x148] sm:$0xff] %v1132
        %1197 = vst [vmem:[%s216 + $0x150] sm:$0xff] %v1133
        %1198 = vst [vmem:[%s216 + $0x158] sm:$0xff] %v1134
        %1199 = vst [vmem:[%s216 + $0x160] sm:$0xff] %v1135
        %1200 = vst [vmem:[%s216 + $0x168] sm:$0xff] %v1136
        %1201 = vst [vmem:[%s216 + $0x170] sm:$0xff] %v1137
        %1202 = vst [vmem:[%s216 + $0x178] sm:$0xff] %v1138
        %1203 = vst [vmem:[%s216 + $0x180] sm:$0xff] %v1139
        %1204 = vst [vmem:[%s216 + $0x188] sm:$0xff] %v1140
        %1205 = vst [vmem:[%s216 + $0x190] sm:$0xff] %v1141
        %1206 = vst [vmem:[%s216 + $0x198] sm:$0xff] %v1142
        %1207 = vst [vmem:[%s216 + $0x1a0] sm:$0xff] %v1143
        %1208 = vst [vmem:[%s216 + $0x1a8] sm:$0xff] %v1144
        %1209 = vst [vmem:[%s216 + $0x1b0] sm:$0xff] %v1145
        %1210 = vst [vmem:[%s216 + $0x1b8] sm:$0xff] %v1146
        %1211 = vst [vmem:[%s216 + $0x1c0] sm:$0xff] %v1147
        %1212 = vst [vmem:[%s216 + $0x1c8] sm:$0xff] %v1148
        %1213 = vst [vmem:[%s216 + $0x1d0] sm:$0xff] %v1149
        %1214 = vst [vmem:[%s216 + $0x1d8] sm:$0xff] %v1150
        %1215 = vst [vmem:[%s216 + $0x1e0] sm:$0xff] %v1151
        %1216 = vst [vmem:[%s216 + $0x1e8] sm:$0xff] %v1152
        %1217 = vst [vmem:[%s216 + $0x1f0] sm:$0xff] %v1153
        %1218 = vst [vmem:[%s216 + $0x1f8] sm:$0xff] %v1154
      $region36: #{dcsa_forward.24} parent=27 // pred_fallthru
        _
      %s1219 = smul.u32 64, %s18
      %p1220 = scmp.lt.s32.totalorder %s1219, 127
      %s1221 = scalar_select %p1220, %s1219, 127
      %p1222 = scmp.lt.s32.totalorder %s19, 0
      %s1223 = scalar_select %p1222, %s19, 0
      %s1224 = sadd.s32 %s1223, %s1221
      %s1225 = smul.addr %s1224, 8
      %s1226 = scalar_lea.vmem %s2, %s1225
      // Predicated region
      $region37: #{dcsa_forward.24} parent=27 // pred_check
        %p1227 = pneg %p108
      $region38: #{dcsa_forward.24} parent=27 // pred_check_branch
        %1229 = sbr.rel (%p1227) target = $region40
      $region39: #{dcsa_forward.24} parent=27 // pred_region
        %s1230 = smul.u32 64, %s18
      $region40: #{dcsa_forward.24} parent=27 // pred_fallthru
        _
    $region28: #{dcsa_forward.24} parent=5 // pred_fallthru
      _
    %p1231 = scmp.le.s32.totalorder 2, %s8
    // Predicated region
    $region41: #{dcsa_forward.24} parent=5 // pred_check
      %p1232 = pneg %p1231
    $region42: #{dcsa_forward.24} parent=5 // pred_check_branch
      %1234 = sbr.rel (%p1232) target = $region44
    $region43: #{dcsa_forward.24} parent=5 // pred_region
      %s1235 = ssub.s32 %s8, 2
      // Predicated region
      $region45: #{dcsa_forward.24} parent=43 // pred_check
        %p1236 = pneg %p114
      $region46: #{dcsa_forward.24} parent=43 // pred_check_branch
        %1238 = sbr.rel (%p1236) target = $region48
      $region47: #{dcsa_forward.24} parent=43 // pred_region
        %s1239 = smul.u32 64, %s21
        %p1240 = scmp.lt.s32.totalorder %s1239, 127
        %s1241 = scalar_select %p1240, %s1239, 127
        %p1242 = scmp.lt.s32.totalorder %s22, 0
        %s1243 = scalar_select %p1242, %s22, 0
        %s1244 = sadd.s32 %s1243, %s1241
        %s1245 = smul.addr %s1244, 8
        %s1246 = scalar_lea.vmem %s2, %s1245
      $region48: #{dcsa_forward.24} parent=43 // pred_fallthru
        _
    $region44: #{dcsa_forward.24} parent=5 // pred_fallthru
      _
  $region6: #{dcsa_forward.24} parent=0 // loop_footer
    %s12 = sadd.s32 1, %s8
  $region7: #{dcsa_forward.24} parent=0 // loop_footer_branch
    %7 = sbr.rel target = $region3
  $region8: #{dcsa_forward.24} parent=0 // loop_exit
    _

// kernel: dcsa_forward.26
$region0: #{dcsa_forward.26}
  #allocation0 [shape = 'u32[]', space=smem, size = 0x4, offset = 0x4, fixed_abs, tag = 'smem constant byte address 0x4 - core index']
  #allocation1 [shape = 'u32[144,128]{1,0:T(1,128)}', space=vmem, size = 0x12000, scoped, tag = 'internal scratch']
  %s0 = inlined_call_operand.vmem [shape: f32[256,128], index: 0, kind: input, shape index: {}]
  %s1 = inlined_call_operand.vmem [shape: f32[1,128], index: 1, kind: input, shape index: {}]
  %s2 = inlined_call_operand.vmem [shape: f32[1,128], index: 2, kind: input, shape index: {}]
  %s3 = inlined_call_operand.vmem [shape: f32[256,128], index: 3, kind: output, shape index: {}]
  %s4 = sld [smem:[#allocation0]]
  $region22: #{dcsa_forward.26} parent=0
    _
  %s6 = ssub.s32 1, %s4
  %s7 = scalar_select 0, %s6, %s4
  // Predicated region
  $region2: #{dcsa_forward.26} parent=0 // pred_check
    _
  $region3: #{dcsa_forward.26} parent=0 // pred_check_branch
    %9 = sbr.rel (0) target = $region5
  $region4: #{dcsa_forward.26} parent=0 // pred_region
    _
  $region5: #{dcsa_forward.26} parent=0 // pred_fallthru
    _
  // Predicated region
  $region6: #{dcsa_forward.26} parent=0 // pred_check
    _
  $region7: #{dcsa_forward.26} parent=0 // pred_check_branch
    %11 = sbr.rel (0) target = $region9
  $region8: #{dcsa_forward.26} parent=0 // pred_region
    _
  $region9: #{dcsa_forward.26} parent=0 // pred_fallthru
    _
  // Predicated region
  $region10: #{dcsa_forward.26} parent=0 // pred_check
    _
  $region11: #{dcsa_forward.26} parent=0 // pred_check_branch
    %13 = sbr.rel (0) target = $region13
  $region12: #{dcsa_forward.26} parent=0 // pred_region
    _
  $region13: #{dcsa_forward.26} parent=0 // pred_fallthru
    _
  %v14 = vld [vmem:[%s0] sm:$0xff]
  %v15 = vld [vmem:[%s0 + $0x8] sm:$0xff]
  %v16 = vld [vmem:[%s0 + $0x10] sm:$0xff]
  %v17 = vld [vmem:[%s0 + $0x18] sm:$0xff]
  %v18 = vld [vmem:[%s0 + $0x20] sm:$0xff]
  %v19 = vld [vmem:[%s0 + $0x28] sm:$0xff]
  %v20 = vld [vmem:[%s0 + $0x30] sm:$0xff]
  %v21 = vld [vmem:[%s0 + $0x38] sm:$0xff]
  %v22 = vld [vmem:[%s0 + $0x40] sm:$0xff]
  %v23 = vld [vmem:[%s0 + $0x48] sm:$0xff]
  %v24 = vld [vmem:[%s0 + $0x50] sm:$0xff]
  %v25 = vld [vmem:[%s0 + $0x58] sm:$0xff]
  %v26 = vld [vmem:[%s0 + $0x60] sm:$0xff]
  %v27 = vld [vmem:[%s0 + $0x68] sm:$0xff]
  %v28 = vld [vmem:[%s0 + $0x70] sm:$0xff]
  %v29 = vld [vmem:[%s0 + $0x78] sm:$0xff]
  %v30 = vld [vmem:[%s0 + $0x80] sm:$0xff]
  %v31 = vld [vmem:[%s0 + $0x88] sm:$0xff]
  %v32 = vld [vmem:[%s0 + $0x90] sm:$0xff]
  %v33 = vld [vmem:[%s0 + $0x98] sm:$0xff]
  %v34 = vld [vmem:[%s0 + $0xa0] sm:$0xff]
  %v35 = vld [vmem:[%s0 + $0xa8] sm:$0xff]
  %v36 = vld [vmem:[%s0 + $0xb0] sm:$0xff]
  %v37 = vld [vmem:[%s0 + $0xb8] sm:$0xff]
  %v38 = vld [vmem:[%s0 + $0xc0] sm:$0xff]
  %v39 = vld [vmem:[%s0 + $0xc8] sm:$0xff]
  %v40 = vld [vmem:[%s0 + $0xd0] sm:$0xff]
  %v41 = vld [vmem:[%s0 + $0xd8] sm:$0xff]
  %v42 = vld [vmem:[%s0 + $0xe0] sm:$0xff]
  %v43 = vld [vmem:[%s0 + $0xe8] sm:$0xff]
  %v44 = vld [vmem:[%s0 + $0xf0] sm:$0xff]
  %v45 = vld [vmem:[%s0 + $0xf8] sm:$0xff]
  %v46 = vld [vmem:[%s1] sm:$0x1]
  %v48 = vlaneseq
  %v49 = vshrl.u32 %v48, 7
  %v50 = vsub.s32 0, %v49
  %v51 = vrot.slane %v46, %v50
  %v53 = vmul.f32 %v14, %v51
  %v54 = vmul.f32 %v15, %v51
  %v55 = vmul.f32 %v16, %v51
  %v56 = vmul.f32 %v17, %v51
  %v57 = vmul.f32 %v18, %v51
  %v58 = vmul.f32 %v19, %v51
  %v59 = vmul.f32 %v20, %v51
  %v60 = vmul.f32 %v21, %v51
  %v61 = vmul.f32 %v22, %v51
  %v62 = vmul.f32 %v23, %v51
  %v63 = vmul.f32 %v24, %v51
  %v64 = vmul.f32 %v25, %v51
  %v65 = vmul.f32 %v26, %v51
  %v66 = vmul.f32 %v27, %v51
  %v67 = vmul.f32 %v28, %v51
  %v68 = vmul.f32 %v29, %v51
  %v69 = vmul.f32 %v30, %v51
  %v70 = vmul.f32 %v31, %v51
  %v71 = vmul.f32 %v32, %v51
  %v72 = vmul.f32 %v33, %v51
  %v73 = vmul.f32 %v34, %v51
  %v74 = vmul.f32 %v35, %v51
  %v75 = vmul.f32 %v36, %v51
  %v76 = vmul.f32 %v37, %v51
  %v77 = vmul.f32 %v38, %v51
  %v78 = vmul.f32 %v39, %v51
  %v79 = vmul.f32 %v40, %v51
  %v80 = vmul.f32 %v41, %v51
  %v81 = vmul.f32 %v42, %v51
  %v82 = vmul.f32 %v43, %v51
  %v83 = vmul.f32 %v44, %v51
  %v84 = vmul.f32 %v45, %v51
  %v85 = vld [vmem:[%s2] sm:$0x1]
  %v87 = vlaneseq
  %v88 = vshrl.u32 %v87, 7
  %v89 = vsub.s32 0, %v88
  %v90 = vrot.slane %v85, %v89
  %v92 = vadd.f32 %v53, %v90
  %v93 = vadd.f32 %v54, %v90
  %v94 = vadd.f32 %v55, %v90
  %v95 = vadd.f32 %v56, %v90
  %v96 = vadd.f32 %v57, %v90
  %v97 = vadd.f32 %v58, %v90
  %v98 = vadd.f32 %v59, %v90
  %v99 = vadd.f32 %v60, %v90
  %v100 = vadd.f32 %v61, %v90
  %v101 = vadd.f32 %v62, %v90
  %v102 = vadd.f32 %v63, %v90
  %v103 = vadd.f32 %v64, %v90
  %v104 = vadd.f32 %v65, %v90
  %v105 = vadd.f32 %v66, %v90
  %v106 = vadd.f32 %v67, %v90
  %v107 = vadd.f32 %v68, %v90
  %v108 = vadd.f32 %v69, %v90
  %v109 = vadd.f32 %v70, %v90
  %v110 = vadd.f32 %v71, %v90
  %v111 = vadd.f32 %v72, %v90
  %v112 = vadd.f32 %v73, %v90
  %v113 = vadd.f32 %v74, %v90
  %v114 = vadd.f32 %v75, %v90
  %v115 = vadd.f32 %v76, %v90
  %v116 = vadd.f32 %v77, %v90
  %v117 = vadd.f32 %v78, %v90
  %v118 = vadd.f32 %v79, %v90
  %v119 = vadd.f32 %v80, %v90
  %v120 = vadd.f32 %v81, %v90
  %v121 = vadd.f32 %v82, %v90
  %v122 = vadd.f32 %v83, %v90
  %v123 = vadd.f32 %v84, %v90
  %v124 = vmax.f32 %v92, 0.0
  %v125 = vmax.f32 %v93, 0.0
  %v126 = vmax.f32 %v94, 0.0
  %v127 = vmax.f32 %v95, 0.0
  %v128 = vmax.f32 %v96, 0.0
  %v129 = vmax.f32 %v97, 0.0
  %v130 = vmax.f32 %v98, 0.0
  %v131 = vmax.f32 %v99, 0.0
  %v132 = vmax.f32 %v100, 0.0
  %v133 = vmax.f32 %v101, 0.0
  %v134 = vmax.f32 %v102, 0.0
  %v135 = vmax.f32 %v103, 0.0
  %v136 = vmax.f32 %v104, 0.0
  %v137 = vmax.f32 %v105, 0.0
  %v138 = vmax.f32 %v106, 0.0
  %v139 = vmax.f32 %v107, 0.0
  %v140 = vmax.f32 %v108, 0.0
  %v141 = vmax.f32 %v109, 0.0
  %v142 = vmax.f32 %v110, 0.0
  %v143 = vmax.f32 %v111, 0.0
  %v144 = vmax.f32 %v112, 0.0
  %v145 = vmax.f32 %v113, 0.0
  %v146 = vmax.f32 %v114, 0.0
  %v147 = vmax.f32 %v115, 0.0
  %v148 = vmax.f32 %v116, 0.0
  %v149 = vmax.f32 %v117, 0.0
  %v150 = vmax.f32 %v118, 0.0
  %v151 = vmax.f32 %v119, 0.0
  %v152 = vmax.f32 %v120, 0.0
  %v153 = vmax.f32 %v121, 0.0
  %v154 = vmax.f32 %v122, 0.0
  %v155 = vmax.f32 %v123, 0.0
  %156 = vst [vmem:[%s3] sm:$0xff] %v124
  %157 = vst [vmem:[%s3 + $0x8] sm:$0xff] %v125
  %158 = vst [vmem:[%s3 + $0x10] sm:$0xff] %v126
  %159 = vst [vmem:[%s3 + $0x18] sm:$0xff] %v127
  %160 = vst [vmem:[%s3 + $0x20] sm:$0xff] %v128
  %161 = vst [vmem:[%s3 + $0x28] sm:$0xff] %v129
  %162 = vst [vmem:[%s3 + $0x30] sm:$0xff] %v130
  %163 = vst [vmem:[%s3 + $0x38] sm:$0xff] %v131
  %164 = vst [vmem:[%s3 + $0x40] sm:$0xff] %v132
  %165 = vst [vmem:[%s3 + $0x48] sm:$0xff] %v133
  %166 = vst [vmem:[%s3 + $0x50] sm:$0xff] %v134
  %167 = vst [vmem:[%s3 + $0x58] sm:$0xff] %v135
  %168 = vst [vmem:[%s3 + $0x60] sm:$0xff] %v136
  %169 = vst [vmem:[%s3 + $0x68] sm:$0xff] %v137
  %170 = vst [vmem:[%s3 + $0x70] sm:$0xff] %v138
  %171 = vst [vmem:[%s3 + $0x78] sm:$0xff] %v139
  %172 = vst [vmem:[%s3 + $0x80] sm:$0xff] %v140
  %173 = vst [vmem:[%s3 + $0x88] sm:$0xff] %v141
  %174 = vst [vmem:[%s3 + $0x90] sm:$0xff] %v142
  %175 = vst [vmem:[%s3 + $0x98] sm:$0xff] %v143
  %176 = vst [vmem:[%s3 + $0xa0] sm:$0xff] %v144
  %177 = vst [vmem:[%s3 + $0xa8] sm:$0xff] %v145
  %178 = vst [vmem:[%s3 + $0xb0] sm:$0xff] %v146
  %179 = vst [vmem:[%s3 + $0xb8] sm:$0xff] %v147
  %180 = vst [vmem:[%s3 + $0xc0] sm:$0xff] %v148
  %181 = vst [vmem:[%s3 + $0xc8] sm:$0xff] %v149
  %182 = vst [vmem:[%s3 + $0xd0] sm:$0xff] %v150
  %183 = vst [vmem:[%s3 + $0xd8] sm:$0xff] %v151
  %184 = vst [vmem:[%s3 + $0xe0] sm:$0xff] %v152
  %185 = vst [vmem:[%s3 + $0xe8] sm:$0xff] %v153
  %186 = vst [vmem:[%s3 + $0xf0] sm:$0xff] %v154
  %187 = vst [vmem:[%s3 + $0xf8] sm:$0xff] %v155
  // Predicated region
  $region14: #{dcsa_forward.26} parent=0 // pred_check
    _
  $region15: #{dcsa_forward.26} parent=0 // pred_check_branch
    %189 = sbr.rel (0) target = $region17
  $region16: #{dcsa_forward.26} parent=0 // pred_region
    _
  $region17: #{dcsa_forward.26} parent=0 // pred_fallthru
    _
  // Predicated region
  $region18: #{dcsa_forward.26} parent=0 // pred_check
    _
  $region19: #{dcsa_forward.26} parent=0 // pred_check_branch
    %191 = sbr.rel (0) target = $region21
  $region20: #{dcsa_forward.26} parent=0 // pred_region
    _
  $region21: #{dcsa_forward.26} parent=0 // pred_fallthru
    _

// kernel: dcsa_forward.25
$region0: #{dcsa_forward.25}
  #allocation0 [shape = 'u32[]', space=smem, size = 0x4, offset = 0x4, fixed_abs, tag = 'smem constant byte address 0x4 - core index']
  #allocation1 [shape = 'u32[144,128]{1,0:T(1,128)}', space=vmem, size = 0x12000, scoped, tag = 'internal scratch']
  #allocation2 [shape = 'f32[2,128]{1,0:T(2,128)}', space=vmem, size = 0x400, scoped, tag = 'scratch operand']
  %s0 = inlined_call_operand.vmem [shape: f32[256,128], index: 0, kind: input, shape index: {}]
  %s1 = inlined_call_operand.vmem [shape: f32[2,128], index: 1, kind: output, shape index: {}]
  %s2 = sld [smem:[#allocation0]]
  $region22: #{dcsa_forward.25} parent=0
    _
  %s4 = ssub.s32 1, %s2
  %s5 = scalar_select 0, %s4, %s2
  // Predicated region
  $region2: #{dcsa_forward.25} parent=0 // pred_check
    _
  $region3: #{dcsa_forward.25} parent=0 // pred_check_branch
    %7 = sbr.rel (0) target = $region5
  $region4: #{dcsa_forward.25} parent=0 // pred_region
    _
  $region5: #{dcsa_forward.25} parent=0 // pred_fallthru
    _
  %p8 = scmp.eq.s32.totalorder 0, 0
  // Predicated region
  $region6: #{dcsa_forward.25} parent=0 // pred_check
    %p9 = pneg %p8
  $region7: #{dcsa_forward.25} parent=0 // pred_check_branch
    %11 = sbr.rel (%p9) target = $region9
  $region8: #{dcsa_forward.25} parent=0 // pred_region
    %12 = vst [vmem:[#allocation2] sm:$0x3] 0.0
  $region9: #{dcsa_forward.25} parent=0 // pred_fallthru
    _
  %v13 = vld [vmem:[%s0] sm:$0xff]
  %v14 = vld [vmem:[%s0 + $0x8] sm:$0xff]
  %v15 = vld [vmem:[%s0 + $0x10] sm:$0xff]
  %v16 = vld [vmem:[%s0 + $0x18] sm:$0xff]
  %v17 = vld [vmem:[%s0 + $0x20] sm:$0xff]
  %v18 = vld [vmem:[%s0 + $0x28] sm:$0xff]
  %v19 = vld [vmem:[%s0 + $0x30] sm:$0xff]
  %v20 = vld [vmem:[%s0 + $0x38] sm:$0xff]
  %v21 = vld [vmem:[%s0 + $0x40] sm:$0xff]
  %v22 = vld [vmem:[%s0 + $0x48] sm:$0xff]
  %v23 = vld [vmem:[%s0 + $0x50] sm:$0xff]
  %v24 = vld [vmem:[%s0 + $0x58] sm:$0xff]
  %v25 = vld [vmem:[%s0 + $0x60] sm:$0xff]
  %v26 = vld [vmem:[%s0 + $0x68] sm:$0xff]
  %v27 = vld [vmem:[%s0 + $0x70] sm:$0xff]
  %v28 = vld [vmem:[%s0 + $0x78] sm:$0xff]
  %v29 = vld [vmem:[%s0 + $0x80] sm:$0xff]
  %v30 = vld [vmem:[%s0 + $0x88] sm:$0xff]
  %v31 = vld [vmem:[%s0 + $0x90] sm:$0xff]
  %v32 = vld [vmem:[%s0 + $0x98] sm:$0xff]
  %v33 = vld [vmem:[%s0 + $0xa0] sm:$0xff]
  %v34 = vld [vmem:[%s0 + $0xa8] sm:$0xff]
  %v35 = vld [vmem:[%s0 + $0xb0] sm:$0xff]
  %v36 = vld [vmem:[%s0 + $0xb8] sm:$0xff]
  %v37 = vld [vmem:[%s0 + $0xc0] sm:$0xff]
  %v38 = vld [vmem:[%s0 + $0xc8] sm:$0xff]
  %v39 = vld [vmem:[%s0 + $0xd0] sm:$0xff]
  %v40 = vld [vmem:[%s0 + $0xd8] sm:$0xff]
  %v41 = vld [vmem:[%s0 + $0xe0] sm:$0xff]
  %v42 = vld [vmem:[%s0 + $0xe8] sm:$0xff]
  %v43 = vld [vmem:[%s0 + $0xf0] sm:$0xff]
  %v44 = vld [vmem:[%s0 + $0xf8] sm:$0xff]
  %v45 = vld [vmem:[#allocation2] sm:$0x1]
  %v46 = vadd.f32 %v13, %v14
  %v47 = vadd.f32 %v46, %v15
  %v48 = vadd.f32 %v47, %v16
  %v49 = vadd.f32 %v48, %v17
  %v50 = vadd.f32 %v49, %v18
  %v51 = vadd.f32 %v50, %v19
  %v52 = vadd.f32 %v51, %v20
  %v53 = vadd.f32 %v52, %v21
  %v54 = vadd.f32 %v53, %v22
  %v55 = vadd.f32 %v54, %v23
  %v56 = vadd.f32 %v55, %v24
  %v57 = vadd.f32 %v56, %v25
  %v58 = vadd.f32 %v57, %v26
  %v59 = vadd.f32 %v58, %v27
  %v60 = vadd.f32 %v59, %v28
  %v61 = vadd.f32 %v60, %v29
  %v62 = vadd.f32 %v61, %v30
  %v63 = vadd.f32 %v62, %v31
  %v64 = vadd.f32 %v63, %v32
  %v65 = vadd.f32 %v64, %v33
  %v66 = vadd.f32 %v65, %v34
  %v67 = vadd.f32 %v66, %v35
  %v68 = vadd.f32 %v67, %v36
  %v69 = vadd.f32 %v68, %v37
  %v70 = vadd.f32 %v69, %v38
  %v71 = vadd.f32 %v70, %v39
  %v72 = vadd.f32 %v71, %v40
  %v73 = vadd.f32 %v72, %v41
  %v74 = vadd.f32 %v73, %v42
  %v75 = vadd.f32 %v74, %v43
  %v76 = vadd.f32 %v75, %v44
  %v77 = vrot.slane %v76, 4
  %v78 = vadd.f32 %v76, %v77
  %v79 = vrot.slane %v78, 2
  %v80 = vadd.f32 %v78, %v79
  %v81 = vrot.slane %v80, 1
  %v82 = vadd.f32 %v80, %v81
  %v83 = vadd.f32 %v45, %v82
  %84 = vst [vmem:[#allocation2] sm:$0x1] %v83
  %v85 = vld [vmem:[#allocation2 + $0x1] sm:$0x1]
  %v86 = vmul.f32 %v13, %v13
  %v87 = vmul.f32 %v14, %v14
  %v88 = vmul.f32 %v15, %v15
  %v89 = vmul.f32 %v16, %v16
  %v90 = vmul.f32 %v17, %v17
  %v91 = vmul.f32 %v18, %v18
  %v92 = vmul.f32 %v19, %v19
  %v93 = vmul.f32 %v20, %v20
  %v94 = vmul.f32 %v21, %v21
  %v95 = vmul.f32 %v22, %v22
  %v96 = vmul.f32 %v23, %v23
  %v97 = vmul.f32 %v24, %v24
  %v98 = vmul.f32 %v25, %v25
  %v99 = vmul.f32 %v26, %v26
  %v100 = vmul.f32 %v27, %v27
  %v101 = vmul.f32 %v28, %v28
  %v102 = vmul.f32 %v29, %v29
  %v103 = vmul.f32 %v30, %v30
  %v104 = vmul.f32 %v31, %v31
  %v105 = vmul.f32 %v32, %v32
  %v106 = vmul.f32 %v33, %v33
  %v107 = vmul.f32 %v34, %v34
  %v108 = vmul.f32 %v35, %v35
  %v109 = vmul.f32 %v36, %v36
  %v110 = vmul.f32 %v37, %v37
  %v111 = vmul.f32 %v38, %v38
  %v112 = vmul.f32 %v39, %v39
  %v113 = vmul.f32 %v40, %v40
  %v114 = vmul.f32 %v41, %v41
  %v115 = vmul.f32 %v42, %v42
  %v116 = vmul.f32 %v43, %v43
  %v117 = vmul.f32 %v44, %v44
  %v118 = vadd.f32 %v86, %v87
  %v119 = vadd.f32 %v118, %v88
  %v120 = vadd.f32 %v119, %v89
  %v121 = vadd.f32 %v120, %v90
  %v122 = vadd.f32 %v121, %v91
  %v123 = vadd.f32 %v122, %v92
  %v124 = vadd.f32 %v123, %v93
  %v125 = vadd.f32 %v124, %v94
  %v126 = vadd.f32 %v125, %v95
  %v127 = vadd.f32 %v126, %v96
  %v128 = vadd.f32 %v127, %v97
  %v129 = vadd.f32 %v128, %v98
  %v130 = vadd.f32 %v129, %v99
  %v131 = vadd.f32 %v130, %v100
  %v132 = vadd.f32 %v131, %v101
  %v133 = vadd.f32 %v132, %v102
  %v134 = vadd.f32 %v133, %v103
  %v135 = vadd.f32 %v134, %v104
  %v136 = vadd.f32 %v135, %v105
  %v137 = vadd.f32 %v136, %v106
  %v138 = vadd.f32 %v137, %v107
  %v139 = vadd.f32 %v138, %v108
  %v140 = vadd.f32 %v139, %v109
  %v141 = vadd.f32 %v140, %v110
  %v142 = vadd.f32 %v141, %v111
  %v143 = vadd.f32 %v142, %v112
  %v144 = vadd.f32 %v143, %v113
  %v145 = vadd.f32 %v144, %v114
  %v146 = vadd.f32 %v145, %v115
  %v147 = vadd.f32 %v146, %v116
  %v148 = vadd.f32 %v147, %v117
  %v149 = vrot.slane %v148, 4
  %v150 = vadd.f32 %v148, %v149
  %v151 = vrot.slane %v150, 2
  %v152 = vadd.f32 %v150, %v151
  %v153 = vrot.slane %v152, 1
  %v154 = vadd.f32 %v152, %v153
  %v155 = vadd.f32 %v85, %v154
  %156 = vst [vmem:[#allocation2 + $0x1] sm:$0x1] %v155
  // Predicated region
  $region10: #{dcsa_forward.25} parent=0 // pred_check
    %p157 = pneg %p8
  $region11: #{dcsa_forward.25} parent=0 // pred_check_branch
    %159 = sbr.rel (%p157) target = $region13
  $region12: #{dcsa_forward.25} parent=0 // pred_region
    %v160 = vld [vmem:[#allocation2] sm:$0x3]
    %161 = vst [vmem:[%s1] sm:$0x3] %v160
  $region13: #{dcsa_forward.25} parent=0 // pred_fallthru
    _
  // Predicated region
  $region14: #{dcsa_forward.25} parent=0 // pred_check
    _
  $region15: #{dcsa_forward.25} parent=0 // pred_check_branch
    %163 = sbr.rel (0) target = $region17
  $region16: #{dcsa_forward.25} parent=0 // pred_region
    _
  $region17: #{dcsa_forward.25} parent=0 // pred_fallthru
    _
  // Predicated region
  $region18: #{dcsa_forward.25} parent=0 // pred_check
    _
  $region19: #{dcsa_forward.25} parent=0 // pred_check_branch
    %165 = sbr.rel (0) target = $region21
  $region20: #{dcsa_forward.25} parent=0 // pred_region
    _
  $region21: #{dcsa_forward.25} parent=0 // pred_fallthru
    _

// kernel: dcsa_forward.27
$region0: #{dcsa_forward.27}
  #allocation0 [shape = 'u32[]', space=smem, size = 0x4, offset = 0x4, fixed_abs, tag = 'smem constant byte address 0x4 - core index']
  #allocation1 [shape = 'u32[144,128]{1,0:T(1,128)}', space=vmem, size = 0x12000, scoped, tag = 'internal scratch']
  #allocation2 [shape = 'f32[512,128]{1,0:T(8,128)}', space=vmem, size = 0x40000, scoped, tag = 'scratch operand']
  %s0 = inlined_call_operand.vmem [shape: bf16[2560,128], index: 0, kind: input, shape index: {}]
  %s1 = inlined_call_operand.vmem [shape: bf16[128,128], index: 1, kind: input, shape index: {}]
  %s2 = inlined_call_operand.vmem [shape: f32[2560,128], index: 2, kind: output, shape index: {}]
  %s3 = sld [smem:[#allocation0]]
  $region49: #{dcsa_forward.27} parent=0
    _
  %s5 = ssub.s32 1, %s3
  %s6 = scalar_select 0, %s5, %s3
  loop: start=0, step=1, limit=7
  $region2: #{dcsa_forward.27} parent=0 // loop_pre_header
    _
  $region3: #{dcsa_forward.27} parent=0 // loop_header
    %s8 = sphi 0, %s12
    %p9 = scmp.ge.s32.totalorder %s8, 7
    %s15 = sphi 0, %s34
    %s16 = sphi 0, %s30
    %s17 = sphi 0, %s26
    %s18 = sphi 0, %s15
    %s19 = sphi 0, %s16
    %s20 = sphi 0, %s17
    %s21 = sphi 0, %s18
    %s22 = sphi 0, %s19
    %s23 = sphi 0, %s20
    %s39 = sphi 0, %s41
    %s42 = sphi 0, %s39
    %s43 = sphi 0, %s42
    %s59 = sphi 0, %s43
    %s67 = sphi 0, %s69
    %s70 = sphi 0, %s67
    %s71 = sphi 0, %s70
    %s87 = sphi 0, %s71
    %s95 = sphi 0, %s97
    %s98 = sphi 0, %s95
    %s99 = sphi 0, %s98
    %s115 = sphi 0, %s99
  $region4: #{dcsa_forward.27} parent=0 // loop_header_branch
    %11 = sbr.rel (%p9) target = $region8
  $region5: #{dcsa_forward.27} parent=0 // loop_body
    %s13 = ssub.s32 %s8, 1
    %s14 = ssub.s32 %s8, 2
    %s24 = sadd.s32 1, %s17
    %p25 = scmp.ge.s32.totalorder %s24, 1
    %s26 = scalar_select %p25, 0, %s24
    %s27 = sadd.s32 1, %s16
    %s28 = scalar_select %p25, %s27, %s16
    %p29 = scmp.ge.s32.totalorder %s28, 1
    %s30 = scalar_select %p29, 0, %s28
    %s31 = sadd.s32 1, %s15
    %s32 = scalar_select %p29, %s31, %s15
    %p33 = scmp.ge.s32.totalorder %s32, 5
    %s34 = scalar_select %p33, 0, %s32
    %s35 = ssub.s32 %s15, %s34
    %s36 = ssub.s32 %s17, %s26
    %s37 = sor.u32 %s35, %s36
    %p38 = scmp.eq.s32.totalorder %s37, 0
    %s40 = sadd.s32 %s39, 1
    %s41 = scalar_select %p38, %s39, %s40
    %p44 = pneg %p38
    %p45 = scmp.eq.s32.totalorder %s8, 4
    %p46 = por %p44, %p45
    %p47 = scmp.ne.s32.totalorder %s39, %s42
    %p48 = scmp.eq.s32.totalorder %s8, 0
    %p49 = por %p47, %p48
    %p50 = scmp.ne.s32.totalorder %s39, %s42
    %p51 = scmp.eq.s32.totalorder %s13, 4
    %p52 = por %p50, %p51
    %p53 = scmp.ne.s32.totalorder %s42, %s43
    %p54 = scmp.eq.s32.totalorder %s13, 0
    %p55 = por %p53, %p54
    %p56 = scmp.ne.s32.totalorder %s42, %s43
    %p57 = scmp.eq.s32.totalorder %s14, 4
    %p58 = por %p56, %p57
    %p60 = scmp.ne.s32.totalorder %s43, %s59
    %p61 = scmp.eq.s32.totalorder %s14, 0
    %p62 = por %p60, %p61
    %s63 = ssub.s32 %s17, %s26
    %s64 = ssub.s32 %s16, %s30
    %s65 = sor.u32 %s63, %s64
    %p66 = scmp.eq.s32.totalorder %s65, 0
    %s68 = sadd.s32 %s67, 1
    %s69 = scalar_select %p66, %s67, %s68
    %p72 = pneg %p66
    %p73 = scmp.eq.s32.totalorder %s8, 4
    %p74 = por %p72, %p73
    %p75 = scmp.ne.s32.totalorder %s67, %s70
    %p76 = scmp.eq.s32.totalorder %s8, 0
    %p77 = por %p75, %p76
    %p78 = scmp.ne.s32.totalorder %s67, %s70
    %p79 = scmp.eq.s32.totalorder %s13, 4
    %p80 = por %p78, %p79
    %p81 = scmp.ne.s32.totalorder %s70, %s71
    %p82 = scmp.eq.s32.totalorder %s13, 0
    %p83 = por %p81, %p82
    %p84 = scmp.ne.s32.totalorder %s70, %s71
    %p85 = scmp.eq.s32.totalorder %s14, 4
    %p86 = por %p84, %p85
    %p88 = scmp.ne.s32.totalorder %s71, %s87
    %p89 = scmp.eq.s32.totalorder %s14, 0
    %p90 = por %p88, %p89
    %s91 = ssub.s32 %s15, %s34
    %s92 = ssub.s32 %s16, %s30
    %s93 = sor.u32 %s91, %s92
    %p94 = scmp.eq.s32.totalorder %s93, 0
    %s96 = sadd.s32 %s95, 1
    %s97 = scalar_select %p94, %s95, %s96
    %p100 = pneg %p94
    %p101 = scmp.eq.s32.totalorder %s8, 4
    %p102 = por %p100, %p101
    %p103 = scmp.ne.s32.totalorder %s95, %s98
    %p104 = scmp.eq.s32.totalorder %s8, 0
    %p105 = por %p103, %p104
    %p106 = scmp.ne.s32.totalorder %s95, %s98
    %p107 = scmp.eq.s32.totalorder %s13, 4
    %p108 = por %p106, %p107
    %p109 = scmp.ne.s32.totalorder %s98, %s99
    %p110 = scmp.eq.s32.totalorder %s13, 0
    %p111 = por %p109, %p110
    %p112 = scmp.ne.s32.totalorder %s98, %s99
    %p113 = scmp.eq.s32.totalorder %s14, 4
    %p114 = por %p112, %p113
    %p116 = scmp.ne.s32.totalorder %s99, %s115
    %p117 = scmp.eq.s32.totalorder %s14, 0
    %p118 = por %p116, %p117
    %p119 = scmp.le.s32.totalorder 1, %s8
    %p120 = scmp.lt.s32.totalorder %s8, 6
    %p121 = pnand %p119, %p120
    %p122 = pneg %p121
    // Predicated region
    $region9: #{dcsa_forward.27} parent=5 // pred_check
      _
    $region10: #{dcsa_forward.27} parent=5 // pred_check_branch
      %124 = sbr.rel (%p121) target = $region12
    $region11: #{dcsa_forward.27} parent=5 // pred_region
      %s125 = ssub.s32 %s8, 1
      // Predicated region
      $region13: #{dcsa_forward.27} parent=11 // pred_check
        %p126 = pneg %p83
      $region14: #{dcsa_forward.27} parent=11 // pred_check_branch
        %128 = sbr.rel (%p126) target = $region16
      $region15: #{dcsa_forward.27} parent=11 // pred_region
        %s129 = smul.u32 16, %s20
        %p130 = scmp.lt.s32.totalorder %s129, 15
        %s131 = scalar_select %p130, %s129, 15
        %p132 = scmp.lt.s32.totalorder %s19, 0
        %s133 = scalar_select %p132, %s19, 0
        %s134 = sadd.s32 %s133, %s131
        %s135 = smul.addr %s134, 4
        %s136 = scalar_lea.vmem %s1, %s135
        %s137 = smul.u32 16, %s20
      $region16: #{dcsa_forward.27} parent=11 // pred_fallthru
        _
    $region12: #{dcsa_forward.27} parent=5 // pred_fallthru
      _
    %p138 = scmp.lt.s32.totalorder %s8, 5
    // Predicated region
    $region17: #{dcsa_forward.27} parent=5 // pred_check
      %p139 = pneg %p138
    $region18: #{dcsa_forward.27} parent=5 // pred_check_branch
      %141 = sbr.rel (%p139) target = $region20
    $region19: #{dcsa_forward.27} parent=5 // pred_region
      // Predicated region
      $region21: #{dcsa_forward.27} parent=19 // pred_check
        %p142 = pneg %p49
      $region22: #{dcsa_forward.27} parent=19 // pred_check_branch
        %144 = sbr.rel (%p142) target = $region24
      $region23: #{dcsa_forward.27} parent=19 // pred_region
        %s145 = smul.u32 64, %s15
        %p146 = scmp.lt.s32.totalorder %s145, 319
        %s147 = scalar_select %p146, %s145, 319
        %p148 = scmp.lt.s32.totalorder %s17, 0
        %s149 = scalar_select %p148, %s17, 0
        %s150 = sadd.s32 %s149, %s147
        %s151 = smul.addr %s150, 4
        %s152 = scalar_lea.vmem %s0, %s151
        %s153 = smul.u32 64, %s15
      $region24: #{dcsa_forward.27} parent=19 // pred_fallthru
        _
    $region20: #{dcsa_forward.27} parent=5 // pred_fallthru
      _
    %p154 = scmp.le.s32.totalorder 1, %s8
    %p155 = scmp.lt.s32.totalorder %s8, 6
    %p156 = pnand %p154, %p155
    %p157 = pneg %p156
    // Predicated region
    $region25: #{dcsa_forward.27} parent=5 // pred_check
      _
    $region26: #{dcsa_forward.27} parent=5 // pred_check_branch
      %159 = sbr.rel (%p156) target = $region28
    $region27: #{dcsa_forward.27} parent=5 // pred_region
      %s160 = ssub.s32 %s8, 1
      %s161 = smul.u32 64, %s18
      %p162 = scmp.lt.s32.totalorder %s161, 319
      %s163 = scalar_select %p162, %s161, 319
      %p164 = scmp.lt.s32.totalorder %s20, 0
      %s165 = scalar_select %p164, %s20, 0
      %s166 = sadd.s32 %s165, %s163
      %s167 = smul.addr %s166, 4
      %s168 = scalar_lea.vmem %s0, %s167
      %p169 = pneg %p55
      %p170 = pneg %p52
      %s171 = smul.u32 16, %s20
      %p172 = scmp.lt.s32.totalorder %s171, 15
      %s173 = scalar_select %p172, %s171, 15
      %p174 = scmp.lt.s32.totalorder %s19, 0
      %s175 = scalar_select %p174, %s19, 0
      %s176 = sadd.s32 %s175, %s173
      %s177 = smul.addr %s176, 4
      %s178 = scalar_lea.vmem %s1, %s177
      %p179 = pneg %p83
      %p180 = pneg %p80
      %p181 = pneg %p111
      %p182 = pneg %p108
      %s183 = smul.u32 64, %s18
      %p184 = scmp.lt.s32.totalorder %s183, 319
      %s185 = scalar_select %p184, %s183, 319
      %p186 = scmp.lt.s32.totalorder %s19, 0
      %s187 = scalar_select %p186, %s19, 0
      %s188 = sadd.s32 %s187, %s185
      %s189 = smul.addr %s188, 8
      %s190 = scalar_lea.vmem %s2, %s189
      %s191 = smul.u32 64, %s18
      %p192 = scmp.lt.s32.totalorder %s191, 319
      %s193 = scalar_select %p192, %s191, 319
      %p194 = scmp.lt.s32.totalorder %s20, 0
      %s195 = scalar_select %p194, %s20, 0
      %s196 = sadd.s32 %s195, %s193
      %s197 = smul.addr %s196, 4
      %s198 = scalar_lea.vmem %s0, %s197
      %s199 = smul.u32 64, %s18
      %s200 = smul.u32 16, %s20
      %p201 = scmp.lt.s32.totalorder %s200, 15
      %s202 = scalar_select %p201, %s200, 15
      %p203 = scmp.lt.s32.totalorder %s19, 0
      %s204 = scalar_select %p203, %s19, 0
      %s205 = sadd.s32 %s204, %s202
      %s206 = smul.addr %s205, 4
      %s207 = scalar_lea.vmem %s1, %s206
      %s208 = smul.u32 16, %s20
      %s209 = smul.u32 64, %s18
      %p210 = scmp.lt.s32.totalorder %s209, 319
      %s211 = scalar_select %p210, %s209, 319
      %p212 = scmp.lt.s32.totalorder %s19, 0
      %s213 = scalar_select %p212, %s19, 0
      %s214 = sadd.s32 %s213, %s211
      %s215 = smul.addr %s214, 8
      %s216 = scalar_lea.vmem %s2, %s215
      %s217 = smul.u32 64, %s18
      %p219 = scmp.eq.s32.totalorder %s20, 0
      // Predicated region
      $region29: #{dcsa_forward.27} parent=27 // pred_check
        %p220 = pneg %p219
      $region30: #{dcsa_forward.27} parent=27 // pred_check_branch
        %222 = sbr.rel (%p220) target = $region32
      $region31: #{dcsa_forward.27} parent=27 // pred_region
        %223 = vst [vmem:[#allocation2] sm:$0xff] 0.0
        %224 = vst [vmem:[#allocation2 + $0x8] sm:$0xff] 0.0
        %225 = vst [vmem:[#allocation2 + $0x10] sm:$0xff] 0.0
        %226 = vst [vmem:[#allocation2 + $0x18] sm:$0xff] 0.0
        %227 = vst [vmem:[#allocation2 + $0x20] sm:$0xff] 0.0
        %228 = vst [vmem:[#allocation2 + $0x28] sm:$0xff] 0.0
        %229 = vst [vmem:[#allocation2 + $0x30] sm:$0xff] 0.0
        %230 = vst [vmem:[#allocation2 + $0x38] sm:$0xff] 0.0
        %231 = vst [vmem:[#allocation2 + $0x40] sm:$0xff] 0.0
        %232 = vst [vmem:[#allocation2 + $0x48] sm:$0xff] 0.0
        %233 = vst [vmem:[#allocation2 + $0x50] sm:$0xff] 0.0
        %234 = vst [vmem:[#allocation2 + $0x58] sm:$0xff] 0.0
        %235 = vst [vmem:[#allocation2 + $0x60] sm:$0xff] 0.0
        %236 = vst [vmem:[#allocation2 + $0x68] sm:$0xff] 0.0
        %237 = vst [vmem:[#allocation2 + $0x70] sm:$0xff] 0.0
        %238 = vst [vmem:[#allocation2 + $0x78] sm:$0xff] 0.0
        %239 = vst [vmem:[#allocation2 + $0x80] sm:$0xff] 0.0
        %240 = vst [vmem:[#allocation2 + $0x88] sm:$0xff] 0.0
        %241 = vst [vmem:[#allocation2 + $0x90] sm:$0xff] 0.0
        %242 = vst [vmem:[#allocation2 + $0x98] sm:$0xff] 0.0
        %243 = vst [vmem:[#allocation2 + $0xa0] sm:$0xff] 0.0
        %244 = vst [vmem:[#allocation2 + $0xa8] sm:$0xff] 0.0
        %245 = vst [vmem:[#allocation2 + $0xb0] sm:$0xff] 0.0
        %246 = vst [vmem:[#allocation2 + $0xb8] sm:$0xff] 0.0
        %247 = vst [vmem:[#allocation2 + $0xc0] sm:$0xff] 0.0
        %248 = vst [vmem:[#allocation2 + $0xc8] sm:$0xff] 0.0
        %249 = vst [vmem:[#allocation2 + $0xd0] sm:$0xff] 0.0
        %250 = vst [vmem:[#allocation2 + $0xd8] sm:$0xff] 0.0
        %251 = vst [vmem:[#allocation2 + $0xe0] sm:$0xff] 0.0
        %252 = vst [vmem:[#allocation2 + $0xe8] sm:$0xff] 0.0
        %253 = vst [vmem:[#allocation2 + $0xf0] sm:$0xff] 0.0
        %254 = vst [vmem:[#allocation2 + $0xf8] sm:$0xff] 0.0
        %255 = vst [vmem:[#allocation2 + $0x100] sm:$0xff] 0.0
        %256 = vst [vmem:[#allocation2 + $0x108] sm:$0xff] 0.0
        %257 = vst [vmem:[#allocation2 + $0x110] sm:$0xff] 0.0
        %258 = vst [vmem:[#allocation2 + $0x118] sm:$0xff] 0.0
        %259 = vst [vmem:[#allocation2 + $0x120] sm:$0xff] 0.0
        %260 = vst [vmem:[#allocation2 + $0x128] sm:$0xff] 0.0
        %261 = vst [vmem:[#allocation2 + $0x130] sm:$0xff] 0.0
        %262 = vst [vmem:[#allocation2 + $0x138] sm:$0xff] 0.0
        %263 = vst [vmem:[#allocation2 + $0x140] sm:$0xff] 0.0
        %264 = vst [vmem:[#allocation2 + $0x148] sm:$0xff] 0.0
        %265 = vst [vmem:[#allocation2 + $0x150] sm:$0xff] 0.0
        %266 = vst [vmem:[#allocation2 + $0x158] sm:$0xff] 0.0
        %267 = vst [vmem:[#allocation2 + $0x160] sm:$0xff] 0.0
        %268 = vst [vmem:[#allocation2 + $0x168] sm:$0xff] 0.0
        %269 = vst [vmem:[#allocation2 + $0x170] sm:$0xff] 0.0
        %270 = vst [vmem:[#allocation2 + $0x178] sm:$0xff] 0.0
        %271 = vst [vmem:[#allocation2 + $0x180] sm:$0xff] 0.0
        %272 = vst [vmem:[#allocation2 + $0x188] sm:$0xff] 0.0
        %273 = vst [vmem:[#allocation2 + $0x190] sm:$0xff] 0.0
        %274 = vst [vmem:[#allocation2 + $0x198] sm:$0xff] 0.0
        %275 = vst [vmem:[#allocation2 + $0x1a0] sm:$0xff] 0.0
        %276 = vst [vmem:[#allocation2 + $0x1a8] sm:$0xff] 0.0
        %277 = vst [vmem:[#allocation2 + $0x1b0] sm:$0xff] 0.0
        %278 = vst [vmem:[#allocation2 + $0x1b8] sm:$0xff] 0.0
        %279 = vst [vmem:[#allocation2 + $0x1c0] sm:$0xff] 0.0
        %280 = vst [vmem:[#allocation2 + $0x1c8] sm:$0xff] 0.0
        %281 = vst [vmem:[#allocation2 + $0x1d0] sm:$0xff] 0.0
        %282 = vst [vmem:[#allocation2 + $0x1d8] sm:$0xff] 0.0
        %283 = vst [vmem:[#allocation2 + $0x1e0] sm:$0xff] 0.0
        %284 = vst [vmem:[#allocation2 + $0x1e8] sm:$0xff] 0.0
        %285 = vst [vmem:[#allocation2 + $0x1f0] sm:$0xff] 0.0
        %286 = vst [vmem:[#allocation2 + $0x1f8] sm:$0xff] 0.0
      $region32: #{dcsa_forward.27} parent=27 // pred_fallthru
        _
      %v287 = vld [vmem:[#allocation2] sm:$0xff]
      %v288 = vld [vmem:[#allocation2 + $0x8] sm:$0xff]
      %v289 = vld [vmem:[#allocation2 + $0x10] sm:$0xff]
      %v290 = vld [vmem:[#allocation2 + $0x18] sm:$0xff]
      %v291 = vld [vmem:[#allocation2 + $0x20] sm:$0xff]
      %v292 = vld [vmem:[#allocation2 + $0x28] sm:$0xff]
      %v293 = vld [vmem:[#allocation2 + $0x30] sm:$0xff]
      %v294 = vld [vmem:[#allocation2 + $0x38] sm:$0xff]
      %v295 = vld [vmem:[#allocation2 + $0x40] sm:$0xff]
      %v296 = vld [vmem:[#allocation2 + $0x48] sm:$0xff]
      %v297 = vld [vmem:[#allocation2 + $0x50] sm:$0xff]
      %v298 = vld [vmem:[#allocation2 + $0x58] sm:$0xff]
      %v299 = vld [vmem:[#allocation2 + $0x60] sm:$0xff]
      %v300 = vld [vmem:[#allocation2 + $0x68] sm:$0xff]
      %v301 = vld [vmem:[#allocation2 + $0x70] sm:$0xff]
      %v302 = vld [vmem:[#allocation2 + $0x78] sm:$0xff]
      %v303 = vld [vmem:[#allocation2 + $0x80] sm:$0xff]
      %v304 = vld [vmem:[#allocation2 + $0x88] sm:$0xff]
      %v305 = vld [vmem:[#allocation2 + $0x90] sm:$0xff]
      %v306 = vld [vmem:[#allocation2 + $0x98] sm:$0xff]
      %v307 = vld [vmem:[#allocation2 + $0xa0] sm:$0xff]
      %v308 = vld [vmem:[#allocation2 + $0xa8] sm:$0xff]
      %v309 = vld [vmem:[#allocation2 + $0xb0] sm:$0xff]
      %v310 = vld [vmem:[#allocation2 + $0xb8] sm:$0xff]
      %v311 = vld [vmem:[#allocation2 + $0xc0] sm:$0xff]
      %v312 = vld [vmem:[#allocation2 + $0xc8] sm:$0xff]
      %v313 = vld [vmem:[#allocation2 + $0xd0] sm:$0xff]
      %v314 = vld [vmem:[#allocation2 + $0xd8] sm:$0xff]
      %v315 = vld [vmem:[#allocation2 + $0xe0] sm:$0xff]
      %v316 = vld [vmem:[#allocation2 + $0xe8] sm:$0xff]
      %v317 = vld [vmem:[#allocation2 + $0xf0] sm:$0xff]
      %v318 = vld [vmem:[#allocation2 + $0xf8] sm:$0xff]
      %v319 = vld [vmem:[#allocation2 + $0x100] sm:$0xff]
      %v320 = vld [vmem:[#allocation2 + $0x108] sm:$0xff]
      %v321 = vld [vmem:[#allocation2 + $0x110] sm:$0xff]
      %v322 = vld [vmem:[#allocation2 + $0x118] sm:$0xff]
      %v323 = vld [vmem:[#allocation2 + $0x120] sm:$0xff]
      %v324 = vld [vmem:[#allocation2 + $0x128] sm:$0xff]
      %v325 = vld [vmem:[#allocation2 + $0x130] sm:$0xff]
      %v326 = vld [vmem:[#allocation2 + $0x138] sm:$0xff]
      %v327 = vld [vmem:[#allocation2 + $0x140] sm:$0xff]
      %v328 = vld [vmem:[#allocation2 + $0x148] sm:$0xff]
      %v329 = vld [vmem:[#allocation2 + $0x150] sm:$0xff]
      %v330 = vld [vmem:[#allocation2 + $0x158] sm:$0xff]
      %v331 = vld [vmem:[#allocation2 + $0x160] sm:$0xff]
      %v332 = vld [vmem:[#allocation2 + $0x168] sm:$0xff]
      %v333 = vld [vmem:[#allocation2 + $0x170] sm:$0xff]
      %v334 = vld [vmem:[#allocation2 + $0x178] sm:$0xff]
      %v335 = vld [vmem:[#allocation2 + $0x180] sm:$0xff]
      %v336 = vld [vmem:[#allocation2 + $0x188] sm:$0xff]
      %v337 = vld [vmem:[#allocation2 + $0x190] sm:$0xff]
      %v338 = vld [vmem:[#allocation2 + $0x198] sm:$0xff]
      %v339 = vld [vmem:[#allocation2 + $0x1a0] sm:$0xff]
      %v340 = vld [vmem:[#allocation2 + $0x1a8] sm:$0xff]
      %v341 = vld [vmem:[#allocation2 + $0x1b0] sm:$0xff]
      %v342 = vld [vmem:[#allocation2 + $0x1b8] sm:$0xff]
      %v343 = vld [vmem:[#allocation2 + $0x1c0] sm:$0xff]
      %v344 = vld [vmem:[#allocation2 + $0x1c8] sm:$0xff]
      %v345 = vld [vmem:[#allocation2 + $0x1d0] sm:$0xff]
      %v346 = vld [vmem:[#allocation2 + $0x1d8] sm:$0xff]
      %v347 = vld [vmem:[#allocation2 + $0x1e0] sm:$0xff]
      %v348 = vld [vmem:[#allocation2 + $0x1e8] sm:$0xff]
      %v349 = vld [vmem:[#allocation2 + $0x1f0] sm:$0xff]
      %v350 = vld [vmem:[#allocation2 + $0x1f8] sm:$0xff]
      %v351 = vld [vmem:[%s198] sm:$0xf]
      %v352 = vld [vmem:[%s198 + $0x4] sm:$0xf]
      %v353 = vld [vmem:[%s198 + $0x8] sm:$0xf]
      %v354 = vld [vmem:[%s198 + $0xc] sm:$0xf]
      %v355 = vld [vmem:[%s198 + $0x10] sm:$0xf]
      %v356 = vld [vmem:[%s198 + $0x14] sm:$0xf]
      %v357 = vld [vmem:[%s198 + $0x18] sm:$0xf]
      %v358 = vld [vmem:[%s198 + $0x1c] sm:$0xf]
      %v359 = vld [vmem:[%s198 + $0x20] sm:$0xf]
      %v360 = vld [vmem:[%s198 + $0x24] sm:$0xf]
      %v361 = vld [vmem:[%s198 + $0x28] sm:$0xf]
      %v362 = vld [vmem:[%s198 + $0x2c] sm:$0xf]
      %v363 = vld [vmem:[%s198 + $0x30] sm:$0xf]
      %v364 = vld [vmem:[%s198 + $0x34] sm:$0xf]
      %v365 = vld [vmem:[%s198 + $0x38] sm:$0xf]
      %v366 = vld [vmem:[%s198 + $0x3c] sm:$0xf]
      %v367 = vld [vmem:[%s198 + $0x40] sm:$0xf]
      %v368 = vld [vmem:[%s198 + $0x44] sm:$0xf]
      %v369 = vld [vmem:[%s198 + $0x48] sm:$0xf]
      %v370 = vld [vmem:[%s198 + $0x4c] sm:$0xf]
      %v371 = vld [vmem:[%s198 + $0x50] sm:$0xf]
      %v372 = vld [vmem:[%s198 + $0x54] sm:$0xf]
      %v373 = vld [vmem:[%s198 + $0x58] sm:$0xf]
      %v374 = vld [vmem:[%s198 + $0x5c] sm:$0xf]
      %v375 = vld [vmem:[%s198 + $0x60] sm:$0xf]
      %v376 = vld [vmem:[%s198 + $0x64] sm:$0xf]
      %v377 = vld [vmem:[%s198 + $0x68] sm:$0xf]
      %v378 = vld [vmem:[%s198 + $0x6c] sm:$0xf]
      %v379 = vld [vmem:[%s198 + $0x70] sm:$0xf]
      %v380 = vld [vmem:[%s198 + $0x74] sm:$0xf]
      %v381 = vld [vmem:[%s198 + $0x78] sm:$0xf]
      %v382 = vld [vmem:[%s198 + $0x7c] sm:$0xf]
      %v383 = vld [vmem:[%s198 + $0x80] sm:$0xf]
      %v384 = vld [vmem:[%s198 + $0x84] sm:$0xf]
      %v385 = vld [vmem:[%s198 + $0x88] sm:$0xf]
      %v386 = vld [vmem:[%s198 + $0x8c] sm:$0xf]
      %v387 = vld [vmem:[%s198 + $0x90] sm:$0xf]
      %v388 = vld [vmem:[%s198 + $0x94] sm:$0xf]
      %v389 = vld [vmem:[%s198 + $0x98] sm:$0xf]
      %v390 = vld [vmem:[%s198 + $0x9c] sm:$0xf]
      %v391 = vld [vmem:[%s198 + $0xa0] sm:$0xf]
      %v392 = vld [vmem:[%s198 + $0xa4] sm:$0xf]
      %v393 = vld [vmem:[%s198 + $0xa8] sm:$0xf]
      %v394 = vld [vmem:[%s198 + $0xac] sm:$0xf]
      %v395 = vld [vmem:[%s198 + $0xb0] sm:$0xf]
      %v396 = vld [vmem:[%s198 + $0xb4] sm:$0xf]
      %v397 = vld [vmem:[%s198 + $0xb8] sm:$0xf]
      %v398 = vld [vmem:[%s198 + $0xbc] sm:$0xf]
      %v399 = vld [vmem:[%s198 + $0xc0] sm:$0xf]
      %v400 = vld [vmem:[%s198 + $0xc4] sm:$0xf]
      %v401 = vld [vmem:[%s198 + $0xc8] sm:$0xf]
      %v402 = vld [vmem:[%s198 + $0xcc] sm:$0xf]
      %v403 = vld [vmem:[%s198 + $0xd0] sm:$0xf]
      %v404 = vld [vmem:[%s198 + $0xd4] sm:$0xf]
      %v405 = vld [vmem:[%s198 + $0xd8] sm:$0xf]
      %v406 = vld [vmem:[%s198 + $0xdc] sm:$0xf]
      %v407 = vld [vmem:[%s198 + $0xe0] sm:$0xf]
      %v408 = vld [vmem:[%s198 + $0xe4] sm:$0xf]
      %v409 = vld [vmem:[%s198 + $0xe8] sm:$0xf]
      %v410 = vld [vmem:[%s198 + $0xec] sm:$0xf]
      %v411 = vld [vmem:[%s198 + $0xf0] sm:$0xf]
      %v412 = vld [vmem:[%s198 + $0xf4] sm:$0xf]
      %v413 = vld [vmem:[%s198 + $0xf8] sm:$0xf]
      %v414 = vld [vmem:[%s198 + $0xfc] sm:$0xf]
      %v415 = vld [vmem:[%s207] sm:$0xf]
      %v416 = vld [vmem:[%s207 + $0x4] sm:$0xf]
      %v417 = vld [vmem:[%s207 + $0x8] sm:$0xf]
      %v418 = vld [vmem:[%s207 + $0xc] sm:$0xf]
      %v419 = vld [vmem:[%s207 + $0x10] sm:$0xf]
      %v420 = vld [vmem:[%s207 + $0x14] sm:$0xf]
      %v421 = vld [vmem:[%s207 + $0x18] sm:$0xf]
      %v422 = vld [vmem:[%s207 + $0x1c] sm:$0xf]
      %v423 = vld [vmem:[%s207 + $0x20] sm:$0xf]
      %v424 = vld [vmem:[%s207 + $0x24] sm:$0xf]
      %v425 = vld [vmem:[%s207 + $0x28] sm:$0xf]
      %v426 = vld [vmem:[%s207 + $0x2c] sm:$0xf]
      %v427 = vld [vmem:[%s207 + $0x30] sm:$0xf]
      %v428 = vld [vmem:[%s207 + $0x34] sm:$0xf]
      %v429 = vld [vmem:[%s207 + $0x38] sm:$0xf]
      %v430 = vld [vmem:[%s207 + $0x3c] sm:$0xf]
      %v495 = vunpack.c.l.b16 %v351
      %v496 = vunpack.c.l.b16 %v352
      %v497 = vunpack.c.l.b16 %v353
      %v498 = vunpack.c.l.b16 %v354
      %v499 = vunpack.c.l.b16 %v355
      %v500 = vunpack.c.l.b16 %v356
      %v501 = vunpack.c.l.b16 %v357
      %v502 = vunpack.c.l.b16 %v358
      %v503 = vunpack.c.l.b16 %v359
      %v504 = vunpack.c.l.b16 %v360
      %v505 = vunpack.c.l.b16 %v361
      %v506 = vunpack.c.l.b16 %v362
      %v507 = vunpack.c.l.b16 %v363
      %v508 = vunpack.c.l.b16 %v364
      %v509 = vunpack.c.l.b16 %v365
      %v510 = vunpack.c.l.b16 %v366
      %v511 = vunpack.c.l.b16 %v367
      %v512 = vunpack.c.l.b16 %v368
      %v513 = vunpack.c.l.b16 %v369
      %v514 = vunpack.c.l.b16 %v370
      %v515 = vunpack.c.l.b16 %v371
      %v516 = vunpack.c.l.b16 %v372
      %v517 = vunpack.c.l.b16 %v373
      %v518 = vunpack.c.l.b16 %v374
      %v519 = vunpack.c.l.b16 %v375
      %v520 = vunpack.c.l.b16 %v376
      %v521 = vunpack.c.l.b16 %v377
      %v522 = vunpack.c.l.b16 %v378
      %v523 = vunpack.c.l.b16 %v379
      %v524 = vunpack.c.l.b16 %v380
      %v525 = vunpack.c.l.b16 %v381
      %v526 = vunpack.c.l.b16 %v382
      %v527 = vunpack.c.l.b16 %v383
      %v528 = vunpack.c.l.b16 %v384
      %v529 = vunpack.c.l.b16 %v385
      %v530 = vunpack.c.l.b16 %v386
      %v531 = vunpack.c.l.b16 %v387
      %v532 = vunpack.c.l.b16 %v388
      %v533 = vunpack.c.l.b16 %v389
      %v534 = vunpack.c.l.b16 %v390
      %v535 = vunpack.c.l.b16 %v391
      %v536 = vunpack.c.l.b16 %v392
      %v537 = vunpack.c.l.b16 %v393
      %v538 = vunpack.c.l.b16 %v394
      %v539 = vunpack.c.l.b16 %v395
      %v540 = vunpack.c.l.b16 %v396
      %v541 = vunpack.c.l.b16 %v397
      %v542 = vunpack.c.l.b16 %v398
      %v543 = vunpack.c.l.b16 %v399
      %v544 = vunpack.c.l.b16 %v400
      %v545 = vunpack.c.l.b16 %v401
      %v546 = vunpack.c.l.b16 %v402
      %v547 = vunpack.c.l.b16 %v403
      %v548 = vunpack.c.l.b16 %v404
      %v549 = vunpack.c.l.b16 %v405
      %v550 = vunpack.c.l.b16 %v406
      %v551 = vunpack.c.l.b16 %v407
      %v552 = vunpack.c.l.b16 %v408
      %v553 = vunpack.c.l.b16 %v409
      %v554 = vunpack.c.l.b16 %v410
      %v555 = vunpack.c.l.b16 %v411
      %v556 = vunpack.c.l.b16 %v412
      %v557 = vunpack.c.l.b16 %v413
      %v558 = vunpack.c.l.b16 %v414
      %v559 = vpack.c.b16 %v496, %v495
      %v560 = vpack.c.b16 %v498, %v497
      %v561 = vpack.c.b16 %v500, %v499
      %v562 = vpack.c.b16 %v502, %v501
      %v563 = vpack.c.b16 %v504, %v503
      %v564 = vpack.c.b16 %v506, %v505
      %v565 = vpack.c.b16 %v508, %v507
      %v566 = vpack.c.b16 %v510, %v509
      %v567 = vpack.c.b16 %v512, %v511
      %v568 = vpack.c.b16 %v514, %v513
      %v569 = vpack.c.b16 %v516, %v515
      %v570 = vpack.c.b16 %v518, %v517
      %v571 = vpack.c.b16 %v520, %v519
      %v572 = vpack.c.b16 %v522, %v521
      %v573 = vpack.c.b16 %v524, %v523
      %v574 = vpack.c.b16 %v526, %v525
      %v575 = vpack.c.b16 %v528, %v527
      %v576 = vpack.c.b16 %v530, %v529
      %v577 = vpack.c.b16 %v532, %v531
      %v578 = vpack.c.b16 %v534, %v533
      %v579 = vpack.c.b16 %v536, %v535
      %v580 = vpack.c.b16 %v538, %v537
      %v581 = vpack.c.b16 %v540, %v539
      %v582 = vpack.c.b16 %v542, %v541
      %v583 = vpack.c.b16 %v544, %v543
      %v584 = vpack.c.b16 %v546, %v545
      %v585 = vpack.c.b16 %v548, %v547
      %v586 = vpack.c.b16 %v550, %v549
      %v587 = vpack.c.b16 %v552, %v551
      %v588 = vpack.c.b16 %v554, %v553
      %v589 = vpack.c.b16 %v556, %v555
      %v590 = vpack.c.b16 %v558, %v557
      %v639 = vunpack.c.l.b16 %v415
      %v640 = vunpack.c.l.b16 %v416
      %v641 = vunpack.c.l.b16 %v417
      %v642 = vunpack.c.l.b16 %v418
      %v643 = vunpack.c.l.b16 %v419
      %v644 = vunpack.c.l.b16 %v420
      %v645 = vunpack.c.l.b16 %v421
      %v646 = vunpack.c.l.b16 %v422
      %v647 = vunpack.c.l.b16 %v423
      %v648 = vunpack.c.l.b16 %v424
      %v649 = vunpack.c.l.b16 %v425
      %v650 = vunpack.c.l.b16 %v426
      %v651 = vunpack.c.l.b16 %v427
      %v652 = vunpack.c.l.b16 %v428
      %v653 = vunpack.c.l.b16 %v429
      %v654 = vunpack.c.l.b16 %v430
      %v655 = vpack.c.b16 %v640, %v639
      %v656 = vpack.c.b16 %v642, %v641
      %v657 = vpack.c.b16 %v644, %v643
      %v658 = vpack.c.b16 %v646, %v645
      %v659 = vpack.c.b16 %v648, %v647
      %v660 = vpack.c.b16 %v650, %v649
      %v661 = vpack.c.b16 %v652, %v651
      %v662 = vpack.c.b16 %v654, %v653
      %671 = vmatprep.subr.bf16.mxu0 0
      %672 = vmatpush1.bf16.msra.mxu0 %v662
      %673 = vmatprep.subr.bf16.mxu0 0
      %674 = vmatpush1.bf16.msra.mxu0 %v661
      %675 = vmatprep.subr.bf16.mxu0 0
      %676 = vmatpush1.bf16.msra.mxu0 %v660
      %677 = vmatprep.subr.bf16.mxu0 0
      %678 = vmatpush1.bf16.msra.mxu0 %v659
      %679 = vmatprep.subr.bf16.mxu0 0
      %680 = vmatpush1.bf16.msra.mxu0 %v658
      %681 = vmatprep.subr.bf16.mxu0 0
      %682 = vmatpush1.bf16.msra.mxu0 %v657
      %683 = vmatprep.subr.bf16.mxu0 0
      %684 = vmatpush1.bf16.msra.mxu0 %v656
      %685 = vmatprep.subr.bf16.mxu0 0
      %686 = vmatpush1.bf16.msra.mxu0 %v655
      %687 = vmatprep.subr.bf16.mxu0 0
      %688 = vmatpush2.bf16.msra.mxu0 0
      %689 = vmatprep.subr.bf16.mxu0 0
      %690 = vmatpush2.bf16.msra.mxu0 0
      %691 = vmatprep.subr.bf16.mxu0 0
      %692 = vmatpush2.bf16.msra.mxu0 0
      %693 = vmatprep.subr.bf16.mxu0 0
      %694 = vmatpush2.bf16.msra.mxu0 0
      %695 = vmatprep.subr.bf16.mxu0 0
      %696 = vmatpush2.bf16.msra.mxu0 0
      %697 = vmatprep.subr.bf16.mxu0 0
      %698 = vmatpush2.bf16.msra.mxu0 0
      %699 = vmatprep.subr.bf16.mxu0 0
      %700 = vmatpush2.bf16.msra.mxu0 0
      %701 = vmatprep.subr.bf16.mxu0 0
      %702 = vmatpush2.bf16.msra.mxu0 0
      %703 = vmatprep.mubr.bf16.mxu0 0
      %704 = vmatmul.mubr.bf16.gmra.mxu0 %v559
      %v705 = vpop.f32.mrf.mxu0
      %v706 = vadd.f32 0.0, %v705
      %v707 = vpop.f32.mrf.mxu0
      %v708 = vpop.f32.mrf.mxu0
      %v709 = vadd.f32 0.0, %v708
      %v710 = vpop.f32.mrf.mxu0
      %711 = vmatprep.mubr.bf16.mxu0 0
      %712 = vmatmul.mubr.bf16.gmra.mxu0 %v560
      %v713 = vpop.f32.mrf.mxu0
      %v714 = vadd.f32 0.0, %v713
      %v715 = vpop.f32.mrf.mxu0
      %v716 = vpop.f32.mrf.mxu0
      %v717 = vadd.f32 0.0, %v716
      %v718 = vpop.f32.mrf.mxu0
      %719 = vmatprep.mubr.bf16.mxu0 0
      %720 = vmatmul.mubr.bf16.gmra.mxu0 %v561
      %v721 = vpop.f32.mrf.mxu0
      %v722 = vadd.f32 0.0, %v721
      %v723 = vpop.f32.mrf.mxu0
      %v724 = vpop.f32.mrf.mxu0
      %v725 = vadd.f32 0.0, %v724
      %v726 = vpop.f32.mrf.mxu0
      %727 = vmatprep.mubr.bf16.mxu0 0
      %728 = vmatmul.mubr.bf16.gmra.mxu0 %v562
      %v729 = vpop.f32.mrf.mxu0
      %v730 = vadd.f32 0.0, %v729
      %v731 = vpop.f32.mrf.mxu0
      %v732 = vpop.f32.mrf.mxu0
      %v733 = vadd.f32 0.0, %v732
      %v734 = vpop.f32.mrf.mxu0
      %735 = vmatprep.mubr.bf16.mxu0 0
      %736 = vmatmul.mubr.bf16.gmra.mxu0 %v563
      %v737 = vpop.f32.mrf.mxu0
      %v738 = vadd.f32 0.0, %v737
      %v739 = vpop.f32.mrf.mxu0
      %v740 = vpop.f32.mrf.mxu0
      %v741 = vadd.f32 0.0, %v740
      %v742 = vpop.f32.mrf.mxu0
      %743 = vmatprep.mubr.bf16.mxu0 0
      %744 = vmatmul.mubr.bf16.gmra.mxu0 %v564
      %v745 = vpop.f32.mrf.mxu0
      %v746 = vadd.f32 0.0, %v745
      %v747 = vpop.f32.mrf.mxu0
      %v748 = vpop.f32.mrf.mxu0
      %v749 = vadd.f32 0.0, %v748
      %v750 = vpop.f32.mrf.mxu0
      %751 = vmatprep.mubr.bf16.mxu0 0
      %752 = vmatmul.mubr.bf16.gmra.mxu0 %v565
      %v753 = vpop.f32.mrf.mxu0
      %v754 = vadd.f32 0.0, %v753
      %v755 = vpop.f32.mrf.mxu0
      %v756 = vpop.f32.mrf.mxu0
      %v757 = vadd.f32 0.0, %v756
      %v758 = vpop.f32.mrf.mxu0
      %759 = vmatprep.mubr.bf16.mxu0 0
      %760 = vmatmul.mubr.bf16.gmra.mxu0 %v566
      %v761 = vpop.f32.mrf.mxu0
      %v762 = vadd.f32 0.0, %v761
      %v763 = vpop.f32.mrf.mxu0
      %v764 = vpop.f32.mrf.mxu0
      %v765 = vadd.f32 0.0, %v764
      %v766 = vpop.f32.mrf.mxu0
      %767 = vmatprep.mubr.bf16.mxu0 0
      %768 = vmatmul.mubr.bf16.gmra.mxu0 %v567
      %v769 = vpop.f32.mrf.mxu0
      %v770 = vadd.f32 0.0, %v769
      %v771 = vpop.f32.mrf.mxu0
      %v772 = vpop.f32.mrf.mxu0
      %v773 = vadd.f32 0.0, %v772
      %v774 = vpop.f32.mrf.mxu0
      %775 = vmatprep.mubr.bf16.mxu0 0
      %776 = vmatmul.mubr.bf16.gmra.mxu0 %v568
      %v777 = vpop.f32.mrf.mxu0
      %v778 = vadd.f32 0.0, %v777
      %v779 = vpop.f32.mrf.mxu0
      %v780 = vpop.f32.mrf.mxu0
      %v781 = vadd.f32 0.0, %v780
      %v782 = vpop.f32.mrf.mxu0
      %783 = vmatprep.mubr.bf16.mxu0 0
      %784 = vmatmul.mubr.bf16.gmra.mxu0 %v569
      %v785 = vpop.f32.mrf.mxu0
      %v786 = vadd.f32 0.0, %v785
      %v787 = vpop.f32.mrf.mxu0
      %v788 = vpop.f32.mrf.mxu0
      %v789 = vadd.f32 0.0, %v788
      %v790 = vpop.f32.mrf.mxu0
      %791 = vmatprep.mubr.bf16.mxu0 0
      %792 = vmatmul.mubr.bf16.gmra.mxu0 %v570
      %v793 = vpop.f32.mrf.mxu0
      %v794 = vadd.f32 0.0, %v793
      %v795 = vpop.f32.mrf.mxu0
      %v796 = vpop.f32.mrf.mxu0
      %v797 = vadd.f32 0.0, %v796
      %v798 = vpop.f32.mrf.mxu0
      %799 = vmatprep.mubr.bf16.mxu0 0
      %800 = vmatmul.mubr.bf16.gmra.mxu0 %v571
      %v801 = vpop.f32.mrf.mxu0
      %v802 = vadd.f32 0.0, %v801
      %v803 = vpop.f32.mrf.mxu0
      %v804 = vpop.f32.mrf.mxu0
      %v805 = vadd.f32 0.0, %v804
      %v806 = vpop.f32.mrf.mxu0
      %807 = vmatprep.mubr.bf16.mxu0 0
      %808 = vmatmul.mubr.bf16.gmra.mxu0 %v572
      %v809 = vpop.f32.mrf.mxu0
      %v810 = vadd.f32 0.0, %v809
      %v811 = vpop.f32.mrf.mxu0
      %v812 = vpop.f32.mrf.mxu0
      %v813 = vadd.f32 0.0, %v812
      %v814 = vpop.f32.mrf.mxu0
      %815 = vmatprep.mubr.bf16.mxu0 0
      %816 = vmatmul.mubr.bf16.gmra.mxu0 %v573
      %v817 = vpop.f32.mrf.mxu0
      %v818 = vadd.f32 0.0, %v817
      %v819 = vpop.f32.mrf.mxu0
      %v820 = vpop.f32.mrf.mxu0
      %v821 = vadd.f32 0.0, %v820
      %v822 = vpop.f32.mrf.mxu0
      %823 = vmatprep.mubr.bf16.mxu0 0
      %824 = vmatmul.mubr.bf16.gmra.mxu0 %v574
      %v825 = vpop.f32.mrf.mxu0
      %v826 = vadd.f32 0.0, %v825
      %v827 = vpop.f32.mrf.mxu0
      %v828 = vpop.f32.mrf.mxu0
      %v829 = vadd.f32 0.0, %v828
      %v830 = vpop.f32.mrf.mxu0
      %831 = vmatprep.mubr.bf16.mxu0 0
      %832 = vmatmul.mubr.bf16.gmra.mxu0 %v575
      %v833 = vpop.f32.mrf.mxu0
      %v834 = vadd.f32 0.0, %v833
      %v835 = vpop.f32.mrf.mxu0
      %v836 = vpop.f32.mrf.mxu0
      %v837 = vadd.f32 0.0, %v836
      %v838 = vpop.f32.mrf.mxu0
      %839 = vmatprep.mubr.bf16.mxu0 0
      %840 = vmatmul.mubr.bf16.gmra.mxu0 %v576
      %v841 = vpop.f32.mrf.mxu0
      %v842 = vadd.f32 0.0, %v841
      %v843 = vpop.f32.mrf.mxu0
      %v844 = vpop.f32.mrf.mxu0
      %v845 = vadd.f32 0.0, %v844
      %v846 = vpop.f32.mrf.mxu0
      %847 = vmatprep.mubr.bf16.mxu0 0
      %848 = vmatmul.mubr.bf16.gmra.mxu0 %v577
      %v849 = vpop.f32.mrf.mxu0
      %v850 = vadd.f32 0.0, %v849
      %v851 = vpop.f32.mrf.mxu0
      %v852 = vpop.f32.mrf.mxu0
      %v853 = vadd.f32 0.0, %v852
      %v854 = vpop.f32.mrf.mxu0
      %855 = vmatprep.mubr.bf16.mxu0 0
      %856 = vmatmul.mubr.bf16.gmra.mxu0 %v578
      %v857 = vpop.f32.mrf.mxu0
      %v858 = vadd.f32 0.0, %v857
      %v859 = vpop.f32.mrf.mxu0
      %v860 = vpop.f32.mrf.mxu0
      %v861 = vadd.f32 0.0, %v860
      %v862 = vpop.f32.mrf.mxu0
      %863 = vmatprep.mubr.bf16.mxu0 0
      %864 = vmatmul.mubr.bf16.gmra.mxu0 %v579
      %v865 = vpop.f32.mrf.mxu0
      %v866 = vadd.f32 0.0, %v865
      %v867 = vpop.f32.mrf.mxu0
      %v868 = vpop.f32.mrf.mxu0
      %v869 = vadd.f32 0.0, %v868
      %v870 = vpop.f32.mrf.mxu0
      %871 = vmatprep.mubr.bf16.mxu0 0
      %872 = vmatmul.mubr.bf16.gmra.mxu0 %v580
      %v873 = vpop.f32.mrf.mxu0
      %v874 = vadd.f32 0.0, %v873
      %v875 = vpop.f32.mrf.mxu0
      %v876 = vpop.f32.mrf.mxu0
      %v877 = vadd.f32 0.0, %v876
      %v878 = vpop.f32.mrf.mxu0
      %879 = vmatprep.mubr.bf16.mxu0 0
      %880 = vmatmul.mubr.bf16.gmra.mxu0 %v581
      %v881 = vpop.f32.mrf.mxu0
      %v882 = vadd.f32 0.0, %v881
      %v883 = vpop.f32.mrf.mxu0
      %v884 = vpop.f32.mrf.mxu0
      %v885 = vadd.f32 0.0, %v884
      %v886 = vpop.f32.mrf.mxu0
      %887 = vmatprep.mubr.bf16.mxu0 0
      %888 = vmatmul.mubr.bf16.gmra.mxu0 %v582
      %v889 = vpop.f32.mrf.mxu0
      %v890 = vadd.f32 0.0, %v889
      %v891 = vpop.f32.mrf.mxu0
      %v892 = vpop.f32.mrf.mxu0
      %v893 = vadd.f32 0.0, %v892
      %v894 = vpop.f32.mrf.mxu0
      %895 = vmatprep.mubr.bf16.mxu0 0
      %896 = vmatmul.mubr.bf16.gmra.mxu0 %v583
      %v897 = vpop.f32.mrf.mxu0
      %v898 = vadd.f32 0.0, %v897
      %v899 = vpop.f32.mrf.mxu0
      %v900 = vpop.f32.mrf.mxu0
      %v901 = vadd.f32 0.0, %v900
      %v902 = vpop.f32.mrf.mxu0
      %903 = vmatprep.mubr.bf16.mxu0 0
      %904 = vmatmul.mubr.bf16.gmra.mxu0 %v584
      %v905 = vpop.f32.mrf.mxu0
      %v906 = vadd.f32 0.0, %v905
      %v907 = vpop.f32.mrf.mxu0
      %v908 = vpop.f32.mrf.mxu0
      %v909 = vadd.f32 0.0, %v908
      %v910 = vpop.f32.mrf.mxu0
      %911 = vmatprep.mubr.bf16.mxu0 0
      %912 = vmatmul.mubr.bf16.gmra.mxu0 %v585
      %v913 = vpop.f32.mrf.mxu0
      %v914 = vadd.f32 0.0, %v913
      %v915 = vpop.f32.mrf.mxu0
      %v916 = vpop.f32.mrf.mxu0
      %v917 = vadd.f32 0.0, %v916
      %v918 = vpop.f32.mrf.mxu0
      %919 = vmatprep.mubr.bf16.mxu0 0
      %920 = vmatmul.mubr.bf16.gmra.mxu0 %v586
      %v921 = vpop.f32.mrf.mxu0
      %v922 = vadd.f32 0.0, %v921
      %v923 = vpop.f32.mrf.mxu0
      %v924 = vpop.f32.mrf.mxu0
      %v925 = vadd.f32 0.0, %v924
      %v926 = vpop.f32.mrf.mxu0
      %927 = vmatprep.mubr.bf16.mxu0 0
      %928 = vmatmul.mubr.bf16.gmra.mxu0 %v587
      %v929 = vpop.f32.mrf.mxu0
      %v930 = vadd.f32 0.0, %v929
      %v931 = vpop.f32.mrf.mxu0
      %v932 = vpop.f32.mrf.mxu0
      %v933 = vadd.f32 0.0, %v932
      %v934 = vpop.f32.mrf.mxu0
      %935 = vmatprep.mubr.bf16.mxu0 0
      %936 = vmatmul.mubr.bf16.gmra.mxu0 %v588
      %v937 = vpop.f32.mrf.mxu0
      %v938 = vadd.f32 0.0, %v937
      %v939 = vpop.f32.mrf.mxu0
      %v940 = vpop.f32.mrf.mxu0
      %v941 = vadd.f32 0.0, %v940
      %v942 = vpop.f32.mrf.mxu0
      %943 = vmatprep.mubr.bf16.mxu0 0
      %944 = vmatmul.mubr.bf16.gmra.mxu0 %v589
      %v945 = vpop.f32.mrf.mxu0
      %v946 = vadd.f32 0.0, %v945
      %v947 = vpop.f32.mrf.mxu0
      %v948 = vpop.f32.mrf.mxu0
      %v949 = vadd.f32 0.0, %v948
      %v950 = vpop.f32.mrf.mxu0
      %951 = vmatprep.mubr.bf16.mxu0 0
      %952 = vmatmul.mubr.bf16.gmra.mxu0 %v590
      %v953 = vpop.f32.mrf.mxu0
      %v954 = vadd.f32 0.0, %v953
      %v955 = vpop.f32.mrf.mxu0
      %v956 = vpop.f32.mrf.mxu0
      %v957 = vadd.f32 0.0, %v956
      %v958 = vpop.f32.mrf.mxu0
      %959 = vdwg.mxu0
      %v960 = vadd.f32 %v287, %v706
      %v961 = vadd.f32 %v288, %v709
      %v962 = vadd.f32 %v289, %v714
      %v963 = vadd.f32 %v290, %v717
      %v964 = vadd.f32 %v291, %v722
      %v965 = vadd.f32 %v292, %v725
      %v966 = vadd.f32 %v293, %v730
      %v967 = vadd.f32 %v294, %v733
      %v968 = vadd.f32 %v295, %v738
      %v969 = vadd.f32 %v296, %v741
      %v970 = vadd.f32 %v297, %v746
      %v971 = vadd.f32 %v298, %v749
      %v972 = vadd.f32 %v299, %v754
      %v973 = vadd.f32 %v300, %v757
      %v974 = vadd.f32 %v301, %v762
      %v975 = vadd.f32 %v302, %v765
      %v976 = vadd.f32 %v303, %v770
      %v977 = vadd.f32 %v304, %v773
      %v978 = vadd.f32 %v305, %v778
      %v979 = vadd.f32 %v306, %v781
      %v980 = vadd.f32 %v307, %v786
      %v981 = vadd.f32 %v308, %v789
      %v982 = vadd.f32 %v309, %v794
      %v983 = vadd.f32 %v310, %v797
      %v984 = vadd.f32 %v311, %v802
      %v985 = vadd.f32 %v312, %v805
      %v986 = vadd.f32 %v313, %v810
      %v987 = vadd.f32 %v314, %v813
      %v988 = vadd.f32 %v315, %v818
      %v989 = vadd.f32 %v316, %v821
      %v990 = vadd.f32 %v317, %v826
      %v991 = vadd.f32 %v318, %v829
      %v992 = vadd.f32 %v319, %v834
      %v993 = vadd.f32 %v320, %v837
      %v994 = vadd.f32 %v321, %v842
      %v995 = vadd.f32 %v322, %v845
      %v996 = vadd.f32 %v323, %v850
      %v997 = vadd.f32 %v324, %v853
      %v998 = vadd.f32 %v325, %v858
      %v999 = vadd.f32 %v326, %v861
      %v1000 = vadd.f32 %v327, %v866
      %v1001 = vadd.f32 %v328, %v869
      %v1002 = vadd.f32 %v329, %v874
      %v1003 = vadd.f32 %v330, %v877
      %v1004 = vadd.f32 %v331, %v882
      %v1005 = vadd.f32 %v332, %v885
      %v1006 = vadd.f32 %v333, %v890
      %v1007 = vadd.f32 %v334, %v893
      %v1008 = vadd.f32 %v335, %v898
      %v1009 = vadd.f32 %v336, %v901
      %v1010 = vadd.f32 %v337, %v906
      %v1011 = vadd.f32 %v338, %v909
      %v1012 = vadd.f32 %v339, %v914
      %v1013 = vadd.f32 %v340, %v917
      %v1014 = vadd.f32 %v341, %v922
      %v1015 = vadd.f32 %v342, %v925
      %v1016 = vadd.f32 %v343, %v930
      %v1017 = vadd.f32 %v344, %v933
      %v1018 = vadd.f32 %v345, %v938
      %v1019 = vadd.f32 %v346, %v941
      %v1020 = vadd.f32 %v347, %v946
      %v1021 = vadd.f32 %v348, %v949
      %v1022 = vadd.f32 %v349, %v954
      %v1023 = vadd.f32 %v350, %v957
      %1024 = vst [vmem:[#allocation2] sm:$0xff] %v960
      %1025 = vst [vmem:[#allocation2 + $0x8] sm:$0xff] %v961
      %1026 = vst [vmem:[#allocation2 + $0x10] sm:$0xff] %v962
      %1027 = vst [vmem:[#allocation2 + $0x18] sm:$0xff] %v963
      %1028 = vst [vmem:[#allocation2 + $0x20] sm:$0xff] %v964
      %1029 = vst [vmem:[#allocation2 + $0x28] sm:$0xff] %v965
      %1030 = vst [vmem:[#allocation2 + $0x30] sm:$0xff] %v966
      %1031 = vst [vmem:[#allocation2 + $0x38] sm:$0xff] %v967
      %1032 = vst [vmem:[#allocation2 + $0x40] sm:$0xff] %v968
      %1033 = vst [vmem:[#allocation2 + $0x48] sm:$0xff] %v969
      %1034 = vst [vmem:[#allocation2 + $0x50] sm:$0xff] %v970
      %1035 = vst [vmem:[#allocation2 + $0x58] sm:$0xff] %v971
      %1036 = vst [vmem:[#allocation2 + $0x60] sm:$0xff] %v972
      %1037 = vst [vmem:[#allocation2 + $0x68] sm:$0xff] %v973
      %1038 = vst [vmem:[#allocation2 + $0x70] sm:$0xff] %v974
      %1039 = vst [vmem:[#allocation2 + $0x78] sm:$0xff] %v975
      %1040 = vst [vmem:[#allocation2 + $0x80] sm:$0xff] %v976
      %1041 = vst [vmem:[#allocation2 + $0x88] sm:$0xff] %v977
      %1042 = vst [vmem:[#allocation2 + $0x90] sm:$0xff] %v978
      %1043 = vst [vmem:[#allocation2 + $0x98] sm:$0xff] %v979
      %1044 = vst [vmem:[#allocation2 + $0xa0] sm:$0xff] %v980
      %1045 = vst [vmem:[#allocation2 + $0xa8] sm:$0xff] %v981
      %1046 = vst [vmem:[#allocation2 + $0xb0] sm:$0xff] %v982
      %1047 = vst [vmem:[#allocation2 + $0xb8] sm:$0xff] %v983
      %1048 = vst [vmem:[#allocation2 + $0xc0] sm:$0xff] %v984
      %1049 = vst [vmem:[#allocation2 + $0xc8] sm:$0xff] %v985
      %1050 = vst [vmem:[#allocation2 + $0xd0] sm:$0xff] %v986
      %1051 = vst [vmem:[#allocation2 + $0xd8] sm:$0xff] %v987
      %1052 = vst [vmem:[#allocation2 + $0xe0] sm:$0xff] %v988
      %1053 = vst [vmem:[#allocation2 + $0xe8] sm:$0xff] %v989
      %1054 = vst [vmem:[#allocation2 + $0xf0] sm:$0xff] %v990
      %1055 = vst [vmem:[#allocation2 + $0xf8] sm:$0xff] %v991
      %1056 = vst [vmem:[#allocation2 + $0x100] sm:$0xff] %v992
      %1057 = vst [vmem:[#allocation2 + $0x108] sm:$0xff] %v993
      %1058 = vst [vmem:[#allocation2 + $0x110] sm:$0xff] %v994
      %1059 = vst [vmem:[#allocation2 + $0x118] sm:$0xff] %v995
      %1060 = vst [vmem:[#allocation2 + $0x120] sm:$0xff] %v996
      %1061 = vst [vmem:[#allocation2 + $0x128] sm:$0xff] %v997
      %1062 = vst [vmem:[#allocation2 + $0x130] sm:$0xff] %v998
      %1063 = vst [vmem:[#allocation2 + $0x138] sm:$0xff] %v999
      %1064 = vst [vmem:[#allocation2 + $0x140] sm:$0xff] %v1000
      %1065 = vst [vmem:[#allocation2 + $0x148] sm:$0xff] %v1001
      %1066 = vst [vmem:[#allocation2 + $0x150] sm:$0xff] %v1002
      %1067 = vst [vmem:[#allocation2 + $0x158] sm:$0xff] %v1003
      %1068 = vst [vmem:[#allocation2 + $0x160] sm:$0xff] %v1004
      %1069 = vst [vmem:[#allocation2 + $0x168] sm:$0xff] %v1005
      %1070 = vst [vmem:[#allocation2 + $0x170] sm:$0xff] %v1006
      %1071 = vst [vmem:[#allocation2 + $0x178] sm:$0xff] %v1007
      %1072 = vst [vmem:[#allocation2 + $0x180] sm:$0xff] %v1008
      %1073 = vst [vmem:[#allocation2 + $0x188] sm:$0xff] %v1009
      %1074 = vst [vmem:[#allocation2 + $0x190] sm:$0xff] %v1010
      %1075 = vst [vmem:[#allocation2 + $0x198] sm:$0xff] %v1011
      %1076 = vst [vmem:[#allocation2 + $0x1a0] sm:$0xff] %v1012
      %1077 = vst [vmem:[#allocation2 + $0x1a8] sm:$0xff] %v1013
      %1078 = vst [vmem:[#allocation2 + $0x1b0] sm:$0xff] %v1014
      %1079 = vst [vmem:[#allocation2 + $0x1b8] sm:$0xff] %v1015
      %1080 = vst [vmem:[#allocation2 + $0x1c0] sm:$0xff] %v1016
      %1081 = vst [vmem:[#allocation2 + $0x1c8] sm:$0xff] %v1017
      %1082 = vst [vmem:[#allocation2 + $0x1d0] sm:$0xff] %v1018
      %1083 = vst [vmem:[#allocation2 + $0x1d8] sm:$0xff] %v1019
      %1084 = vst [vmem:[#allocation2 + $0x1e0] sm:$0xff] %v1020
      %1085 = vst [vmem:[#allocation2 + $0x1e8] sm:$0xff] %v1021
      %1086 = vst [vmem:[#allocation2 + $0x1f0] sm:$0xff] %v1022
      %1087 = vst [vmem:[#allocation2 + $0x1f8] sm:$0xff] %v1023
      // Predicated region
      $region33: #{dcsa_forward.27} parent=27 // pred_check
        %p1088 = pneg %p219
      $region34: #{dcsa_forward.27} parent=27 // pred_check_branch
        %1090 = sbr.rel (%p1088) target = $region36
      $region35: #{dcsa_forward.27} parent=27 // pred_region
        %v1091 = vld [vmem:[#allocation2] sm:$0xff]
        %v1092 = vld [vmem:[#allocation2 + $0x8] sm:$0xff]
        %v1093 = vld [vmem:[#allocation2 + $0x10] sm:$0xff]
        %v1094 = vld [vmem:[#allocation2 + $0x18] sm:$0xff]
        %v1095 = vld [vmem:[#allocation2 + $0x20] sm:$0xff]
        %v1096 = vld [vmem:[#allocation2 + $0x28] sm:$0xff]
        %v1097 = vld [vmem:[#allocation2 + $0x30] sm:$0xff]
        %v1098 = vld [vmem:[#allocation2 + $0x38] sm:$0xff]
        %v1099 = vld [vmem:[#allocation2 + $0x40] sm:$0xff]
        %v1100 = vld [vmem:[#allocation2 + $0x48] sm:$0xff]
        %v1101 = vld [vmem:[#allocation2 + $0x50] sm:$0xff]
        %v1102 = vld [vmem:[#allocation2 + $0x58] sm:$0xff]
        %v1103 = vld [vmem:[#allocation2 + $0x60] sm:$0xff]
        %v1104 = vld [vmem:[#allocation2 + $0x68] sm:$0xff]
        %v1105 = vld [vmem:[#allocation2 + $0x70] sm:$0xff]
        %v1106 = vld [vmem:[#allocation2 + $0x78] sm:$0xff]
        %v1107 = vld [vmem:[#allocation2 + $0x80] sm:$0xff]
        %v1108 = vld [vmem:[#allocation2 + $0x88] sm:$0xff]
        %v1109 = vld [vmem:[#allocation2 + $0x90] sm:$0xff]
        %v1110 = vld [vmem:[#allocation2 + $0x98] sm:$0xff]
        %v1111 = vld [vmem:[#allocation2 + $0xa0] sm:$0xff]
        %v1112 = vld [vmem:[#allocation2 + $0xa8] sm:$0xff]
        %v1113 = vld [vmem:[#allocation2 + $0xb0] sm:$0xff]
        %v1114 = vld [vmem:[#allocation2 + $0xb8] sm:$0xff]
        %v1115 = vld [vmem:[#allocation2 + $0xc0] sm:$0xff]
        %v1116 = vld [vmem:[#allocation2 + $0xc8] sm:$0xff]
        %v1117 = vld [vmem:[#allocation2 + $0xd0] sm:$0xff]
        %v1118 = vld [vmem:[#allocation2 + $0xd8] sm:$0xff]
        %v1119 = vld [vmem:[#allocation2 + $0xe0] sm:$0xff]
        %v1120 = vld [vmem:[#allocation2 + $0xe8] sm:$0xff]
        %v1121 = vld [vmem:[#allocation2 + $0xf0] sm:$0xff]
        %v1122 = vld [vmem:[#allocation2 + $0xf8] sm:$0xff]
        %v1123 = vld [vmem:[#allocation2 + $0x100] sm:$0xff]
        %v1124 = vld [vmem:[#allocation2 + $0x108] sm:$0xff]
        %v1125 = vld [vmem:[#allocation2 + $0x110] sm:$0xff]
        %v1126 = vld [vmem:[#allocation2 + $0x118] sm:$0xff]
        %v1127 = vld [vmem:[#allocation2 + $0x120] sm:$0xff]
        %v1128 = vld [vmem:[#allocation2 + $0x128] sm:$0xff]
        %v1129 = vld [vmem:[#allocation2 + $0x130] sm:$0xff]
        %v1130 = vld [vmem:[#allocation2 + $0x138] sm:$0xff]
        %v1131 = vld [vmem:[#allocation2 + $0x140] sm:$0xff]
        %v1132 = vld [vmem:[#allocation2 + $0x148] sm:$0xff]
        %v1133 = vld [vmem:[#allocation2 + $0x150] sm:$0xff]
        %v1134 = vld [vmem:[#allocation2 + $0x158] sm:$0xff]
        %v1135 = vld [vmem:[#allocation2 + $0x160] sm:$0xff]
        %v1136 = vld [vmem:[#allocation2 + $0x168] sm:$0xff]
        %v1137 = vld [vmem:[#allocation2 + $0x170] sm:$0xff]
        %v1138 = vld [vmem:[#allocation2 + $0x178] sm:$0xff]
        %v1139 = vld [vmem:[#allocation2 + $0x180] sm:$0xff]
        %v1140 = vld [vmem:[#allocation2 + $0x188] sm:$0xff]
        %v1141 = vld [vmem:[#allocation2 + $0x190] sm:$0xff]
        %v1142 = vld [vmem:[#allocation2 + $0x198] sm:$0xff]
        %v1143 = vld [vmem:[#allocation2 + $0x1a0] sm:$0xff]
        %v1144 = vld [vmem:[#allocation2 + $0x1a8] sm:$0xff]
        %v1145 = vld [vmem:[#allocation2 + $0x1b0] sm:$0xff]
        %v1146 = vld [vmem:[#allocation2 + $0x1b8] sm:$0xff]
        %v1147 = vld [vmem:[#allocation2 + $0x1c0] sm:$0xff]
        %v1148 = vld [vmem:[#allocation2 + $0x1c8] sm:$0xff]
        %v1149 = vld [vmem:[#allocation2 + $0x1d0] sm:$0xff]
        %v1150 = vld [vmem:[#allocation2 + $0x1d8] sm:$0xff]
        %v1151 = vld [vmem:[#allocation2 + $0x1e0] sm:$0xff]
        %v1152 = vld [vmem:[#allocation2 + $0x1e8] sm:$0xff]
        %v1153 = vld [vmem:[#allocation2 + $0x1f0] sm:$0xff]
        %v1154 = vld [vmem:[#allocation2 + $0x1f8] sm:$0xff]
        %1155 = vst [vmem:[%s216] sm:$0xff] %v1091
        %1156 = vst [vmem:[%s216 + $0x8] sm:$0xff] %v1092
        %1157 = vst [vmem:[%s216 + $0x10] sm:$0xff] %v1093
        %1158 = vst [vmem:[%s216 + $0x18] sm:$0xff] %v1094
        %1159 = vst [vmem:[%s216 + $0x20] sm:$0xff] %v1095
        %1160 = vst [vmem:[%s216 + $0x28] sm:$0xff] %v1096
        %1161 = vst [vmem:[%s216 + $0x30] sm:$0xff] %v1097
        %1162 = vst [vmem:[%s216 + $0x38] sm:$0xff] %v1098
        %1163 = vst [vmem:[%s216 + $0x40] sm:$0xff] %v1099
        %1164 = vst [vmem:[%s216 + $0x48] sm:$0xff] %v1100
        %1165 = vst [vmem:[%s216 + $0x50] sm:$0xff] %v1101
        %1166 = vst [vmem:[%s216 + $0x58] sm:$0xff] %v1102
        %1167 = vst [vmem:[%s216 + $0x60] sm:$0xff] %v1103
        %1168 = vst [vmem:[%s216 + $0x68] sm:$0xff] %v1104
        %1169 = vst [vmem:[%s216 + $0x70] sm:$0xff] %v1105
        %1170 = vst [vmem:[%s216 + $0x78] sm:$0xff] %v1106
        %1171 = vst [vmem:[%s216 + $0x80] sm:$0xff] %v1107
        %1172 = vst [vmem:[%s216 + $0x88] sm:$0xff] %v1108
        %1173 = vst [vmem:[%s216 + $0x90] sm:$0xff] %v1109
        %1174 = vst [vmem:[%s216 + $0x98] sm:$0xff] %v1110
        %1175 = vst [vmem:[%s216 + $0xa0] sm:$0xff] %v1111
        %1176 = vst [vmem:[%s216 + $0xa8] sm:$0xff] %v1112
        %1177 = vst [vmem:[%s216 + $0xb0] sm:$0xff] %v1113
        %1178 = vst [vmem:[%s216 + $0xb8] sm:$0xff] %v1114
        %1179 = vst [vmem:[%s216 + $0xc0] sm:$0xff] %v1115
        %1180 = vst [vmem:[%s216 + $0xc8] sm:$0xff] %v1116
        %1181 = vst [vmem:[%s216 + $0xd0] sm:$0xff] %v1117
        %1182 = vst [vmem:[%s216 + $0xd8] sm:$0xff] %v1118
        %1183 = vst [vmem:[%s216 + $0xe0] sm:$0xff] %v1119
        %1184 = vst [vmem:[%s216 + $0xe8] sm:$0xff] %v1120
        %1185 = vst [vmem:[%s216 + $0xf0] sm:$0xff] %v1121
        %1186 = vst [vmem:[%s216 + $0xf8] sm:$0xff] %v1122
        %1187 = vst [vmem:[%s216 + $0x100] sm:$0xff] %v1123
        %1188 = vst [vmem:[%s216 + $0x108] sm:$0xff] %v1124
        %1189 = vst [vmem:[%s216 + $0x110] sm:$0xff] %v1125
        %1190 = vst [vmem:[%s216 + $0x118] sm:$0xff] %v1126
        %1191 = vst [vmem:[%s216 + $0x120] sm:$0xff] %v1127
        %1192 = vst [vmem:[%s216 + $0x128] sm:$0xff] %v1128
        %1193 = vst [vmem:[%s216 + $0x130] sm:$0xff] %v1129
        %1194 = vst [vmem:[%s216 + $0x138] sm:$0xff] %v1130
        %1195 = vst [vmem:[%s216 + $0x140] sm:$0xff] %v1131
        %1196 = vst [vmem:[%s216 + $0x148] sm:$0xff] %v1132
        %1197 = vst [vmem:[%s216 + $0x150] sm:$0xff] %v1133
        %1198 = vst [vmem:[%s216 + $0x158] sm:$0xff] %v1134
        %1199 = vst [vmem:[%s216 + $0x160] sm:$0xff] %v1135
        %1200 = vst [vmem:[%s216 + $0x168] sm:$0xff] %v1136
        %1201 = vst [vmem:[%s216 + $0x170] sm:$0xff] %v1137
        %1202 = vst [vmem:[%s216 + $0x178] sm:$0xff] %v1138
        %1203 = vst [vmem:[%s216 + $0x180] sm:$0xff] %v1139
        %1204 = vst [vmem:[%s216 + $0x188] sm:$0xff] %v1140
        %1205 = vst [vmem:[%s216 + $0x190] sm:$0xff] %v1141
        %1206 = vst [vmem:[%s216 + $0x198] sm:$0xff] %v1142
        %1207 = vst [vmem:[%s216 + $0x1a0] sm:$0xff] %v1143
        %1208 = vst [vmem:[%s216 + $0x1a8] sm:$0xff] %v1144
        %1209 = vst [vmem:[%s216 + $0x1b0] sm:$0xff] %v1145
        %1210 = vst [vmem:[%s216 + $0x1b8] sm:$0xff] %v1146
        %1211 = vst [vmem:[%s216 + $0x1c0] sm:$0xff] %v1147
        %1212 = vst [vmem:[%s216 + $0x1c8] sm:$0xff] %v1148
        %1213 = vst [vmem:[%s216 + $0x1d0] sm:$0xff] %v1149
        %1214 = vst [vmem:[%s216 + $0x1d8] sm:$0xff] %v1150
        %1215 = vst [vmem:[%s216 + $0x1e0] sm:$0xff] %v1151
        %1216 = vst [vmem:[%s216 + $0x1e8] sm:$0xff] %v1152
        %1217 = vst [vmem:[%s216 + $0x1f0] sm:$0xff] %v1153
        %1218 = vst [vmem:[%s216 + $0x1f8] sm:$0xff] %v1154
      $region36: #{dcsa_forward.27} parent=27 // pred_fallthru
        _
      %s1219 = smul.u32 64, %s18
      %p1220 = scmp.lt.s32.totalorder %s1219, 319
      %s1221 = scalar_select %p1220, %s1219, 319
      %p1222 = scmp.lt.s32.totalorder %s19, 0
      %s1223 = scalar_select %p1222, %s19, 0
      %s1224 = sadd.s32 %s1223, %s1221
      %s1225 = smul.addr %s1224, 8
      %s1226 = scalar_lea.vmem %s2, %s1225
      // Predicated region
      $region37: #{dcsa_forward.27} parent=27 // pred_check
        %p1227 = pneg %p108
      $region38: #{dcsa_forward.27} parent=27 // pred_check_branch
        %1229 = sbr.rel (%p1227) target = $region40
      $region39: #{dcsa_forward.27} parent=27 // pred_region
        %s1230 = smul.u32 64, %s18
      $region40: #{dcsa_forward.27} parent=27 // pred_fallthru
        _
    $region28: #{dcsa_forward.27} parent=5 // pred_fallthru
      _
    %p1231 = scmp.le.s32.totalorder 2, %s8
    // Predicated region
    $region41: #{dcsa_forward.27} parent=5 // pred_check
      %p1232 = pneg %p1231
    $region42: #{dcsa_forward.27} parent=5 // pred_check_branch
      %1234 = sbr.rel (%p1232) target = $region44
    $region43: #{dcsa_forward.27} parent=5 // pred_region
      %s1235 = ssub.s32 %s8, 2
      // Predicated region
      $region45: #{dcsa_forward.27} parent=43 // pred_check
        %p1236 = pneg %p114
      $region46: #{dcsa_forward.27} parent=43 // pred_check_branch
        %1238 = sbr.rel (%p1236) target = $region48
      $region47: #{dcsa_forward.27} parent=43 // pred_region
        %s1239 = smul.u32 64, %s21
        %p1240 = scmp.lt.s32.totalorder %s1239, 319
        %s1241 = scalar_select %p1240, %s1239, 319
        %p1242 = scmp.lt.s32.totalorder %s22, 0
        %s1243 = scalar_select %p1242, %s22, 0
        %s1244 = sadd.s32 %s1243, %s1241
        %s1245 = smul.addr %s1244, 8
        %s1246 = scalar_lea.vmem %s2, %s1245
      $region48: #{dcsa_forward.27} parent=43 // pred_fallthru
        _
    $region44: #{dcsa_forward.27} parent=5 // pred_fallthru
      _
  $region6: #{dcsa_forward.27} parent=0 // loop_footer
    %s12 = sadd.s32 1, %s8
  $region7: #{dcsa_forward.27} parent=0 // loop_footer_branch
    %7 = sbr.rel target = $region3
  $region8: #{dcsa_forward.27} parent=0 // loop_exit
    _

// kernel: dcsa_forward.29
$region0: #{dcsa_forward.29}
  #allocation0 [shape = 'u32[]', space=smem, size = 0x4, offset = 0x4, fixed_abs, tag = 'smem constant byte address 0x4 - core index']
  #allocation1 [shape = 'u32[144,128]{1,0:T(1,128)}', space=vmem, size = 0x12000, scoped, tag = 'internal scratch']
  #allocation2 [shape = 'f32[512,128]{1,0:T(8,128)}', space=vmem, size = 0x40000, scoped, tag = 'scratch operand']
  %s0 = inlined_call_operand.vmem [shape: bf16[8704,128], index: 0, kind: input, shape index: {}]
  %s1 = inlined_call_operand.vmem [shape: bf16[128,128], index: 1, kind: input, shape index: {}]
  %s2 = inlined_call_operand.vmem [shape: f32[8704,128], index: 2, kind: output, shape index: {}]
  %s3 = sld [smem:[#allocation0]]
  $region49: #{dcsa_forward.29} parent=0
    _
  %s5 = ssub.s32 1, %s3
  %s6 = scalar_select 0, %s5, %s3
  loop: start=0, step=1, limit=19
  $region2: #{dcsa_forward.29} parent=0 // loop_pre_header
    _
  $region3: #{dcsa_forward.29} parent=0 // loop_header
    %s8 = sphi 0, %s12
    %p9 = scmp.ge.s32.totalorder %s8, 19
    %s15 = sphi 0, %s34
    %s16 = sphi 0, %s30
    %s17 = sphi 0, %s26
    %s18 = sphi 0, %s15
    %s19 = sphi 0, %s16
    %s20 = sphi 0, %s17
    %s21 = sphi 0, %s18
    %s22 = sphi 0, %s19
    %s23 = sphi 0, %s20
    %s39 = sphi 0, %s41
    %s42 = sphi 0, %s39
    %s43 = sphi 0, %s42
    %s59 = sphi 0, %s43
    %s67 = sphi 0, %s69
    %s70 = sphi 0, %s67
    %s71 = sphi 0, %s70
    %s87 = sphi 0, %s71
    %s95 = sphi 0, %s97
    %s98 = sphi 0, %s95
    %s99 = sphi 0, %s98
    %s115 = sphi 0, %s99
  $region4: #{dcsa_forward.29} parent=0 // loop_header_branch
    %11 = sbr.rel (%p9) target = $region8
  $region5: #{dcsa_forward.29} parent=0 // loop_body
    %s13 = ssub.s32 %s8, 1
    %s14 = ssub.s32 %s8, 2
    %s24 = sadd.s32 1, %s17
    %p25 = scmp.ge.s32.totalorder %s24, 1
    %s26 = scalar_select %p25, 0, %s24
    %s27 = sadd.s32 1, %s16
    %s28 = scalar_select %p25, %s27, %s16
    %p29 = scmp.ge.s32.totalorder %s28, 1
    %s30 = scalar_select %p29, 0, %s28
    %s31 = sadd.s32 1, %s15
    %s32 = scalar_select %p29, %s31, %s15
    %p33 = scmp.ge.s32.totalorder %s32, 17
    %s34 = scalar_select %p33, 0, %s32
    %s35 = ssub.s32 %s15, %s34
    %s36 = ssub.s32 %s17, %s26
    %s37 = sor.u32 %s35, %s36
    %p38 = scmp.eq.s32.totalorder %s37, 0
    %s40 = sadd.s32 %s39, 1
    %s41 = scalar_select %p38, %s39, %s40
    %p44 = pneg %p38
    %p45 = scmp.eq.s32.totalorder %s8, 16
    %p46 = por %p44, %p45
    %p47 = scmp.ne.s32.totalorder %s39, %s42
    %p48 = scmp.eq.s32.totalorder %s8, 0
    %p49 = por %p47, %p48
    %p50 = scmp.ne.s32.totalorder %s39, %s42
    %p51 = scmp.eq.s32.totalorder %s13, 16
    %p52 = por %p50, %p51
    %p53 = scmp.ne.s32.totalorder %s42, %s43
    %p54 = scmp.eq.s32.totalorder %s13, 0
    %p55 = por %p53, %p54
    %p56 = scmp.ne.s32.totalorder %s42, %s43
    %p57 = scmp.eq.s32.totalorder %s14, 16
    %p58 = por %p56, %p57
    %p60 = scmp.ne.s32.totalorder %s43, %s59
    %p61 = scmp.eq.s32.totalorder %s14, 0
    %p62 = por %p60, %p61
    %s63 = ssub.s32 %s17, %s26
    %s64 = ssub.s32 %s16, %s30
    %s65 = sor.u32 %s63, %s64
    %p66 = scmp.eq.s32.totalorder %s65, 0
    %s68 = sadd.s32 %s67, 1
    %s69 = scalar_select %p66, %s67, %s68
    %p72 = pneg %p66
    %p73 = scmp.eq.s32.totalorder %s8, 16
    %p74 = por %p72, %p73
    %p75 = scmp.ne.s32.totalorder %s67, %s70
    %p76 = scmp.eq.s32.totalorder %s8, 0
    %p77 = por %p75, %p76
    %p78 = scmp.ne.s32.totalorder %s67, %s70
    %p79 = scmp.eq.s32.totalorder %s13, 16
    %p80 = por %p78, %p79
    %p81 = scmp.ne.s32.totalorder %s70, %s71
    %p82 = scmp.eq.s32.totalorder %s13, 0
    %p83 = por %p81, %p82
    %p84 = scmp.ne.s32.totalorder %s70, %s71
    %p85 = scmp.eq.s32.totalorder %s14, 16
    %p86 = por %p84, %p85
    %p88 = scmp.ne.s32.totalorder %s71, %s87
    %p89 = scmp.eq.s32.totalorder %s14, 0
    %p90 = por %p88, %p89
    %s91 = ssub.s32 %s15, %s34
    %s92 = ssub.s32 %s16, %s30
    %s93 = sor.u32 %s91, %s92
    %p94 = scmp.eq.s32.totalorder %s93, 0
    %s96 = sadd.s32 %s95, 1
    %s97 = scalar_select %p94, %s95, %s96
    %p100 = pneg %p94
    %p101 = scmp.eq.s32.totalorder %s8, 16
    %p102 = por %p100, %p101
    %p103 = scmp.ne.s32.totalorder %s95, %s98
    %p104 = scmp.eq.s32.totalorder %s8, 0
    %p105 = por %p103, %p104
    %p106 = scmp.ne.s32.totalorder %s95, %s98
    %p107 = scmp.eq.s32.totalorder %s13, 16
    %p108 = por %p106, %p107
    %p109 = scmp.ne.s32.totalorder %s98, %s99
    %p110 = scmp.eq.s32.totalorder %s13, 0
    %p111 = por %p109, %p110
    %p112 = scmp.ne.s32.totalorder %s98, %s99
    %p113 = scmp.eq.s32.totalorder %s14, 16
    %p114 = por %p112, %p113
    %p116 = scmp.ne.s32.totalorder %s99, %s115
    %p117 = scmp.eq.s32.totalorder %s14, 0
    %p118 = por %p116, %p117
    %p119 = scmp.le.s32.totalorder 1, %s8
    %p120 = scmp.lt.s32.totalorder %s8, 18
    %p121 = pnand %p119, %p120
    %p122 = pneg %p121
    // Predicated region
    $region9: #{dcsa_forward.29} parent=5 // pred_check
      _
    $region10: #{dcsa_forward.29} parent=5 // pred_check_branch
      %124 = sbr.rel (%p121) target = $region12
    $region11: #{dcsa_forward.29} parent=5 // pred_region
      %s125 = ssub.s32 %s8, 1
      // Predicated region
      $region13: #{dcsa_forward.29} parent=11 // pred_check
        %p126 = pneg %p83
      $region14: #{dcsa_forward.29} parent=11 // pred_check_branch
        %128 = sbr.rel (%p126) target = $region16
      $region15: #{dcsa_forward.29} parent=11 // pred_region
        %s129 = smul.u32 16, %s20
        %p130 = scmp.lt.s32.totalorder %s129, 15
        %s131 = scalar_select %p130, %s129, 15
        %p132 = scmp.lt.s32.totalorder %s19, 0
        %s133 = scalar_select %p132, %s19, 0
        %s134 = sadd.s32 %s133, %s131
        %s135 = smul.addr %s134, 4
        %s136 = scalar_lea.vmem %s1, %s135
        %s137 = smul.u32 16, %s20
      $region16: #{dcsa_forward.29} parent=11 // pred_fallthru
        _
    $region12: #{dcsa_forward.29} parent=5 // pred_fallthru
      _
    %p138 = scmp.lt.s32.totalorder %s8, 17
    // Predicated region
    $region17: #{dcsa_forward.29} parent=5 // pred_check
      %p139 = pneg %p138
    $region18: #{dcsa_forward.29} parent=5 // pred_check_branch
      %141 = sbr.rel (%p139) target = $region20
    $region19: #{dcsa_forward.29} parent=5 // pred_region
      // Predicated region
      $region21: #{dcsa_forward.29} parent=19 // pred_check
        %p142 = pneg %p49
      $region22: #{dcsa_forward.29} parent=19 // pred_check_branch
        %144 = sbr.rel (%p142) target = $region24
      $region23: #{dcsa_forward.29} parent=19 // pred_region
        %s145 = smul.u32 64, %s15
        %p146 = scmp.lt.s32.totalorder %s145, 1087
        %s147 = scalar_select %p146, %s145, 1087
        %p148 = scmp.lt.s32.totalorder %s17, 0
        %s149 = scalar_select %p148, %s17, 0
        %s150 = sadd.s32 %s149, %s147
        %s151 = smul.addr %s150, 4
        %s152 = scalar_lea.vmem %s0, %s151
        %s153 = smul.u32 64, %s15
      $region24: #{dcsa_forward.29} parent=19 // pred_fallthru
        _
    $region20: #{dcsa_forward.29} parent=5 // pred_fallthru
      _
    %p154 = scmp.le.s32.totalorder 1, %s8
    %p155 = scmp.lt.s32.totalorder %s8, 18
    %p156 = pnand %p154, %p155
    %p157 = pneg %p156
    // Predicated region
    $region25: #{dcsa_forward.29} parent=5 // pred_check
      _
    $region26: #{dcsa_forward.29} parent=5 // pred_check_branch
      %159 = sbr.rel (%p156) target = $region28
    $region27: #{dcsa_forward.29} parent=5 // pred_region
      %s160 = ssub.s32 %s8, 1
      %s161 = smul.u32 64, %s18
      %p162 = scmp.lt.s32.totalorder %s161, 1087
      %s163 = scalar_select %p162, %s161, 1087
      %p164 = scmp.lt.s32.totalorder %s20, 0
      %s165 = scalar_select %p164, %s20, 0
      %s166 = sadd.s32 %s165, %s163
      %s167 = smul.addr %s166, 4
      %s168 = scalar_lea.vmem %s0, %s167
      %p169 = pneg %p55
      %p170 = pneg %p52
      %s171 = smul.u32 16, %s20
      %p172 = scmp.lt.s32.totalorder %s171, 15
      %s173 = scalar_select %p172, %s171, 15
      %p174 = scmp.lt.s32.totalorder %s19, 0
      %s175 = scalar_select %p174, %s19, 0
      %s176 = sadd.s32 %s175, %s173
      %s177 = smul.addr %s176, 4
      %s178 = scalar_lea.vmem %s1, %s177
      %p179 = pneg %p83
      %p180 = pneg %p80
      %p181 = pneg %p111
      %p182 = pneg %p108
      %s183 = smul.u32 64, %s18
      %p184 = scmp.lt.s32.totalorder %s183, 1087
      %s185 = scalar_select %p184, %s183, 1087
      %p186 = scmp.lt.s32.totalorder %s19, 0
      %s187 = scalar_select %p186, %s19, 0
      %s188 = sadd.s32 %s187, %s185
      %s189 = smul.addr %s188, 8
      %s190 = scalar_lea.vmem %s2, %s189
      %s191 = smul.u32 64, %s18
      %p192 = scmp.lt.s32.totalorder %s191, 1087
      %s193 = scalar_select %p192, %s191, 1087
      %p194 = scmp.lt.s32.totalorder %s20, 0
      %s195 = scalar_select %p194, %s20, 0
      %s196 = sadd.s32 %s195, %s193
      %s197 = smul.addr %s196, 4
      %s198 = scalar_lea.vmem %s0, %s197
      %s199 = smul.u32 64, %s18
      %s200 = smul.u32 16, %s20
      %p201 = scmp.lt.s32.totalorder %s200, 15
      %s202 = scalar_select %p201, %s200, 15
      %p203 = scmp.lt.s32.totalorder %s19, 0
      %s204 = scalar_select %p203, %s19, 0
      %s205 = sadd.s32 %s204, %s202
      %s206 = smul.addr %s205, 4
      %s207 = scalar_lea.vmem %s1, %s206
      %s208 = smul.u32 16, %s20
      %s209 = smul.u32 64, %s18
      %p210 = scmp.lt.s32.totalorder %s209, 1087
      %s211 = scalar_select %p210, %s209, 1087
      %p212 = scmp.lt.s32.totalorder %s19, 0
      %s213 = scalar_select %p212, %s19, 0
      %s214 = sadd.s32 %s213, %s211
      %s215 = smul.addr %s214, 8
      %s216 = scalar_lea.vmem %s2, %s215
      %s217 = smul.u32 64, %s18
      %p219 = scmp.eq.s32.totalorder %s20, 0
      // Predicated region
      $region29: #{dcsa_forward.29} parent=27 // pred_check
        %p220 = pneg %p219
      $region30: #{dcsa_forward.29} parent=27 // pred_check_branch
        %222 = sbr.rel (%p220) target = $region32
      $region31: #{dcsa_forward.29} parent=27 // pred_region
        %223 = vst [vmem:[#allocation2] sm:$0xff] 0.0
        %224 = vst [vmem:[#allocation2 + $0x8] sm:$0xff] 0.0
        %225 = vst [vmem:[#allocation2 + $0x10] sm:$0xff] 0.0
        %226 = vst [vmem:[#allocation2 + $0x18] sm:$0xff] 0.0
        %227 = vst [vmem:[#allocation2 + $0x20] sm:$0xff] 0.0
        %228 = vst [vmem:[#allocation2 + $0x28] sm:$0xff] 0.0
        %229 = vst [vmem:[#allocation2 + $0x30] sm:$0xff] 0.0
        %230 = vst [vmem:[#allocation2 + $0x38] sm:$0xff] 0.0
        %231 = vst [vmem:[#allocation2 + $0x40] sm:$0xff] 0.0
        %232 = vst [vmem:[#allocation2 + $0x48] sm:$0xff] 0.0
        %233 = vst [vmem:[#allocation2 + $0x50] sm:$0xff] 0.0
        %234 = vst [vmem:[#allocation2 + $0x58] sm:$0xff] 0.0
        %235 = vst [vmem:[#allocation2 + $0x60] sm:$0xff] 0.0
        %236 = vst [vmem:[#allocation2 + $0x68] sm:$0xff] 0.0
        %237 = vst [vmem:[#allocation2 + $0x70] sm:$0xff] 0.0
        %238 = vst [vmem:[#allocation2 + $0x78] sm:$0xff] 0.0
        %239 = vst [vmem:[#allocation2 + $0x80] sm:$0xff] 0.0
        %240 = vst [vmem:[#allocation2 + $0x88] sm:$0xff] 0.0
        %241 = vst [vmem:[#allocation2 + $0x90] sm:$0xff] 0.0
        %242 = vst [vmem:[#allocation2 + $0x98] sm:$0xff] 0.0
        %243 = vst [vmem:[#allocation2 + $0xa0] sm:$0xff] 0.0
        %244 = vst [vmem:[#allocation2 + $0xa8] sm:$0xff] 0.0
        %245 = vst [vmem:[#allocation2 + $0xb0] sm:$0xff] 0.0
        %246 = vst [vmem:[#allocation2 + $0xb8] sm:$0xff] 0.0
        %247 = vst [vmem:[#allocation2 + $0xc0] sm:$0xff] 0.0
        %248 = vst [vmem:[#allocation2 + $0xc8] sm:$0xff] 0.0
        %249 = vst [vmem:[#allocation2 + $0xd0] sm:$0xff] 0.0
        %250 = vst [vmem:[#allocation2 + $0xd8] sm:$0xff] 0.0
        %251 = vst [vmem:[#allocation2 + $0xe0] sm:$0xff] 0.0
        %252 = vst [vmem:[#allocation2 + $0xe8] sm:$0xff] 0.0
        %253 = vst [vmem:[#allocation2 + $0xf0] sm:$0xff] 0.0
        %254 = vst [vmem:[#allocation2 + $0xf8] sm:$0xff] 0.0
        %255 = vst [vmem:[#allocation2 + $0x100] sm:$0xff] 0.0
        %256 = vst [vmem:[#allocation2 + $0x108] sm:$0xff] 0.0
        %257 = vst [vmem:[#allocation2 + $0x110] sm:$0xff] 0.0
        %258 = vst [vmem:[#allocation2 + $0x118] sm:$0xff] 0.0
        %259 = vst [vmem:[#allocation2 + $0x120] sm:$0xff] 0.0
        %260 = vst [vmem:[#allocation2 + $0x128] sm:$0xff] 0.0
        %261 = vst [vmem:[#allocation2 + $0x130] sm:$0xff] 0.0
        %262 = vst [vmem:[#allocation2 + $0x138] sm:$0xff] 0.0
        %263 = vst [vmem:[#allocation2 + $0x140] sm:$0xff] 0.0
        %264 = vst [vmem:[#allocation2 + $0x148] sm:$0xff] 0.0
        %265 = vst [vmem:[#allocation2 + $0x150] sm:$0xff] 0.0
        %266 = vst [vmem:[#allocation2 + $0x158] sm:$0xff] 0.0
        %267 = vst [vmem:[#allocation2 + $0x160] sm:$0xff] 0.0
        %268 = vst [vmem:[#allocation2 + $0x168] sm:$0xff] 0.0
        %269 = vst [vmem:[#allocation2 + $0x170] sm:$0xff] 0.0
        %270 = vst [vmem:[#allocation2 + $0x178] sm:$0xff] 0.0
        %271 = vst [vmem:[#allocation2 + $0x180] sm:$0xff] 0.0
        %272 = vst [vmem:[#allocation2 + $0x188] sm:$0xff] 0.0
        %273 = vst [vmem:[#allocation2 + $0x190] sm:$0xff] 0.0
        %274 = vst [vmem:[#allocation2 + $0x198] sm:$0xff] 0.0
        %275 = vst [vmem:[#allocation2 + $0x1a0] sm:$0xff] 0.0
        %276 = vst [vmem:[#allocation2 + $0x1a8] sm:$0xff] 0.0
        %277 = vst [vmem:[#allocation2 + $0x1b0] sm:$0xff] 0.0
        %278 = vst [vmem:[#allocation2 + $0x1b8] sm:$0xff] 0.0
        %279 = vst [vmem:[#allocation2 + $0x1c0] sm:$0xff] 0.0
        %280 = vst [vmem:[#allocation2 + $0x1c8] sm:$0xff] 0.0
        %281 = vst [vmem:[#allocation2 + $0x1d0] sm:$0xff] 0.0
        %282 = vst [vmem:[#allocation2 + $0x1d8] sm:$0xff] 0.0
        %283 = vst [vmem:[#allocation2 + $0x1e0] sm:$0xff] 0.0
        %284 = vst [vmem:[#allocation2 + $0x1e8] sm:$0xff] 0.0
        %285 = vst [vmem:[#allocation2 + $0x1f0] sm:$0xff] 0.0
        %286 = vst [vmem:[#allocation2 + $0x1f8] sm:$0xff] 0.0
      $region32: #{dcsa_forward.29} parent=27 // pred_fallthru
        _
      %v287 = vld [vmem:[#allocation2] sm:$0xff]
      %v288 = vld [vmem:[#allocation2 + $0x8] sm:$0xff]
      %v289 = vld [vmem:[#allocation2 + $0x10] sm:$0xff]
      %v290 = vld [vmem:[#allocation2 + $0x18] sm:$0xff]
      %v291 = vld [vmem:[#allocation2 + $0x20] sm:$0xff]
      %v292 = vld [vmem:[#allocation2 + $0x28] sm:$0xff]
      %v293 = vld [vmem:[#allocation2 + $0x30] sm:$0xff]
      %v294 = vld [vmem:[#allocation2 + $0x38] sm:$0xff]
      %v295 = vld [vmem:[#allocation2 + $0x40] sm:$0xff]
      %v296 = vld [vmem:[#allocation2 + $0x48] sm:$0xff]
      %v297 = vld [vmem:[#allocation2 + $0x50] sm:$0xff]
      %v298 = vld [vmem:[#allocation2 + $0x58] sm:$0xff]
      %v299 = vld [vmem:[#allocation2 + $0x60] sm:$0xff]
      %v300 = vld [vmem:[#allocation2 + $0x68] sm:$0xff]
      %v301 = vld [vmem:[#allocation2 + $0x70] sm:$0xff]
      %v302 = vld [vmem:[#allocation2 + $0x78] sm:$0xff]
      %v303 = vld [vmem:[#allocation2 + $0x80] sm:$0xff]
      %v304 = vld [vmem:[#allocation2 + $0x88] sm:$0xff]
      %v305 = vld [vmem:[#allocation2 + $0x90] sm:$0xff]
      %v306 = vld [vmem:[#allocation2 + $0x98] sm:$0xff]
      %v307 = vld [vmem:[#allocation2 + $0xa0] sm:$0xff]
      %v308 = vld [vmem:[#allocation2 + $0xa8] sm:$0xff]
      %v309 = vld [vmem:[#allocation2 + $0xb0] sm:$0xff]
      %v310 = vld [vmem:[#allocation2 + $0xb8] sm:$0xff]
      %v311 = vld [vmem:[#allocation2 + $0xc0] sm:$0xff]
      %v312 = vld [vmem:[#allocation2 + $0xc8] sm:$0xff]
      %v313 = vld [vmem:[#allocation2 + $0xd0] sm:$0xff]
      %v314 = vld [vmem:[#allocation2 + $0xd8] sm:$0xff]
      %v315 = vld [vmem:[#allocation2 + $0xe0] sm:$0xff]
      %v316 = vld [vmem:[#allocation2 + $0xe8] sm:$0xff]
      %v317 = vld [vmem:[#allocation2 + $0xf0] sm:$0xff]
      %v318 = vld [vmem:[#allocation2 + $0xf8] sm:$0xff]
      %v319 = vld [vmem:[#allocation2 + $0x100] sm:$0xff]
      %v320 = vld [vmem:[#allocation2 + $0x108] sm:$0xff]
      %v321 = vld [vmem:[#allocation2 + $0x110] sm:$0xff]
      %v322 = vld [vmem:[#allocation2 + $0x118] sm:$0xff]
      %v323 = vld [vmem:[#allocation2 + $0x120] sm:$0xff]
      %v324 = vld [vmem:[#allocation2 + $0x128] sm:$0xff]
      %v325 = vld [vmem:[#allocation2 + $0x130] sm:$0xff]
      %v326 = vld [vmem:[#allocation2 + $0x138] sm:$0xff]
      %v327 = vld [vmem:[#allocation2 + $0x140] sm:$0xff]
      %v328 = vld [vmem:[#allocation2 + $0x148] sm:$0xff]
      %v329 = vld [vmem:[#allocation2 + $0x150] sm:$0xff]
      %v330 = vld [vmem:[#allocation2 + $0x158] sm:$0xff]
      %v331 = vld [vmem:[#allocation2 + $0x160] sm:$0xff]
      %v332 = vld [vmem:[#allocation2 + $0x168] sm:$0xff]
      %v333 = vld [vmem:[#allocation2 + $0x170] sm:$0xff]
      %v334 = vld [vmem:[#allocation2 + $0x178] sm:$0xff]
      %v335 = vld [vmem:[#allocation2 + $0x180] sm:$0xff]
      %v336 = vld [vmem:[#allocation2 + $0x188] sm:$0xff]
      %v337 = vld [vmem:[#allocation2 + $0x190] sm:$0xff]
      %v338 = vld [vmem:[#allocation2 + $0x198] sm:$0xff]
      %v339 = vld [vmem:[#allocation2 + $0x1a0] sm:$0xff]
      %v340 = vld [vmem:[#allocation2 + $0x1a8] sm:$0xff]
      %v341 = vld [vmem:[#allocation2 + $0x1b0] sm:$0xff]
      %v342 = vld [vmem:[#allocation2 + $0x1b8] sm:$0xff]
      %v343 = vld [vmem:[#allocation2 + $0x1c0] sm:$0xff]
      %v344 = vld [vmem:[#allocation2 + $0x1c8] sm:$0xff]
      %v345 = vld [vmem:[#allocation2 + $0x1d0] sm:$0xff]
      %v346 = vld [vmem:[#allocation2 + $0x1d8] sm:$0xff]
      %v347 = vld [vmem:[#allocation2 + $0x1e0] sm:$0xff]
      %v348 = vld [vmem:[#allocation2 + $0x1e8] sm:$0xff]
      %v349 = vld [vmem:[#allocation2 + $0x1f0] sm:$0xff]
      %v350 = vld [vmem:[#allocation2 + $0x1f8] sm:$0xff]
      %v351 = vld [vmem:[%s198] sm:$0xf]
      %v352 = vld [vmem:[%s198 + $0x4] sm:$0xf]
      %v353 = vld [vmem:[%s198 + $0x8] sm:$0xf]
      %v354 = vld [vmem:[%s198 + $0xc] sm:$0xf]
      %v355 = vld [vmem:[%s198 + $0x10] sm:$0xf]
      %v356 = vld [vmem:[%s198 + $0x14] sm:$0xf]
      %v357 = vld [vmem:[%s198 + $0x18] sm:$0xf]
      %v358 = vld [vmem:[%s198 + $0x1c] sm:$0xf]
      %v359 = vld [vmem:[%s198 + $0x20] sm:$0xf]
      %v360 = vld [vmem:[%s198 + $0x24] sm:$0xf]
      %v361 = vld [vmem:[%s198 + $0x28] sm:$0xf]
      %v362 = vld [vmem:[%s198 + $0x2c] sm:$0xf]
      %v363 = vld [vmem:[%s198 + $0x30] sm:$0xf]
      %v364 = vld [vmem:[%s198 + $0x34] sm:$0xf]
      %v365 = vld [vmem:[%s198 + $0x38] sm:$0xf]
      %v366 = vld [vmem:[%s198 + $0x3c] sm:$0xf]
      %v367 = vld [vmem:[%s198 + $0x40] sm:$0xf]
      %v368 = vld [vmem:[%s198 + $0x44] sm:$0xf]
      %v369 = vld [vmem:[%s198 + $0x48] sm:$0xf]
      %v370 = vld [vmem:[%s198 + $0x4c] sm:$0xf]
      %v371 = vld [vmem:[%s198 + $0x50] sm:$0xf]
      %v372 = vld [vmem:[%s198 + $0x54] sm:$0xf]
      %v373 = vld [vmem:[%s198 + $0x58] sm:$0xf]
      %v374 = vld [vmem:[%s198 + $0x5c] sm:$0xf]
      %v375 = vld [vmem:[%s198 + $0x60] sm:$0xf]
      %v376 = vld [vmem:[%s198 + $0x64] sm:$0xf]
      %v377 = vld [vmem:[%s198 + $0x68] sm:$0xf]
      %v378 = vld [vmem:[%s198 + $0x6c] sm:$0xf]
      %v379 = vld [vmem:[%s198 + $0x70] sm:$0xf]
      %v380 = vld [vmem:[%s198 + $0x74] sm:$0xf]
      %v381 = vld [vmem:[%s198 + $0x78] sm:$0xf]
      %v382 = vld [vmem:[%s198 + $0x7c] sm:$0xf]
      %v383 = vld [vmem:[%s198 + $0x80] sm:$0xf]
      %v384 = vld [vmem:[%s198 + $0x84] sm:$0xf]
      %v385 = vld [vmem:[%s198 + $0x88] sm:$0xf]
      %v386 = vld [vmem:[%s198 + $0x8c] sm:$0xf]
      %v387 = vld [vmem:[%s198 + $0x90] sm:$0xf]
      %v388 = vld [vmem:[%s198 + $0x94] sm:$0xf]
      %v389 = vld [vmem:[%s198 + $0x98] sm:$0xf]
      %v390 = vld [vmem:[%s198 + $0x9c] sm:$0xf]
      %v391 = vld [vmem:[%s198 + $0xa0] sm:$0xf]
      %v392 = vld [vmem:[%s198 + $0xa4] sm:$0xf]
      %v393 = vld [vmem:[%s198 + $0xa8] sm:$0xf]
      %v394 = vld [vmem:[%s198 + $0xac] sm:$0xf]
      %v395 = vld [vmem:[%s198 + $0xb0] sm:$0xf]
      %v396 = vld [vmem:[%s198 + $0xb4] sm:$0xf]
      %v397 = vld [vmem:[%s198 + $0xb8] sm:$0xf]
      %v398 = vld [vmem:[%s198 + $0xbc] sm:$0xf]
      %v399 = vld [vmem:[%s198 + $0xc0] sm:$0xf]
      %v400 = vld [vmem:[%s198 + $0xc4] sm:$0xf]
      %v401 = vld [vmem:[%s198 + $0xc8] sm:$0xf]
      %v402 = vld [vmem:[%s198 + $0xcc] sm:$0xf]
      %v403 = vld [vmem:[%s198 + $0xd0] sm:$0xf]
      %v404 = vld [vmem:[%s198 + $0xd4] sm:$0xf]
      %v405 = vld [vmem:[%s198 + $0xd8] sm:$0xf]
      %v406 = vld [vmem:[%s198 + $0xdc] sm:$0xf]
      %v407 = vld [vmem:[%s198 + $0xe0] sm:$0xf]
      %v408 = vld [vmem:[%s198 + $0xe4] sm:$0xf]
      %v409 = vld [vmem:[%s198 + $0xe8] sm:$0xf]
      %v410 = vld [vmem:[%s198 + $0xec] sm:$0xf]
      %v411 = vld [vmem:[%s198 + $0xf0] sm:$0xf]
      %v412 = vld [vmem:[%s198 + $0xf4] sm:$0xf]
      %v413 = vld [vmem:[%s198 + $0xf8] sm:$0xf]
      %v414 = vld [vmem:[%s198 + $0xfc] sm:$0xf]
      %v415 = vld [vmem:[%s207] sm:$0xf]
      %v416 = vld [vmem:[%s207 + $0x4] sm:$0xf]
      %v417 = vld [vmem:[%s207 + $0x8] sm:$0xf]
      %v418 = vld [vmem:[%s207 + $0xc] sm:$0xf]
      %v419 = vld [vmem:[%s207 + $0x10] sm:$0xf]
      %v420 = vld [vmem:[%s207 + $0x14] sm:$0xf]
      %v421 = vld [vmem:[%s207 + $0x18] sm:$0xf]
      %v422 = vld [vmem:[%s207 + $0x1c] sm:$0xf]
      %v423 = vld [vmem:[%s207 + $0x20] sm:$0xf]
      %v424 = vld [vmem:[%s207 + $0x24] sm:$0xf]
      %v425 = vld [vmem:[%s207 + $0x28] sm:$0xf]
      %v426 = vld [vmem:[%s207 + $0x2c] sm:$0xf]
      %v427 = vld [vmem:[%s207 + $0x30] sm:$0xf]
      %v428 = vld [vmem:[%s207 + $0x34] sm:$0xf]
      %v429 = vld [vmem:[%s207 + $0x38] sm:$0xf]
      %v430 = vld [vmem:[%s207 + $0x3c] sm:$0xf]
      %v495 = vunpack.c.l.b16 %v351
      %v496 = vunpack.c.l.b16 %v352
      %v497 = vunpack.c.l.b16 %v353
      %v498 = vunpack.c.l.b16 %v354
      %v499 = vunpack.c.l.b16 %v355
      %v500 = vunpack.c.l.b16 %v356
      %v501 = vunpack.c.l.b16 %v357
      %v502 = vunpack.c.l.b16 %v358
      %v503 = vunpack.c.l.b16 %v359
      %v504 = vunpack.c.l.b16 %v360
      %v505 = vunpack.c.l.b16 %v361
      %v506 = vunpack.c.l.b16 %v362
      %v507 = vunpack.c.l.b16 %v363
      %v508 = vunpack.c.l.b16 %v364
      %v509 = vunpack.c.l.b16 %v365
      %v510 = vunpack.c.l.b16 %v366
      %v511 = vunpack.c.l.b16 %v367
      %v512 = vunpack.c.l.b16 %v368
      %v513 = vunpack.c.l.b16 %v369
      %v514 = vunpack.c.l.b16 %v370
      %v515 = vunpack.c.l.b16 %v371
      %v516 = vunpack.c.l.b16 %v372
      %v517 = vunpack.c.l.b16 %v373
      %v518 = vunpack.c.l.b16 %v374
      %v519 = vunpack.c.l.b16 %v375
      %v520 = vunpack.c.l.b16 %v376
      %v521 = vunpack.c.l.b16 %v377
      %v522 = vunpack.c.l.b16 %v378
      %v523 = vunpack.c.l.b16 %v379
      %v524 = vunpack.c.l.b16 %v380
      %v525 = vunpack.c.l.b16 %v381
      %v526 = vunpack.c.l.b16 %v382
      %v527 = vunpack.c.l.b16 %v383
      %v528 = vunpack.c.l.b16 %v384
      %v529 = vunpack.c.l.b16 %v385
      %v530 = vunpack.c.l.b16 %v386
      %v531 = vunpack.c.l.b16 %v387
      %v532 = vunpack.c.l.b16 %v388
      %v533 = vunpack.c.l.b16 %v389
      %v534 = vunpack.c.l.b16 %v390
      %v535 = vunpack.c.l.b16 %v391
      %v536 = vunpack.c.l.b16 %v392
      %v537 = vunpack.c.l.b16 %v393
      %v538 = vunpack.c.l.b16 %v394
      %v539 = vunpack.c.l.b16 %v395
      %v540 = vunpack.c.l.b16 %v396
      %v541 = vunpack.c.l.b16 %v397
      %v542 = vunpack.c.l.b16 %v398
      %v543 = vunpack.c.l.b16 %v399
      %v544 = vunpack.c.l.b16 %v400
      %v545 = vunpack.c.l.b16 %v401
      %v546 = vunpack.c.l.b16 %v402
      %v547 = vunpack.c.l.b16 %v403
      %v548 = vunpack.c.l.b16 %v404
      %v549 = vunpack.c.l.b16 %v405
      %v550 = vunpack.c.l.b16 %v406
      %v551 = vunpack.c.l.b16 %v407
      %v552 = vunpack.c.l.b16 %v408
      %v553 = vunpack.c.l.b16 %v409
      %v554 = vunpack.c.l.b16 %v410
      %v555 = vunpack.c.l.b16 %v411
      %v556 = vunpack.c.l.b16 %v412
      %v557 = vunpack.c.l.b16 %v413
      %v558 = vunpack.c.l.b16 %v414
      %v559 = vpack.c.b16 %v496, %v495
      %v560 = vpack.c.b16 %v498, %v497
      %v561 = vpack.c.b16 %v500, %v499
      %v562 = vpack.c.b16 %v502, %v501
      %v563 = vpack.c.b16 %v504, %v503
      %v564 = vpack.c.b16 %v506, %v505
      %v565 = vpack.c.b16 %v508, %v507
      %v566 = vpack.c.b16 %v510, %v509
      %v567 = vpack.c.b16 %v512, %v511
      %v568 = vpack.c.b16 %v514, %v513
      %v569 = vpack.c.b16 %v516, %v515
      %v570 = vpack.c.b16 %v518, %v517
      %v571 = vpack.c.b16 %v520, %v519
      %v572 = vpack.c.b16 %v522, %v521
      %v573 = vpack.c.b16 %v524, %v523
      %v574 = vpack.c.b16 %v526, %v525
      %v575 = vpack.c.b16 %v528, %v527
      %v576 = vpack.c.b16 %v530, %v529
      %v577 = vpack.c.b16 %v532, %v531
      %v578 = vpack.c.b16 %v534, %v533
      %v579 = vpack.c.b16 %v536, %v535
      %v580 = vpack.c.b16 %v538, %v537
      %v581 = vpack.c.b16 %v540, %v539
      %v582 = vpack.c.b16 %v542, %v541
      %v583 = vpack.c.b16 %v544, %v543
      %v584 = vpack.c.b16 %v546, %v545
      %v585 = vpack.c.b16 %v548, %v547
      %v586 = vpack.c.b16 %v550, %v549
      %v587 = vpack.c.b16 %v552, %v551
      %v588 = vpack.c.b16 %v554, %v553
      %v589 = vpack.c.b16 %v556, %v555
      %v590 = vpack.c.b16 %v558, %v557
      %v639 = vunpack.c.l.b16 %v415
      %v640 = vunpack.c.l.b16 %v416
      %v641 = vunpack.c.l.b16 %v417
      %v642 = vunpack.c.l.b16 %v418
      %v643 = vunpack.c.l.b16 %v419
      %v644 = vunpack.c.l.b16 %v420
      %v645 = vunpack.c.l.b16 %v421
      %v646 = vunpack.c.l.b16 %v422
      %v647 = vunpack.c.l.b16 %v423
      %v648 = vunpack.c.l.b16 %v424
      %v649 = vunpack.c.l.b16 %v425
      %v650 = vunpack.c.l.b16 %v426
      %v651 = vunpack.c.l.b16 %v427
      %v652 = vunpack.c.l.b16 %v428
      %v653 = vunpack.c.l.b16 %v429
      %v654 = vunpack.c.l.b16 %v430
      %v655 = vpack.c.b16 %v640, %v639
      %v656 = vpack.c.b16 %v642, %v641
      %v657 = vpack.c.b16 %v644, %v643
      %v658 = vpack.c.b16 %v646, %v645
      %v659 = vpack.c.b16 %v648, %v647
      %v660 = vpack.c.b16 %v650, %v649
      %v661 = vpack.c.b16 %v652, %v651
      %v662 = vpack.c.b16 %v654, %v653
      %671 = vmatprep.subr.bf16.mxu0 0
      %672 = vmatpush1.bf16.msra.mxu0 %v662
      %673 = vmatprep.subr.bf16.mxu0 0
      %674 = vmatpush1.bf16.msra.mxu0 %v661
      %675 = vmatprep.subr.bf16.mxu0 0
      %676 = vmatpush1.bf16.msra.mxu0 %v660
      %677 = vmatprep.subr.bf16.mxu0 0
      %678 = vmatpush1.bf16.msra.mxu0 %v659
      %679 = vmatprep.subr.bf16.mxu0 0
      %680 = vmatpush1.bf16.msra.mxu0 %v658
      %681 = vmatprep.subr.bf16.mxu0 0
      %682 = vmatpush1.bf16.msra.mxu0 %v657
      %683 = vmatprep.subr.bf16.mxu0 0
      %684 = vmatpush1.bf16.msra.mxu0 %v656
      %685 = vmatprep.subr.bf16.mxu0 0
      %686 = vmatpush1.bf16.msra.mxu0 %v655
      %687 = vmatprep.subr.bf16.mxu0 0
      %688 = vmatpush2.bf16.msra.mxu0 0
      %689 = vmatprep.subr.bf16.mxu0 0
      %690 = vmatpush2.bf16.msra.mxu0 0
      %691 = vmatprep.subr.bf16.mxu0 0
      %692 = vmatpush2.bf16.msra.mxu0 0
      %693 = vmatprep.subr.bf16.mxu0 0
      %694 = vmatpush2.bf16.msra.mxu0 0
      %695 = vmatprep.subr.bf16.mxu0 0
      %696 = vmatpush2.bf16.msra.mxu0 0
      %697 = vmatprep.subr.bf16.mxu0 0
      %698 = vmatpush2.bf16.msra.mxu0 0
      %699 = vmatprep.subr.bf16.mxu0 0
      %700 = vmatpush2.bf16.msra.mxu0 0
      %701 = vmatprep.subr.bf16.mxu0 0
      %702 = vmatpush2.bf16.msra.mxu0 0
      %703 = vmatprep.mubr.bf16.mxu0 0
      %704 = vmatmul.mubr.bf16.gmra.mxu0 %v559
      %v705 = vpop.f32.mrf.mxu0
      %v706 = vadd.f32 0.0, %v705
      %v707 = vpop.f32.mrf.mxu0
      %v708 = vpop.f32.mrf.mxu0
      %v709 = vadd.f32 0.0, %v708
      %v710 = vpop.f32.mrf.mxu0
      %711 = vmatprep.mubr.bf16.mxu0 0
      %712 = vmatmul.mubr.bf16.gmra.mxu0 %v560
      %v713 = vpop.f32.mrf.mxu0
      %v714 = vadd.f32 0.0, %v713
      %v715 = vpop.f32.mrf.mxu0
      %v716 = vpop.f32.mrf.mxu0
      %v717 = vadd.f32 0.0, %v716
      %v718 = vpop.f32.mrf.mxu0
      %719 = vmatprep.mubr.bf16.mxu0 0
      %720 = vmatmul.mubr.bf16.gmra.mxu0 %v561
      %v721 = vpop.f32.mrf.mxu0
      %v722 = vadd.f32 0.0, %v721
      %v723 = vpop.f32.mrf.mxu0
      %v724 = vpop.f32.mrf.mxu0
      %v725 = vadd.f32 0.0, %v724
      %v726 = vpop.f32.mrf.mxu0
      %727 = vmatprep.mubr.bf16.mxu0 0
      %728 = vmatmul.mubr.bf16.gmra.mxu0 %v562
      %v729 = vpop.f32.mrf.mxu0
      %v730 = vadd.f32 0.0, %v729
      %v731 = vpop.f32.mrf.mxu0
      %v732 = vpop.f32.mrf.mxu0
      %v733 = vadd.f32 0.0, %v732
      %v734 = vpop.f32.mrf.mxu0
      %735 = vmatprep.mubr.bf16.mxu0 0
      %736 = vmatmul.mubr.bf16.gmra.mxu0 %v563
      %v737 = vpop.f32.mrf.mxu0
      %v738 = vadd.f32 0.0, %v737
      %v739 = vpop.f32.mrf.mxu0
      %v740 = vpop.f32.mrf.mxu0
      %v741 = vadd.f32 0.0, %v740
      %v742 = vpop.f32.mrf.mxu0
      %743 = vmatprep.mubr.bf16.mxu0 0
      %744 = vmatmul.mubr.bf16.gmra.mxu0 %v564
      %v745 = vpop.f32.mrf.mxu0
      %v746 = vadd.f32 0.0, %v745
      %v747 = vpop.f32.mrf.mxu0
      %v748 = vpop.f32.mrf.mxu0
      %v749 = vadd.f32 0.0, %v748
      %v750 = vpop.f32.mrf.mxu0
      %751 = vmatprep.mubr.bf16.mxu0 0
      %752 = vmatmul.mubr.bf16.gmra.mxu0 %v565
      %v753 = vpop.f32.mrf.mxu0
      %v754 = vadd.f32 0.0, %v753
      %v755 = vpop.f32.mrf.mxu0
      %v756 = vpop.f32.mrf.mxu0
      %v757 = vadd.f32 0.0, %v756
      %v758 = vpop.f32.mrf.mxu0
      %759 = vmatprep.mubr.bf16.mxu0 0
      %760 = vmatmul.mubr.bf16.gmra.mxu0 %v566
      %v761 = vpop.f32.mrf.mxu0
      %v762 = vadd.f32 0.0, %v761
      %v763 = vpop.f32.mrf.mxu0
      %v764 = vpop.f32.mrf.mxu0
      %v765 = vadd.f32 0.0, %v764
      %v766 = vpop.f32.mrf.mxu0
      %767 = vmatprep.mubr.bf16.mxu0 0
      %768 = vmatmul.mubr.bf16.gmra.mxu0 %v567
      %v769 = vpop.f32.mrf.mxu0
      %v770 = vadd.f32 0.0, %v769
      %v771 = vpop.f32.mrf.mxu0
      %v772 = vpop.f32.mrf.mxu0
      %v773 = vadd.f32 0.0, %v772
      %v774 = vpop.f32.mrf.mxu0
      %775 = vmatprep.mubr.bf16.mxu0 0
      %776 = vmatmul.mubr.bf16.gmra.mxu0 %v568
      %v777 = vpop.f32.mrf.mxu0
      %v778 = vadd.f32 0.0, %v777
      %v779 = vpop.f32.mrf.mxu0
      %v780 = vpop.f32.mrf.mxu0
      %v781 = vadd.f32 0.0, %v780
      %v782 = vpop.f32.mrf.mxu0
      %783 = vmatprep.mubr.bf16.mxu0 0
      %784 = vmatmul.mubr.bf16.gmra.mxu0 %v569
      %v785 = vpop.f32.mrf.mxu0
      %v786 = vadd.f32 0.0, %v785
      %v787 = vpop.f32.mrf.mxu0
      %v788 = vpop.f32.mrf.mxu0
      %v789 = vadd.f32 0.0, %v788
      %v790 = vpop.f32.mrf.mxu0
      %791 = vmatprep.mubr.bf16.mxu0 0
      %792 = vmatmul.mubr.bf16.gmra.mxu0 %v570
      %v793 = vpop.f32.mrf.mxu0
      %v794 = vadd.f32 0.0, %v793
      %v795 = vpop.f32.mrf.mxu0
      %v796 = vpop.f32.mrf.mxu0
      %v797 = vadd.f32 0.0, %v796
      %v798 = vpop.f32.mrf.mxu0
      %799 = vmatprep.mubr.bf16.mxu0 0
      %800 = vmatmul.mubr.bf16.gmra.mxu0 %v571
      %v801 = vpop.f32.mrf.mxu0
      %v802 = vadd.f32 0.0, %v801
      %v803 = vpop.f32.mrf.mxu0
      %v804 = vpop.f32.mrf.mxu0
      %v805 = vadd.f32 0.0, %v804
      %v806 = vpop.f32.mrf.mxu0
      %807 = vmatprep.mubr.bf16.mxu0 0
      %808 = vmatmul.mubr.bf16.gmra.mxu0 %v572
      %v809 = vpop.f32.mrf.mxu0
      %v810 = vadd.f32 0.0, %v809
      %v811 = vpop.f32.mrf.mxu0
      %v812 = vpop.f32.mrf.mxu0
      %v813 = vadd.f32 0.0, %v812
      %v814 = vpop.f32.mrf.mxu0
      %815 = vmatprep.mubr.bf16.mxu0 0
      %816 = vmatmul.mubr.bf16.gmra.mxu0 %v573
      %v817 = vpop.f32.mrf.mxu0
      %v818 = vadd.f32 0.0, %v817
      %v819 = vpop.f32.mrf.mxu0
      %v820 = vpop.f32.mrf.mxu0
      %v821 = vadd.f32 0.0, %v820
      %v822 = vpop.f32.mrf.mxu0
      %823 = vmatprep.mubr.bf16.mxu0 0
      %824 = vmatmul.mubr.bf16.gmra.mxu0 %v574
      %v825 = vpop.f32.mrf.mxu0
      %v826 = vadd.f32 0.0, %v825
      %v827 = vpop.f32.mrf.mxu0
      %v828 = vpop.f32.mrf.mxu0
      %v829 = vadd.f32 0.0, %v828
      %v830 = vpop.f32.mrf.mxu0
      %831 = vmatprep.mubr.bf16.mxu0 0
      %832 = vmatmul.mubr.bf16.gmra.mxu0 %v575
      %v833 = vpop.f32.mrf.mxu0
      %v834 = vadd.f32 0.0, %v833
      %v835 = vpop.f32.mrf.mxu0
      %v836 = vpop.f32.mrf.mxu0
      %v837 = vadd.f32 0.0, %v836
      %v838 = vpop.f32.mrf.mxu0
      %839 = vmatprep.mubr.bf16.mxu0 0
      %840 = vmatmul.mubr.bf16.gmra.mxu0 %v576
      %v841 = vpop.f32.mrf.mxu0
      %v842 = vadd.f32 0.0, %v841
      %v843 = vpop.f32.mrf.mxu0
      %v844 = vpop.f32.mrf.mxu0
      %v845 = vadd.f32 0.0, %v844
      %v846 = vpop.f32.mrf.mxu0
      %847 = vmatprep.mubr.bf16.mxu0 0
      %848 = vmatmul.mubr.bf16.gmra.mxu0 %v577
      %v849 = vpop.f32.mrf.mxu0
      %v850 = vadd.f32 0.0, %v849
      %v851 = vpop.f32.mrf.mxu0
      %v852 = vpop.f32.mrf.mxu0
      %v853 = vadd.f32 0.0, %v852
      %v854 = vpop.f32.mrf.mxu0
      %855 = vmatprep.mubr.bf16.mxu0 0
      %856 = vmatmul.mubr.bf16.gmra.mxu0 %v578
      %v857 = vpop.f32.mrf.mxu0
      %v858 = vadd.f32 0.0, %v857
      %v859 = vpop.f32.mrf.mxu0
      %v860 = vpop.f32.mrf.mxu0
      %v861 = vadd.f32 0.0, %v860
      %v862 = vpop.f32.mrf.mxu0
      %863 = vmatprep.mubr.bf16.mxu0 0
      %864 = vmatmul.mubr.bf16.gmra.mxu0 %v579
      %v865 = vpop.f32.mrf.mxu0
      %v866 = vadd.f32 0.0, %v865
      %v867 = vpop.f32.mrf.mxu0
      %v868 = vpop.f32.mrf.mxu0
      %v869 = vadd.f32 0.0, %v868
      %v870 = vpop.f32.mrf.mxu0
      %871 = vmatprep.mubr.bf16.mxu0 0
      %872 = vmatmul.mubr.bf16.gmra.mxu0 %v580
      %v873 = vpop.f32.mrf.mxu0
      %v874 = vadd.f32 0.0, %v873
      %v875 = vpop.f32.mrf.mxu0
      %v876 = vpop.f32.mrf.mxu0
      %v877 = vadd.f32 0.0, %v876
      %v878 = vpop.f32.mrf.mxu0
      %879 = vmatprep.mubr.bf16.mxu0 0
      %880 = vmatmul.mubr.bf16.gmra.mxu0 %v581
      %v881 = vpop.f32.mrf.mxu0
      %v882 = vadd.f32 0.0, %v881
      %v883 = vpop.f32.mrf.mxu0
      %v884 = vpop.f32.mrf.mxu0
      %v885 = vadd.f32 0.0, %v884
      %v886 = vpop.f32.mrf.mxu0
      %887 = vmatprep.mubr.bf16.mxu0 0
      %888 = vmatmul.mubr.bf16.gmra.mxu0 %v582
      %v889 = vpop.f32.mrf.mxu0
      %v890 = vadd.f32 0.0, %v889
      %v891 = vpop.f32.mrf.mxu0
      %v892 = vpop.f32.mrf.mxu0
      %v893 = vadd.f32 0.0, %v892
      %v894 = vpop.f32.mrf.mxu0
      %895 = vmatprep.mubr.bf16.mxu0 0
      %896 = vmatmul.mubr.bf16.gmra.mxu0 %v583
      %v897 = vpop.f32.mrf.mxu0
      %v898 = vadd.f32 0.0, %v897
      %v899 = vpop.f32.mrf.mxu0
      %v900 = vpop.f32.mrf.mxu0
      %v901 = vadd.f32 0.0, %v900
      %v902 = vpop.f32.mrf.mxu0
      %903 = vmatprep.mubr.bf16.mxu0 0
      %904 = vmatmul.mubr.bf16.gmra.mxu0 %v584
      %v905 = vpop.f32.mrf.mxu0
      %v906 = vadd.f32 0.0, %v905
      %v907 = vpop.f32.mrf.mxu0
      %v908 = vpop.f32.mrf.mxu0
      %v909 = vadd.f32 0.0, %v908
      %v910 = vpop.f32.mrf.mxu0
      %911 = vmatprep.mubr.bf16.mxu0 0
      %912 = vmatmul.mubr.bf16.gmra.mxu0 %v585
      %v913 = vpop.f32.mrf.mxu0
      %v914 = vadd.f32 0.0, %v913
      %v915 = vpop.f32.mrf.mxu0
      %v916 = vpop.f32.mrf.mxu0
      %v917 = vadd.f32 0.0, %v916
      %v918 = vpop.f32.mrf.mxu0
      %919 = vmatprep.mubr.bf16.mxu0 0
      %920 = vmatmul.mubr.bf16.gmra.mxu0 %v586
      %v921 = vpop.f32.mrf.mxu0
      %v922 = vadd.f32 0.0, %v921
      %v923 = vpop.f32.mrf.mxu0
      %v924 = vpop.f32.mrf.mxu0
      %v925 = vadd.f32 0.0, %v924
      %v926 = vpop.f32.mrf.mxu0
      %927 = vmatprep.mubr.bf16.mxu0 0
      %928 = vmatmul.mubr.bf16.gmra.mxu0 %v587
      %v929 = vpop.f32.mrf.mxu0
      %v930 = vadd.f32 0.0, %v929
      %v931 = vpop.f32.mrf.mxu0
      %v932 = vpop.f32.mrf.mxu0
      %v933 = vadd.f32 0.0, %v932
      %v934 = vpop.f32.mrf.mxu0
      %935 = vmatprep.mubr.bf16.mxu0 0
      %936 = vmatmul.mubr.bf16.gmra.mxu0 %v588
      %v937 = vpop.f32.mrf.mxu0
      %v938 = vadd.f32 0.0, %v937
      %v939 = vpop.f32.mrf.mxu0
      %v940 = vpop.f32.mrf.mxu0
      %v941 = vadd.f32 0.0, %v940
      %v942 = vpop.f32.mrf.mxu0
      %943 = vmatprep.mubr.bf16.mxu0 0
      %944 = vmatmul.mubr.bf16.gmra.mxu0 %v589
      %v945 = vpop.f32.mrf.mxu0
      %v946 = vadd.f32 0.0, %v945
      %v947 = vpop.f32.mrf.mxu0
      %v948 = vpop.f32.mrf.mxu0
      %v949 = vadd.f32 0.0, %v948
      %v950 = vpop.f32.mrf.mxu0
      %951 = vmatprep.mubr.bf16.mxu0 0
      %952 = vmatmul.mubr.bf16.gmra.mxu0 %v590
      %v953 = vpop.f32.mrf.mxu0
      %v954 = vadd.f32 0.0, %v953
      %v955 = vpop.f32.mrf.mxu0
      %v956 = vpop.f32.mrf.mxu0
      %v957 = vadd.f32 0.0, %v956
      %v958 = vpop.f32.mrf.mxu0
      %959 = vdwg.mxu0
      %v960 = vadd.f32 %v287, %v706
      %v961 = vadd.f32 %v288, %v709
      %v962 = vadd.f32 %v289, %v714
      %v963 = vadd.f32 %v290, %v717
      %v964 = vadd.f32 %v291, %v722
      %v965 = vadd.f32 %v292, %v725
      %v966 = vadd.f32 %v293, %v730
      %v967 = vadd.f32 %v294, %v733
      %v968 = vadd.f32 %v295, %v738
      %v969 = vadd.f32 %v296, %v741
      %v970 = vadd.f32 %v297, %v746
      %v971 = vadd.f32 %v298, %v749
      %v972 = vadd.f32 %v299, %v754
      %v973 = vadd.f32 %v300, %v757
      %v974 = vadd.f32 %v301, %v762
      %v975 = vadd.f32 %v302, %v765
      %v976 = vadd.f32 %v303, %v770
      %v977 = vadd.f32 %v304, %v773
      %v978 = vadd.f32 %v305, %v778
      %v979 = vadd.f32 %v306, %v781
      %v980 = vadd.f32 %v307, %v786
      %v981 = vadd.f32 %v308, %v789
      %v982 = vadd.f32 %v309, %v794
      %v983 = vadd.f32 %v310, %v797
      %v984 = vadd.f32 %v311, %v802
      %v985 = vadd.f32 %v312, %v805
      %v986 = vadd.f32 %v313, %v810
      %v987 = vadd.f32 %v314, %v813
      %v988 = vadd.f32 %v315, %v818
      %v989 = vadd.f32 %v316, %v821
      %v990 = vadd.f32 %v317, %v826
      %v991 = vadd.f32 %v318, %v829
      %v992 = vadd.f32 %v319, %v834
      %v993 = vadd.f32 %v320, %v837
      %v994 = vadd.f32 %v321, %v842
      %v995 = vadd.f32 %v322, %v845
      %v996 = vadd.f32 %v323, %v850
      %v997 = vadd.f32 %v324, %v853
      %v998 = vadd.f32 %v325, %v858
      %v999 = vadd.f32 %v326, %v861
      %v1000 = vadd.f32 %v327, %v866
      %v1001 = vadd.f32 %v328, %v869
      %v1002 = vadd.f32 %v329, %v874
      %v1003 = vadd.f32 %v330, %v877
      %v1004 = vadd.f32 %v331, %v882
      %v1005 = vadd.f32 %v332, %v885
      %v1006 = vadd.f32 %v333, %v890
      %v1007 = vadd.f32 %v334, %v893
      %v1008 = vadd.f32 %v335, %v898
      %v1009 = vadd.f32 %v336, %v901
      %v1010 = vadd.f32 %v337, %v906
      %v1011 = vadd.f32 %v338, %v909
      %v1012 = vadd.f32 %v339, %v914
      %v1013 = vadd.f32 %v340, %v917
      %v1014 = vadd.f32 %v341, %v922
      %v1015 = vadd.f32 %v342, %v925
      %v1016 = vadd.f32 %v343, %v930
      %v1017 = vadd.f32 %v344, %v933
      %v1018 = vadd.f32 %v345, %v938
      %v1019 = vadd.f32 %v346, %v941
      %v1020 = vadd.f32 %v347, %v946
      %v1021 = vadd.f32 %v348, %v949
      %v1022 = vadd.f32 %v349, %v954
      %v1023 = vadd.f32 %v350, %v957
      %1024 = vst [vmem:[#allocation2] sm:$0xff] %v960
      %1025 = vst [vmem:[#allocation2 + $0x8] sm:$0xff] %v961
      %1026 = vst [vmem:[#allocation2 + $0x10] sm:$0xff] %v962
      %1027 = vst [vmem:[#allocation2 + $0x18] sm:$0xff] %v963
      %1028 = vst [vmem:[#allocation2 + $0x20] sm:$0xff] %v964
      %1029 = vst [vmem:[#allocation2 + $0x28] sm:$0xff] %v965
      %1030 = vst [vmem:[#allocation2 + $0x30] sm:$0xff] %v966
      %1031 = vst [vmem:[#allocation2 + $0x38] sm:$0xff] %v967
      %1032 = vst [vmem:[#allocation2 + $0x40] sm:$0xff] %v968
      %1033 = vst [vmem:[#allocation2 + $0x48] sm:$0xff] %v969
      %1034 = vst [vmem:[#allocation2 + $0x50] sm:$0xff] %v970
      %1035 = vst [vmem:[#allocation2 + $0x58] sm:$0xff] %v971
      %1036 = vst [vmem:[#allocation2 + $0x60] sm:$0xff] %v972
      %1037 = vst [vmem:[#allocation2 + $0x68] sm:$0xff] %v973
      %1038 = vst [vmem:[#allocation2 + $0x70] sm:$0xff] %v974
      %1039 = vst [vmem:[#allocation2 + $0x78] sm:$0xff] %v975
      %1040 = vst [vmem:[#allocation2 + $0x80] sm:$0xff] %v976
      %1041 = vst [vmem:[#allocation2 + $0x88] sm:$0xff] %v977
      %1042 = vst [vmem:[#allocation2 + $0x90] sm:$0xff] %v978
      %1043 = vst [vmem:[#allocation2 + $0x98] sm:$0xff] %v979
      %1044 = vst [vmem:[#allocation2 + $0xa0] sm:$0xff] %v980
      %1045 = vst [vmem:[#allocation2 + $0xa8] sm:$0xff] %v981
      %1046 = vst [vmem:[#allocation2 + $0xb0] sm:$0xff] %v982
      %1047 = vst [vmem:[#allocation2 + $0xb8] sm:$0xff] %v983
      %1048 = vst [vmem:[#allocation2 + $0xc0] sm:$0xff] %v984
      %1049 = vst [vmem:[#allocation2 + $0xc8] sm:$0xff] %v985
      %1050 = vst [vmem:[#allocation2 + $0xd0] sm:$0xff] %v986
      %1051 = vst [vmem:[#allocation2 + $0xd8] sm:$0xff] %v987
      %1052 = vst [vmem:[#allocation2 + $0xe0] sm:$0xff] %v988
      %1053 = vst [vmem:[#allocation2 + $0xe8] sm:$0xff] %v989
      %1054 = vst [vmem:[#allocation2 + $0xf0] sm:$0xff] %v990
      %1055 = vst [vmem:[#allocation2 + $0xf8] sm:$0xff] %v991
      %1056 = vst [vmem:[#allocation2 + $0x100] sm:$0xff] %v992
      %1057 = vst [vmem:[#allocation2 + $0x108] sm:$0xff] %v993
      %1058 = vst [vmem:[#allocation2 + $0x110] sm:$0xff] %v994
      %1059 = vst [vmem:[#allocation2 + $0x118] sm:$0xff] %v995
      %1060 = vst [vmem:[#allocation2 + $0x120] sm:$0xff] %v996
      %1061 = vst [vmem:[#allocation2 + $0x128] sm:$0xff] %v997
      %1062 = vst [vmem:[#allocation2 + $0x130] sm:$0xff] %v998
      %1063 = vst [vmem:[#allocation2 + $0x138] sm:$0xff] %v999
      %1064 = vst [vmem:[#allocation2 + $0x140] sm:$0xff] %v1000
      %1065 = vst [vmem:[#allocation2 + $0x148] sm:$0xff] %v1001
      %1066 = vst [vmem:[#allocation2 + $0x150] sm:$0xff] %v1002
      %1067 = vst [vmem:[#allocation2 + $0x158] sm:$0xff] %v1003
      %1068 = vst [vmem:[#allocation2 + $0x160] sm:$0xff] %v1004
      %1069 = vst [vmem:[#allocation2 + $0x168] sm:$0xff] %v1005
      %1070 = vst [vmem:[#allocation2 + $0x170] sm:$0xff] %v1006
      %1071 = vst [vmem:[#allocation2 + $0x178] sm:$0xff] %v1007
      %1072 = vst [vmem:[#allocation2 + $0x180] sm:$0xff] %v1008
      %1073 = vst [vmem:[#allocation2 + $0x188] sm:$0xff] %v1009
      %1074 = vst [vmem:[#allocation2 + $0x190] sm:$0xff] %v1010
      %1075 = vst [vmem:[#allocation2 + $0x198] sm:$0xff] %v1011
      %1076 = vst [vmem:[#allocation2 + $0x1a0] sm:$0xff] %v1012
      %1077 = vst [vmem:[#allocation2 + $0x1a8] sm:$0xff] %v1013
      %1078 = vst [vmem:[#allocation2 + $0x1b0] sm:$0xff] %v1014
      %1079 = vst [vmem:[#allocation2 + $0x1b8] sm:$0xff] %v1015
      %1080 = vst [vmem:[#allocation2 + $0x1c0] sm:$0xff] %v1016
      %1081 = vst [vmem:[#allocation2 + $0x1c8] sm:$0xff] %v1017
      %1082 = vst [vmem:[#allocation2 + $0x1d0] sm:$0xff] %v1018
      %1083 = vst [vmem:[#allocation2 + $0x1d8] sm:$0xff] %v1019
      %1084 = vst [vmem:[#allocation2 + $0x1e0] sm:$0xff] %v1020
      %1085 = vst [vmem:[#allocation2 + $0x1e8] sm:$0xff] %v1021
      %1086 = vst [vmem:[#allocation2 + $0x1f0] sm:$0xff] %v1022
      %1087 = vst [vmem:[#allocation2 + $0x1f8] sm:$0xff] %v1023
      // Predicated region
      $region33: #{dcsa_forward.29} parent=27 // pred_check
        %p1088 = pneg %p219
      $region34: #{dcsa_forward.29} parent=27 // pred_check_branch
        %1090 = sbr.rel (%p1088) target = $region36
      $region35: #{dcsa_forward.29} parent=27 // pred_region
        %v1091 = vld [vmem:[#allocation2] sm:$0xff]
        %v1092 = vld [vmem:[#allocation2 + $0x8] sm:$0xff]
        %v1093 = vld [vmem:[#allocation2 + $0x10] sm:$0xff]
        %v1094 = vld [vmem:[#allocation2 + $0x18] sm:$0xff]
        %v1095 = vld [vmem:[#allocation2 + $0x20] sm:$0xff]
        %v1096 = vld [vmem:[#allocation2 + $0x28] sm:$0xff]
        %v1097 = vld [vmem:[#allocation2 + $0x30] sm:$0xff]
        %v1098 = vld [vmem:[#allocation2 + $0x38] sm:$0xff]
        %v1099 = vld [vmem:[#allocation2 + $0x40] sm:$0xff]
        %v1100 = vld [vmem:[#allocation2 + $0x48] sm:$0xff]
        %v1101 = vld [vmem:[#allocation2 + $0x50] sm:$0xff]
        %v1102 = vld [vmem:[#allocation2 + $0x58] sm:$0xff]
        %v1103 = vld [vmem:[#allocation2 + $0x60] sm:$0xff]
        %v1104 = vld [vmem:[#allocation2 + $0x68] sm:$0xff]
        %v1105 = vld [vmem:[#allocation2 + $0x70] sm:$0xff]
        %v1106 = vld [vmem:[#allocation2 + $0x78] sm:$0xff]
        %v1107 = vld [vmem:[#allocation2 + $0x80] sm:$0xff]
        %v1108 = vld [vmem:[#allocation2 + $0x88] sm:$0xff]
        %v1109 = vld [vmem:[#allocation2 + $0x90] sm:$0xff]
        %v1110 = vld [vmem:[#allocation2 + $0x98] sm:$0xff]
        %v1111 = vld [vmem:[#allocation2 + $0xa0] sm:$0xff]
        %v1112 = vld [vmem:[#allocation2 + $0xa8] sm:$0xff]
        %v1113 = vld [vmem:[#allocation2 + $0xb0] sm:$0xff]
        %v1114 = vld [vmem:[#allocation2 + $0xb8] sm:$0xff]
        %v1115 = vld [vmem:[#allocation2 + $0xc0] sm:$0xff]
        %v1116 = vld [vmem:[#allocation2 + $0xc8] sm:$0xff]
        %v1117 = vld [vmem:[#allocation2 + $0xd0] sm:$0xff]
        %v1118 = vld [vmem:[#allocation2 + $0xd8] sm:$0xff]
        %v1119 = vld [vmem:[#allocation2 + $0xe0] sm:$0xff]
        %v1120 = vld [vmem:[#allocation2 + $0xe8] sm:$0xff]
        %v1121 = vld [vmem:[#allocation2 + $0xf0] sm:$0xff]
        %v1122 = vld [vmem:[#allocation2 + $0xf8] sm:$0xff]
        %v1123 = vld [vmem:[#allocation2 + $0x100] sm:$0xff]
        %v1124 = vld [vmem:[#allocation2 + $0x108] sm:$0xff]
        %v1125 = vld [vmem:[#allocation2 + $0x110] sm:$0xff]
        %v1126 = vld [vmem:[#allocation2 + $0x118] sm:$0xff]
        %v1127 = vld [vmem:[#allocation2 + $0x120] sm:$0xff]
        %v1128 = vld [vmem:[#allocation2 + $0x128] sm:$0xff]
        %v1129 = vld [vmem:[#allocation2 + $0x130] sm:$0xff]
        %v1130 = vld [vmem:[#allocation2 + $0x138] sm:$0xff]
        %v1131 = vld [vmem:[#allocation2 + $0x140] sm:$0xff]
        %v1132 = vld [vmem:[#allocation2 + $0x148] sm:$0xff]
        %v1133 = vld [vmem:[#allocation2 + $0x150] sm:$0xff]
        %v1134 = vld [vmem:[#allocation2 + $0x158] sm:$0xff]
        %v1135 = vld [vmem:[#allocation2 + $0x160] sm:$0xff]
        %v1136 = vld [vmem:[#allocation2 + $0x168] sm:$0xff]
        %v1137 = vld [vmem:[#allocation2 + $0x170] sm:$0xff]
        %v1138 = vld [vmem:[#allocation2 + $0x178] sm:$0xff]
        %v1139 = vld [vmem:[#allocation2 + $0x180] sm:$0xff]
        %v1140 = vld [vmem:[#allocation2 + $0x188] sm:$0xff]
        %v1141 = vld [vmem:[#allocation2 + $0x190] sm:$0xff]
        %v1142 = vld [vmem:[#allocation2 + $0x198] sm:$0xff]
        %v1143 = vld [vmem:[#allocation2 + $0x1a0] sm:$0xff]
        %v1144 = vld [vmem:[#allocation2 + $0x1a8] sm:$0xff]
        %v1145 = vld [vmem:[#allocation2 + $0x1b0] sm:$0xff]
        %v1146 = vld [vmem:[#allocation2 + $0x1b8] sm:$0xff]
        %v1147 = vld [vmem:[#allocation2 + $0x1c0] sm:$0xff]
        %v1148 = vld [vmem:[#allocation2 + $0x1c8] sm:$0xff]
        %v1149 = vld [vmem:[#allocation2 + $0x1d0] sm:$0xff]
        %v1150 = vld [vmem:[#allocation2 + $0x1d8] sm:$0xff]
        %v1151 = vld [vmem:[#allocation2 + $0x1e0] sm:$0xff]
        %v1152 = vld [vmem:[#allocation2 + $0x1e8] sm:$0xff]
        %v1153 = vld [vmem:[#allocation2 + $0x1f0] sm:$0xff]
        %v1154 = vld [vmem:[#allocation2 + $0x1f8] sm:$0xff]
        %v1155 = vtanh.pop %v1091
        %v1156 = vtanh.pop %v1092
        %v1157 = vtanh.pop %v1093
        %v1158 = vtanh.pop %v1094
        %v1159 = vtanh.pop %v1095
        %v1160 = vtanh.pop %v1096
        %v1161 = vtanh.pop %v1097
        %v1162 = vtanh.pop %v1098
        %v1163 = vtanh.pop %v1099
        %v1164 = vtanh.pop %v1100
        %v1165 = vtanh.pop %v1101
        %v1166 = vtanh.pop %v1102
        %v1167 = vtanh.pop %v1103
        %v1168 = vtanh.pop %v1104
        %v1169 = vtanh.pop %v1105
        %v1170 = vtanh.pop %v1106
        %v1171 = vtanh.pop %v1107
        %v1172 = vtanh.pop %v1108
        %v1173 = vtanh.pop %v1109
        %v1174 = vtanh.pop %v1110
        %v1175 = vtanh.pop %v1111
        %v1176 = vtanh.pop %v1112
        %v1177 = vtanh.pop %v1113
        %v1178 = vtanh.pop %v1114
        %v1179 = vtanh.pop %v1115
        %v1180 = vtanh.pop %v1116
        %v1181 = vtanh.pop %v1117
        %v1182 = vtanh.pop %v1118
        %v1183 = vtanh.pop %v1119
        %v1184 = vtanh.pop %v1120
        %v1185 = vtanh.pop %v1121
        %v1186 = vtanh.pop %v1122
        %v1187 = vtanh.pop %v1123
        %v1188 = vtanh.pop %v1124
        %v1189 = vtanh.pop %v1125
        %v1190 = vtanh.pop %v1126
        %v1191 = vtanh.pop %v1127
        %v1192 = vtanh.pop %v1128
        %v1193 = vtanh.pop %v1129
        %v1194 = vtanh.pop %v1130
        %v1195 = vtanh.pop %v1131
        %v1196 = vtanh.pop %v1132
        %v1197 = vtanh.pop %v1133
        %v1198 = vtanh.pop %v1134
        %v1199 = vtanh.pop %v1135
        %v1200 = vtanh.pop %v1136
        %v1201 = vtanh.pop %v1137
        %v1202 = vtanh.pop %v1138
        %v1203 = vtanh.pop %v1139
        %v1204 = vtanh.pop %v1140
        %v1205 = vtanh.pop %v1141
        %v1206 = vtanh.pop %v1142
        %v1207 = vtanh.pop %v1143
        %v1208 = vtanh.pop %v1144
        %v1209 = vtanh.pop %v1145
        %v1210 = vtanh.pop %v1146
        %v1211 = vtanh.pop %v1147
        %v1212 = vtanh.pop %v1148
        %v1213 = vtanh.pop %v1149
        %v1214 = vtanh.pop %v1150
        %v1215 = vtanh.pop %v1151
        %v1216 = vtanh.pop %v1152
        %v1217 = vtanh.pop %v1153
        %v1218 = vtanh.pop %v1154
        %1219 = vst [vmem:[%s216] sm:$0xff] %v1155
        %1220 = vst [vmem:[%s216 + $0x8] sm:$0xff] %v1156
        %1221 = vst [vmem:[%s216 + $0x10] sm:$0xff] %v1157
        %1222 = vst [vmem:[%s216 + $0x18] sm:$0xff] %v1158
        %1223 = vst [vmem:[%s216 + $0x20] sm:$0xff] %v1159
        %1224 = vst [vmem:[%s216 + $0x28] sm:$0xff] %v1160
        %1225 = vst [vmem:[%s216 + $0x30] sm:$0xff] %v1161
        %1226 = vst [vmem:[%s216 + $0x38] sm:$0xff] %v1162
        %1227 = vst [vmem:[%s216 + $0x40] sm:$0xff] %v1163
        %1228 = vst [vmem:[%s216 + $0x48] sm:$0xff] %v1164
        %1229 = vst [vmem:[%s216 + $0x50] sm:$0xff] %v1165
        %1230 = vst [vmem:[%s216 + $0x58] sm:$0xff] %v1166
        %1231 = vst [vmem:[%s216 + $0x60] sm:$0xff] %v1167
        %1232 = vst [vmem:[%s216 + $0x68] sm:$0xff] %v1168
        %1233 = vst [vmem:[%s216 + $0x70] sm:$0xff] %v1169
        %1234 = vst [vmem:[%s216 + $0x78] sm:$0xff] %v1170
        %1235 = vst [vmem:[%s216 + $0x80] sm:$0xff] %v1171
        %1236 = vst [vmem:[%s216 + $0x88] sm:$0xff] %v1172
        %1237 = vst [vmem:[%s216 + $0x90] sm:$0xff] %v1173
        %1238 = vst [vmem:[%s216 + $0x98] sm:$0xff] %v1174
        %1239 = vst [vmem:[%s216 + $0xa0] sm:$0xff] %v1175
        %1240 = vst [vmem:[%s216 + $0xa8] sm:$0xff] %v1176
        %1241 = vst [vmem:[%s216 + $0xb0] sm:$0xff] %v1177
        %1242 = vst [vmem:[%s216 + $0xb8] sm:$0xff] %v1178
        %1243 = vst [vmem:[%s216 + $0xc0] sm:$0xff] %v1179
        %1244 = vst [vmem:[%s216 + $0xc8] sm:$0xff] %v1180
        %1245 = vst [vmem:[%s216 + $0xd0] sm:$0xff] %v1181
        %1246 = vst [vmem:[%s216 + $0xd8] sm:$0xff] %v1182
        %1247 = vst [vmem:[%s216 + $0xe0] sm:$0xff] %v1183
        %1248 = vst [vmem:[%s216 + $0xe8] sm:$0xff] %v1184
        %1249 = vst [vmem:[%s216 + $0xf0] sm:$0xff] %v1185
        %1250 = vst [vmem:[%s216 + $0xf8] sm:$0xff] %v1186
        %1251 = vst [vmem:[%s216 + $0x100] sm:$0xff] %v1187
        %1252 = vst [vmem:[%s216 + $0x108] sm:$0xff] %v1188
        %1253 = vst [vmem:[%s216 + $0x110] sm:$0xff] %v1189
        %1254 = vst [vmem:[%s216 + $0x118] sm:$0xff] %v1190
        %1255 = vst [vmem:[%s216 + $0x120] sm:$0xff] %v1191
        %1256 = vst [vmem:[%s216 + $0x128] sm:$0xff] %v1192
        %1257 = vst [vmem:[%s216 + $0x130] sm:$0xff] %v1193
        %1258 = vst [vmem:[%s216 + $0x138] sm:$0xff] %v1194
        %1259 = vst [vmem:[%s216 + $0x140] sm:$0xff] %v1195
        %1260 = vst [vmem:[%s216 + $0x148] sm:$0xff] %v1196
        %1261 = vst [vmem:[%s216 + $0x150] sm:$0xff] %v1197
        %1262 = vst [vmem:[%s216 + $0x158] sm:$0xff] %v1198
        %1263 = vst [vmem:[%s216 + $0x160] sm:$0xff] %v1199
        %1264 = vst [vmem:[%s216 + $0x168] sm:$0xff] %v1200
        %1265 = vst [vmem:[%s216 + $0x170] sm:$0xff] %v1201
        %1266 = vst [vmem:[%s216 + $0x178] sm:$0xff] %v1202
        %1267 = vst [vmem:[%s216 + $0x180] sm:$0xff] %v1203
        %1268 = vst [vmem:[%s216 + $0x188] sm:$0xff] %v1204
        %1269 = vst [vmem:[%s216 + $0x190] sm:$0xff] %v1205
        %1270 = vst [vmem:[%s216 + $0x198] sm:$0xff] %v1206
        %1271 = vst [vmem:[%s216 + $0x1a0] sm:$0xff] %v1207
        %1272 = vst [vmem:[%s216 + $0x1a8] sm:$0xff] %v1208
        %1273 = vst [vmem:[%s216 + $0x1b0] sm:$0xff] %v1209
        %1274 = vst [vmem:[%s216 + $0x1b8] sm:$0xff] %v1210
        %1275 = vst [vmem:[%s216 + $0x1c0] sm:$0xff] %v1211
        %1276 = vst [vmem:[%s216 + $0x1c8] sm:$0xff] %v1212
        %1277 = vst [vmem:[%s216 + $0x1d0] sm:$0xff] %v1213
        %1278 = vst [vmem:[%s216 + $0x1d8] sm:$0xff] %v1214
        %1279 = vst [vmem:[%s216 + $0x1e0] sm:$0xff] %v1215
        %1280 = vst [vmem:[%s216 + $0x1e8] sm:$0xff] %v1216
        %1281 = vst [vmem:[%s216 + $0x1f0] sm:$0xff] %v1217
        %1282 = vst [vmem:[%s216 + $0x1f8] sm:$0xff] %v1218
      $region36: #{dcsa_forward.29} parent=27 // pred_fallthru
        _
      %s1283 = smul.u32 64, %s18
      %p1284 = scmp.lt.s32.totalorder %s1283, 1087
      %s1285 = scalar_select %p1284, %s1283, 1087
      %p1286 = scmp.lt.s32.totalorder %s19, 0
      %s1287 = scalar_select %p1286, %s19, 0
      %s1288 = sadd.s32 %s1287, %s1285
      %s1289 = smul.addr %s1288, 8
      %s1290 = scalar_lea.vmem %s2, %s1289
      // Predicated region
      $region37: #{dcsa_forward.29} parent=27 // pred_check
        %p1291 = pneg %p108
      $region38: #{dcsa_forward.29} parent=27 // pred_check_branch
        %1293 = sbr.rel (%p1291) target = $region40
      $region39: #{dcsa_forward.29} parent=27 // pred_region
        %s1294 = smul.u32 64, %s18
      $region40: #{dcsa_forward.29} parent=27 // pred_fallthru
        _
    $region28: #{dcsa_forward.29} parent=5 // pred_fallthru
      _
    %p1295 = scmp.le.s32.totalorder 2, %s8
    // Predicated region
    $region41: #{dcsa_forward.29} parent=5 // pred_check
      %p1296 = pneg %p1295
    $region42: #{dcsa_forward.29} parent=5 // pred_check_branch
      %1298 = sbr.rel (%p1296) target = $region44
    $region43: #{dcsa_forward.29} parent=5 // pred_region
      %s1299 = ssub.s32 %s8, 2
      // Predicated region
      $region45: #{dcsa_forward.29} parent=43 // pred_check
        %p1300 = pneg %p114
      $region46: #{dcsa_forward.29} parent=43 // pred_check_branch
        %1302 = sbr.rel (%p1300) target = $region48
      $region47: #{dcsa_forward.29} parent=43 // pred_region
        %s1303 = smul.u32 64, %s21
        %p1304 = scmp.lt.s32.totalorder %s1303, 1087
        %s1305 = scalar_select %p1304, %s1303, 1087
        %p1306 = scmp.lt.s32.totalorder %s22, 0
        %s1307 = scalar_select %p1306, %s22, 0
        %s1308 = sadd.s32 %s1307, %s1305
        %s1309 = smul.addr %s1308, 8
        %s1310 = scalar_lea.vmem %s2, %s1309
      $region48: #{dcsa_forward.29} parent=43 // pred_fallthru
        _
    $region44: #{dcsa_forward.29} parent=5 // pred_fallthru
      _
  $region6: #{dcsa_forward.29} parent=0 // loop_footer
    %s12 = sadd.s32 1, %s8
  $region7: #{dcsa_forward.29} parent=0 // loop_footer_branch
    %7 = sbr.rel target = $region3
  $region8: #{dcsa_forward.29} parent=0 // loop_exit
    _

// kernel: dcsa_forward.28
$region0: #{dcsa_forward.28}
  #allocation0 [shape = 'u32[]', space=smem, size = 0x4, offset = 0x4, fixed_abs, tag = 'smem constant byte address 0x4 - core index']
  #allocation1 [shape = 'u32[144,128]{1,0:T(1,128)}', space=vmem, size = 0x12000, scoped, tag = 'internal scratch']
  #allocation2 [shape = 'f32[1,4096]{1,0:T(1,128)}', space=vmem, size = 0x4000, scoped, tag = 'scratch operand']
  %s0 = inlined_call_operand.vmem [shape: f32[1,2], index: 0, kind: input, shape index: {}]
  %s1 = inlined_call_operand.vmem [shape: f32[2,4096,16], index: 1, kind: input, shape index: {}]
  %s2 = inlined_call_operand.vmem [shape: f32[2,16,4096], index: 2, kind: input, shape index: {}]
  %s3 = inlined_call_operand.vmem [shape: f32[1,16], index: 3, kind: input, shape index: {}]
  %s4 = inlined_call_operand.vmem [shape: f32[16,1], index: 4, kind: input, shape index: {}]
  %s5 = inlined_call_operand.hbm [shape: bf16[2,4096,4096], index: 5, kind: output, shape index: {}]
  %s6 = sld [smem:[#allocation0]]
  $region60: #{dcsa_forward.28} parent=0
    _
  %s8 = ssub.s32 1, %s6
  %s9 = scalar_select 0, %s8, %s6
  $region1: #{dcsa_forward.28} parent=0
    #allocation3 [shape = 'u8[8388608]{0}', space=vmem, size = 0x800000, scoped, tag = 'output window, operand 0']
    #allocation4 [shape = 's32[2]{0}', space=sflag, size = 0x8, scoped, tag = 'scoped memory for dcsa_forward.28']
    %10 = vsyncpa [#allocation4], 0
    %s11 = scalar_lea.sflag [#allocation4], 1
    %12 = vsyncpa %s11, 0
    loop: start=0, step=1, limit=18
    $region2: #{dcsa_forward.28} parent=1 // loop_pre_header
      _
    $region3: #{dcsa_forward.28} parent=1 // loop_header
      %s14 = sphi 0, %s18
      %p15 = scmp.ge.s32.totalorder %s14, 18
      %s21 = sphi 0, %s33
      %s22 = sphi 0, %s29
      %s23 = sphi 0, %s21
      %s24 = sphi 0, %s22
      %s25 = sphi 0, %s23
      %s26 = sphi 0, %s24
      %s34 = sphi 0, %s34
      %s36 = sphi 0, %s34
      %s37 = sphi 0, %s36
      %s51 = sphi 0, %s37
      %s59 = sphi 0, %s61
      %s62 = sphi 0, %s59
      %s63 = sphi 0, %s62
      %s79 = sphi 0, %s63
      %s85 = sphi 0, %s87
      %s88 = sphi 0, %s85
      %s89 = sphi 0, %s88
      %s105 = sphi 0, %s89
      %s109 = sphi 0, %s109
      %s111 = sphi 0, %s109
      %s112 = sphi 0, %s111
      %s126 = sphi 0, %s112
      %s130 = sphi 0, %s130
      %s132 = sphi 0, %s130
      %s133 = sphi 0, %s132
      %s147 = sphi 0, %s133
      %s155 = sphi 0, %s157
      %s158 = sphi 0, %s155
      %s159 = sphi 0, %s158
      %s175 = sphi 0, %s159
    $region4: #{dcsa_forward.28} parent=1 // loop_header_branch
      %17 = sbr.rel (%p15) target = $region8
    $region5: #{dcsa_forward.28} parent=1 // loop_body
      %s19 = ssub.s32 %s14, 1
      %s20 = ssub.s32 %s14, 2
      %s27 = sadd.s32 1, %s22
      %p28 = scmp.ge.s32.totalorder %s27, 8
      %s29 = scalar_select %p28, 0, %s27
      %s30 = sadd.s32 1, %s21
      %s31 = scalar_select %p28, %s30, %s21
      %p32 = scmp.ge.s32.totalorder %s31, 2
      %s33 = scalar_select %p32, 0, %s31
      %s35 = sadd.s32 %s34, 1
      %p38 = scmp.eq.s32.totalorder %s14, 15
      %p39 = scmp.ne.s32.totalorder %s34, %s36
      %p40 = scmp.eq.s32.totalorder %s14, 0
      %p41 = por %p39, %p40
      %p42 = scmp.ne.s32.totalorder %s34, %s36
      %p43 = scmp.eq.s32.totalorder %s19, 15
      %p44 = por %p42, %p43
      %p45 = scmp.ne.s32.totalorder %s36, %s37
      %p46 = scmp.eq.s32.totalorder %s19, 0
      %p47 = por %p45, %p46
      %p48 = scmp.ne.s32.totalorder %s36, %s37
      %p49 = scmp.eq.s32.totalorder %s20, 15
      %p50 = por %p48, %p49
      %p52 = scmp.ne.s32.totalorder %s37, %s51
      %p53 = scmp.eq.s32.totalorder %s20, 0
      %p54 = por %p52, %p53
      %s55 = ssub.s32 %s21, %s33
      %s56 = ssub.s32 %s22, %s29
      %s57 = sor.u32 %s55, %s56
      %p58 = scmp.eq.s32.totalorder %s57, 0
      %s60 = sadd.s32 %s59, 1
      %s61 = scalar_select %p58, %s59, %s60
      %p64 = pneg %p58
      %p65 = scmp.eq.s32.totalorder %s14, 15
      %p66 = por %p64, %p65
      %p67 = scmp.ne.s32.totalorder %s59, %s62
      %p68 = scmp.eq.s32.totalorder %s14, 0
      %p69 = por %p67, %p68
      %p70 = scmp.ne.s32.totalorder %s59, %s62
      %p71 = scmp.eq.s32.totalorder %s19, 15
      %p72 = por %p70, %p71
      %p73 = scmp.ne.s32.totalorder %s62, %s63
      %p74 = scmp.eq.s32.totalorder %s19, 0
      %p75 = por %p73, %p74
      %p76 = scmp.ne.s32.totalorder %s62, %s63
      %p77 = scmp.eq.s32.totalorder %s20, 15
      %p78 = por %p76, %p77
      %p80 = scmp.ne.s32.totalorder %s63, %s79
      %p81 = scmp.eq.s32.totalorder %s20, 0
      %p82 = por %p80, %p81
      %s83 = ssub.s32 %s21, %s33
      %p84 = scmp.eq.s32.totalorder %s83, 0
      %s86 = sadd.s32 %s85, 1
      %s87 = scalar_select %p84, %s85, %s86
      %p90 = pneg %p84
      %p91 = scmp.eq.s32.totalorder %s14, 15
      %p92 = por %p90, %p91
      %p93 = scmp.ne.s32.totalorder %s85, %s88
      %p94 = scmp.eq.s32.totalorder %s14, 0
      %p95 = por %p93, %p94
      %p96 = scmp.ne.s32.totalorder %s85, %s88
      %p97 = scmp.eq.s32.totalorder %s19, 15
      %p98 = por %p96, %p97
      %p99 = scmp.ne.s32.totalorder %s88, %s89
      %p100 = scmp.eq.s32.totalorder %s19, 0
      %p101 = por %p99, %p100
      %p102 = scmp.ne.s32.totalorder %s88, %s89
      %p103 = scmp.eq.s32.totalorder %s20, 15
      %p104 = por %p102, %p103
      %p106 = scmp.ne.s32.totalorder %s89, %s105
      %p107 = scmp.eq.s32.totalorder %s20, 0
      %p108 = por %p106, %p107
      %s110 = sadd.s32 %s109, 1
      %p113 = scmp.eq.s32.totalorder %s14, 15
      %p114 = scmp.ne.s32.totalorder %s109, %s111
      %p115 = scmp.eq.s32.totalorder %s14, 0
      %p116 = por %p114, %p115
      %p117 = scmp.ne.s32.totalorder %s109, %s111
      %p118 = scmp.eq.s32.totalorder %s19, 15
      %p119 = por %p117, %p118
      %p120 = scmp.ne.s32.totalorder %s111, %s112
      %p121 = scmp.eq.s32.totalorder %s19, 0
      %p122 = por %p120, %p121
      %p123 = scmp.ne.s32.totalorder %s111, %s112
      %p124 = scmp.eq.s32.totalorder %s20, 15
      %p125 = por %p123, %p124
      %p127 = scmp.ne.s32.totalorder %s112, %s126
      %p128 = scmp.eq.s32.totalorder %s20, 0
      %p129 = por %p127, %p128
      %s131 = sadd.s32 %s130, 1
      %p134 = scmp.eq.s32.totalorder %s14, 15
      %p135 = scmp.ne.s32.totalorder %s130, %s132
      %p136 = scmp.eq.s32.totalorder %s14, 0
      %p137 = por %p135, %p136
      %p138 = scmp.ne.s32.totalorder %s130, %s132
      %p139 = scmp.eq.s32.totalorder %s19, 15
      %p140 = por %p138, %p139
      %p141 = scmp.ne.s32.totalorder %s132, %s133
      %p142 = scmp.eq.s32.totalorder %s19, 0
      %p143 = por %p141, %p142
      %p144 = scmp.ne.s32.totalorder %s132, %s133
      %p145 = scmp.eq.s32.totalorder %s20, 15
      %p146 = por %p144, %p145
      %p148 = scmp.ne.s32.totalorder %s133, %s147
      %p149 = scmp.eq.s32.totalorder %s20, 0
      %p150 = por %p148, %p149
      %s151 = ssub.s32 %s21, %s33
      %s152 = ssub.s32 %s22, %s29
      %s153 = sor.u32 %s151, %s152
      %p154 = scmp.eq.s32.totalorder %s153, 0
      %s156 = sadd.s32 %s155, 1
      %s157 = scalar_select %p154, %s155, %s156
      %p160 = pneg %p154
      %p161 = scmp.eq.s32.totalorder %s14, 15
      %p162 = por %p160, %p161
      %p163 = scmp.ne.s32.totalorder %s155, %s158
      %p164 = scmp.eq.s32.totalorder %s14, 0
      %p165 = por %p163, %p164
      %p166 = scmp.ne.s32.totalorder %s155, %s158
      %p167 = scmp.eq.s32.totalorder %s19, 15
      %p168 = por %p166, %p167
      %p169 = scmp.ne.s32.totalorder %s158, %s159
      %p170 = scmp.eq.s32.totalorder %s19, 0
      %p171 = por %p169, %p170
      %p172 = scmp.ne.s32.totalorder %s158, %s159
      %p173 = scmp.eq.s32.totalorder %s20, 15
      %p174 = por %p172, %p173
      %p176 = scmp.ne.s32.totalorder %s159, %s175
      %p177 = scmp.eq.s32.totalorder %s20, 0
      %p178 = por %p176, %p177
      %p179 = scmp.le.s32.totalorder 1, %s14
      %p180 = scmp.lt.s32.totalorder %s14, 17
      %p181 = pnand %p179, %p180
      %p182 = pneg %p181
      // Predicated region
      $region9: #{dcsa_forward.28} parent=5 // pred_check
        _
      $region10: #{dcsa_forward.28} parent=5 // pred_check_branch
        %184 = sbr.rel (%p181) target = $region12
      $region11: #{dcsa_forward.28} parent=5 // pred_region
        %s185 = ssub.s32 %s14, 1
        // Predicated region
        $region13: #{dcsa_forward.28} parent=11 // pred_check
          %p186 = pneg %p47
        $region14: #{dcsa_forward.28} parent=11 // pred_check_branch
          %188 = sbr.rel (%p186) target = $region16
        $region15: #{dcsa_forward.28} parent=11 // pred_region
          _
        $region16: #{dcsa_forward.28} parent=11 // pred_fallthru
          _
        // Predicated region
        $region17: #{dcsa_forward.28} parent=11 // pred_check
          %p189 = pneg %p122
        $region18: #{dcsa_forward.28} parent=11 // pred_check_branch
          %191 = sbr.rel (%p189) target = $region20
        $region19: #{dcsa_forward.28} parent=11 // pred_region
          _
        $region20: #{dcsa_forward.28} parent=11 // pred_fallthru
          _
        // Predicated region
        $region21: #{dcsa_forward.28} parent=11 // pred_check
          %p192 = pneg %p143
        $region22: #{dcsa_forward.28} parent=11 // pred_check_branch
          %194 = sbr.rel (%p192) target = $region24
        $region23: #{dcsa_forward.28} parent=11 // pred_region
          _
        $region24: #{dcsa_forward.28} parent=11 // pred_fallthru
          _
      $region12: #{dcsa_forward.28} parent=5 // pred_fallthru
        _
      %p195 = scmp.lt.s32.totalorder %s14, 16
      // Predicated region
      $region25: #{dcsa_forward.28} parent=5 // pred_check
        %p196 = pneg %p195
      $region26: #{dcsa_forward.28} parent=5 // pred_check_branch
        %198 = sbr.rel (%p196) target = $region28
      $region27: #{dcsa_forward.28} parent=5 // pred_region
        // Predicated region
        $region29: #{dcsa_forward.28} parent=27 // pred_check
          %p199 = pneg %p69
        $region30: #{dcsa_forward.28} parent=27 // pred_check_branch
          %201 = sbr.rel (%p199) target = $region32
        $region31: #{dcsa_forward.28} parent=27 // pred_region
          %s202 = smul.u32 64, %s22
          %p203 = scmp.lt.s32.totalorder %s21, 1
          %s204 = scalar_select %p203, %s21, 1
          %p205 = scmp.lt.s32.totalorder %s202, 511
          %s206 = scalar_select %p205, %s202, 511
          %s207 = smul.addr %s204, 512
          %s208 = sadd.s32 %s206, %s207
          %s209 = smul.addr %s208, 8
          %s210 = scalar_lea.vmem %s1, %s209
          %s211 = smul.u32 64, %s22
        $region32: #{dcsa_forward.28} parent=27 // pred_fallthru
          _
        // Predicated region
        $region33: #{dcsa_forward.28} parent=27 // pred_check
          %p212 = pneg %p95
        $region34: #{dcsa_forward.28} parent=27 // pred_check_branch
          %214 = sbr.rel (%p212) target = $region36
        $region35: #{dcsa_forward.28} parent=27 // pred_region
          %p215 = scmp.lt.s32.totalorder %s21, 1
          %s216 = scalar_select %p215, %s21, 1
          %s217 = smul.addr %s216, 64
          %s218 = smul.addr %s217, 8
          %s219 = scalar_lea.vmem %s2, %s218
        $region36: #{dcsa_forward.28} parent=27 // pred_fallthru
          _
      $region28: #{dcsa_forward.28} parent=5 // pred_fallthru
        _
      %p220 = scmp.le.s32.totalorder 1, %s14
      %p221 = scmp.lt.s32.totalorder %s14, 17
      %p222 = pnand %p220, %p221
      %p223 = pneg %p222
      // Predicated region
      $region37: #{dcsa_forward.28} parent=5 // pred_check
        _
      $region38: #{dcsa_forward.28} parent=5 // pred_check_branch
        %225 = sbr.rel (%p222) target = $region40
      $region39: #{dcsa_forward.28} parent=5 // pred_region
        %s226 = ssub.s32 %s14, 1
        %p227 = pneg %p47
        %p228 = pneg %p44
        %s229 = smul.u32 64, %s24
        %p230 = scmp.lt.s32.totalorder %s23, 1
        %s231 = scalar_select %p230, %s23, 1
        %p232 = scmp.lt.s32.totalorder %s229, 511
        %s233 = scalar_select %p232, %s229, 511
        %s234 = smul.addr %s231, 512
        %s235 = sadd.s32 %s233, %s234
        %s236 = smul.addr %s235, 8
        %s237 = scalar_lea.vmem %s1, %s236
        %p238 = pneg %p75
        %p239 = pneg %p72
        %p240 = scmp.lt.s32.totalorder %s23, 1
        %s241 = scalar_select %p240, %s23, 1
        %s242 = smul.addr %s241, 64
        %s243 = smul.addr %s242, 8
        %s244 = scalar_lea.vmem %s2, %s243
        %p245 = pneg %p101
        %p246 = pneg %p98
        %p247 = pneg %p122
        %p248 = pneg %p119
        %p249 = pneg %p143
        %p250 = pneg %p140
        %p251 = pneg %p171
        %p252 = pneg %p168
        %s253 = sand.u32 %s158, 1
        %s254 = scalar_lea.sflag [#allocation4], %s253
        %s255 = sand.u32 %s158, 1
        %s256 = smul.addr %s255, 8192
        %s257 = scalar_lea.vmem [#allocation3], %s256
        %s258 = smul.u32 64, %s24
        %p259 = scmp.lt.s32.totalorder %s23, 1
        %s260 = scalar_select %p259, %s23, 1
        %p261 = scmp.lt.s32.totalorder %s258, 511
        %s262 = scalar_select %p261, %s258, 511
        %s263 = smul.addr %s260, 512
        %s264 = sadd.s32 %s262, %s263
        %s265 = smul.addr %s264, 8
        %s266 = scalar_lea.vmem %s1, %s265
        %s267 = smul.u32 64, %s24
        %p268 = scmp.lt.s32.totalorder %s23, 1
        %s269 = scalar_select %p268, %s23, 1
        %s270 = smul.addr %s269, 64
        %s271 = smul.addr %s270, 8
        %s272 = scalar_lea.vmem %s2, %s271
        %s273 = smul.u32 64, %s24
        %v274 = vld [vmem:[%s0] sm:$0x1]
        %s275 = vtos %v274
        %277 = vrot.lane.b32.xlu0 %v274, 127
        %v278 = vpop.permute.xlu0 %277
        %s280 = vtos %v278
        %v281 = vld [vmem:[%s272] sm:$0xff]
        %v282 = vld [vmem:[%s272 + $0x8] sm:$0xff]
        %v283 = vld [vmem:[%s272 + $0x10] sm:$0xff]
        %v284 = vld [vmem:[%s272 + $0x18] sm:$0xff]
        %v285 = vld [vmem:[%s272 + $0x20] sm:$0xff]
        %v286 = vld [vmem:[%s272 + $0x28] sm:$0xff]
        %v287 = vld [vmem:[%s272 + $0x30] sm:$0xff]
        %v288 = vld [vmem:[%s272 + $0x38] sm:$0xff]
        %v289 = vld [vmem:[%s272 + $0x40] sm:$0xff]
        %v290 = vld [vmem:[%s272 + $0x48] sm:$0xff]
        %v291 = vld [vmem:[%s272 + $0x50] sm:$0xff]
        %v292 = vld [vmem:[%s272 + $0x58] sm:$0xff]
        %v293 = vld [vmem:[%s272 + $0x60] sm:$0xff]
        %v294 = vld [vmem:[%s272 + $0x68] sm:$0xff]
        %v295 = vld [vmem:[%s272 + $0x70] sm:$0xff]
        %v296 = vld [vmem:[%s272 + $0x78] sm:$0xff]
        %v297 = vld [vmem:[%s272 + $0x80] sm:$0xff]
        %v298 = vld [vmem:[%s272 + $0x88] sm:$0xff]
        %v299 = vld [vmem:[%s272 + $0x90] sm:$0xff]
        %v300 = vld [vmem:[%s272 + $0x98] sm:$0xff]
        %v301 = vld [vmem:[%s272 + $0xa0] sm:$0xff]
        %v302 = vld [vmem:[%s272 + $0xa8] sm:$0xff]
        %v303 = vld [vmem:[%s272 + $0xb0] sm:$0xff]
        %v304 = vld [vmem:[%s272 + $0xb8] sm:$0xff]
        %v305 = vld [vmem:[%s272 + $0xc0] sm:$0xff]
        %v306 = vld [vmem:[%s272 + $0xc8] sm:$0xff]
        %v307 = vld [vmem:[%s272 + $0xd0] sm:$0xff]
        %v308 = vld [vmem:[%s272 + $0xd8] sm:$0xff]
        %v309 = vld [vmem:[%s272 + $0xe0] sm:$0xff]
        %v310 = vld [vmem:[%s272 + $0xe8] sm:$0xff]
        %v311 = vld [vmem:[%s272 + $0xf0] sm:$0xff]
        %v312 = vld [vmem:[%s272 + $0xf8] sm:$0xff]
        %v313 = vld [vmem:[%s272 + $0x100] sm:$0xff]
        %v314 = vld [vmem:[%s272 + $0x108] sm:$0xff]
        %v315 = vld [vmem:[%s272 + $0x110] sm:$0xff]
        %v316 = vld [vmem:[%s272 + $0x118] sm:$0xff]
        %v317 = vld [vmem:[%s272 + $0x120] sm:$0xff]
        %v318 = vld [vmem:[%s272 + $0x128] sm:$0xff]
        %v319 = vld [vmem:[%s272 + $0x130] sm:$0xff]
        %v320 = vld [vmem:[%s272 + $0x138] sm:$0xff]
        %v321 = vld [vmem:[%s272 + $0x140] sm:$0xff]
        %v322 = vld [vmem:[%s272 + $0x148] sm:$0xff]
        %v323 = vld [vmem:[%s272 + $0x150] sm:$0xff]
        %v324 = vld [vmem:[%s272 + $0x158] sm:$0xff]
        %v325 = vld [vmem:[%s272 + $0x160] sm:$0xff]
        %v326 = vld [vmem:[%s272 + $0x168] sm:$0xff]
        %v327 = vld [vmem:[%s272 + $0x170] sm:$0xff]
        %v328 = vld [vmem:[%s272 + $0x178] sm:$0xff]
        %v329 = vld [vmem:[%s272 + $0x180] sm:$0xff]
        %v330 = vld [vmem:[%s272 + $0x188] sm:$0xff]
        %v331 = vld [vmem:[%s272 + $0x190] sm:$0xff]
        %v332 = vld [vmem:[%s272 + $0x198] sm:$0xff]
        %v333 = vld [vmem:[%s272 + $0x1a0] sm:$0xff]
        %v334 = vld [vmem:[%s272 + $0x1a8] sm:$0xff]
        %v335 = vld [vmem:[%s272 + $0x1b0] sm:$0xff]
        %v336 = vld [vmem:[%s272 + $0x1b8] sm:$0xff]
        %v337 = vld [vmem:[%s272 + $0x1c0] sm:$0xff]
        %v338 = vld [vmem:[%s272 + $0x1c8] sm:$0xff]
        %v339 = vld [vmem:[%s272 + $0x1d0] sm:$0xff]
        %v340 = vld [vmem:[%s272 + $0x1d8] sm:$0xff]
        %v341 = vld [vmem:[%s272 + $0x1e0] sm:$0xff]
        %v342 = vld [vmem:[%s272 + $0x1e8] sm:$0xff]
        %v343 = vld [vmem:[%s272 + $0x1f0] sm:$0xff]
        %v344 = vld [vmem:[%s272 + $0x1f8] sm:$0xff]
        %v345 = vld [vmem:[%s4] sm:$0xff]
        %v346 = vld [vmem:[%s4 + $0x8] sm:$0xff]
        %348 = vset.pattern.permute.xlu0 0
        %349 = vperm.xlu0 %348, %v345
        %v350 = vpop.permute.xlu0 %349
        %353 = vset.pattern.permute.xlu0 0
        %354 = vperm.xlu0 %353, %v346
        %v355 = vpop.permute.xlu0 %354
        %v357 = vmul.f32 %v281, %v350
        %v358 = vmul.f32 %v282, %v350
        %v359 = vmul.f32 %v283, %v350
        %v360 = vmul.f32 %v284, %v350
        %v361 = vmul.f32 %v285, %v350
        %v362 = vmul.f32 %v286, %v350
        %v363 = vmul.f32 %v287, %v350
        %v364 = vmul.f32 %v288, %v350
        %v365 = vmul.f32 %v289, %v350
        %v366 = vmul.f32 %v290, %v350
        %v367 = vmul.f32 %v291, %v350
        %v368 = vmul.f32 %v292, %v350
        %v369 = vmul.f32 %v293, %v350
        %v370 = vmul.f32 %v294, %v350
        %v371 = vmul.f32 %v295, %v350
        %v372 = vmul.f32 %v296, %v350
        %v373 = vmul.f32 %v297, %v350
        %v374 = vmul.f32 %v298, %v350
        %v375 = vmul.f32 %v299, %v350
        %v376 = vmul.f32 %v300, %v350
        %v377 = vmul.f32 %v301, %v350
        %v378 = vmul.f32 %v302, %v350
        %v379 = vmul.f32 %v303, %v350
        %v380 = vmul.f32 %v304, %v350
        %v381 = vmul.f32 %v305, %v350
        %v382 = vmul.f32 %v306, %v350
        %v383 = vmul.f32 %v307, %v350
        %v384 = vmul.f32 %v308, %v350
        %v385 = vmul.f32 %v309, %v350
        %v386 = vmul.f32 %v310, %v350
        %v387 = vmul.f32 %v311, %v350
        %v388 = vmul.f32 %v312, %v350
        %v389 = vmul.f32 %v313, %v355
        %v390 = vmul.f32 %v314, %v355
        %v391 = vmul.f32 %v315, %v355
        %v392 = vmul.f32 %v316, %v355
        %v393 = vmul.f32 %v317, %v355
        %v394 = vmul.f32 %v318, %v355
        %v395 = vmul.f32 %v319, %v355
        %v396 = vmul.f32 %v320, %v355
        %v397 = vmul.f32 %v321, %v355
        %v398 = vmul.f32 %v322, %v355
        %v399 = vmul.f32 %v323, %v355
        %v400 = vmul.f32 %v324, %v355
        %v401 = vmul.f32 %v325, %v355
        %v402 = vmul.f32 %v326, %v355
        %v403 = vmul.f32 %v327, %v355
        %v404 = vmul.f32 %v328, %v355
        %v405 = vmul.f32 %v329, %v355
        %v406 = vmul.f32 %v330, %v355
        %v407 = vmul.f32 %v331, %v355
        %v408 = vmul.f32 %v332, %v355
        %v409 = vmul.f32 %v333, %v355
        %v410 = vmul.f32 %v334, %v355
        %v411 = vmul.f32 %v335, %v355
        %v412 = vmul.f32 %v336, %v355
        %v413 = vmul.f32 %v337, %v355
        %v414 = vmul.f32 %v338, %v355
        %v415 = vmul.f32 %v339, %v355
        %v416 = vmul.f32 %v340, %v355
        %v417 = vmul.f32 %v341, %v355
        %v418 = vmul.f32 %v342, %v355
        %v419 = vmul.f32 %v343, %v355
        %v420 = vmul.f32 %v344, %v355
        %v421 = vadd.f32 %v357, %v389
        %v422 = vrot.slane %v421, 4
        %v423 = vadd.f32 %v421, %v422
        %v424 = vrot.slane %v423, 2
        %v425 = vadd.f32 %v423, %v424
        %v426 = vrot.slane %v425, 1
        %v427 = vadd.f32 %v425, %v426
        %v428 = vadd.f32 %v358, %v390
        %v429 = vrot.slane %v428, 4
        %v430 = vadd.f32 %v428, %v429
        %v431 = vrot.slane %v430, 2
        %v432 = vadd.f32 %v430, %v431
        %v433 = vrot.slane %v432, 1
        %v434 = vadd.f32 %v432, %v433
        %v435 = vadd.f32 %v359, %v391
        %v436 = vrot.slane %v435, 4
        %v437 = vadd.f32 %v435, %v436
        %v438 = vrot.slane %v437, 2
        %v439 = vadd.f32 %v437, %v438
        %v440 = vrot.slane %v439, 1
        %v441 = vadd.f32 %v439, %v440
        %v442 = vadd.f32 %v360, %v392
        %v443 = vrot.slane %v442, 4
        %v444 = vadd.f32 %v442, %v443
        %v445 = vrot.slane %v444, 2
        %v446 = vadd.f32 %v444, %v445
        %v447 = vrot.slane %v446, 1
        %v448 = vadd.f32 %v446, %v447
        %v449 = vadd.f32 %v361, %v393
        %v450 = vrot.slane %v449, 4
        %v451 = vadd.f32 %v449, %v450
        %v452 = vrot.slane %v451, 2
        %v453 = vadd.f32 %v451, %v452
        %v454 = vrot.slane %v453, 1
        %v455 = vadd.f32 %v453, %v454
        %v456 = vadd.f32 %v362, %v394
        %v457 = vrot.slane %v456, 4
        %v458 = vadd.f32 %v456, %v457
        %v459 = vrot.slane %v458, 2
        %v460 = vadd.f32 %v458, %v459
        %v461 = vrot.slane %v460, 1
        %v462 = vadd.f32 %v460, %v461
        %v463 = vadd.f32 %v363, %v395
        %v464 = vrot.slane %v463, 4
        %v465 = vadd.f32 %v463, %v464
        %v466 = vrot.slane %v465, 2
        %v467 = vadd.f32 %v465, %v466
        %v468 = vrot.slane %v467, 1
        %v469 = vadd.f32 %v467, %v468
        %v470 = vadd.f32 %v364, %v396
        %v471 = vrot.slane %v470, 4
        %v472 = vadd.f32 %v470, %v471
        %v473 = vrot.slane %v472, 2
        %v474 = vadd.f32 %v472, %v473
        %v475 = vrot.slane %v474, 1
        %v476 = vadd.f32 %v474, %v475
        %v477 = vadd.f32 %v365, %v397
        %v478 = vrot.slane %v477, 4
        %v479 = vadd.f32 %v477, %v478
        %v480 = vrot.slane %v479, 2
        %v481 = vadd.f32 %v479, %v480
        %v482 = vrot.slane %v481, 1
        %v483 = vadd.f32 %v481, %v482
        %v484 = vadd.f32 %v366, %v398
        %v485 = vrot.slane %v484, 4
        %v486 = vadd.f32 %v484, %v485
        %v487 = vrot.slane %v486, 2
        %v488 = vadd.f32 %v486, %v487
        %v489 = vrot.slane %v488, 1
        %v490 = vadd.f32 %v488, %v489
        %v491 = vadd.f32 %v367, %v399
        %v492 = vrot.slane %v491, 4
        %v493 = vadd.f32 %v491, %v492
        %v494 = vrot.slane %v493, 2
        %v495 = vadd.f32 %v493, %v494
        %v496 = vrot.slane %v495, 1
        %v497 = vadd.f32 %v495, %v496
        %v498 = vadd.f32 %v368, %v400
        %v499 = vrot.slane %v498, 4
        %v500 = vadd.f32 %v498, %v499
        %v501 = vrot.slane %v500, 2
        %v502 = vadd.f32 %v500, %v501
        %v503 = vrot.slane %v502, 1
        %v504 = vadd.f32 %v502, %v503
        %v505 = vadd.f32 %v369, %v401
        %v506 = vrot.slane %v505, 4
        %v507 = vadd.f32 %v505, %v506
        %v508 = vrot.slane %v507, 2
        %v509 = vadd.f32 %v507, %v508
        %v510 = vrot.slane %v509, 1
        %v511 = vadd.f32 %v509, %v510
        %v512 = vadd.f32 %v370, %v402
        %v513 = vrot.slane %v512, 4
        %v514 = vadd.f32 %v512, %v513
        %v515 = vrot.slane %v514, 2
        %v516 = vadd.f32 %v514, %v515
        %v517 = vrot.slane %v516, 1
        %v518 = vadd.f32 %v516, %v517
        %v519 = vadd.f32 %v371, %v403
        %v520 = vrot.slane %v519, 4
        %v521 = vadd.f32 %v519, %v520
        %v522 = vrot.slane %v521, 2
        %v523 = vadd.f32 %v521, %v522
        %v524 = vrot.slane %v523, 1
        %v525 = vadd.f32 %v523, %v524
        %v526 = vadd.f32 %v372, %v404
        %v527 = vrot.slane %v526, 4
        %v528 = vadd.f32 %v526, %v527
        %v529 = vrot.slane %v528, 2
        %v530 = vadd.f32 %v528, %v529
        %v531 = vrot.slane %v530, 1
        %v532 = vadd.f32 %v530, %v531
        %v533 = vadd.f32 %v373, %v405
        %v534 = vrot.slane %v533, 4
        %v535 = vadd.f32 %v533, %v534
        %v536 = vrot.slane %v535, 2
        %v537 = vadd.f32 %v535, %v536
        %v538 = vrot.slane %v537, 1
        %v539 = vadd.f32 %v537, %v538
        %v540 = vadd.f32 %v374, %v406
        %v541 = vrot.slane %v540, 4
        %v542 = vadd.f32 %v540, %v541
        %v543 = vrot.slane %v542, 2
        %v544 = vadd.f32 %v542, %v543
        %v545 = vrot.slane %v544, 1
        %v546 = vadd.f32 %v544, %v545
        %v547 = vadd.f32 %v375, %v407
        %v548 = vrot.slane %v547, 4
        %v549 = vadd.f32 %v547, %v548
        %v550 = vrot.slane %v549, 2
        %v551 = vadd.f32 %v549, %v550
        %v552 = vrot.slane %v551, 1
        %v553 = vadd.f32 %v551, %v552
        %v554 = vadd.f32 %v376, %v408
        %v555 = vrot.slane %v554, 4
        %v556 = vadd.f32 %v554, %v555
        %v557 = vrot.slane %v556, 2
        %v558 = vadd.f32 %v556, %v557
        %v559 = vrot.slane %v558, 1
        %v560 = vadd.f32 %v558, %v559
        %v561 = vadd.f32 %v377, %v409
        %v562 = vrot.slane %v561, 4
        %v563 = vadd.f32 %v561, %v562
        %v564 = vrot.slane %v563, 2
        %v565 = vadd.f32 %v563, %v564
        %v566 = vrot.slane %v565, 1
        %v567 = vadd.f32 %v565, %v566
        %v568 = vadd.f32 %v378, %v410
        %v569 = vrot.slane %v568, 4
        %v570 = vadd.f32 %v568, %v569
        %v571 = vrot.slane %v570, 2
        %v572 = vadd.f32 %v570, %v571
        %v573 = vrot.slane %v572, 1
        %v574 = vadd.f32 %v572, %v573
        %v575 = vadd.f32 %v379, %v411
        %v576 = vrot.slane %v575, 4
        %v577 = vadd.f32 %v575, %v576
        %v578 = vrot.slane %v577, 2
        %v579 = vadd.f32 %v577, %v578
        %v580 = vrot.slane %v579, 1
        %v581 = vadd.f32 %v579, %v580
        %v582 = vadd.f32 %v380, %v412
        %v583 = vrot.slane %v582, 4
        %v584 = vadd.f32 %v582, %v583
        %v585 = vrot.slane %v584, 2
        %v586 = vadd.f32 %v584, %v585
        %v587 = vrot.slane %v586, 1
        %v588 = vadd.f32 %v586, %v587
        %v589 = vadd.f32 %v381, %v413
        %v590 = vrot.slane %v589, 4
        %v591 = vadd.f32 %v589, %v590
        %v592 = vrot.slane %v591, 2
        %v593 = vadd.f32 %v591, %v592
        %v594 = vrot.slane %v593, 1
        %v595 = vadd.f32 %v593, %v594
        %v596 = vadd.f32 %v382, %v414
        %v597 = vrot.slane %v596, 4
        %v598 = vadd.f32 %v596, %v597
        %v599 = vrot.slane %v598, 2
        %v600 = vadd.f32 %v598, %v599
        %v601 = vrot.slane %v600, 1
        %v602 = vadd.f32 %v600, %v601
        %v603 = vadd.f32 %v383, %v415
        %v604 = vrot.slane %v603, 4
        %v605 = vadd.f32 %v603, %v604
        %v606 = vrot.slane %v605, 2
        %v607 = vadd.f32 %v605, %v606
        %v608 = vrot.slane %v607, 1
        %v609 = vadd.f32 %v607, %v608
        %v610 = vadd.f32 %v384, %v416
        %v611 = vrot.slane %v610, 4
        %v612 = vadd.f32 %v610, %v611
        %v613 = vrot.slane %v612, 2
        %v614 = vadd.f32 %v612, %v613
        %v615 = vrot.slane %v614, 1
        %v616 = vadd.f32 %v614, %v615
        %v617 = vadd.f32 %v385, %v417
        %v618 = vrot.slane %v617, 4
        %v619 = vadd.f32 %v617, %v618
        %v620 = vrot.slane %v619, 2
        %v621 = vadd.f32 %v619, %v620
        %v622 = vrot.slane %v621, 1
        %v623 = vadd.f32 %v621, %v622
        %v624 = vadd.f32 %v386, %v418
        %v625 = vrot.slane %v624, 4
        %v626 = vadd.f32 %v624, %v625
        %v627 = vrot.slane %v626, 2
        %v628 = vadd.f32 %v626, %v627
        %v629 = vrot.slane %v628, 1
        %v630 = vadd.f32 %v628, %v629
        %v631 = vadd.f32 %v387, %v419
        %v632 = vrot.slane %v631, 4
        %v633 = vadd.f32 %v631, %v632
        %v634 = vrot.slane %v633, 2
        %v635 = vadd.f32 %v633, %v634
        %v636 = vrot.slane %v635, 1
        %v637 = vadd.f32 %v635, %v636
        %v638 = vadd.f32 %v388, %v420
        %v639 = vrot.slane %v638, 4
        %v640 = vadd.f32 %v638, %v639
        %v641 = vrot.slane %v640, 2
        %v642 = vadd.f32 %v640, %v641
        %v643 = vrot.slane %v642, 1
        %v644 = vadd.f32 %v642, %v643
        %v645 = vstv %s280
        %v646 = vadd.f32 %v427, %v645
        %v647 = vadd.f32 %v434, %v645
        %v648 = vadd.f32 %v441, %v645
        %v649 = vadd.f32 %v448, %v645
        %v650 = vadd.f32 %v455, %v645
        %v651 = vadd.f32 %v462, %v645
        %v652 = vadd.f32 %v469, %v645
        %v653 = vadd.f32 %v476, %v645
        %v654 = vadd.f32 %v483, %v645
        %v655 = vadd.f32 %v490, %v645
        %v656 = vadd.f32 %v497, %v645
        %v657 = vadd.f32 %v504, %v645
        %v658 = vadd.f32 %v511, %v645
        %v659 = vadd.f32 %v518, %v645
        %v660 = vadd.f32 %v525, %v645
        %v661 = vadd.f32 %v532, %v645
        %v662 = vadd.f32 %v539, %v645
        %v663 = vadd.f32 %v546, %v645
        %v664 = vadd.f32 %v553, %v645
        %v665 = vadd.f32 %v560, %v645
        %v666 = vadd.f32 %v567, %v645
        %v667 = vadd.f32 %v574, %v645
        %v668 = vadd.f32 %v581, %v645
        %v669 = vadd.f32 %v588, %v645
        %v670 = vadd.f32 %v595, %v645
        %v671 = vadd.f32 %v602, %v645
        %v672 = vadd.f32 %v609, %v645
        %v673 = vadd.f32 %v616, %v645
        %v674 = vadd.f32 %v623, %v645
        %v675 = vadd.f32 %v630, %v645
        %v676 = vadd.f32 %v637, %v645
        %v677 = vadd.f32 %v644, %v645
        %v710 = vcombine.low %v646, %v647
        %v711 = vcombine.low %v648, %v649
        %v712 = vcombine.low %v650, %v651
        %v713 = vcombine.low %v652, %v653
        %v715 = vunpack.c.l.s4 1966171168
        %v716 = vunpack.c.0.s8 %v715
        %v717 = vlaneseq
        %v718 = vshrl.u32 %v717, 7
        %v719 = vsub.s32 %v716, %v718
        %v720 = vrot.slane %v710, %v719
        %v722 = vunpack.c.l.s4 1966171168
        %v723 = vunpack.c.0.s8 %v722
        %v724 = vlaneseq
        %v725 = vshrl.u32 %v724, 7
        %v726 = vsub.s32 %v723, %v725
        %v727 = vrot.slane %v711, %v726
        %v729 = vunpack.c.l.s4 1966171168
        %v730 = vunpack.c.0.s8 %v729
        %v731 = vlaneseq
        %v732 = vshrl.u32 %v731, 7
        %v733 = vsub.s32 %v730, %v732
        %v734 = vrot.slane %v712, %v733
        %v736 = vunpack.c.l.s4 1966171168
        %v737 = vunpack.c.0.s8 %v736
        %v738 = vlaneseq
        %v739 = vshrl.u32 %v738, 7
        %v740 = vsub.s32 %v737, %v739
        %v741 = vrot.slane %v713, %v740
        %v742 = vcombine.low %v720, %v727
        %v743 = vcombine.low %v734, %v741
        %v745 = vunpack.c.l.s4 1966171168
        %v746 = vunpack.c.0.s8 %v745
        %v747 = vlaneseq
        %v748 = vshrl.u32 %v747, 7
        %v749 = vsub.s32 %v746, %v748
        %v750 = vrot.slane %v742, %v749
        %v752 = vunpack.c.l.s4 1966171168
        %v753 = vunpack.c.0.s8 %v752
        %v754 = vlaneseq
        %v755 = vshrl.u32 %v754, 7
        %v756 = vsub.s32 %v753, %v755
        %v757 = vrot.slane %v743, %v756
        %v758 = vcombine.low %v750, %v757
        %v759 = vcombine.low %v654, %v655
        %v760 = vcombine.low %v656, %v657
        %v761 = vcombine.low %v658, %v659
        %v762 = vcombine.low %v660, %v661
        %v764 = vunpack.c.l.s4 1966171168
        %v765 = vunpack.c.0.s8 %v764
        %v766 = vlaneseq
        %v767 = vshrl.u32 %v766, 7
        %v768 = vsub.s32 %v765, %v767
        %v769 = vrot.slane %v759, %v768
        %v771 = vunpack.c.l.s4 1966171168
        %v772 = vunpack.c.0.s8 %v771
        %v773 = vlaneseq
        %v774 = vshrl.u32 %v773, 7
        %v775 = vsub.s32 %v772, %v774
        %v776 = vrot.slane %v760, %v775
        %v778 = vunpack.c.l.s4 1966171168
        %v779 = vunpack.c.0.s8 %v778
        %v780 = vlaneseq
        %v781 = vshrl.u32 %v780, 7
        %v782 = vsub.s32 %v779, %v781
        %v783 = vrot.slane %v761, %v782
        %v785 = vunpack.c.l.s4 1966171168
        %v786 = vunpack.c.0.s8 %v785
        %v787 = vlaneseq
        %v788 = vshrl.u32 %v787, 7
        %v789 = vsub.s32 %v786, %v788
        %v790 = vrot.slane %v762, %v789
        %v791 = vcombine.low %v769, %v776
        %v792 = vcombine.low %v783, %v790
        %v794 = vunpack.c.l.s4 1966171168
        %v795 = vunpack.c.0.s8 %v794
        %v796 = vlaneseq
        %v797 = vshrl.u32 %v796, 7
        %v798 = vsub.s32 %v795, %v797
        %v799 = vrot.slane %v791, %v798
        %v801 = vunpack.c.l.s4 1966171168
        %v802 = vunpack.c.0.s8 %v801
        %v803 = vlaneseq
        %v804 = vshrl.u32 %v803, 7
        %v805 = vsub.s32 %v802, %v804
        %v806 = vrot.slane %v792, %v805
        %v807 = vcombine.low %v799, %v806
        %v808 = vcombine.low %v662, %v663
        %v809 = vcombine.low %v664, %v665
        %v810 = vcombine.low %v666, %v667
        %v811 = vcombine.low %v668, %v669
        %v813 = vunpack.c.l.s4 1966171168
        %v814 = vunpack.c.0.s8 %v813
        %v815 = vlaneseq
        %v816 = vshrl.u32 %v815, 7
        %v817 = vsub.s32 %v814, %v816
        %v818 = vrot.slane %v808, %v817
        %v820 = vunpack.c.l.s4 1966171168
        %v821 = vunpack.c.0.s8 %v820
        %v822 = vlaneseq
        %v823 = vshrl.u32 %v822, 7
        %v824 = vsub.s32 %v821, %v823
        %v825 = vrot.slane %v809, %v824
        %v827 = vunpack.c.l.s4 1966171168
        %v828 = vunpack.c.0.s8 %v827
        %v829 = vlaneseq
        %v830 = vshrl.u32 %v829, 7
        %v831 = vsub.s32 %v828, %v830
        %v832 = vrot.slane %v810, %v831
        %v834 = vunpack.c.l.s4 1966171168
        %v835 = vunpack.c.0.s8 %v834
        %v836 = vlaneseq
        %v837 = vshrl.u32 %v836, 7
        %v838 = vsub.s32 %v835, %v837
        %v839 = vrot.slane %v811, %v838
        %v840 = vcombine.low %v818, %v825
        %v841 = vcombine.low %v832, %v839
        %v843 = vunpack.c.l.s4 1966171168
        %v844 = vunpack.c.0.s8 %v843
        %v845 = vlaneseq
        %v846 = vshrl.u32 %v845, 7
        %v847 = vsub.s32 %v844, %v846
        %v848 = vrot.slane %v840, %v847
        %v850 = vunpack.c.l.s4 1966171168
        %v851 = vunpack.c.0.s8 %v850
        %v852 = vlaneseq
        %v853 = vshrl.u32 %v852, 7
        %v854 = vsub.s32 %v851, %v853
        %v855 = vrot.slane %v841, %v854
        %v856 = vcombine.low %v848, %v855
        %v857 = vcombine.low %v670, %v671
        %v858 = vcombine.low %v672, %v673
        %v859 = vcombine.low %v674, %v675
        %v860 = vcombine.low %v676, %v677
        %v862 = vunpack.c.l.s4 1966171168
        %v863 = vunpack.c.0.s8 %v862
        %v864 = vlaneseq
        %v865 = vshrl.u32 %v864, 7
        %v866 = vsub.s32 %v863, %v865
        %v867 = vrot.slane %v857, %v866
        %v869 = vunpack.c.l.s4 1966171168
        %v870 = vunpack.c.0.s8 %v869
        %v871 = vlaneseq
        %v872 = vshrl.u32 %v871, 7
        %v873 = vsub.s32 %v870, %v872
        %v874 = vrot.slane %v858, %v873
        %v876 = vunpack.c.l.s4 1966171168
        %v877 = vunpack.c.0.s8 %v876
        %v878 = vlaneseq
        %v879 = vshrl.u32 %v878, 7
        %v880 = vsub.s32 %v877, %v879
        %v881 = vrot.slane %v859, %v880
        %v883 = vunpack.c.l.s4 1966171168
        %v884 = vunpack.c.0.s8 %v883
        %v885 = vlaneseq
        %v886 = vshrl.u32 %v885, 7
        %v887 = vsub.s32 %v884, %v886
        %v888 = vrot.slane %v860, %v887
        %v889 = vcombine.low %v867, %v874
        %v890 = vcombine.low %v881, %v888
        %v892 = vunpack.c.l.s4 1966171168
        %v893 = vunpack.c.0.s8 %v892
        %v894 = vlaneseq
        %v895 = vshrl.u32 %v894, 7
        %v896 = vsub.s32 %v893, %v895
        %v897 = vrot.slane %v889, %v896
        %v899 = vunpack.c.l.s4 1966171168
        %v900 = vunpack.c.0.s8 %v899
        %v901 = vlaneseq
        %v902 = vshrl.u32 %v901, 7
        %v903 = vsub.s32 %v900, %v902
        %v904 = vrot.slane %v890, %v903
        %v905 = vcombine.low %v897, %v904
        %910 = vst [vmem:[#allocation2] sm:$0xff] %v758
        %911 = vst [vmem:[#allocation2 + $0x8] sm:$0xff] %v807
        %912 = vst [vmem:[#allocation2 + $0x10] sm:$0xff] %v856
        %913 = vst [vmem:[#allocation2 + $0x18] sm:$0xff] %v905
        %v914 = vld [vmem:[#allocation2] sm:$0xff]
        %v915 = vld [vmem:[#allocation2 + $0x8] sm:$0xff]
        %v916 = vld [vmem:[#allocation2 + $0x10] sm:$0xff]
        %v917 = vld [vmem:[#allocation2 + $0x18] sm:$0xff]
        %v922 = vlaneseq
        %v923 = vshrl.u32 %v922, 7
        %v924 = vsub.s32 0, %v923
        %v925 = vrot.slane %v914, %v924
        %v926 = vlaneseq
        %v927 = vshrl.u32 %v926, 7
        %v928 = vsub.s32 1, %v927
        %v929 = vrot.slane %v914, %v928
        %v930 = vlaneseq
        %v931 = vshrl.u32 %v930, 7
        %v932 = vsub.s32 2, %v931
        %v933 = vrot.slane %v914, %v932
        %v934 = vlaneseq
        %v935 = vshrl.u32 %v934, 7
        %v936 = vsub.s32 3, %v935
        %v937 = vrot.slane %v914, %v936
        %v938 = vlaneseq
        %v939 = vshrl.u32 %v938, 7
        %v940 = vsub.s32 4, %v939
        %v941 = vrot.slane %v914, %v940
        %v942 = vlaneseq
        %v943 = vshrl.u32 %v942, 7
        %v944 = vsub.s32 5, %v943
        %v945 = vrot.slane %v914, %v944
        %v946 = vlaneseq
        %v947 = vshrl.u32 %v946, 7
        %v948 = vsub.s32 6, %v947
        %v949 = vrot.slane %v914, %v948
        %v950 = vlaneseq
        %v951 = vshrl.u32 %v950, 7
        %v952 = vsub.s32 7, %v951
        %v953 = vrot.slane %v914, %v952
        %v954 = vlaneseq
        %v955 = vshrl.u32 %v954, 7
        %v956 = vsub.s32 0, %v955
        %v957 = vrot.slane %v915, %v956
        %v958 = vlaneseq
        %v959 = vshrl.u32 %v958, 7
        %v960 = vsub.s32 1, %v959
        %v961 = vrot.slane %v915, %v960
        %v962 = vlaneseq
        %v963 = vshrl.u32 %v962, 7
        %v964 = vsub.s32 2, %v963
        %v965 = vrot.slane %v915, %v964
        %v966 = vlaneseq
        %v967 = vshrl.u32 %v966, 7
        %v968 = vsub.s32 3, %v967
        %v969 = vrot.slane %v915, %v968
        %v970 = vlaneseq
        %v971 = vshrl.u32 %v970, 7
        %v972 = vsub.s32 4, %v971
        %v973 = vrot.slane %v915, %v972
        %v974 = vlaneseq
        %v975 = vshrl.u32 %v974, 7
        %v976 = vsub.s32 5, %v975
        %v977 = vrot.slane %v915, %v976
        %v978 = vlaneseq
        %v979 = vshrl.u32 %v978, 7
        %v980 = vsub.s32 6, %v979
        %v981 = vrot.slane %v915, %v980
        %v982 = vlaneseq
        %v983 = vshrl.u32 %v982, 7
        %v984 = vsub.s32 7, %v983
        %v985 = vrot.slane %v915, %v984
        %v986 = vlaneseq
        %v987 = vshrl.u32 %v986, 7
        %v988 = vsub.s32 0, %v987
        %v989 = vrot.slane %v916, %v988
        %v990 = vlaneseq
        %v991 = vshrl.u32 %v990, 7
        %v992 = vsub.s32 1, %v991
        %v993 = vrot.slane %v916, %v992
        %v994 = vlaneseq
        %v995 = vshrl.u32 %v994, 7
        %v996 = vsub.s32 2, %v995
        %v997 = vrot.slane %v916, %v996
        %v998 = vlaneseq
        %v999 = vshrl.u32 %v998, 7
        %v1000 = vsub.s32 3, %v999
        %v1001 = vrot.slane %v916, %v1000
        %v1002 = vlaneseq
        %v1003 = vshrl.u32 %v1002, 7
        %v1004 = vsub.s32 4, %v1003
        %v1005 = vrot.slane %v916, %v1004
        %v1006 = vlaneseq
        %v1007 = vshrl.u32 %v1006, 7
        %v1008 = vsub.s32 5, %v1007
        %v1009 = vrot.slane %v916, %v1008
        %v1010 = vlaneseq
        %v1011 = vshrl.u32 %v1010, 7
        %v1012 = vsub.s32 6, %v1011
        %v1013 = vrot.slane %v916, %v1012
        %v1014 = vlaneseq
        %v1015 = vshrl.u32 %v1014, 7
        %v1016 = vsub.s32 7, %v1015
        %v1017 = vrot.slane %v916, %v1016
        %v1018 = vlaneseq
        %v1019 = vshrl.u32 %v1018, 7
        %v1020 = vsub.s32 0, %v1019
        %v1021 = vrot.slane %v917, %v1020
        %v1022 = vlaneseq
        %v1023 = vshrl.u32 %v1022, 7
        %v1024 = vsub.s32 1, %v1023
        %v1025 = vrot.slane %v917, %v1024
        %v1026 = vlaneseq
        %v1027 = vshrl.u32 %v1026, 7
        %v1028 = vsub.s32 2, %v1027
        %v1029 = vrot.slane %v917, %v1028
        %v1030 = vlaneseq
        %v1031 = vshrl.u32 %v1030, 7
        %v1032 = vsub.s32 3, %v1031
        %v1033 = vrot.slane %v917, %v1032
        %v1034 = vlaneseq
        %v1035 = vshrl.u32 %v1034, 7
        %v1036 = vsub.s32 4, %v1035
        %v1037 = vrot.slane %v917, %v1036
        %v1038 = vlaneseq
        %v1039 = vshrl.u32 %v1038, 7
        %v1040 = vsub.s32 5, %v1039
        %v1041 = vrot.slane %v917, %v1040
        %v1042 = vlaneseq
        %v1043 = vshrl.u32 %v1042, 7
        %v1044 = vsub.s32 6, %v1043
        %v1045 = vrot.slane %v917, %v1044
        %v1046 = vlaneseq
        %v1047 = vshrl.u32 %v1046, 7
        %v1048 = vsub.s32 7, %v1047
        %v1049 = vrot.slane %v917, %v1048
        %vm1082 = vcmask 1040384
        %v1083 = vsel %vm1082, %v925, -inf
        %v1084 = vsel %vm1082, %v929, -inf
        %v1085 = vsel %vm1082, %v933, -inf
        %v1086 = vsel %vm1082, %v937, -inf
        %v1087 = vsel %vm1082, %v941, -inf
        %v1088 = vmax.f32 %v1083, %v1087
        %v1089 = vsel %vm1082, %v945, -inf
        %v1090 = vmax.f32 %v1084, %v1089
        %v1091 = vsel %vm1082, %v949, -inf
        %v1092 = vmax.f32 %v1085, %v1091
        %v1093 = vsel %vm1082, %v953, -inf
        %v1094 = vmax.f32 %v1086, %v1093
        %v1095 = vsel %vm1082, %v957, -inf
        %v1096 = vmax.f32 %v1088, %v1095
        %v1097 = vsel %vm1082, %v961, -inf
        %v1098 = vmax.f32 %v1090, %v1097
        %v1099 = vsel %vm1082, %v965, -inf
        %v1100 = vmax.f32 %v1092, %v1099
        %v1101 = vsel %vm1082, %v969, -inf
        %v1102 = vmax.f32 %v1094, %v1101
        %v1103 = vsel %vm1082, %v973, -inf
        %v1104 = vmax.f32 %v1096, %v1103
        %v1105 = vsel %vm1082, %v977, -inf
        %v1106 = vmax.f32 %v1098, %v1105
        %v1107 = vsel %vm1082, %v981, -inf
        %v1108 = vmax.f32 %v1100, %v1107
        %v1109 = vsel %vm1082, %v985, -inf
        %v1110 = vmax.f32 %v1102, %v1109
        %v1111 = vsel %vm1082, %v989, -inf
        %v1112 = vmax.f32 %v1104, %v1111
        %v1113 = vsel %vm1082, %v993, -inf
        %v1114 = vmax.f32 %v1106, %v1113
        %v1115 = vsel %vm1082, %v997, -inf
        %v1116 = vmax.f32 %v1108, %v1115
        %v1117 = vsel %vm1082, %v1001, -inf
        %v1118 = vmax.f32 %v1110, %v1117
        %v1119 = vsel %vm1082, %v1005, -inf
        %v1120 = vmax.f32 %v1112, %v1119
        %v1121 = vsel %vm1082, %v1009, -inf
        %v1122 = vmax.f32 %v1114, %v1121
        %v1123 = vsel %vm1082, %v1013, -inf
        %v1124 = vmax.f32 %v1116, %v1123
        %v1125 = vsel %vm1082, %v1017, -inf
        %v1126 = vmax.f32 %v1118, %v1125
        %v1127 = vsel %vm1082, %v1021, -inf
        %v1128 = vmax.f32 %v1120, %v1127
        %v1129 = vsel %vm1082, %v1025, -inf
        %v1130 = vmax.f32 %v1122, %v1129
        %v1131 = vsel %vm1082, %v1029, -inf
        %v1132 = vmax.f32 %v1124, %v1131
        %v1133 = vsel %vm1082, %v1033, -inf
        %v1134 = vmax.f32 %v1126, %v1133
        %v1135 = vsel %vm1082, %v1037, -inf
        %v1136 = vmax.f32 %v1128, %v1135
        %v1137 = vsel %vm1082, %v1041, -inf
        %v1138 = vmax.f32 %v1130, %v1137
        %v1139 = vsel %vm1082, %v1045, -inf
        %v1140 = vmax.f32 %v1132, %v1139
        %v1141 = vsel %vm1082, %v1049, -inf
        %v1142 = vmax.f32 %v1134, %v1141
        %v1143 = vmax.f32 %v1136, %v1138
        %v1144 = vmax.f32 %v1140, %v1142
        %v1145 = vmax.f32 %v1143, %v1144
        %1146 = vmax.xlane.f32.xlu0 %v1145
        %v1147 = vpop.xlane.xlu0 %1146
        %v1148 = vrot.slane %v1147, 4
        %v1149 = vmax.f32 %v1147, %v1148
        %v1150 = vrot.slane %v1149, 2
        %v1151 = vmax.f32 %v1149, %v1150
        %v1152 = vrot.slane %v1151, 1
        %v1153 = vmax.f32 %v1151, %v1152
        %s1154 = vtos %v1153
        %v1155 = vsel %vm1082, %v925, inf
        %v1156 = vsel %vm1082, %v929, inf
        %v1157 = vsel %vm1082, %v933, inf
        %v1158 = vsel %vm1082, %v937, inf
        %v1159 = vsel %vm1082, %v941, inf
        %v1160 = vmin.f32 %v1155, %v1159
        %v1161 = vsel %vm1082, %v945, inf
        %v1162 = vmin.f32 %v1156, %v1161
        %v1163 = vsel %vm1082, %v949, inf
        %v1164 = vmin.f32 %v1157, %v1163
        %v1165 = vsel %vm1082, %v953, inf
        %v1166 = vmin.f32 %v1158, %v1165
        %v1167 = vsel %vm1082, %v957, inf
        %v1168 = vmin.f32 %v1160, %v1167
        %v1169 = vsel %vm1082, %v961, inf
        %v1170 = vmin.f32 %v1162, %v1169
        %v1171 = vsel %vm1082, %v965, inf
        %v1172 = vmin.f32 %v1164, %v1171
        %v1173 = vsel %vm1082, %v969, inf
        %v1174 = vmin.f32 %v1166, %v1173
        %v1175 = vsel %vm1082, %v973, inf
        %v1176 = vmin.f32 %v1168, %v1175
        %v1177 = vsel %vm1082, %v977, inf
        %v1178 = vmin.f32 %v1170, %v1177
        %v1179 = vsel %vm1082, %v981, inf
        %v1180 = vmin.f32 %v1172, %v1179
        %v1181 = vsel %vm1082, %v985, inf
        %v1182 = vmin.f32 %v1174, %v1181
        %v1183 = vsel %vm1082, %v989, inf
        %v1184 = vmin.f32 %v1176, %v1183
        %v1185 = vsel %vm1082, %v993, inf
        %v1186 = vmin.f32 %v1178, %v1185
        %v1187 = vsel %vm1082, %v997, inf
        %v1188 = vmin.f32 %v1180, %v1187
        %v1189 = vsel %vm1082, %v1001, inf
        %v1190 = vmin.f32 %v1182, %v1189
        %v1191 = vsel %vm1082, %v1005, inf
        %v1192 = vmin.f32 %v1184, %v1191
        %v1193 = vsel %vm1082, %v1009, inf
        %v1194 = vmin.f32 %v1186, %v1193
        %v1195 = vsel %vm1082, %v1013, inf
        %v1196 = vmin.f32 %v1188, %v1195
        %v1197 = vsel %vm1082, %v1017, inf
        %v1198 = vmin.f32 %v1190, %v1197
        %v1199 = vsel %vm1082, %v1021, inf
        %v1200 = vmin.f32 %v1192, %v1199
        %v1201 = vsel %vm1082, %v1025, inf
        %v1202 = vmin.f32 %v1194, %v1201
        %v1203 = vsel %vm1082, %v1029, inf
        %v1204 = vmin.f32 %v1196, %v1203
        %v1205 = vsel %vm1082, %v1033, inf
        %v1206 = vmin.f32 %v1198, %v1205
        %v1207 = vsel %vm1082, %v1037, inf
        %v1208 = vmin.f32 %v1200, %v1207
        %v1209 = vsel %vm1082, %v1041, inf
        %v1210 = vmin.f32 %v1202, %v1209
        %v1211 = vsel %vm1082, %v1045, inf
        %v1212 = vmin.f32 %v1204, %v1211
        %v1213 = vsel %vm1082, %v1049, inf
        %v1214 = vmin.f32 %v1206, %v1213
        %v1215 = vmin.f32 %v1208, %v1210
        %v1216 = vmin.f32 %v1212, %v1214
        %v1217 = vmin.f32 %v1215, %v1216
        %1218 = vmin.xlane.f32.xlu0 %v1217
        %v1219 = vpop.xlane.xlu0 %1218
        %v1220 = vrot.slane %v1219, 4
        %v1221 = vmin.f32 %v1219, %v1220
        %v1222 = vrot.slane %v1221, 2
        %v1223 = vmin.f32 %v1221, %v1222
        %v1224 = vrot.slane %v1223, 1
        %v1225 = vmin.f32 %v1223, %v1224
        %s1226 = vtos %v1225
        loop: start=0, step=1, limit=32
        $region41: #{dcsa_forward.28} parent=39 // loop_pre_header
          _
        $region42: #{dcsa_forward.28} parent=39 // loop_header
          %s1228 = sphi 0, %s1232
          %p1229 = scmp.ge.s32.totalorder %s1228, 32
        $region43: #{dcsa_forward.28} parent=39 // loop_header_branch
          %1231 = sbr.rel (%p1229) target = $region47
        $region44: #{dcsa_forward.28} parent=39 // loop_body
          %s1233 = smul.u32 %s1228, 16
          %s1234 = scalar_lea.vmem %s266, %s1233
          %v1235 = vld [vmem:[%s1234] sm:$0xff]
          %v1236 = vld [vmem:[%s1234 + $0x8] sm:$0xff]
          %v1237 = vld [vmem:[%s3] sm:$0x1]
          %v1239 = vlaneseq
          %v1240 = vshrl.u32 %v1239, 7
          %v1241 = vsub.s32 0, %v1240
          %v1242 = vrot.slane %v1237, %v1241
          %v1244 = vmul.f32 %v1235, %v1242
          %v1245 = vmul.f32 %v1236, %v1242
          %vm1246 = vcmask 130048
          %v1247 = vsel %vm1246, %v1244, 0.0
          %1248 = vadd.xlane.f32.xlu0 %v1247
          %v1249 = vpop.xlane.xlu0 %1248
          %v1250 = vsel %vm1246, %v1245, 0.0
          %1251 = vadd.xlane.f32.xlu0 %v1250
          %v1252 = vpop.xlane.xlu0 %1251
          %v1253 = vstv %s275
          %v1254 = vadd.f32 %v1249, %v1253
          %v1255 = vadd.f32 %v1252, %v1253
          %vm1256 = vcmp.ge.f32.partialorder %v1254, 0.0
          %vm1257 = vcmp.ge.f32.partialorder %v1255, 0.0
          %v1258 = vstv %s1154
          %v1259 = vmul.f32 %v1254, %v1258
          %v1260 = vmul.f32 %v1255, %v1258
          %v1261 = vstv %s1226
          %v1262 = vmul.f32 %v1254, %v1261
          %v1263 = vmul.f32 %v1255, %v1261
          %v1264 = vsel %vm1256, %v1259, %v1262
          %v1265 = vsel %vm1257, %v1260, %v1263
          %v1266 = vld [vmem:[#allocation2] sm:$0xff]
          %v1267 = vld [vmem:[#allocation2 + $0x8] sm:$0xff]
          %v1268 = vld [vmem:[#allocation2 + $0x10] sm:$0xff]
          %v1269 = vld [vmem:[#allocation2 + $0x18] sm:$0xff]
          %v1274 = vlaneseq
          %v1275 = vshrl.u32 %v1274, 7
          %v1276 = vsub.s32 0, %v1275
          %v1277 = vrot.slane %v1266, %v1276
          %v1278 = vlaneseq
          %v1279 = vshrl.u32 %v1278, 7
          %v1280 = vsub.s32 1, %v1279
          %v1281 = vrot.slane %v1266, %v1280
          %v1282 = vlaneseq
          %v1283 = vshrl.u32 %v1282, 7
          %v1284 = vsub.s32 2, %v1283
          %v1285 = vrot.slane %v1266, %v1284
          %v1286 = vlaneseq
          %v1287 = vshrl.u32 %v1286, 7
          %v1288 = vsub.s32 3, %v1287
          %v1289 = vrot.slane %v1266, %v1288
          %v1290 = vlaneseq
          %v1291 = vshrl.u32 %v1290, 7
          %v1292 = vsub.s32 4, %v1291
          %v1293 = vrot.slane %v1266, %v1292
          %v1294 = vlaneseq
          %v1295 = vshrl.u32 %v1294, 7
          %v1296 = vsub.s32 5, %v1295
          %v1297 = vrot.slane %v1266, %v1296
          %v1298 = vlaneseq
          %v1299 = vshrl.u32 %v1298, 7
          %v1300 = vsub.s32 6, %v1299
          %v1301 = vrot.slane %v1266, %v1300
          %v1302 = vlaneseq
          %v1303 = vshrl.u32 %v1302, 7
          %v1304 = vsub.s32 7, %v1303
          %v1305 = vrot.slane %v1266, %v1304
          %v1306 = vlaneseq
          %v1307 = vshrl.u32 %v1306, 7
          %v1308 = vsub.s32 0, %v1307
          %v1309 = vrot.slane %v1267, %v1308
          %v1310 = vlaneseq
          %v1311 = vshrl.u32 %v1310, 7
          %v1312 = vsub.s32 1, %v1311
          %v1313 = vrot.slane %v1267, %v1312
          %v1314 = vlaneseq
          %v1315 = vshrl.u32 %v1314, 7
          %v1316 = vsub.s32 2, %v1315
          %v1317 = vrot.slane %v1267, %v1316
          %v1318 = vlaneseq
          %v1319 = vshrl.u32 %v1318, 7
          %v1320 = vsub.s32 3, %v1319
          %v1321 = vrot.slane %v1267, %v1320
          %v1322 = vlaneseq
          %v1323 = vshrl.u32 %v1322, 7
          %v1324 = vsub.s32 4, %v1323
          %v1325 = vrot.slane %v1267, %v1324
          %v1326 = vlaneseq
          %v1327 = vshrl.u32 %v1326, 7
          %v1328 = vsub.s32 5, %v1327
          %v1329 = vrot.slane %v1267, %v1328
          %v1330 = vlaneseq
          %v1331 = vshrl.u32 %v1330, 7
          %v1332 = vsub.s32 6, %v1331
          %v1333 = vrot.slane %v1267, %v1332
          %v1334 = vlaneseq
          %v1335 = vshrl.u32 %v1334, 7
          %v1336 = vsub.s32 7, %v1335
          %v1337 = vrot.slane %v1267, %v1336
          %v1338 = vlaneseq
          %v1339 = vshrl.u32 %v1338, 7
          %v1340 = vsub.s32 0, %v1339
          %v1341 = vrot.slane %v1268, %v1340
          %v1342 = vlaneseq
          %v1343 = vshrl.u32 %v1342, 7
          %v1344 = vsub.s32 1, %v1343
          %v1345 = vrot.slane %v1268, %v1344
          %v1346 = vlaneseq
          %v1347 = vshrl.u32 %v1346, 7
          %v1348 = vsub.s32 2, %v1347
          %v1349 = vrot.slane %v1268, %v1348
          %v1350 = vlaneseq
          %v1351 = vshrl.u32 %v1350, 7
          %v1352 = vsub.s32 3, %v1351
          %v1353 = vrot.slane %v1268, %v1352
          %v1354 = vlaneseq
          %v1355 = vshrl.u32 %v1354, 7
          %v1356 = vsub.s32 4, %v1355
          %v1357 = vrot.slane %v1268, %v1356
          %v1358 = vlaneseq
          %v1359 = vshrl.u32 %v1358, 7
          %v1360 = vsub.s32 5, %v1359
          %v1361 = vrot.slane %v1268, %v1360
          %v1362 = vlaneseq
          %v1363 = vshrl.u32 %v1362, 7
          %v1364 = vsub.s32 6, %v1363
          %v1365 = vrot.slane %v1268, %v1364
          %v1366 = vlaneseq
          %v1367 = vshrl.u32 %v1366, 7
          %v1368 = vsub.s32 7, %v1367
          %v1369 = vrot.slane %v1268, %v1368
          %v1370 = vlaneseq
          %v1371 = vshrl.u32 %v1370, 7
          %v1372 = vsub.s32 0, %v1371
          %v1373 = vrot.slane %v1269, %v1372
          %v1374 = vlaneseq
          %v1375 = vshrl.u32 %v1374, 7
          %v1376 = vsub.s32 1, %v1375
          %v1377 = vrot.slane %v1269, %v1376
          %v1378 = vlaneseq
          %v1379 = vshrl.u32 %v1378, 7
          %v1380 = vsub.s32 2, %v1379
          %v1381 = vrot.slane %v1269, %v1380
          %v1382 = vlaneseq
          %v1383 = vshrl.u32 %v1382, 7
          %v1384 = vsub.s32 3, %v1383
          %v1385 = vrot.slane %v1269, %v1384
          %v1386 = vlaneseq
          %v1387 = vshrl.u32 %v1386, 7
          %v1388 = vsub.s32 4, %v1387
          %v1389 = vrot.slane %v1269, %v1388
          %v1390 = vlaneseq
          %v1391 = vshrl.u32 %v1390, 7
          %v1392 = vsub.s32 5, %v1391
          %v1393 = vrot.slane %v1269, %v1392
          %v1394 = vlaneseq
          %v1395 = vshrl.u32 %v1394, 7
          %v1396 = vsub.s32 6, %v1395
          %v1397 = vrot.slane %v1269, %v1396
          %v1398 = vlaneseq
          %v1399 = vshrl.u32 %v1398, 7
          %v1400 = vsub.s32 7, %v1399
          %v1401 = vrot.slane %v1269, %v1400
          %v1434 = vmul.f32 %v1254, %v1277
          %v1435 = vmul.f32 %v1254, %v1281
          %v1436 = vmul.f32 %v1254, %v1285
          %v1437 = vmul.f32 %v1254, %v1289
          %v1438 = vmul.f32 %v1254, %v1293
          %v1439 = vmul.f32 %v1254, %v1297
          %v1440 = vmul.f32 %v1254, %v1301
          %v1441 = vmul.f32 %v1254, %v1305
          %v1442 = vmul.f32 %v1254, %v1309
          %v1443 = vmul.f32 %v1254, %v1313
          %v1444 = vmul.f32 %v1254, %v1317
          %v1445 = vmul.f32 %v1254, %v1321
          %v1446 = vmul.f32 %v1254, %v1325
          %v1447 = vmul.f32 %v1254, %v1329
          %v1448 = vmul.f32 %v1254, %v1333
          %v1449 = vmul.f32 %v1254, %v1337
          %v1450 = vmul.f32 %v1254, %v1341
          %v1451 = vmul.f32 %v1254, %v1345
          %v1452 = vmul.f32 %v1254, %v1349
          %v1453 = vmul.f32 %v1254, %v1353
          %v1454 = vmul.f32 %v1254, %v1357
          %v1455 = vmul.f32 %v1254, %v1361
          %v1456 = vmul.f32 %v1254, %v1365
          %v1457 = vmul.f32 %v1254, %v1369
          %v1458 = vmul.f32 %v1254, %v1373
          %v1459 = vmul.f32 %v1254, %v1377
          %v1460 = vmul.f32 %v1254, %v1381
          %v1461 = vmul.f32 %v1254, %v1385
          %v1462 = vmul.f32 %v1254, %v1389
          %v1463 = vmul.f32 %v1254, %v1393
          %v1464 = vmul.f32 %v1254, %v1397
          %v1465 = vmul.f32 %v1254, %v1401
          %v1466 = vmul.f32 %v1255, %v1277
          %v1467 = vmul.f32 %v1255, %v1281
          %v1468 = vmul.f32 %v1255, %v1285
          %v1469 = vmul.f32 %v1255, %v1289
          %v1470 = vmul.f32 %v1255, %v1293
          %v1471 = vmul.f32 %v1255, %v1297
          %v1472 = vmul.f32 %v1255, %v1301
          %v1473 = vmul.f32 %v1255, %v1305
          %v1474 = vmul.f32 %v1255, %v1309
          %v1475 = vmul.f32 %v1255, %v1313
          %v1476 = vmul.f32 %v1255, %v1317
          %v1477 = vmul.f32 %v1255, %v1321
          %v1478 = vmul.f32 %v1255, %v1325
          %v1479 = vmul.f32 %v1255, %v1329
          %v1480 = vmul.f32 %v1255, %v1333
          %v1481 = vmul.f32 %v1255, %v1337
          %v1482 = vmul.f32 %v1255, %v1341
          %v1483 = vmul.f32 %v1255, %v1345
          %v1484 = vmul.f32 %v1255, %v1349
          %v1485 = vmul.f32 %v1255, %v1353
          %v1486 = vmul.f32 %v1255, %v1357
          %v1487 = vmul.f32 %v1255, %v1361
          %v1488 = vmul.f32 %v1255, %v1365
          %v1489 = vmul.f32 %v1255, %v1369
          %v1490 = vmul.f32 %v1255, %v1373
          %v1491 = vmul.f32 %v1255, %v1377
          %v1492 = vmul.f32 %v1255, %v1381
          %v1493 = vmul.f32 %v1255, %v1385
          %v1494 = vmul.f32 %v1255, %v1389
          %v1495 = vmul.f32 %v1255, %v1393
          %v1496 = vmul.f32 %v1255, %v1397
          %v1497 = vmul.f32 %v1255, %v1401
          %v1498 = vsub.f32 %v1434, %v1264
          %v1499 = vsub.f32 %v1435, %v1264
          %v1500 = vsub.f32 %v1436, %v1264
          %v1501 = vsub.f32 %v1437, %v1264
          %v1502 = vsub.f32 %v1438, %v1264
          %v1503 = vsub.f32 %v1439, %v1264
          %v1504 = vsub.f32 %v1440, %v1264
          %v1505 = vsub.f32 %v1441, %v1264
          %v1506 = vsub.f32 %v1442, %v1264
          %v1507 = vsub.f32 %v1443, %v1264
          %v1508 = vsub.f32 %v1444, %v1264
          %v1509 = vsub.f32 %v1445, %v1264
          %v1510 = vsub.f32 %v1446, %v1264
          %v1511 = vsub.f32 %v1447, %v1264
          %v1512 = vsub.f32 %v1448, %v1264
          %v1513 = vsub.f32 %v1449, %v1264
          %v1514 = vsub.f32 %v1450, %v1264
          %v1515 = vsub.f32 %v1451, %v1264
          %v1516 = vsub.f32 %v1452, %v1264
          %v1517 = vsub.f32 %v1453, %v1264
          %v1518 = vsub.f32 %v1454, %v1264
          %v1519 = vsub.f32 %v1455, %v1264
          %v1520 = vsub.f32 %v1456, %v1264
          %v1521 = vsub.f32 %v1457, %v1264
          %v1522 = vsub.f32 %v1458, %v1264
          %v1523 = vsub.f32 %v1459, %v1264
          %v1524 = vsub.f32 %v1460, %v1264
          %v1525 = vsub.f32 %v1461, %v1264
          %v1526 = vsub.f32 %v1462, %v1264
          %v1527 = vsub.f32 %v1463, %v1264
          %v1528 = vsub.f32 %v1464, %v1264
          %v1529 = vsub.f32 %v1465, %v1264
          %v1530 = vsub.f32 %v1466, %v1265
          %v1531 = vsub.f32 %v1467, %v1265
          %v1532 = vsub.f32 %v1468, %v1265
          %v1533 = vsub.f32 %v1469, %v1265
          %v1534 = vsub.f32 %v1470, %v1265
          %v1535 = vsub.f32 %v1471, %v1265
          %v1536 = vsub.f32 %v1472, %v1265
          %v1537 = vsub.f32 %v1473, %v1265
          %v1538 = vsub.f32 %v1474, %v1265
          %v1539 = vsub.f32 %v1475, %v1265
          %v1540 = vsub.f32 %v1476, %v1265
          %v1541 = vsub.f32 %v1477, %v1265
          %v1542 = vsub.f32 %v1478, %v1265
          %v1543 = vsub.f32 %v1479, %v1265
          %v1544 = vsub.f32 %v1480, %v1265
          %v1545 = vsub.f32 %v1481, %v1265
          %v1546 = vsub.f32 %v1482, %v1265
          %v1547 = vsub.f32 %v1483, %v1265
          %v1548 = vsub.f32 %v1484, %v1265
          %v1549 = vsub.f32 %v1485, %v1265
          %v1550 = vsub.f32 %v1486, %v1265
          %v1551 = vsub.f32 %v1487, %v1265
          %v1552 = vsub.f32 %v1488, %v1265
          %v1553 = vsub.f32 %v1489, %v1265
          %v1554 = vsub.f32 %v1490, %v1265
          %v1555 = vsub.f32 %v1491, %v1265
          %v1556 = vsub.f32 %v1492, %v1265
          %v1557 = vsub.f32 %v1493, %v1265
          %v1558 = vsub.f32 %v1494, %v1265
          %v1559 = vsub.f32 %v1495, %v1265
          %v1560 = vsub.f32 %v1496, %v1265
          %v1561 = vsub.f32 %v1497, %v1265
          %v1562 = vmul.f32 %v1498, 1.442695
          %v1563 = vpow.pop %v1562
          %v1564 = vmul.f32 %v1499, 1.442695
          %v1565 = vpow.pop %v1564
          %v1566 = vmul.f32 %v1500, 1.442695
          %v1567 = vpow.pop %v1566
          %v1568 = vmul.f32 %v1501, 1.442695
          %v1569 = vpow.pop %v1568
          %v1570 = vmul.f32 %v1502, 1.442695
          %v1571 = vpow.pop %v1570
          %v1572 = vmul.f32 %v1503, 1.442695
          %v1573 = vpow.pop %v1572
          %v1574 = vmul.f32 %v1504, 1.442695
          %v1575 = vpow.pop %v1574
          %v1576 = vmul.f32 %v1505, 1.442695
          %v1577 = vpow.pop %v1576
          %v1578 = vmul.f32 %v1506, 1.442695
          %v1579 = vpow.pop %v1578
          %v1580 = vmul.f32 %v1507, 1.442695
          %v1581 = vpow.pop %v1580
          %v1582 = vmul.f32 %v1508, 1.442695
          %v1583 = vpow.pop %v1582
          %v1584 = vmul.f32 %v1509, 1.442695
          %v1585 = vpow.pop %v1584
          %v1586 = vmul.f32 %v1510, 1.442695
          %v1587 = vpow.pop %v1586
          %v1588 = vmul.f32 %v1511, 1.442695
          %v1589 = vpow.pop %v1588
          %v1590 = vmul.f32 %v1512, 1.442695
          %v1591 = vpow.pop %v1590
          %v1592 = vmul.f32 %v1513, 1.442695
          %v1593 = vpow.pop %v1592
          %v1594 = vmul.f32 %v1514, 1.442695
          %v1595 = vpow.pop %v1594
          %v1596 = vmul.f32 %v1515, 1.442695
          %v1597 = vpow.pop %v1596
          %v1598 = vmul.f32 %v1516, 1.442695
          %v1599 = vpow.pop %v1598
          %v1600 = vmul.f32 %v1517, 1.442695
          %v1601 = vpow.pop %v1600
          %v1602 = vmul.f32 %v1518, 1.442695
          %v1603 = vpow.pop %v1602
          %v1604 = vmul.f32 %v1519, 1.442695
          %v1605 = vpow.pop %v1604
          %v1606 = vmul.f32 %v1520, 1.442695
          %v1607 = vpow.pop %v1606
          %v1608 = vmul.f32 %v1521, 1.442695
          %v1609 = vpow.pop %v1608
          %v1610 = vmul.f32 %v1522, 1.442695
          %v1611 = vpow.pop %v1610
          %v1612 = vmul.f32 %v1523, 1.442695
          %v1613 = vpow.pop %v1612
          %v1614 = vmul.f32 %v1524, 1.442695
          %v1615 = vpow.pop %v1614
          %v1616 = vmul.f32 %v1525, 1.442695
          %v1617 = vpow.pop %v1616
          %v1618 = vmul.f32 %v1526, 1.442695
          %v1619 = vpow.pop %v1618
          %v1620 = vmul.f32 %v1527, 1.442695
          %v1621 = vpow.pop %v1620
          %v1622 = vmul.f32 %v1528, 1.442695
          %v1623 = vpow.pop %v1622
          %v1624 = vmul.f32 %v1529, 1.442695
          %v1625 = vpow.pop %v1624
          %v1626 = vmul.f32 %v1530, 1.442695
          %v1627 = vpow.pop %v1626
          %v1628 = vmul.f32 %v1531, 1.442695
          %v1629 = vpow.pop %v1628
          %v1630 = vmul.f32 %v1532, 1.442695
          %v1631 = vpow.pop %v1630
          %v1632 = vmul.f32 %v1533, 1.442695
          %v1633 = vpow.pop %v1632
          %v1634 = vmul.f32 %v1534, 1.442695
          %v1635 = vpow.pop %v1634
          %v1636 = vmul.f32 %v1535, 1.442695
          %v1637 = vpow.pop %v1636
          %v1638 = vmul.f32 %v1536, 1.442695
          %v1639 = vpow.pop %v1638
          %v1640 = vmul.f32 %v1537, 1.442695
          %v1641 = vpow.pop %v1640
          %v1642 = vmul.f32 %v1538, 1.442695
          %v1643 = vpow.pop %v1642
          %v1644 = vmul.f32 %v1539, 1.442695
          %v1645 = vpow.pop %v1644
          %v1646 = vmul.f32 %v1540, 1.442695
          %v1647 = vpow.pop %v1646
          %v1648 = vmul.f32 %v1541, 1.442695
          %v1649 = vpow.pop %v1648
          %v1650 = vmul.f32 %v1542, 1.442695
          %v1651 = vpow.pop %v1650
          %v1652 = vmul.f32 %v1543, 1.442695
          %v1653 = vpow.pop %v1652
          %v1654 = vmul.f32 %v1544, 1.442695
          %v1655 = vpow.pop %v1654
          %v1656 = vmul.f32 %v1545, 1.442695
          %v1657 = vpow.pop %v1656
          %v1658 = vmul.f32 %v1546, 1.442695
          %v1659 = vpow.pop %v1658
          %v1660 = vmul.f32 %v1547, 1.442695
          %v1661 = vpow.pop %v1660
          %v1662 = vmul.f32 %v1548, 1.442695
          %v1663 = vpow.pop %v1662
          %v1664 = vmul.f32 %v1549, 1.442695
          %v1665 = vpow.pop %v1664
          %v1666 = vmul.f32 %v1550, 1.442695
          %v1667 = vpow.pop %v1666
          %v1668 = vmul.f32 %v1551, 1.442695
          %v1669 = vpow.pop %v1668
          %v1670 = vmul.f32 %v1552, 1.442695
          %v1671 = vpow.pop %v1670
          %v1672 = vmul.f32 %v1553, 1.442695
          %v1673 = vpow.pop %v1672
          %v1674 = vmul.f32 %v1554, 1.442695
          %v1675 = vpow.pop %v1674
          %v1676 = vmul.f32 %v1555, 1.442695
          %v1677 = vpow.pop %v1676
          %v1678 = vmul.f32 %v1556, 1.442695
          %v1679 = vpow.pop %v1678
          %v1680 = vmul.f32 %v1557, 1.442695
          %v1681 = vpow.pop %v1680
          %v1682 = vmul.f32 %v1558, 1.442695
          %v1683 = vpow.pop %v1682
          %v1684 = vmul.f32 %v1559, 1.442695
          %v1685 = vpow.pop %v1684
          %v1686 = vmul.f32 %v1560, 1.442695
          %v1687 = vpow.pop %v1686
          %v1688 = vmul.f32 %v1561, 1.442695
          %v1689 = vpow.pop %v1688
          %v1690 = vadd.f32 %v1563, %v1565
          %v1691 = vadd.f32 %v1690, %v1567
          %v1692 = vadd.f32 %v1691, %v1569
          %v1693 = vadd.f32 %v1692, %v1571
          %v1694 = vadd.f32 %v1693, %v1573
          %v1695 = vadd.f32 %v1694, %v1575
          %v1696 = vadd.f32 %v1695, %v1577
          %v1697 = vadd.f32 %v1696, %v1579
          %v1698 = vadd.f32 %v1697, %v1581
          %v1699 = vadd.f32 %v1698, %v1583
          %v1700 = vadd.f32 %v1699, %v1585
          %v1701 = vadd.f32 %v1700, %v1587
          %v1702 = vadd.f32 %v1701, %v1589
          %v1703 = vadd.f32 %v1702, %v1591
          %v1704 = vadd.f32 %v1703, %v1593
          %v1705 = vadd.f32 %v1704, %v1595
          %v1706 = vadd.f32 %v1705, %v1597
          %v1707 = vadd.f32 %v1706, %v1599
          %v1708 = vadd.f32 %v1707, %v1601
          %v1709 = vadd.f32 %v1708, %v1603
          %v1710 = vadd.f32 %v1709, %v1605
          %v1711 = vadd.f32 %v1710, %v1607
          %v1712 = vadd.f32 %v1711, %v1609
          %v1713 = vadd.f32 %v1712, %v1611
          %v1714 = vadd.f32 %v1713, %v1613
          %v1715 = vadd.f32 %v1714, %v1615
          %v1716 = vadd.f32 %v1715, %v1617
          %v1717 = vadd.f32 %v1716, %v1619
          %v1718 = vadd.f32 %v1717, %v1621
          %v1719 = vadd.f32 %v1718, %v1623
          %v1720 = vadd.f32 %v1719, %v1625
          %1721 = vadd.xlane.f32.xlu0 %v1720
          %v1722 = vpop.xlane.xlu0 %1721
          %v1723 = vadd.f32 %v1627, %v1629
          %v1724 = vadd.f32 %v1723, %v1631
          %v1725 = vadd.f32 %v1724, %v1633
          %v1726 = vadd.f32 %v1725, %v1635
          %v1727 = vadd.f32 %v1726, %v1637
          %v1728 = vadd.f32 %v1727, %v1639
          %v1729 = vadd.f32 %v1728, %v1641
          %v1730 = vadd.f32 %v1729, %v1643
          %v1731 = vadd.f32 %v1730, %v1645
          %v1732 = vadd.f32 %v1731, %v1647
          %v1733 = vadd.f32 %v1732, %v1649
          %v1734 = vadd.f32 %v1733, %v1651
          %v1735 = vadd.f32 %v1734, %v1653
          %v1736 = vadd.f32 %v1735, %v1655
          %v1737 = vadd.f32 %v1736, %v1657
          %v1738 = vadd.f32 %v1737, %v1659
          %v1739 = vadd.f32 %v1738, %v1661
          %v1740 = vadd.f32 %v1739, %v1663
          %v1741 = vadd.f32 %v1740, %v1665
          %v1742 = vadd.f32 %v1741, %v1667
          %v1743 = vadd.f32 %v1742, %v1669
          %v1744 = vadd.f32 %v1743, %v1671
          %v1745 = vadd.f32 %v1744, %v1673
          %v1746 = vadd.f32 %v1745, %v1675
          %v1747 = vadd.f32 %v1746, %v1677
          %v1748 = vadd.f32 %v1747, %v1679
          %v1749 = vadd.f32 %v1748, %v1681
          %v1750 = vadd.f32 %v1749, %v1683
          %v1751 = vadd.f32 %v1750, %v1685
          %v1752 = vadd.f32 %v1751, %v1687
          %v1753 = vadd.f32 %v1752, %v1689
          %1754 = vadd.xlane.f32.xlu0 %v1753
          %v1755 = vpop.xlane.xlu0 %1754
          %v1756 = vrcp.pop %v1722
          %v1757 = vmul.f32 1.0, %v1756
          %v1758 = vrcp.pop %v1755
          %v1759 = vmul.f32 1.0, %v1758
          %v1760 = vmul.f32 %v1563, %v1757
          %v1761 = vmul.f32 %v1565, %v1757
          %v1762 = vmul.f32 %v1567, %v1757
          %v1763 = vmul.f32 %v1569, %v1757
          %v1764 = vmul.f32 %v1571, %v1757
          %v1765 = vmul.f32 %v1573, %v1757
          %v1766 = vmul.f32 %v1575, %v1757
          %v1767 = vmul.f32 %v1577, %v1757
          %v1768 = vmul.f32 %v1579, %v1757
          %v1769 = vmul.f32 %v1581, %v1757
          %v1770 = vmul.f32 %v1583, %v1757
          %v1771 = vmul.f32 %v1585, %v1757
          %v1772 = vmul.f32 %v1587, %v1757
          %v1773 = vmul.f32 %v1589, %v1757
          %v1774 = vmul.f32 %v1591, %v1757
          %v1775 = vmul.f32 %v1593, %v1757
          %v1776 = vmul.f32 %v1595, %v1757
          %v1777 = vmul.f32 %v1597, %v1757
          %v1778 = vmul.f32 %v1599, %v1757
          %v1779 = vmul.f32 %v1601, %v1757
          %v1780 = vmul.f32 %v1603, %v1757
          %v1781 = vmul.f32 %v1605, %v1757
          %v1782 = vmul.f32 %v1607, %v1757
          %v1783 = vmul.f32 %v1609, %v1757
          %v1784 = vmul.f32 %v1611, %v1757
          %v1785 = vmul.f32 %v1613, %v1757
          %v1786 = vmul.f32 %v1615, %v1757
          %v1787 = vmul.f32 %v1617, %v1757
          %v1788 = vmul.f32 %v1619, %v1757
          %v1789 = vmul.f32 %v1621, %v1757
          %v1790 = vmul.f32 %v1623, %v1757
          %v1791 = vmul.f32 %v1625, %v1757
          %v1792 = vmul.f32 %v1627, %v1759
          %v1793 = vmul.f32 %v1629, %v1759
          %v1794 = vmul.f32 %v1631, %v1759
          %v1795 = vmul.f32 %v1633, %v1759
          %v1796 = vmul.f32 %v1635, %v1759
          %v1797 = vmul.f32 %v1637, %v1759
          %v1798 = vmul.f32 %v1639, %v1759
          %v1799 = vmul.f32 %v1641, %v1759
          %v1800 = vmul.f32 %v1643, %v1759
          %v1801 = vmul.f32 %v1645, %v1759
          %v1802 = vmul.f32 %v1647, %v1759
          %v1803 = vmul.f32 %v1649, %v1759
          %v1804 = vmul.f32 %v1651, %v1759
          %v1805 = vmul.f32 %v1653, %v1759
          %v1806 = vmul.f32 %v1655, %v1759
          %v1807 = vmul.f32 %v1657, %v1759
          %v1808 = vmul.f32 %v1659, %v1759
          %v1809 = vmul.f32 %v1661, %v1759
          %v1810 = vmul.f32 %v1663, %v1759
          %v1811 = vmul.f32 %v1665, %v1759
          %v1812 = vmul.f32 %v1667, %v1759
          %v1813 = vmul.f32 %v1669, %v1759
          %v1814 = vmul.f32 %v1671, %v1759
          %v1815 = vmul.f32 %v1673, %v1759
          %v1816 = vmul.f32 %v1675, %v1759
          %v1817 = vmul.f32 %v1677, %v1759
          %v1818 = vmul.f32 %v1679, %v1759
          %v1819 = vmul.f32 %v1681, %v1759
          %v1820 = vmul.f32 %v1683, %v1759
          %v1821 = vmul.f32 %v1685, %v1759
          %v1822 = vmul.f32 %v1687, %v1759
          %v1823 = vmul.f32 %v1689, %v1759
          %v1824 = vpack.c.bf16 %v1792, %v1760
          %v1825 = vpack.c.bf16 %v1793, %v1761
          %v1826 = vpack.c.bf16 %v1794, %v1762
          %v1827 = vpack.c.bf16 %v1795, %v1763
          %v1828 = vpack.c.bf16 %v1796, %v1764
          %v1829 = vpack.c.bf16 %v1797, %v1765
          %v1830 = vpack.c.bf16 %v1798, %v1766
          %v1831 = vpack.c.bf16 %v1799, %v1767
          %v1832 = vpack.c.bf16 %v1800, %v1768
          %v1833 = vpack.c.bf16 %v1801, %v1769
          %v1834 = vpack.c.bf16 %v1802, %v1770
          %v1835 = vpack.c.bf16 %v1803, %v1771
          %v1836 = vpack.c.bf16 %v1804, %v1772
          %v1837 = vpack.c.bf16 %v1805, %v1773
          %v1838 = vpack.c.bf16 %v1806, %v1774
          %v1839 = vpack.c.bf16 %v1807, %v1775
          %v1840 = vpack.c.bf16 %v1808, %v1776
          %v1841 = vpack.c.bf16 %v1809, %v1777
          %v1842 = vpack.c.bf16 %v1810, %v1778
          %v1843 = vpack.c.bf16 %v1811, %v1779
          %v1844 = vpack.c.bf16 %v1812, %v1780
          %v1845 = vpack.c.bf16 %v1813, %v1781
          %v1846 = vpack.c.bf16 %v1814, %v1782
          %v1847 = vpack.c.bf16 %v1815, %v1783
          %v1848 = vpack.c.bf16 %v1816, %v1784
          %v1849 = vpack.c.bf16 %v1817, %v1785
          %v1850 = vpack.c.bf16 %v1818, %v1786
          %v1851 = vpack.c.bf16 %v1819, %v1787
          %v1852 = vpack.c.bf16 %v1820, %v1788
          %v1853 = vpack.c.bf16 %v1821, %v1789
          %v1854 = vpack.c.bf16 %v1822, %v1790
          %v1855 = vpack.c.bf16 %v1823, %v1791
          %v1888 = vunpack.c.l.b16 %v1824
          %v1889 = vunpack.c.l.b16 %v1825
          %v1890 = vunpack.c.l.b16 %v1826
          %v1891 = vunpack.c.l.b16 %v1827
          %v1892 = vunpack.c.l.b16 %v1828
          %v1893 = vunpack.c.l.b16 %v1829
          %v1894 = vunpack.c.l.b16 %v1830
          %v1895 = vunpack.c.l.b16 %v1831
          %v1896 = vunpack.c.l.b16 %v1832
          %v1897 = vunpack.c.l.b16 %v1833
          %v1898 = vunpack.c.l.b16 %v1834
          %v1899 = vunpack.c.l.b16 %v1835
          %v1900 = vunpack.c.l.b16 %v1836
          %v1901 = vunpack.c.l.b16 %v1837
          %v1902 = vunpack.c.l.b16 %v1838
          %v1903 = vunpack.c.l.b16 %v1839
          %v1904 = vunpack.c.l.b16 %v1840
          %v1905 = vunpack.c.l.b16 %v1841
          %v1906 = vunpack.c.l.b16 %v1842
          %v1907 = vunpack.c.l.b16 %v1843
          %v1908 = vunpack.c.l.b16 %v1844
          %v1909 = vunpack.c.l.b16 %v1845
          %v1910 = vunpack.c.l.b16 %v1846
          %v1911 = vunpack.c.l.b16 %v1847
          %v1912 = vunpack.c.l.b16 %v1848
          %v1913 = vunpack.c.l.b16 %v1849
          %v1914 = vunpack.c.l.b16 %v1850
          %v1915 = vunpack.c.l.b16 %v1851
          %v1916 = vunpack.c.l.b16 %v1852
          %v1917 = vunpack.c.l.b16 %v1853
          %v1918 = vunpack.c.l.b16 %v1854
          %v1919 = vunpack.c.l.b16 %v1855
          %v1920 = vunpack.c.h.b16 %v1824
          %v1921 = vunpack.c.h.b16 %v1825
          %v1922 = vunpack.c.h.b16 %v1826
          %v1923 = vunpack.c.h.b16 %v1827
          %v1924 = vunpack.c.h.b16 %v1828
          %v1925 = vunpack.c.h.b16 %v1829
          %v1926 = vunpack.c.h.b16 %v1830
          %v1927 = vunpack.c.h.b16 %v1831
          %v1928 = vunpack.c.h.b16 %v1832
          %v1929 = vunpack.c.h.b16 %v1833
          %v1930 = vunpack.c.h.b16 %v1834
          %v1931 = vunpack.c.h.b16 %v1835
          %v1932 = vunpack.c.h.b16 %v1836
          %v1933 = vunpack.c.h.b16 %v1837
          %v1934 = vunpack.c.h.b16 %v1838
          %v1935 = vunpack.c.h.b16 %v1839
          %v1936 = vunpack.c.h.b16 %v1840
          %v1937 = vunpack.c.h.b16 %v1841
          %v1938 = vunpack.c.h.b16 %v1842
          %v1939 = vunpack.c.h.b16 %v1843
          %v1940 = vunpack.c.h.b16 %v1844
          %v1941 = vunpack.c.h.b16 %v1845
          %v1942 = vunpack.c.h.b16 %v1846
          %v1943 = vunpack.c.h.b16 %v1847
          %v1944 = vunpack.c.h.b16 %v1848
          %v1945 = vunpack.c.h.b16 %v1849
          %v1946 = vunpack.c.h.b16 %v1850
          %v1947 = vunpack.c.h.b16 %v1851
          %v1948 = vunpack.c.h.b16 %v1852
          %v1949 = vunpack.c.h.b16 %v1853
          %v1950 = vunpack.c.h.b16 %v1854
          %v1951 = vunpack.c.h.b16 %v1855
          %v1952 = vpack.c.b16 %v1889, %v1888
          %v1953 = vpack.c.b16 %v1891, %v1890
          %v1954 = vpack.c.b16 %v1893, %v1892
          %v1955 = vpack.c.b16 %v1895, %v1894
          %v1956 = vpack.c.b16 %v1897, %v1896
          %v1957 = vpack.c.b16 %v1899, %v1898
          %v1958 = vpack.c.b16 %v1901, %v1900
          %v1959 = vpack.c.b16 %v1903, %v1902
          %v1960 = vpack.c.b16 %v1905, %v1904
          %v1961 = vpack.c.b16 %v1907, %v1906
          %v1962 = vpack.c.b16 %v1909, %v1908
          %v1963 = vpack.c.b16 %v1911, %v1910
          %v1964 = vpack.c.b16 %v1913, %v1912
          %v1965 = vpack.c.b16 %v1915, %v1914
          %v1966 = vpack.c.b16 %v1917, %v1916
          %v1967 = vpack.c.b16 %v1919, %v1918
          %v1968 = vpack.c.b16 %v1921, %v1920
          %v1969 = vpack.c.b16 %v1923, %v1922
          %v1970 = vpack.c.b16 %v1925, %v1924
          %v1971 = vpack.c.b16 %v1927, %v1926
          %v1972 = vpack.c.b16 %v1929, %v1928
          %v1973 = vpack.c.b16 %v1931, %v1930
          %v1974 = vpack.c.b16 %v1933, %v1932
          %v1975 = vpack.c.b16 %v1935, %v1934
          %v1976 = vpack.c.b16 %v1937, %v1936
          %v1977 = vpack.c.b16 %v1939, %v1938
          %v1978 = vpack.c.b16 %v1941, %v1940
          %v1979 = vpack.c.b16 %v1943, %v1942
          %v1980 = vpack.c.b16 %v1945, %v1944
          %v1981 = vpack.c.b16 %v1947, %v1946
          %v1982 = vpack.c.b16 %v1949, %v1948
          %v1983 = vpack.c.b16 %v1951, %v1950
          %s2016 = sshra.s32 %s1233, 3
          %s2017 = sand.u32 %s1233, 7
          %s2018 = smul.u32 %s2016, 32
          %s2019 = smul.addr %s2018, 4
          %s2020 = scalar_lea.vmem %s257, %s2019 [#allocation3]
          %2021 = vst [vmem:[%s2020] sm:$0xff] %v1952
          %2022 = vst [vmem:[%s2020 + $0x8] sm:$0xff] %v1953
          %2023 = vst [vmem:[%s2020 + $0x10] sm:$0xff] %v1954
          %2024 = vst [vmem:[%s2020 + $0x18] sm:$0xff] %v1955
          %2025 = vst [vmem:[%s2020 + $0x20] sm:$0xff] %v1956
          %2026 = vst [vmem:[%s2020 + $0x28] sm:$0xff] %v1957
          %2027 = vst [vmem:[%s2020 + $0x30] sm:$0xff] %v1958
          %2028 = vst [vmem:[%s2020 + $0x38] sm:$0xff] %v1959
          %2029 = vst [vmem:[%s2020 + $0x40] sm:$0xff] %v1960
          %2030 = vst [vmem:[%s2020 + $0x48] sm:$0xff] %v1961
          %2031 = vst [vmem:[%s2020 + $0x50] sm:$0xff] %v1962
          %2032 = vst [vmem:[%s2020 + $0x58] sm:$0xff] %v1963
          %2033 = vst [vmem:[%s2020 + $0x60] sm:$0xff] %v1964
          %2034 = vst [vmem:[%s2020 + $0x68] sm:$0xff] %v1965
          %2035 = vst [vmem:[%s2020 + $0x70] sm:$0xff] %v1966
          %2036 = vst [vmem:[%s2020 + $0x78] sm:$0xff] %v1967
          %2037 = vst [vmem:[%s2020 + $0x80] sm:$0xff] %v1968
          %2038 = vst [vmem:[%s2020 + $0x88] sm:$0xff] %v1969
          %2039 = vst [vmem:[%s2020 + $0x90] sm:$0xff] %v1970
          %2040 = vst [vmem:[%s2020 + $0x98] sm:$0xff] %v1971
          %2041 = vst [vmem:[%s2020 + $0xa0] sm:$0xff] %v1972
          %2042 = vst [vmem:[%s2020 + $0xa8] sm:$0xff] %v1973
          %2043 = vst [vmem:[%s2020 + $0xb0] sm:$0xff] %v1974
          %2044 = vst [vmem:[%s2020 + $0xb8] sm:$0xff] %v1975
          %2045 = vst [vmem:[%s2020 + $0xc0] sm:$0xff] %v1976
          %2046 = vst [vmem:[%s2020 + $0xc8] sm:$0xff] %v1977
          %2047 = vst [vmem:[%s2020 + $0xd0] sm:$0xff] %v1978
          %2048 = vst [vmem:[%s2020 + $0xd8] sm:$0xff] %v1979
          %2049 = vst [vmem:[%s2020 + $0xe0] sm:$0xff] %v1980
          %2050 = vst [vmem:[%s2020 + $0xe8] sm:$0xff] %v1981
          %2051 = vst [vmem:[%s2020 + $0xf0] sm:$0xff] %v1982
          %2052 = vst [vmem:[%s2020 + $0xf8] sm:$0xff] %v1983
        $region45: #{dcsa_forward.28} parent=39 // loop_footer
          %s1232 = sadd.s32 1, %s1228
        $region46: #{dcsa_forward.28} parent=39 // loop_footer_branch
          %1227 = sbr.rel target = $region42
        $region47: #{dcsa_forward.28} parent=39 // loop_exit
          _
        %s2053 = sand.u32 %s158, 1
        %s2054 = scalar_lea.sflag [#allocation4], %s2053
        %s2055 = sand.u32 %s158, 1
        %s2056 = smul.addr %s2055, 8192
        %s2057 = scalar_lea.vmem [#allocation3], %s2056
        // Predicated region
        $region48: #{dcsa_forward.28} parent=39 // pred_check
          %p2058 = pneg %p168
        $region49: #{dcsa_forward.28} parent=39 // pred_check_branch
          %2060 = sbr.rel (%p2058) target = $region51
        $region50: #{dcsa_forward.28} parent=39 // pred_region
          %s2061 = smul.u32 64, %s24
          %s2063 = ssub.s32 131072, 131072
          %2064 = vsyncadd %s2054, %s2063
          %s2065 = smul.addr %s2061, 32
          %s2066 = smul.addr %s23, 16384
          %s2067 = sadd.s32 %s2065, %s2066
          %s2068 = smul.addr %s2067, 64
          %s2069 = scalar_lea.hbm %s5, %s2068
          %s2070 = sshll.u32 %s2057, 4
          %s2071 = int_to_ptr.vmem [resolvable:$true] %s2070
          %2076 = dma.vmem_to_hbm [thread:$0]  %s2071, 131072, %s2069, %s2054, 2048, 2048, 128
        $region51: #{dcsa_forward.28} parent=39 // pred_fallthru
          _
      $region40: #{dcsa_forward.28} parent=5 // pred_fallthru
        _
      %p2077 = scmp.le.s32.totalorder 2, %s14
      // Predicated region
      $region52: #{dcsa_forward.28} parent=5 // pred_check
        %p2078 = pneg %p2077
      $region53: #{dcsa_forward.28} parent=5 // pred_check_branch
        %2080 = sbr.rel (%p2078) target = $region55
      $region54: #{dcsa_forward.28} parent=5 // pred_region
        %s2081 = ssub.s32 %s14, 2
        // Predicated region
        $region56: #{dcsa_forward.28} parent=54 // pred_check
          %p2082 = pneg %p174
        $region57: #{dcsa_forward.28} parent=54 // pred_check_branch
          %2084 = sbr.rel (%p2082) target = $region59
        $region58: #{dcsa_forward.28} parent=54 // pred_region
          %s2085 = sand.u32 %s159, 1
          %s2086 = scalar_lea.sflag [#allocation4], %s2085
          %s2087 = sand.u32 %s159, 1
          %s2088 = smul.addr %s2087, 8192
          %s2089 = scalar_lea.vmem [#allocation3], %s2088
          %2090 = dma.done %s2086, 131072
        $region59: #{dcsa_forward.28} parent=54 // pred_fallthru
          _
      $region55: #{dcsa_forward.28} parent=5 // pred_fallthru
        _
    $region6: #{dcsa_forward.28} parent=1 // loop_footer
      %s18 = sadd.s32 1, %s14
    $region7: #{dcsa_forward.28} parent=1 // loop_footer_branch
      %13 = sbr.rel target = $region3
    $region8: #{dcsa_forward.28} parent=1 // loop_exit
      _
    %2091 = vsyncpa [#allocation4], 1
    %s2092 = scalar_lea.sflag [#allocation4], 1
    %2093 = vsyncpa %s2092, 1

</llo_original>
